<compile_context>
chip_gen: v7x
topology: tpu7x:2x2x1
jax: 0.10.0
libtpu: 0.0.40
codegen_flags: <defaults>
</compile_context>

<pallas_src>
import functools
import math

import jax
import jax.numpy as jnp
from jax import lax
from jax.experimental import pallas as pl
from jax.experimental.pallas import tpu as pltpu

BF16 = jnp.bfloat16
F32 = jnp.float32


# --------------------------------------------------------------------------
# Grid / BlockSpec helpers
# --------------------------------------------------------------------------

def _grid_split(batch):
    """2-way batch split (one chunk per v7x TensorCore), else 1."""
    g = 2 if (batch % 2 == 0 and batch >= 2) else 1
    return g, batch // g


def _cspec(bc, tail):
    """Per-grid-step batch chunk: leading dim = bc samples, rest full."""
    nd = len(tail)
    return pl.BlockSpec((bc,) + tuple(tail), lambda g: (g,) + (0,) * nd)


def _wspec(shape):
    """Whole-array weight block, constant index, single-buffered."""
    nd = len(shape)
    return pl.BlockSpec(tuple(shape), lambda g: (0,) * nd,
                        pipeline_mode=pl.Buffered(1))


_PARALLEL = pltpu.CompilerParams(dimension_semantics=("parallel",))


# --------------------------------------------------------------------------
# In-kernel math helpers (f32 VPU/EUP math; bf16 only on MXU operands)
# --------------------------------------------------------------------------

def _sigmoid(x):
    return pl.reciprocal(1.0 + jnp.exp(-x), approx=True)


def _ln(x, g, b):
    mu = jnp.mean(x, axis=-1, keepdims=True)
    var = jnp.mean((x - mu) ** 2, axis=-1, keepdims=True)
    return (x - mu) * lax.rsqrt(var + 1e-5) * g + b


def _mm(a_f32, w_bf16, bias_f32=None):
    y = jnp.dot(a_f32.astype(BF16), w_bf16, preferred_element_type=F32)
    if bias_f32 is not None:
        y = y + bias_f32
    return y


def _softmax_lastdim(s):
    s = s - jnp.max(s, axis=-1, keepdims=True)
    e = jnp.exp(s)
    return e * pl.reciprocal(jnp.sum(e, axis=-1, keepdims=True), approx=True)


# --------------------------------------------------------------------------
# Kernel 1: fused NAML user encoder (conv + word attn + cat + news attn + proj)
# --------------------------------------------------------------------------

def _naml_kernel(emb_ref, cat_ref, hmask_ref,
                 convw_ref, convb_ref,
                 waw_ref, wab_ref, waq_ref,
                 naw_ref, nab_ref, naq_ref,
                 upw_ref, upb_ref,
                 out_ref):
    BC, H, L, E = emb_ref.shape
    F = convb_ref.shape[-1]
    N = BC * H * L

    emb = emb_ref[...]                                   # [BC, H, L, E] f32
    ef = emb.reshape(N, E)

    # im2col fused in-kernel: prev/next tokens via sublane roll + edge masking
    # (rows wrapped across title boundaries are exactly the l==0 / l==L-1 rows
    #  that conv padding zeroes anyway).
    pos = lax.broadcasted_iota(jnp.int32, (BC, H, L, E), 2).reshape(N, E)
    prev = pltpu.roll(ef, shift=1, axis=0)
    prev = jnp.where(pos == 0, 0.0, prev)
    nxt = pltpu.roll(ef, shift=N - 1, axis=0)
    nxt = jnp.where(pos == L - 1, 0.0, nxt)

    wl = convw_ref[0:E, :]
    wc = convw_ref[E:2 * E, :]
    wr = convw_ref[2 * E:3 * E, :]
    conv = _mm(prev, wl) + _mm(ef, wc) + _mm(nxt, wr) + convb_ref[...]
    conv = jnp.maximum(conv, 0.0)                        # [N, F]

    # Word-level additive attention (word mask == all ones).
    proj = jnp.tanh(_mm(conv, waw_ref[...], wab_ref[...]))
    scores = _mm(proj, waq_ref[...]).reshape(BC, H, L)
    alpha = _softmax_lastdim(scores)                     # [BC, H, L]
    conv4 = conv.reshape(BC, H, L, F)
    # VPU pooling (broadcast-multiply + sum over L) -- no tiny-M MXU calls.
    news = jnp.sum(alpha[..., None] * conv4, axis=2)     # [BC, H, F]
    news = news + cat_ref[...]

    # News-level additive attention over history (masked).
    news_f = news.reshape(BC * H, F)
    proj2 = jnp.tanh(_mm(news_f, naw_ref[...], nab_ref[...]))
    sc2 = _mm(proj2, naq_ref[...]).reshape(BC, H, 1)
    # NOTE: fully-masked histories fall back to a uniform softmax (vs NaN with
    # a hard -inf masked_fill in torch); benign for this synthetic setup.
    sc2 = jnp.where(hmask_ref[...] > 0, sc2, -1e9)
    sc2 = sc2 - jnp.max(sc2, axis=1, keepdims=True)
    e2 = jnp.exp(sc2)
    alpha2 = e2 * pl.reciprocal(jnp.sum(e2, axis=1, keepdims=True), approx=True)
    user_vec = jnp.sum(alpha2 * news, axis=1)            # [BC, F]

    U = upb_ref.shape[-1]
    out_ref[...] = jnp.tanh(
        _mm(user_vec, upw_ref[...], upb_ref[...])).reshape(BC, 1, U)


def naml_user_encoder(p, user_history, history_mask, history_categories):
    B, H, L = user_history.shape
    E = p["tok_emb"].shape[1]
    F = p["conv_b"].shape[-1]
    A = p["word_attn_w"].shape[1]
    U = p["user_proj_w"].shape[1]
    G, BC = _grid_split(B)

    emb = jnp.take(p["tok_emb"], user_history.reshape(-1),
                   axis=0).reshape(B, H, L, E)
    cat = jnp.take(p["cat_emb"], history_categories.reshape(-1),
                   axis=0).reshape(B, H, F)
    hmask = history_mask.astype(F32).reshape(B, H, 1)

    user3 = pl.pallas_call(
        _naml_kernel,
        grid=(G,),
        in_specs=[
            _cspec(BC, (H, L, E)), _cspec(BC, (H, F)), _cspec(BC, (H, 1)),
            _wspec((3 * E, F)), _wspec((1, F)),
            _wspec((F, A)), _wspec((1, A)), _wspec((A, 1)),
            _wspec((F, A)), _wspec((1, A)), _wspec((A, 1)),
            _wspec((F, U)), _wspec((1, U)),
        ],
        out_specs=_cspec(BC, (1, U)),
        out_shape=jax.ShapeDtypeStruct((B, 1, U), F32),
        compiler_params=_PARALLEL,
    )(emb, cat, hmask,
      p["conv_w"], p["conv_b"],
      p["word_attn_w"], p["word_attn_b"], p["word_attn_q"],
      p["news_attn_w"], p["news_attn_b"], p["news_attn_q"],
      p["user_proj_w"], p["user_proj_b"])
    return user3[:, 0, :]                                # [B, U]


# --------------------------------------------------------------------------
# Kernel 2: fused transformer encoder layer (QKV + attn + residual LN + FFN)
# --------------------------------------------------------------------------

def _encoder_kernel(x_ref, m_ref, wqkv_ref, bqkv_ref, wo_ref, bo_ref,
                    ln1g_ref, ln1b_ref, ff1w_ref, ff1b_ref,
                    ff2w_ref, ff2b_ref, ln2g_ref, ln2b_ref, o_ref):
    BC, S, D = x_ref.shape
    x = x_ref[...]                                       # [BC, S, D] f32
    xf = x.reshape(BC * S, D)

    # Fused QKV projection on the folded batch (1/sqrt(D) pre-folded into Wq).
    qkv = _mm(xf, wqkv_ref[...], bqkv_ref[...])          # [BC*S, 3D]
    q = qkv[:, 0:D].reshape(BC, S, D)
    k = qkv[:, D:2 * D].reshape(BC, S, D)
    v = qkv[:, 2 * D:3 * D].reshape(BC, S, D)

    s = jnp.einsum("bqd,bkd->bqk", q.astype(BF16), k.astype(BF16),
                   preferred_element_type=F32)           # [BC, S, S]
    s = jnp.where(m_ref[...] > 0, s, -1e9)
    attw = _softmax_lastdim(s)
    ctx = jnp.einsum("bqk,bkd->bqd", attw.astype(BF16), v.astype(BF16),
                     preferred_element_type=F32).reshape(BC * S, D)
    attn_out = _mm(ctx, wo_ref[...], bo_ref[...])

    h1 = _ln(xf + attn_out, ln1g_ref[...], ln1b_ref[...])
    ff = jnp.maximum(_mm(h1, ff1w_ref[...], ff1b_ref[...]), 0.0)
    ff = _mm(ff, ff2w_ref[...], ff2b_ref[...])
    o_ref[...] = _ln(h1 + ff, ln2g_ref[...], ln2b_ref[...]).reshape(BC, S, D)


def transformer_encoder(p, input_ids, attention_mask, sentence_positions):
    B, S = input_ids.shape
    D = p["tok_emb"].shape[1]
    FF = p["ff1_w"].shape[1]
    G, BC = _grid_split(B)

    x = jnp.take(p["tok_emb"], input_ids.reshape(-1), axis=0).reshape(B, S, D)
    x = x + p["pos_emb"][:S][None, :, :]
    x = x + jnp.take(p["sent_pos_emb"], sentence_positions.reshape(-1),
                     axis=0).reshape(B, S, D)
    x = x.astype(F32)
    mask = attention_mask.astype(F32).reshape(B, 1, S)

    return pl.pallas_call(
        _encoder_kernel,
        grid=(G,),
        in_specs=[
            _cspec(BC, (S, D)), _cspec(BC, (1, S)),
            _wspec((D, 3 * D)), _wspec((1, 3 * D)),
            _wspec((D, D)), _wspec((1, D)),
            _wspec((1, D)), _wspec((1, D)),
            _wspec((D, FF)), _wspec((1, FF)),
            _wspec((FF, D)), _wspec((1, D)),
            _wspec((1, D)), _wspec((1, D)),
        ],
        out_specs=_cspec(BC, (S, D)),
        out_shape=jax.ShapeDtypeStruct((B, S, D), F32),
        compiler_params=_PARALLEL,
    )(x, mask, p["wqkv"], p["bqkv"],
      p["wo"], p["bo"],
      p["ln1_g"], p["ln1_b"],
      p["ff1_w"], p["ff1_b"],
      p["ff2_w"], p["ff2_b"],
      p["ln2_g"], p["ln2_b"])


# --------------------------------------------------------------------------
# Kernel 3: fused pointer-generator decoder
#   GRU recurrence (VMEM scratch hidden states) + F2 user-injected cross
#   attention + vocab head + p_gen + in-kernel one-hot copy dist + mixture.
# --------------------------------------------------------------------------

def _decoder_kernel(emb_ref, enc_ref, m_ref, ids_ref, user_ref,
                    wih_ref, bih_ref, whh_ref, bhh_ref,
                    wh_ref, bh_ref, wu_ref, bu_ref, wk_ref, bk_ref,
                    outw_ref, outb_ref, pgw_ref, pgb_ref,
                    logits_ref, final_ref, attw_ref, pgen_ref,
                    hs_ref):
    BC, Tp, E = emb_ref.shape
    S, D = enc_ref.shape[1], enc_ref.shape[2]
    Hd = whh_ref.shape[0]
    V = outb_ref.shape[-1]
    U = user_ref.shape[-1]

    emb = emb_ref[...]                                   # [BC, Tp, E] f32
    enc = enc_ref[...]                                   # [BC, S, D]  f32
    enc_bf = enc.astype(BF16)                            # single cast, reused
    u = user_ref[...].reshape(BC, U)                     # [BC, U]

    # ---- GRU (teacher forcing): input gates batched, recurrence unrolled. ----
    xg = _mm(emb.reshape(BC * Tp, E),
             wih_ref[...], bih_ref[...]).reshape(BC, Tp, 3 * Hd)
    whh = whh_ref[...]                                   # hoisted out of loop
    bhh = bhh_ref[...]
    h = jnp.zeros((BC, Hd), F32)
    for t in range(Tp):                                  # Tp is small & static
        xg_t = xg[:, t, :]
        hg = _mm(h, whh, bhh)                            # [BC, 3Hd]
        r = _sigmoid(xg_t[:, 0:Hd] + hg[:, 0:Hd])
        z = _sigmoid(xg_t[:, Hd:2 * Hd] + hg[:, Hd:2 * Hd])
        n = jnp.tanh(xg_t[:, 2 * Hd:3 * Hd] + r * hg[:, 2 * Hd:3 * Hd])
        h = (1.0 - z) * n + z * h
        hs_ref[:, pl.ds(t, 1), :] = h.reshape(BC, 1, Hd)  # per-step scratch row
    hs = hs_ref[...]                                     # [BC, Tp, Hd]
    hs_f = hs.reshape(BC * Tp, Hd)

    # ---- F2 injection: user embedding added to the attention query. ----
    # (1/sqrt(D) pre-folded into wh/bh/wu/bu.)
    uq = _mm(u, wu_ref[...], bu_ref[...])                # [BC, D]
    q = _mm(hs_f, wh_ref[...], bh_ref[...]).reshape(BC, Tp, D) + uq[:, None, :]
    k = _mm(enc.reshape(BC * S, D),
            wk_ref[...], bk_ref[...]).reshape(BC, S, D)

    s = jnp.einsum("btd,bsd->bts", q.astype(BF16), k.astype(BF16),
                   preferred_element_type=F32)           # [BC, Tp, S]
    s = jnp.where(m_ref[...] > 0, s, -1e9)
    attw = _softmax_lastdim(s)                           # [BC, Tp, S]
    attw_bf = attw.astype(BF16)
    ctx = jnp.einsum("bts,bsd->btd", attw_bf, enc_bf,
                     preferred_element_type=F32)         # [BC, Tp, D]

    # ---- Vocab head, p_gen and pointer mixture. ----
    ctx_f = ctx.reshape(BC * Tp, D)
    emb_f = emb.reshape(BC * Tp, E)
    u_b = jnp.broadcast_to(u[:, None, :], (BC, Tp, U)).reshape(BC * Tp, U)

    feat = jnp.concatenate([hs_f, ctx_f, u_b], axis=-1)  # [BC*Tp, Hd+D+U]
    logits = _mm(feat, outw_ref[...], outb_ref[...])     # [BC*Tp, V]

    pg_feat = jnp.concatenate([hs_f, ctx_f, emb_f], axis=-1)
    p_gen = _sigmoid(_mm(pg_feat, pgw_ref[...], pgb_ref[...]))   # [BC*Tp, 1]

    vocab_dist = _softmax_lastdim(logits).reshape(BC, Tp, V)

    # Copy distribution: attw @ one_hot(encoder_ids) built in-kernel.
    # TODO(synk): tile V + SMEM scatter-add at realistic vocab sizes.
    ids = ids_ref[...]                                   # [BC, S, 1] int32
    vocab_iota = lax.broadcasted_iota(jnp.int32, (BC, S, V), 2)
    onehot = (ids == vocab_iota).astype(BF16)            # [BC, S, V]
    copy_dist = jnp.einsum("bts,bsv->btv", attw_bf, onehot,
                           preferred_element_type=F32)   # [BC, Tp, V]

    p_gen3 = p_gen.reshape(BC, Tp, 1)
    logits_ref[...] = logits.reshape(BC, Tp, V)
    final_ref[...] = p_gen3 * vocab_dist + (1.0 - p_gen3) * copy_dist
    attw_ref[...] = attw
    pgen_ref[...] = p_gen3


def pointer_decoder(p, encoder_outputs, encoder_input_ids, target_ids,
                    encoder_mask, user_embedding, vocab_size):
    B, S, D = encoder_outputs.shape
    Hd = p["gru_whh"].shape[0]
    U = user_embedding.shape[-1]
    E = p["tok_emb"].shape[1]
    V = vocab_size
    G, BC = _grid_split(B)

    dec_in = target_ids[:, :-1]
    T = dec_in.shape[1]
    T_pad = ((T + 7) // 8) * 8                           # sublane-align steps
    dec_in_p = jnp.pad(dec_in, ((0, 0), (0, T_pad - T)))
    emb = jnp.take(p["tok_emb"], dec_in_p.reshape(-1),
                   axis=0).reshape(B, T_pad, E).astype(F32)
    mask = encoder_mask.astype(F32).reshape(B, 1, S)
    ids = encoder_input_ids.astype(jnp.int32).reshape(B, S, 1)
    user3 = user_embedding.astype(F32).reshape(B, 1, U)

    logits, final_dists, attw, p_gen = pl.pallas_call(
        _decoder_kernel,
        grid=(G,),
        in_specs=[
            _cspec(BC, (T_pad, E)), _cspec(BC, (S, D)), _cspec(BC, (1, S)),
            _cspec(BC, (S, 1)), _cspec(BC, (1, U)),
            _wspec((E, 3 * Hd)), _wspec((1, 3 * Hd)),
            _wspec((Hd, 3 * Hd)), _wspec((1, 3 * Hd)),
            _wspec((Hd, D)), _wspec((1, D)),
            _wspec((U, D)), _wspec((1, D)),
            _wspec((D, D)), _wspec((1, D)),
            _wspec((Hd + D + U, V)), _wspec((1, V)),
            _wspec((Hd + D + E, 1)), _wspec((1, 1)),
        ],
        out_specs=(_cspec(BC, (T_pad, V)), _cspec(BC, (T_pad, V)),
                   _cspec(BC, (T_pad, S)), _cspec(BC, (T_pad, 1))),
        out_shape=(jax.ShapeDtypeStruct((B, T_pad, V), F32),
                   jax.ShapeDtypeStruct((B, T_pad, V), F32),
                   jax.ShapeDtypeStruct((B, T_pad, S), F32),
                   jax.ShapeDtypeStruct((B, T_pad, 1), F32)),
        scratch_shapes=[pltpu.VMEM((BC, T_pad, Hd), F32)],
        compiler_params=_PARALLEL,
    )(emb, encoder_outputs.astype(F32), mask, ids, user3,
      p["gru_wih"], p["gru_bih"], p["gru_whh"], p["gru_bhh"],
      p["attn_wh"], p["attn_bh"], p["attn_wu"], p["attn_bu"],
      p["attn_wk"], p["attn_bk"],
      p["out_w"], p["out_b"], p["pgen_w"], p["pgen_b"])

    return {"logits": logits[:, :T, :],
            "final_dists": final_dists[:, :T, :],
            "attention_weights": attw[:, :T, :],
            "p_gen": p_gen[:, :T, :]}


# --------------------------------------------------------------------------
# Loss + full forward (glue: embedding gathers, loss, slicing stay in XLA)
# --------------------------------------------------------------------------

def cross_entropy_ignore0(logits, targets):
    # nn.CrossEntropyLoss(ignore_index=0), mean over non-ignored tokens.
    logp = jax.nn.log_softmax(logits, axis=-1)
    nll = -jnp.take_along_axis(logp, targets[..., None], axis=-1)[..., 0]
    mask = (targets != 0).astype(F32)
    return jnp.sum(nll * mask) / jnp.maximum(jnp.sum(mask), 1.0)


def personalized_headline_forward(params, user_history, news_input_ids,
                                  target_ids, history_mask,
                                  history_categories, news_attention_mask,
                                  news_sentence_positions, vocab_size):
    user_embedding = naml_user_encoder(params["naml"], user_history,
                                       history_mask, history_categories)
    encoder_outputs = transformer_encoder(params["enc"], news_input_ids,
                                          news_attention_mask,
                                          news_sentence_positions)
    dec = pointer_decoder(params["dec"], encoder_outputs, news_input_ids,
                          target_ids, news_attention_mask, user_embedding,
                          vocab_size)
    target_shifted = target_ids[:, 1:]
    logits = dec["logits"]
    min_len = min(target_shifted.shape[1], logits.shape[1])
    loss = cross_entropy_ignore0(logits[:, :min_len, :],
                                 target_shifted[:, :min_len])
    return {"loss": loss, "user_embedding": user_embedding,
            "encoder_outputs": encoder_outputs, **dec}


# --------------------------------------------------------------------------
# Parameter init (torch-like f32) + one-time kernel-ready preparation
# --------------------------------------------------------------------------

def init_params(key, V, E, D, F, U, Hd, C, FF, A, MAX_S, MAX_SENT):
    keys = iter(jax.random.split(key, 32))

    def rnd(shape, scale=0.02):
        return (scale * jax.random.normal(next(keys), shape)).astype(F32)

    def zeros(*shape):
        return jnp.zeros(shape, F32)

    naml = {
        "tok_emb": rnd((V, E)),
        "conv_w": rnd((3 * E, F)), "conv_b": zeros(F),
        "word_attn_w": rnd((F, A)), "word_attn_b": zeros(A),
        "word_attn_q": rnd((A,)),
        "cat_emb": rnd((C, F)),
        "news_attn_w": rnd((F, A)), "news_attn_b": zeros(A),
        "news_attn_q": rnd((A,)),
        "user_proj_w": rnd((F, U)), "user_proj_b": zeros(U),
    }
    enc = {
        "tok_emb": rnd((V, D)), "pos_emb": rnd((MAX_S, D)),
        "sent_pos_emb": rnd((MAX_SENT, D)),
        "wq": rnd((D, D)), "bq": zeros(D),
        "wk": rnd((D, D)), "bk": zeros(D),
        "wv": rnd((D, D)), "bv": zeros(D),
        "wo": rnd((D, D)), "bo": zeros(D),
        "ln1_g": jnp.ones((D,), F32), "ln1_b": zeros(D),
        "ff1_w": rnd((D, FF)), "ff1_b": zeros(FF),
        "ff2_w": rnd((FF, D)), "ff2_b": zeros(D),
        "ln2_g": jnp.ones((D,), F32), "ln2_b": zeros(D),
    }
    dec = {
        "tok_emb": rnd((V, E)),
        "gru_wih": rnd((E, 3 * Hd)), "gru_bih": zeros(3 * Hd),
        "gru_whh": rnd((Hd, 3 * Hd)), "gru_bhh": zeros(3 * Hd),
        "attn_wh": rnd((Hd, D)), "attn_bh": zeros(D),
        "attn_wu": rnd((U, D)), "attn_bu": zeros(D),
        "attn_wk": rnd((D, D)), "attn_bk": zeros(D),
        "out_w": rnd((Hd + D + U, V)), "out_b": zeros(V),
        "pgen_w": rnd((Hd + D + E, 1)), "pgen_b": zeros(1),
    }
    return {"naml": naml, "enc": enc, "dec": dec}


def prepare_params(raw):
    """One-time (outside jit) weight prep: bf16 casts, fused QKV, attention
    scale folded into the query-side weights, bias reshapes to [1, N]."""
    nr, er, dr = raw["naml"], raw["enc"], raw["dec"]
    F = nr["conv_b"].shape[0]
    A = nr["word_attn_b"].shape[0]
    U = nr["user_proj_b"].shape[0]
    D = er["wq"].shape[0]
    FF = er["ff1_b"].shape[0]
    Hd = dr["gru_whh"].shape[0]
    V = dr["out_b"].shape[0]
    enc_scale = 1.0 / math.sqrt(D)
    dec_scale = 1.0 / math.sqrt(dr["attn_wk"].shape[0])

    naml = {
        "tok_emb": nr["tok_emb"].astype(F32),
        "cat_emb": nr["cat_emb"].astype(F32),
        "conv_w": nr["conv_w"].astype(BF16),
        "conv_b": nr["conv_b"].reshape(1, F).astype(F32),
        "word_attn_w": nr["word_attn_w"].astype(BF16),
        "word_attn_b": nr["word_attn_b"].reshape(1, A).astype(F32),
        "word_attn_q": nr["word_attn_q"].reshape(A, 1).astype(BF16),
        "news_attn_w": nr["news_attn_w"].astype(BF16),
        "news_attn_b": nr["news_attn_b"].reshape(1, A).astype(F32),
        "news_attn_q": nr["news_attn_q"].reshape(A, 1).astype(BF16),
        "user_proj_w": nr["user_proj_w"].astype(BF16),
        "user_proj_b": nr["user_proj_b"].reshape(1, U).astype(F32),
    }
    wqkv = jnp.concatenate([er["wq"] * enc_scale, er["wk"], er["wv"]], axis=1)
    bqkv = jnp.concatenate([er["bq"] * enc_scale, er["bk"], er["bv"]])
    enc = {
        "tok_emb": er["tok_emb"].astype(F32),
        "pos_emb": er["pos_emb"].astype(F32),
        "sent_pos_emb": er["sent_pos_emb"].astype(F32),
        "wqkv": wqkv.astype(BF16),
        "bqkv": bqkv.reshape(1, 3 * D).astype(F32),
        "wo": er["wo"].astype(BF16), "bo": er["bo"].reshape(1, D).astype(F32),
        "ln1_g": er["ln1_g"].reshape(1, D).astype(F32),
        "ln1_b": er["ln1_b"].reshape(1, D).astype(F32),
        "ff1_w": er["ff1_w"].astype(BF16),
        "ff1_b": er["ff1_b"].reshape(1, FF).astype(F32),
        "ff2_w": er["ff2_w"].astype(BF16),
        "ff2_b": er["ff2_b"].reshape(1, D).astype(F32),
        "ln2_g": er["ln2_g"].reshape(1, D).astype(F32),
        "ln2_b": er["ln2_b"].reshape(1, D).astype(F32),
    }
    dec = {
        "tok_emb": dr["tok_emb"].astype(F32),
        "gru_wih": dr["gru_wih"].astype(BF16),
        "gru_bih": dr["gru_bih"].reshape(1, 3 * Hd).astype(F32),
        "gru_whh": dr["gru_whh"].astype(BF16),
        "gru_bhh": dr["gru_bhh"].reshape(1, 3 * Hd).astype(F32),
        "attn_wh": (dr["attn_wh"] * dec_scale).astype(BF16),
        "attn_bh": (dr["attn_bh"] * dec_scale).reshape(1, D).astype(F32),
        "attn_wu": (dr["attn_wu"] * dec_scale).astype(BF16),
        "attn_bu": (dr["attn_bu"] * dec_scale).reshape(1, D).astype(F32),
        "attn_wk": dr["attn_wk"].astype(BF16),
        "attn_bk": dr["attn_bk"].reshape(1, D).astype(F32),
        "out_w": dr["out_w"].astype(BF16),
        "out_b": dr["out_b"].reshape(1, V).astype(F32),
        "pgen_w": dr["pgen_w"].astype(BF16),
        "pgen_b": dr["pgen_b"].reshape(1, 1).astype(F32),
    }
    return {"naml": naml, "enc": enc, "dec": dec}


# --------------------------------------------------------------------------
# Main
# --------------------------------------------------------------------------

if __name__ == "__main__":
    # Small sequence shapes; feature/vocab dims lane-dense (multiples of 128).
    # B=4 so the batch fold gives 2 samples per grid step on a 2-step grid.
    B, H, L, S, T_TGT = 4, 4, 8, 16, 8
    V, E, D, F, U, Hd, C, FF, A = 256, 128, 128, 128, 128, 128, 8, 256, 128
    MAX_S, MAX_SENT = 32, 8

    root = jax.random.PRNGKey(0)
    kp, k1, k2, k3, k4, k5 = jax.random.split(root, 6)

    raw_params = init_params(kp, V, E, D, F, U, Hd, C, FF, A, MAX_S, MAX_SENT)
    params = prepare_params(raw_params)          # one-time, outside jit

    user_history = jax.random.randint(k1, (B, H, L), 1, V)
    history_mask = jnp.array([[1, 1, 1, 0],
                              [1, 1, 1, 1],
                              [1, 1, 0, 0],
                              [1, 0, 0, 0]], dtype=F32)
    history_categories = jax.random.randint(k2, (B, H), 0, C)
    news_input_ids = jax.random.randint(k3, (B, S), 1, V)
    news_attention_mask = jnp.ones((B, S), F32)
    news_sentence_positions = jax.random.randint(k4, (B, S), 0, MAX_SENT)
    target_ids = jax.random.randint(k5, (B, T_TGT), 1, V)

    fwd = jax.jit(functools.partial(personalized_headline_forward,
                                    vocab_size=V))
    out = fwd(params, user_history, news_input_ids, target_ids, history_mask,
              history_categories, news_attention_mask,
              news_sentence_positions)

    jax.block_until_ready(out["loss"])
    jax.block_until_ready(out["final_dists"])
    assert out["logits"].shape == (B, T_TGT - 1, V)
    assert out["final_dists"].shape == (B, T_TGT - 1, V)
    assert out["user_embedding"].shape == (B, U)
    assert out["encoder_outputs"].shape == (B, S, D)
    assert bool(jnp.isfinite(out["loss"]))
    print("KERNEL_OK")
</pallas_src>

<mosaic_0001>
module attributes {stable_mosaic.version = 11 : i64} {
  func.func @_encoder_kernel(%arg0: i32, %arg1: memref<2x16x128xf32, #tpu.memory_space<vmem>>, %arg2: memref<2x1x16xf32, #tpu.memory_space<vmem>>, %arg3: memref<128x384xbf16, #tpu.memory_space<vmem>>, %arg4: memref<1x384xf32, #tpu.memory_space<vmem>>, %arg5: memref<128x128xbf16, #tpu.memory_space<vmem>>, %arg6: memref<1x128xf32, #tpu.memory_space<vmem>>, %arg7: memref<1x128xf32, #tpu.memory_space<vmem>>, %arg8: memref<1x128xf32, #tpu.memory_space<vmem>>, %arg9: memref<128x256xbf16, #tpu.memory_space<vmem>>, %arg10: memref<1x256xf32, #tpu.memory_space<vmem>>, %arg11: memref<256x128xbf16, #tpu.memory_space<vmem>>, %arg12: memref<1x128xf32, #tpu.memory_space<vmem>>, %arg13: memref<1x128xf32, #tpu.memory_space<vmem>>, %arg14: memref<1x128xf32, #tpu.memory_space<vmem>>, %arg15: memref<2x16x128xf32, #tpu.memory_space<vmem>>) attributes {dimension_semantics = [#tpu.dimension_semantics<parallel>], iteration_bounds = array<i64: 2>, scalar_prefetch = 0 : i64, scratch_operands = 0 : i64, tpu.core_type = #tpu.core_type<tc>, window_params = [{transform_indices = @transform_0, window_bounds = array<i64: 2, 16, 128>}, {transform_indices = @transform_1, window_bounds = array<i64: 2, 1, 16>}, {pipeline_mode = #tpu.pipeline_mode<synchronous>, transform_indices = @transform_2, window_bounds = array<i64: 128, 384>}, {pipeline_mode = #tpu.pipeline_mode<synchronous>, transform_indices = @transform_3, window_bounds = array<i64: 1, 384>}, {pipeline_mode = #tpu.pipeline_mode<synchronous>, transform_indices = @transform_4, window_bounds = array<i64: 128, 128>}, {pipeline_mode = #tpu.pipeline_mode<synchronous>, transform_indices = @transform_5, window_bounds = array<i64: 1, 128>}, {pipeline_mode = #tpu.pipeline_mode<synchronous>, transform_indices = @transform_6, window_bounds = array<i64: 1, 128>}, {pipeline_mode = #tpu.pipeline_mode<synchronous>, transform_indices = @transform_7, window_bounds = array<i64: 1, 128>}, {pipeline_mode = #tpu.pipeline_mode<synchronous>, transform_indices = @transform_8, window_bounds = array<i64: 128, 256>}, {pipeline_mode = #tpu.pipeline_mode<synchronous>, transform_indices = @transform_9, window_bounds = array<i64: 1, 256>}, {pipeline_mode = #tpu.pipeline_mode<synchronous>, transform_indices = @transform_10, window_bounds = array<i64: 256, 128>}, {pipeline_mode = #tpu.pipeline_mode<synchronous>, transform_indices = @transform_11, window_bounds = array<i64: 1, 128>}, {pipeline_mode = #tpu.pipeline_mode<synchronous>, transform_indices = @transform_12, window_bounds = array<i64: 1, 128>}, {pipeline_mode = #tpu.pipeline_mode<synchronous>, transform_indices = @transform_13, window_bounds = array<i64: 1, 128>}, {transform_indices = @transform_14, window_bounds = array<i64: 2, 16, 128>}]} {
    %c0 = arith.constant 0 : index
    %c0_0 = arith.constant 0 : index
    %c0_1 = arith.constant 0 : index
    %0 = vector.load %arg1[%c0, %c0_0, %c0_1] : memref<2x16x128xf32, #tpu.memory_space<vmem>>, vector<2x16x128xf32>
    %1 = vector.shape_cast %0 : vector<2x16x128xf32> to vector<32x128xf32>
    %c0_2 = arith.constant 0 : index
    %c0_3 = arith.constant 0 : index
    %2 = vector.load %arg3[%c0_2, %c0_3] : memref<128x384xbf16, #tpu.memory_space<vmem>>, vector<128x384xbf16>
    %c0_4 = arith.constant 0 : index
    %c0_5 = arith.constant 0 : index
    %3 = vector.load %arg4[%c0_4, %c0_5] : memref<1x384xf32, #tpu.memory_space<vmem>>, vector<1x384xf32>
    %4 = arith.truncf %1 : vector<32x128xf32> to vector<32x128xbf16>
    %cst = arith.constant dense<0.000000e+00> : vector<32x384xf32>
    %5 = tpu.matmul %4, %2, %cst {dimension_numbers = #tpu.dot_dimension_numbers<[1], [0], [0], [1], [0, 0, 1, 1], [], []>} : vector<32x128xbf16>, vector<128x384xbf16>, vector<32x384xf32> -> vector<32x384xf32>
    %6 = vector.broadcast %3 : vector<1x384xf32> to vector<32x384xf32>
    %7 = arith.addf %5, %6 : vector<32x384xf32>
    %8 = vector.extract_strided_slice %7 {offsets = [0, 0], sizes = [32, 128], strides = [1, 1]} : vector<32x384xf32> to vector<32x128xf32>
    %9 = vector.shape_cast %8 : vector<32x128xf32> to vector<2x16x128xf32>
    %10 = vector.extract_strided_slice %7 {offsets = [0, 128], sizes = [32, 128], strides = [1, 1]} : vector<32x384xf32> to vector<32x128xf32>
    %11 = vector.shape_cast %10 : vector<32x128xf32> to vector<2x16x128xf32>
    %12 = vector.extract_strided_slice %7 {offsets = [0, 256], sizes = [32, 128], strides = [1, 1]} : vector<32x384xf32> to vector<32x128xf32>
    %13 = vector.shape_cast %12 : vector<32x128xf32> to vector<2x16x128xf32>
    %14 = arith.truncf %9 : vector<2x16x128xf32> to vector<2x16x128xbf16>
    %15 = arith.truncf %11 : vector<2x16x128xf32> to vector<2x16x128xbf16>
    "tpu.trace_start"() <{level = 10 : i32, message = "bqd,bkd->bqk"}> : () -> ()
    %cst_6 = arith.constant dense<0.000000e+00> : vector<2x16x16xf32>
    %16 = tpu.matmul %14, %15, %cst_6 {dimension_numbers = #tpu.dot_dimension_numbers<[2], [2], [1], [1], [0, 0, 0, 1, 1, 1], [0], [0]>} : vector<2x16x128xbf16>, vector<2x16x128xbf16>, vector<2x16x16xf32> -> vector<2x16x16xf32>
    "tpu.trace_stop"() : () -> ()
    %c0_7 = arith.constant 0 : index
    %c0_8 = arith.constant 0 : index
    %c0_9 = arith.constant 0 : index
    %17 = vector.load %arg2[%c0_7, %c0_8, %c0_9] : memref<2x1x16xf32, #tpu.memory_space<vmem>>, vector<2x1x16xf32>
    %cst_10 = arith.constant 0.000000e+00 : f32
    %18 = vector.broadcast %cst_10 : f32 to vector<2x1x16xf32>
    %19 = arith.cmpf ogt, %17, %18 : vector<2x1x16xf32>
    %cst_11 = arith.constant -1.000000e+09 : f32
    %20 = vector.shape_cast %19 : vector<2x1x16xi1> to vector<2x1x16xi1>
    %21 = vector.broadcast %20 : vector<2x1x16xi1> to vector<2x16x16xi1>
    %22 = vector.broadcast %cst_11 : f32 to vector<2x16x16xf32>
    %23 = arith.select %21, %16, %22 : vector<2x16x16xi1>, vector<2x16x16xf32>
    %cst_12 = arith.constant dense<0xFF800000> : vector<2x16xf32>
    %24 = vector.multi_reduction <maximumf>, %23, %cst_12 [2] : vector<2x16x16xf32> to vector<2x16xf32>
    %25 = vector.shape_cast %24 : vector<2x16xf32> to vector<2x16x1xf32>
    %26 = vector.broadcast %25 : vector<2x16x1xf32> to vector<2x16x16xf32>
    %27 = arith.subf %23, %26 : vector<2x16x16xf32>
    %28 = math.exp %27 : vector<2x16x16xf32>
    %cst_13 = arith.constant dense<0.000000e+00> : vector<2x16xf32>
    %29 = vector.multi_reduction <add>, %28, %cst_13 [2] : vector<2x16x16xf32> to vector<2x16xf32>
    %30 = vector.shape_cast %29 : vector<2x16xf32> to vector<2x16x1xf32>
    %31 = tpu.reciprocal %30 {approx = true} : vector<2x16x1xf32> -> vector<2x16x1xf32>
    %32 = vector.broadcast %31 : vector<2x16x1xf32> to vector<2x16x16xf32>
    %33 = arith.mulf %28, %32 : vector<2x16x16xf32>
    %34 = arith.truncf %33 : vector<2x16x16xf32> to vector<2x16x16xbf16>
    %35 = arith.truncf %13 : vector<2x16x128xf32> to vector<2x16x128xbf16>
    "tpu.trace_start"() <{level = 10 : i32, message = "bqk,bkd->bqd"}> : () -> ()
    %cst_14 = arith.constant dense<0.000000e+00> : vector<2x16x128xf32>
    %36 = tpu.matmul %34, %35, %cst_14 {dimension_numbers = #tpu.dot_dimension_numbers<[2], [1], [1], [2], [0, 0, 0, 1, 1, 2], [0], [0]>} : vector<2x16x16xbf16>, vector<2x16x128xbf16>, vector<2x16x128xf32> -> vector<2x16x128xf32>
    "tpu.trace_stop"() : () -> ()
    %37 = vector.shape_cast %36 : vector<2x16x128xf32> to vector<32x128xf32>
    %c0_15 = arith.constant 0 : index
    %c0_16 = arith.constant 0 : index
    %38 = vector.load %arg5[%c0_15, %c0_16] : memref<128x128xbf16, #tpu.memory_space<vmem>>, vector<128x128xbf16>
    %c0_17 = arith.constant 0 : index
    %c0_18 = arith.constant 0 : index
    %39 = vector.load %arg6[%c0_17, %c0_18] : memref<1x128xf32, #tpu.memory_space<vmem>>, vector<1x128xf32>
    %40 = arith.truncf %37 : vector<32x128xf32> to vector<32x128xbf16>
    %cst_19 = arith.constant dense<0.000000e+00> : vector<32x128xf32>
    %41 = tpu.matmul %40, %38, %cst_19 {dimension_numbers = #tpu.dot_dimension_numbers<[1], [0], [0], [1], [0, 0, 1, 1], [], []>} : vector<32x128xbf16>, vector<128x128xbf16>, vector<32x128xf32> -> vector<32x128xf32>
    %42 = vector.broadcast %39 : vector<1x128xf32> to vector<32x128xf32>
    %43 = arith.addf %41, %42 : vector<32x128xf32>
    %44 = arith.addf %1, %43 : vector<32x128xf32>
    %c0_20 = arith.constant 0 : index
    %c0_21 = arith.constant 0 : index
    %45 = vector.load %arg7[%c0_20, %c0_21] : memref<1x128xf32, #tpu.memory_space<vmem>>, vector<1x128xf32>
    %c0_22 = arith.constant 0 : index
    %c0_23 = arith.constant 0 : index
    %46 = vector.load %arg8[%c0_22, %c0_23] : memref<1x128xf32, #tpu.memory_space<vmem>>, vector<1x128xf32>
    %cst_24 = arith.constant dense<0.000000e+00> : vector<32xf32>
    %47 = vector.multi_reduction <add>, %44, %cst_24 [1] : vector<32x128xf32> to vector<32xf32>
    %48 = vector.shape_cast %47 : vector<32xf32> to vector<32x1xf32>
    %cst_25 = arith.constant 1.280000e+02 : f32
    %49 = vector.broadcast %cst_25 : f32 to vector<32x1xf32>
    %50 = arith.divf %48, %49 : vector<32x1xf32>
    %51 = vector.broadcast %50 : vector<32x1xf32> to vector<32x128xf32>
    %52 = arith.subf %44, %51 : vector<32x128xf32>
    %53 = arith.mulf %52, %52 : vector<32x128xf32>
    %cst_26 = arith.constant dense<0.000000e+00> : vector<32xf32>
    %54 = vector.multi_reduction <add>, %53, %cst_26 [1] : vector<32x128xf32> to vector<32xf32>
    %55 = vector.shape_cast %54 : vector<32xf32> to vector<32x1xf32>
    %cst_27 = arith.constant 1.280000e+02 : f32
    %56 = vector.broadcast %cst_27 : f32 to vector<32x1xf32>
    %57 = arith.divf %55, %56 : vector<32x1xf32>
    %58 = vector.broadcast %50 : vector<32x1xf32> to vector<32x128xf32>
    %59 = arith.subf %44, %58 : vector<32x128xf32>
    %cst_28 = arith.constant 9.99999974E-6 : f32
    %60 = vector.broadcast %cst_28 : f32 to vector<32x1xf32>
    %61 = arith.addf %57, %60 : vector<32x1xf32>
    %62 = math.rsqrt %61 : vector<32x1xf32>
    %63 = vector.broadcast %62 : vector<32x1xf32> to vector<32x128xf32>
    %64 = arith.mulf %59, %63 : vector<32x128xf32>
    %65 = vector.broadcast %45 : vector<1x128xf32> to vector<32x128xf32>
    %66 = arith.mulf %64, %65 : vector<32x128xf32>
    %67 = vector.broadcast %46 : vector<1x128xf32> to vector<32x128xf32>
    %68 = arith.addf %66, %67 : vector<32x128xf32>
    %c0_29 = arith.constant 0 : index
    %c0_30 = arith.constant 0 : index
    %69 = vector.load %arg9[%c0_29, %c0_30] : memref<128x256xbf16, #tpu.memory_space<vmem>>, vector<128x256xbf16>
    %c0_31 = arith.constant 0 : index
    %c0_32 = arith.constant 0 : index
    %70 = vector.load %arg10[%c0_31, %c0_32] : memref<1x256xf32, #tpu.memory_space<vmem>>, vector<1x256xf32>
    %71 = arith.truncf %68 : vector<32x128xf32> to vector<32x128xbf16>
    %cst_33 = arith.constant dense<0.000000e+00> : vector<32x256xf32>
    %72 = tpu.matmul %71, %69, %cst_33 {dimension_numbers = #tpu.dot_dimension_numbers<[1], [0], [0], [1], [0, 0, 1, 1], [], []>} : vector<32x128xbf16>, vector<128x256xbf16>, vector<32x256xf32> -> vector<32x256xf32>
    %73 = vector.broadcast %70 : vector<1x256xf32> to vector<32x256xf32>
    %74 = arith.addf %72, %73 : vector<32x256xf32>
    %cst_34 = arith.constant 0.000000e+00 : f32
    %75 = vector.broadcast %cst_34 : f32 to vector<32x256xf32>
    %76 = arith.maximumf %74, %75 : vector<32x256xf32>
    %c0_35 = arith.constant 0 : index
    %c0_36 = arith.constant 0 : index
    %77 = vector.load %arg11[%c0_35, %c0_36] : memref<256x128xbf16, #tpu.memory_space<vmem>>, vector<256x128xbf16>
    %c0_37 = arith.constant 0 : index
    %c0_38 = arith.constant 0 : index
    %78 = vector.load %arg12[%c0_37, %c0_38] : memref<1x128xf32, #tpu.memory_space<vmem>>, vector<1x128xf32>
    %79 = arith.truncf %76 : vector<32x256xf32> to vector<32x256xbf16>
    %cst_39 = arith.constant dense<0.000000e+00> : vector<32x128xf32>
    %80 = tpu.matmul %79, %77, %cst_39 {dimension_numbers = #tpu.dot_dimension_numbers<[1], [0], [0], [1], [0, 0, 1, 1], [], []>} : vector<32x256xbf16>, vector<256x128xbf16>, vector<32x128xf32> -> vector<32x128xf32>
    %81 = vector.broadcast %78 : vector<1x128xf32> to vector<32x128xf32>
    %82 = arith.addf %80, %81 : vector<32x128xf32>
    %83 = arith.addf %68, %82 : vector<32x128xf32>
    %c0_40 = arith.constant 0 : index
    %c0_41 = arith.constant 0 : index
    %84 = vector.load %arg13[%c0_40, %c0_41] : memref<1x128xf32, #tpu.memory_space<vmem>>, vector<1x128xf32>
    %c0_42 = arith.constant 0 : index
    %c0_43 = arith.constant 0 : index
    %85 = vector.load %arg14[%c0_42, %c0_43] : memref<1x128xf32, #tpu.memory_space<vmem>>, vector<1x128xf32>
    %cst_44 = arith.constant dense<0.000000e+00> : vector<32xf32>
    %86 = vector.multi_reduction <add>, %83, %cst_44 [1] : vector<32x128xf32> to vector<32xf32>
    %87 = vector.shape_cast %86 : vector<32xf32> to vector<32x1xf32>
    %cst_45 = arith.constant 1.280000e+02 : f32
    %88 = vector.broadcast %cst_45 : f32 to vector<32x1xf32>
    %89 = arith.divf %87, %88 : vector<32x1xf32>
    %90 = vector.broadcast %89 : vector<32x1xf32> to vector<32x128xf32>
    %91 = arith.subf %83, %90 : vector<32x128xf32>
    %92 = arith.mulf %91, %91 : vector<32x128xf32>
    %cst_46 = arith.constant dense<0.000000e+00> : vector<32xf32>
    %93 = vector.multi_reduction <add>, %92, %cst_46 [1] : vector<32x128xf32> to vector<32xf32>
    %94 = vector.shape_cast %93 : vector<32xf32> to vector<32x1xf32>
    %cst_47 = arith.constant 1.280000e+02 : f32
    %95 = vector.broadcast %cst_47 : f32 to vector<32x1xf32>
    %96 = arith.divf %94, %95 : vector<32x1xf32>
    %97 = vector.broadcast %89 : vector<32x1xf32> to vector<32x128xf32>
    %98 = arith.subf %83, %97 : vector<32x128xf32>
    %cst_48 = arith.constant 9.99999974E-6 : f32
    %99 = vector.broadcast %cst_48 : f32 to vector<32x1xf32>
    %100 = arith.addf %96, %99 : vector<32x1xf32>
    %101 = math.rsqrt %100 : vector<32x1xf32>
    %102 = vector.broadcast %101 : vector<32x1xf32> to vector<32x128xf32>
    %103 = arith.mulf %98, %102 : vector<32x128xf32>
    %104 = vector.broadcast %84 : vector<1x128xf32> to vector<32x128xf32>
    %105 = arith.mulf %103, %104 : vector<32x128xf32>
    %106 = vector.broadcast %85 : vector<1x128xf32> to vector<32x128xf32>
    %107 = arith.addf %105, %106 : vector<32x128xf32>
    %108 = vector.shape_cast %107 : vector<32x128xf32> to vector<2x16x128xf32>
    %c0_49 = arith.constant 0 : index
    %c0_50 = arith.constant 0 : index
    %c0_51 = arith.constant 0 : index
    %109 = vector.load %arg15[%c0_49, %c0_50, %c0_51] : memref<2x16x128xf32, #tpu.memory_space<vmem>>, vector<2x16x128xf32>
    tpu.vector_store %arg15[%c0_49, %c0_50, %c0_51], %108 {strides = array<i32>} : memref<2x16x128xf32, #tpu.memory_space<vmem>>, vector<2x16x128xf32>,
    return
  }
  func.func @transform_0(%arg0: i32) -> (i32, i32, i32) {
    %c0_i32 = arith.constant 0 : i32
    %c0_i32_0 = arith.constant 0 : i32
    %c0_i32_1 = arith.constant 0 : i32
    return %arg0, %c0_i32, %c0_i32_0 : i32, i32, i32
  }
  func.func @transform_1(%arg0: i32) -> (i32, i32, i32) {
    %c0_i32 = arith.constant 0 : i32
    %c0_i32_0 = arith.constant 0 : i32
    %c0_i32_1 = arith.constant 0 : i32
    return %arg0, %c0_i32, %c0_i32_0 : i32, i32, i32
  }
  func.func @transform_2(%arg0: i32) -> (i32, i32) {
    %c0_i32 = arith.constant 0 : i32
    %c0_i32_0 = arith.constant 0 : i32
    %c0_i32_1 = arith.constant 0 : i32
    return %c0_i32, %c0_i32_0 : i32, i32
  }
  func.func @transform_3(%arg0: i32) -> (i32, i32) {
    %c0_i32 = arith.constant 0 : i32
    %c0_i32_0 = arith.constant 0 : i32
    %c0_i32_1 = arith.constant 0 : i32
    return %c0_i32, %c0_i32_0 : i32, i32
  }
  func.func @transform_4(%arg0: i32) -> (i32, i32) {
    %c0_i32 = arith.constant 0 : i32
    %c0_i32_0 = arith.constant 0 : i32
    %c0_i32_1 = arith.constant 0 : i32
    return %c0_i32, %c0_i32_0 : i32, i32
  }
  func.func @transform_5(%arg0: i32) -> (i32, i32) {
    %c0_i32 = arith.constant 0 : i32
    %c0_i32_0 = arith.constant 0 : i32
    %c0_i32_1 = arith.constant 0 : i32
    return %c0_i32, %c0_i32_0 : i32, i32
  }
  func.func @transform_6(%arg0: i32) -> (i32, i32) {
    %c0_i32 = arith.constant 0 : i32
    %c0_i32_0 = arith.constant 0 : i32
    %c0_i32_1 = arith.constant 0 : i32
    return %c0_i32, %c0_i32_0 : i32, i32
  }
  func.func @transform_7(%arg0: i32) -> (i32, i32) {
    %c0_i32 = arith.constant 0 : i32
    %c0_i32_0 = arith.constant 0 : i32
    %c0_i32_1 = arith.constant 0 : i32
    return %c0_i32, %c0_i32_0 : i32, i32
  }
  func.func @transform_8(%arg0: i32) -> (i32, i32) {
    %c0_i32 = arith.constant 0 : i32
    %c0_i32_0 = arith.constant 0 : i32
    %c0_i32_1 = arith.constant 0 : i32
    return %c0_i32, %c0_i32_0 : i32, i32
  }
  func.func @transform_9(%arg0: i32) -> (i32, i32) {
    %c0_i32 = arith.constant 0 : i32
    %c0_i32_0 = arith.constant 0 : i32
    %c0_i32_1 = arith.constant 0 : i32
    return %c0_i32, %c0_i32_0 : i32, i32
  }
  func.func @transform_10(%arg0: i32) -> (i32, i32) {
    %c0_i32 = arith.constant 0 : i32
    %c0_i32_0 = arith.constant 0 : i32
    %c0_i32_1 = arith.constant 0 : i32
    return %c0_i32, %c0_i32_0 : i32, i32
  }
  func.func @transform_11(%arg0: i32) -> (i32, i32) {
    %c0_i32 = arith.constant 0 : i32
    %c0_i32_0 = arith.constant 0 : i32
    %c0_i32_1 = arith.constant 0 : i32
    return %c0_i32, %c0_i32_0 : i32, i32
  }
  func.func @transform_12(%arg0: i32) -> (i32, i32) {
    %c0_i32 = arith.constant 0 : i32
    %c0_i32_0 = arith.constant 0 : i32
    %c0_i32_1 = arith.constant 0 : i32
    return %c0_i32, %c0_i32_0 : i32, i32
  }
  func.func @transform_13(%arg0: i32) -> (i32, i32) {
    %c0_i32 = arith.constant 0 : i32
    %c0_i32_0 = arith.constant 0 : i32
    %c0_i32_1 = arith.constant 0 : i32
    return %c0_i32, %c0_i32_0 : i32, i32
  }
  func.func @transform_14(%arg0: i32) -> (i32, i32, i32) {
    %c0_i32 = arith.constant 0 : i32
    %c0_i32_0 = arith.constant 0 : i32
    %c0_i32_1 = arith.constant 0 : i32
    return %arg0, %c0_i32, %c0_i32_0 : i32, i32, i32
  }
}

module attributes {stable_mosaic.version = 11 : i64} {
  func.func @_naml_kernel(%arg0: i32, %arg1: memref<2x4x8x128xf32, #tpu.memory_space<vmem>>, %arg2: memref<2x4x128xf32, #tpu.memory_space<vmem>>, %arg3: memref<2x4x1xf32, #tpu.memory_space<vmem>>, %arg4: memref<384x128xbf16, #tpu.memory_space<vmem>>, %arg5: memref<1x128xf32, #tpu.memory_space<vmem>>, %arg6: memref<128x128xbf16, #tpu.memory_space<vmem>>, %arg7: memref<1x128xf32, #tpu.memory_space<vmem>>, %arg8: memref<128x1xbf16, #tpu.memory_space<vmem>>, %arg9: memref<128x128xbf16, #tpu.memory_space<vmem>>, %arg10: memref<1x128xf32, #tpu.memory_space<vmem>>, %arg11: memref<128x1xbf16, #tpu.memory_space<vmem>>, %arg12: memref<128x128xbf16, #tpu.memory_space<vmem>>, %arg13: memref<1x128xf32, #tpu.memory_space<vmem>>, %arg14: memref<2x1x128xf32, #tpu.memory_space<vmem>>) attributes {dimension_semantics = [#tpu.dimension_semantics<parallel>], iteration_bounds = array<i64: 2>, scalar_prefetch = 0 : i64, scratch_operands = 0 : i64, tpu.core_type = #tpu.core_type<tc>, window_params = [{transform_indices = @transform_0, window_bounds = array<i64: 2, 4, 8, 128>}, {transform_indices = @transform_1, window_bounds = array<i64: 2, 4, 128>}, {transform_indices = @transform_2, window_bounds = array<i64: 2, 4, 1>}, {pipeline_mode = #tpu.pipeline_mode<synchronous>, transform_indices = @transform_3, window_bounds = array<i64: 384, 128>}, {pipeline_mode = #tpu.pipeline_mode<synchronous>, transform_indices = @transform_4, window_bounds = array<i64: 1, 128>}, {pipeline_mode = #tpu.pipeline_mode<synchronous>, transform_indices = @transform_5, window_bounds = array<i64: 128, 128>}, {pipeline_mode = #tpu.pipeline_mode<synchronous>, transform_indices = @transform_6, window_bounds = array<i64: 1, 128>}, {pipeline_mode = #tpu.pipeline_mode<synchronous>, transform_indices = @transform_7, window_bounds = array<i64: 128, 1>}, {pipeline_mode = #tpu.pipeline_mode<synchronous>, transform_indices = @transform_8, window_bounds = array<i64: 128, 128>}, {pipeline_mode = #tpu.pipeline_mode<synchronous>, transform_indices = @transform_9, window_bounds = array<i64: 1, 128>}, {pipeline_mode = #tpu.pipeline_mode<synchronous>, transform_indices = @transform_10, window_bounds = array<i64: 128, 1>}, {pipeline_mode = #tpu.pipeline_mode<synchronous>, transform_indices = @transform_11, window_bounds = array<i64: 128, 128>}, {pipeline_mode = #tpu.pipeline_mode<synchronous>, transform_indices = @transform_12, window_bounds = array<i64: 1, 128>}, {transform_indices = @transform_13, window_bounds = array<i64: 2, 1, 128>}]} {
    %c0 = arith.constant 0 : index
    %c0_0 = arith.constant 0 : index
    %c0_1 = arith.constant 0 : index
    %c0_2 = arith.constant 0 : index
    %0 = vector.load %arg1[%c0, %c0_0, %c0_1, %c0_2] : memref<2x4x8x128xf32, #tpu.memory_space<vmem>>, vector<2x4x8x128xf32>
    %1 = vector.shape_cast %0 : vector<2x4x8x128xf32> to vector<64x128xf32>
    %2 = tpu.iota {dimensions = array<i32: 2>} : vector<2x4x8x128xi32>
    %3 = vector.shape_cast %2 : vector<2x4x8x128xi32> to vector<64x128xi32>
    %c1_i32 = arith.constant 1 : i32
    %4 = tpu.dynamic_rotate %1 by %c1_i32 dim 0 : vector<64x128xf32>, i32 -> vector<64x128xf32>
    %c0_i32 = arith.constant 0 : i32
    %5 = vector.broadcast %c0_i32 : i32 to vector<64x128xi32>
    %6 = arith.cmpi eq, %3, %5 : vector<64x128xi32>
    %cst = arith.constant 0.000000e+00 : f32
    %7 = vector.broadcast %cst : f32 to vector<64x128xf32>
    %8 = arith.select %6, %7, %4 : vector<64x128xi1>, vector<64x128xf32>
    %c63_i32 = arith.constant 63 : i32
    %9 = tpu.dynamic_rotate %1 by %c63_i32 dim 0 : vector<64x128xf32>, i32 -> vector<64x128xf32>
    %c7_i32 = arith.constant 7 : i32
    %10 = vector.broadcast %c7_i32 : i32 to vector<64x128xi32>
    %11 = arith.cmpi eq, %3, %10 : vector<64x128xi32>
    %cst_3 = arith.constant 0.000000e+00 : f32
    %12 = vector.broadcast %cst_3 : f32 to vector<64x128xf32>
    %13 = arith.select %11, %12, %9 : vector<64x128xi1>, vector<64x128xf32>
    %c0_4 = arith.constant 0 : index
    %c0_5 = arith.constant 0 : index
    %14 = vector.load %arg4[%c0_4, %c0_5] : memref<384x128xbf16, #tpu.memory_space<vmem>>, vector<128x128xbf16>
    %c128 = arith.constant 128 : index
    %c0_6 = arith.constant 0 : index
    %15 = vector.load %arg4[%c128, %c0_6] : memref<384x128xbf16, #tpu.memory_space<vmem>>, vector<128x128xbf16>
    %c256 = arith.constant 256 : index
    %c0_7 = arith.constant 0 : index
    %16 = vector.load %arg4[%c256, %c0_7] : memref<384x128xbf16, #tpu.memory_space<vmem>>, vector<128x128xbf16>
    %17 = arith.truncf %8 : vector<64x128xf32> to vector<64x128xbf16>
    %cst_8 = arith.constant dense<0.000000e+00> : vector<64x128xf32>
    %18 = tpu.matmul %17, %14, %cst_8 {dimension_numbers = #tpu.dot_dimension_numbers<[1], [0], [0], [1], [0, 0, 1, 1], [], []>} : vector<64x128xbf16>, vector<128x128xbf16>, vector<64x128xf32> -> vector<64x128xf32>
    %19 = arith.truncf %1 : vector<64x128xf32> to vector<64x128xbf16>
    %cst_9 = arith.constant dense<0.000000e+00> : vector<64x128xf32>
    %20 = tpu.matmul %19, %15, %cst_9 {dimension_numbers = #tpu.dot_dimension_numbers<[1], [0], [0], [1], [0, 0, 1, 1], [], []>} : vector<64x128xbf16>, vector<128x128xbf16>, vector<64x128xf32> -> vector<64x128xf32>
    %21 = arith.addf %18, %20 : vector<64x128xf32>
    %22 = arith.truncf %13 : vector<64x128xf32> to vector<64x128xbf16>
    %cst_10 = arith.constant dense<0.000000e+00> : vector<64x128xf32>
    %23 = tpu.matmul %22, %16, %cst_10 {dimension_numbers = #tpu.dot_dimension_numbers<[1], [0], [0], [1], [0, 0, 1, 1], [], []>} : vector<64x128xbf16>, vector<128x128xbf16>, vector<64x128xf32> -> vector<64x128xf32>
    %24 = arith.addf %21, %23 : vector<64x128xf32>
    %c0_11 = arith.constant 0 : index
    %c0_12 = arith.constant 0 : index
    %25 = vector.load %arg5[%c0_11, %c0_12] : memref<1x128xf32, #tpu.memory_space<vmem>>, vector<1x128xf32>
    %26 = vector.broadcast %25 : vector<1x128xf32> to vector<64x128xf32>
    %27 = arith.addf %24, %26 : vector<64x128xf32>
    %cst_13 = arith.constant 0.000000e+00 : f32
    %28 = vector.broadcast %cst_13 : f32 to vector<64x128xf32>
    %29 = arith.maximumf %27, %28 : vector<64x128xf32>
    %c0_14 = arith.constant 0 : index
    %c0_15 = arith.constant 0 : index
    %30 = vector.load %arg6[%c0_14, %c0_15] : memref<128x128xbf16, #tpu.memory_space<vmem>>, vector<128x128xbf16>
    %c0_16 = arith.constant 0 : index
    %c0_17 = arith.constant 0 : index
    %31 = vector.load %arg7[%c0_16, %c0_17] : memref<1x128xf32, #tpu.memory_space<vmem>>, vector<1x128xf32>
    %32 = arith.truncf %29 : vector<64x128xf32> to vector<64x128xbf16>
    %cst_18 = arith.constant dense<0.000000e+00> : vector<64x128xf32>
    %33 = tpu.matmul %32, %30, %cst_18 {dimension_numbers = #tpu.dot_dimension_numbers<[1], [0], [0], [1], [0, 0, 1, 1], [], []>} : vector<64x128xbf16>, vector<128x128xbf16>, vector<64x128xf32> -> vector<64x128xf32>
    %34 = vector.broadcast %31 : vector<1x128xf32> to vector<64x128xf32>
    %35 = arith.addf %33, %34 : vector<64x128xf32>
    %36 = math.tanh %35 : vector<64x128xf32>
    %c0_19 = arith.constant 0 : index
    %c0_20 = arith.constant 0 : index
    %37 = vector.load %arg8[%c0_19, %c0_20] : memref<128x1xbf16, #tpu.memory_space<vmem>>, vector<128x1xbf16>
    %38 = arith.truncf %36 : vector<64x128xf32> to vector<64x128xbf16>
    %cst_21 = arith.constant dense<0.000000e+00> : vector<64x1xf32>
    %39 = tpu.matmul %38, %37, %cst_21 {dimension_numbers = #tpu.dot_dimension_numbers<[1], [0], [0], [1], [0, 0, 1, 1], [], []>} : vector<64x128xbf16>, vector<128x1xbf16>, vector<64x1xf32> -> vector<64x1xf32>
    %40 = vector.shape_cast %39 : vector<64x1xf32> to vector<2x4x8xf32>
    %cst_22 = arith.constant dense<0xFF800000> : vector<2x4xf32>
    %41 = vector.multi_reduction <maximumf>, %40, %cst_22 [2] : vector<2x4x8xf32> to vector<2x4xf32>
    %42 = vector.shape_cast %41 : vector<2x4xf32> to vector<2x4x1xf32>
    %43 = vector.broadcast %42 : vector<2x4x1xf32> to vector<2x4x8xf32>
    %44 = arith.subf %40, %43 : vector<2x4x8xf32>
    %45 = math.exp %44 : vector<2x4x8xf32>
    %cst_23 = arith.constant dense<0.000000e+00> : vector<2x4xf32>
    %46 = vector.multi_reduction <add>, %45, %cst_23 [2] : vector<2x4x8xf32> to vector<2x4xf32>
    %47 = vector.shape_cast %46 : vector<2x4xf32> to vector<2x4x1xf32>
    %48 = tpu.reciprocal %47 {approx = true} : vector<2x4x1xf32> -> vector<2x4x1xf32>
    %49 = vector.broadcast %48 : vector<2x4x1xf32> to vector<2x4x8xf32>
    %50 = arith.mulf %45, %49 : vector<2x4x8xf32>
    %51 = vector.shape_cast %29 : vector<64x128xf32> to vector<2x4x8x128xf32>
    %52 = vector.shape_cast %50 : vector<2x4x8xf32> to vector<2x4x8x1xf32>
    %53 = vector.broadcast %52 : vector<2x4x8x1xf32> to vector<2x4x8x128xf32>
    %54 = arith.mulf %53, %51 : vector<2x4x8x128xf32>
    %cst_24 = arith.constant dense<0.000000e+00> : vector<2x4x128xf32>
    %55 = vector.multi_reduction <add>, %54, %cst_24 [2] : vector<2x4x8x128xf32> to vector<2x4x128xf32>
    %c0_25 = arith.constant 0 : index
    %c0_26 = arith.constant 0 : index
    %c0_27 = arith.constant 0 : index
    %56 = vector.load %arg2[%c0_25, %c0_26, %c0_27] : memref<2x4x128xf32, #tpu.memory_space<vmem>>, vector<2x4x128xf32>
    %57 = arith.addf %55, %56 : vector<2x4x128xf32>
    %58 = vector.shape_cast %57 : vector<2x4x128xf32> to vector<8x128xf32>
    %c0_28 = arith.constant 0 : index
    %c0_29 = arith.constant 0 : index
    %59 = vector.load %arg9[%c0_28, %c0_29] : memref<128x128xbf16, #tpu.memory_space<vmem>>, vector<128x128xbf16>
    %c0_30 = arith.constant 0 : index
    %c0_31 = arith.constant 0 : index
    %60 = vector.load %arg10[%c0_30, %c0_31] : memref<1x128xf32, #tpu.memory_space<vmem>>, vector<1x128xf32>
    %61 = arith.truncf %58 : vector<8x128xf32> to vector<8x128xbf16>
    %cst_32 = arith.constant dense<0.000000e+00> : vector<8x128xf32>
    %62 = tpu.matmul %61, %59, %cst_32 {dimension_numbers = #tpu.dot_dimension_numbers<[1], [0], [0], [1], [0, 0, 1, 1], [], []>} : vector<8x128xbf16>, vector<128x128xbf16>, vector<8x128xf32> -> vector<8x128xf32>
    %63 = vector.broadcast %60 : vector<1x128xf32> to vector<8x128xf32>
    %64 = arith.addf %62, %63 : vector<8x128xf32>
    %65 = math.tanh %64 : vector<8x128xf32>
    %c0_33 = arith.constant 0 : index
    %c0_34 = arith.constant 0 : index
    %66 = vector.load %arg11[%c0_33, %c0_34] : memref<128x1xbf16, #tpu.memory_space<vmem>>, vector<128x1xbf16>
    %67 = arith.truncf %65 : vector<8x128xf32> to vector<8x128xbf16>
    %cst_35 = arith.constant dense<0.000000e+00> : vector<8x1xf32>
    %68 = tpu.matmul %67, %66, %cst_35 {dimension_numbers = #tpu.dot_dimension_numbers<[1], [0], [0], [1], [0, 0, 1, 1], [], []>} : vector<8x128xbf16>, vector<128x1xbf16>, vector<8x1xf32> -> vector<8x1xf32>
    %69 = vector.shape_cast %68 : vector<8x1xf32> to vector<2x4x1xf32>
    %c0_36 = arith.constant 0 : index
    %c0_37 = arith.constant 0 : index
    %c0_38 = arith.constant 0 : index
    %70 = vector.load %arg3[%c0_36, %c0_37, %c0_38] : memref<2x4x1xf32, #tpu.memory_space<vmem>>, vector<2x4x1xf32>
    %cst_39 = arith.constant 0.000000e+00 : f32
    %71 = vector.broadcast %cst_39 : f32 to vector<2x4x1xf32>
    %72 = arith.cmpf ogt, %70, %71 : vector<2x4x1xf32>
    %cst_40 = arith.constant -1.000000e+09 : f32
    %73 = vector.broadcast %cst_40 : f32 to vector<2x4x1xf32>
    %74 = arith.select %72, %69, %73 : vector<2x4x1xi1>, vector<2x4x1xf32>
    %cst_41 = arith.constant dense<0xFF800000> : vector<2x1xf32>
    %75 = vector.multi_reduction <maximumf>, %74, %cst_41 [1] : vector<2x4x1xf32> to vector<2x1xf32>
    %76 = vector.shape_cast %75 : vector<2x1xf32> to vector<2x1x1xf32>
    %77 = vector.broadcast %76 : vector<2x1x1xf32> to vector<2x4x1xf32>
    %78 = arith.subf %74, %77 : vector<2x4x1xf32>
    %79 = math.exp %78 : vector<2x4x1xf32>
    %cst_42 = arith.constant dense<0.000000e+00> : vector<2x1xf32>
    %80 = vector.multi_reduction <add>, %79, %cst_42 [1] : vector<2x4x1xf32> to vector<2x1xf32>
    %81 = vector.shape_cast %80 : vector<2x1xf32> to vector<2x1x1xf32>
    %82 = tpu.reciprocal %81 {approx = true} : vector<2x1x1xf32> -> vector<2x1x1xf32>
    %83 = vector.broadcast %82 : vector<2x1x1xf32> to vector<2x4x1xf32>
    %84 = arith.mulf %79, %83 : vector<2x4x1xf32>
    %85 = vector.broadcast %84 : vector<2x4x1xf32> to vector<2x4x128xf32>
    %86 = arith.mulf %85, %57 : vector<2x4x128xf32>
    %cst_43 = arith.constant dense<0.000000e+00> : vector<2x128xf32>
    %87 = vector.multi_reduction <add>, %86, %cst_43 [1] : vector<2x4x128xf32> to vector<2x128xf32>
    %c0_44 = arith.constant 0 : index
    %c0_45 = arith.constant 0 : index
    %88 = vector.load %arg12[%c0_44, %c0_45] : memref<128x128xbf16, #tpu.memory_space<vmem>>, vector<128x128xbf16>
    %c0_46 = arith.constant 0 : index
    %c0_47 = arith.constant 0 : index
    %89 = vector.load %arg13[%c0_46, %c0_47] : memref<1x128xf32, #tpu.memory_space<vmem>>, vector<1x128xf32>
    %90 = arith.truncf %87 : vector<2x128xf32> to vector<2x128xbf16>
    %cst_48 = arith.constant dense<0.000000e+00> : vector<2x128xf32>
    %91 = tpu.matmul %90, %88, %cst_48 {dimension_numbers = #tpu.dot_dimension_numbers<[1], [0], [0], [1], [0, 0, 1, 1], [], []>} : vector<2x128xbf16>, vector<128x128xbf16>, vector<2x128xf32> -> vector<2x128xf32>
    %92 = vector.broadcast %89 : vector<1x128xf32> to vector<2x128xf32>
    %93 = arith.addf %91, %92 : vector<2x128xf32>
    %94 = math.tanh %93 : vector<2x128xf32>
    %95 = vector.shape_cast %94 : vector<2x128xf32> to vector<2x1x128xf32>
    %c0_49 = arith.constant 0 : index
    %c0_50 = arith.constant 0 : index
    %c0_51 = arith.constant 0 : index
    %96 = vector.load %arg14[%c0_49, %c0_50, %c0_51] : memref<2x1x128xf32, #tpu.memory_space<vmem>>, vector<2x1x128xf32>
    tpu.vector_store %arg14[%c0_49, %c0_50, %c0_51], %95 {strides = array<i32>} : memref<2x1x128xf32, #tpu.memory_space<vmem>>, vector<2x1x128xf32>,
    return
  }
  func.func @transform_0(%arg0: i32) -> (i32, i32, i32, i32) {
    %c0_i32 = arith.constant 0 : i32
    %c0_i32_0 = arith.constant 0 : i32
    %c0_i32_1 = arith.constant 0 : i32
    %c0_i32_2 = arith.constant 0 : i32
    return %arg0, %c0_i32, %c0_i32_0, %c0_i32_1 : i32, i32, i32, i32
  }
  func.func @transform_1(%arg0: i32) -> (i32, i32, i32) {
    %c0_i32 = arith.constant 0 : i32
    %c0_i32_0 = arith.constant 0 : i32
    %c0_i32_1 = arith.constant 0 : i32
    return %arg0, %c0_i32, %c0_i32_0 : i32, i32, i32
  }
  func.func @transform_2(%arg0: i32) -> (i32, i32, i32) {
    %c0_i32 = arith.constant 0 : i32
    %c0_i32_0 = arith.constant 0 : i32
    %c0_i32_1 = arith.constant 0 : i32
    return %arg0, %c0_i32, %c0_i32_0 : i32, i32, i32
  }
  func.func @transform_3(%arg0: i32) -> (i32, i32) {
    %c0_i32 = arith.constant 0 : i32
    %c0_i32_0 = arith.constant 0 : i32
    %c0_i32_1 = arith.constant 0 : i32
    return %c0_i32, %c0_i32_0 : i32, i32
  }
  func.func @transform_4(%arg0: i32) -> (i32, i32) {
    %c0_i32 = arith.constant 0 : i32
    %c0_i32_0 = arith.constant 0 : i32
    %c0_i32_1 = arith.constant 0 : i32
    return %c0_i32, %c0_i32_0 : i32, i32
  }
  func.func @transform_5(%arg0: i32) -> (i32, i32) {
    %c0_i32 = arith.constant 0 : i32
    %c0_i32_0 = arith.constant 0 : i32
    %c0_i32_1 = arith.constant 0 : i32
    return %c0_i32, %c0_i32_0 : i32, i32
  }
  func.func @transform_6(%arg0: i32) -> (i32, i32) {
    %c0_i32 = arith.constant 0 : i32
    %c0_i32_0 = arith.constant 0 : i32
    %c0_i32_1 = arith.constant 0 : i32
    return %c0_i32, %c0_i32_0 : i32, i32
  }
  func.func @transform_7(%arg0: i32) -> (i32, i32) {
    %c0_i32 = arith.constant 0 : i32
    %c0_i32_0 = arith.constant 0 : i32
    %c0_i32_1 = arith.constant 0 : i32
    return %c0_i32, %c0_i32_0 : i32, i32
  }
  func.func @transform_8(%arg0: i32) -> (i32, i32) {
    %c0_i32 = arith.constant 0 : i32
    %c0_i32_0 = arith.constant 0 : i32
    %c0_i32_1 = arith.constant 0 : i32
    return %c0_i32, %c0_i32_0 : i32, i32
  }
  func.func @transform_9(%arg0: i32) -> (i32, i32) {
    %c0_i32 = arith.constant 0 : i32
    %c0_i32_0 = arith.constant 0 : i32
    %c0_i32_1 = arith.constant 0 : i32
    return %c0_i32, %c0_i32_0 : i32, i32
  }
  func.func @transform_10(%arg0: i32) -> (i32, i32) {
    %c0_i32 = arith.constant 0 : i32
    %c0_i32_0 = arith.constant 0 : i32
    %c0_i32_1 = arith.constant 0 : i32
    return %c0_i32, %c0_i32_0 : i32, i32
  }
  func.func @transform_11(%arg0: i32) -> (i32, i32) {
    %c0_i32 = arith.constant 0 : i32
    %c0_i32_0 = arith.constant 0 : i32
    %c0_i32_1 = arith.constant 0 : i32
    return %c0_i32, %c0_i32_0 : i32, i32
  }
  func.func @transform_12(%arg0: i32) -> (i32, i32) {
    %c0_i32 = arith.constant 0 : i32
    %c0_i32_0 = arith.constant 0 : i32
    %c0_i32_1 = arith.constant 0 : i32
    return %c0_i32, %c0_i32_0 : i32, i32
  }
  func.func @transform_13(%arg0: i32) -> (i32, i32, i32) {
    %c0_i32 = arith.constant 0 : i32
    %c0_i32_0 = arith.constant 0 : i32
    %c0_i32_1 = arith.constant 0 : i32
    return %arg0, %c0_i32, %c0_i32_0 : i32, i32, i32
  }
}

module attributes {stable_mosaic.version = 11 : i64} {
  func.func @_decoder_kernel(%arg0: i32, %arg1: memref<2x8x128xf32, #tpu.memory_space<vmem>>, %arg2: memref<2x16x128xf32, #tpu.memory_space<vmem>>, %arg3: memref<2x1x16xf32, #tpu.memory_space<vmem>>, %arg4: memref<2x16x1xi32, #tpu.memory_space<vmem>>, %arg5: memref<2x1x128xf32, #tpu.memory_space<vmem>>, %arg6: memref<128x384xbf16, #tpu.memory_space<vmem>>, %arg7: memref<1x384xf32, #tpu.memory_space<vmem>>, %arg8: memref<128x384xbf16, #tpu.memory_space<vmem>>, %arg9: memref<1x384xf32, #tpu.memory_space<vmem>>, %arg10: memref<128x128xbf16, #tpu.memory_space<vmem>>, %arg11: memref<1x128xf32, #tpu.memory_space<vmem>>, %arg12: memref<128x128xbf16, #tpu.memory_space<vmem>>, %arg13: memref<1x128xf32, #tpu.memory_space<vmem>>, %arg14: memref<128x128xbf16, #tpu.memory_space<vmem>>, %arg15: memref<1x128xf32, #tpu.memory_space<vmem>>, %arg16: memref<384x256xbf16, #tpu.memory_space<vmem>>, %arg17: memref<1x256xf32, #tpu.memory_space<vmem>>, %arg18: memref<384x1xbf16, #tpu.memory_space<vmem>>, %arg19: memref<1x1xf32, #tpu.memory_space<vmem>>, %arg20: memref<2x8x256xf32, #tpu.memory_space<vmem>>, %arg21: memref<2x8x256xf32, #tpu.memory_space<vmem>>, %arg22: memref<2x8x16xf32, #tpu.memory_space<vmem>>, %arg23: memref<2x8x1xf32, #tpu.memory_space<vmem>>, %arg24: memref<2x8x128xf32, #tpu.memory_space<vmem>>) attributes {dimension_semantics = [#tpu.dimension_semantics<parallel>], iteration_bounds = array<i64: 2>, scalar_prefetch = 0 : i64, scratch_operands = 1 : i64, tpu.core_type = #tpu.core_type<tc>, window_params = [{transform_indices = @transform_0, window_bounds = array<i64: 2, 8, 128>}, {transform_indices = @transform_1, window_bounds = array<i64: 2, 16, 128>}, {transform_indices = @transform_2, window_bounds = array<i64: 2, 1, 16>}, {transform_indices = @transform_3, window_bounds = array<i64: 2, 16, 1>}, {transform_indices = @transform_4, window_bounds = array<i64: 2, 1, 128>}, {pipeline_mode = #tpu.pipeline_mode<synchronous>, transform_indices = @transform_5, window_bounds = array<i64: 128, 384>}, {pipeline_mode = #tpu.pipeline_mode<synchronous>, transform_indices = @transform_6, window_bounds = array<i64: 1, 384>}, {pipeline_mode = #tpu.pipeline_mode<synchronous>, transform_indices = @transform_7, window_bounds = array<i64: 128, 384>}, {pipeline_mode = #tpu.pipeline_mode<synchronous>, transform_indices = @transform_8, window_bounds = array<i64: 1, 384>}, {pipeline_mode = #tpu.pipeline_mode<synchronous>, transform_indices = @transform_9, window_bounds = array<i64: 128, 128>}, {pipeline_mode = #tpu.pipeline_mode<synchronous>, transform_indices = @transform_10, window_bounds = array<i64: 1, 128>}, {pipeline_mode = #tpu.pipeline_mode<synchronous>, transform_indices = @transform_11, window_bounds = array<i64: 128, 128>}, {pipeline_mode = #tpu.pipeline_mode<synchronous>, transform_indices = @transform_12, window_bounds = array<i64: 1, 128>}, {pipeline_mode = #tpu.pipeline_mode<synchronous>, transform_indices = @transform_13, window_bounds = array<i64: 128, 128>}, {pipeline_mode = #tpu.pipeline_mode<synchronous>, transform_indices = @transform_14, window_bounds = array<i64: 1, 128>}, {pipeline_mode = #tpu.pipeline_mode<synchronous>, transform_indices = @transform_15, window_bounds = array<i64: 384, 256>}, {pipeline_mode = #tpu.pipeline_mode<synchronous>, transform_indices = @transform_16, window_bounds = array<i64: 1, 256>}, {pipeline_mode = #tpu.pipeline_mode<synchronous>, transform_indices = @transform_17, window_bounds = array<i64: 384, 1>}, {pipeline_mode = #tpu.pipeline_mode<synchronous>, transform_indices = @transform_18, window_bounds = array<i64: 1, 1>}, {transform_indices = @transform_19, window_bounds = array<i64: 2, 8, 256>}, {transform_indices = @transform_20, window_bounds = array<i64: 2, 8, 256>}, {transform_indices = @transform_21, window_bounds = array<i64: 2, 8, 16>}, {transform_indices = @transform_22, window_bounds = array<i64: 2, 8, 1>}]} {
    %c0 = arith.constant 0 : index
    %c0_0 = arith.constant 0 : index
    %c0_1 = arith.constant 0 : index
    %0 = vector.load %arg1[%c0, %c0_0, %c0_1] : memref<2x8x128xf32, #tpu.memory_space<vmem>>, vector<2x8x128xf32>
    %c0_2 = arith.constant 0 : index
    %c0_3 = arith.constant 0 : index
    %c0_4 = arith.constant 0 : index
    %1 = vector.load %arg2[%c0_2, %c0_3, %c0_4] : memref<2x16x128xf32, #tpu.memory_space<vmem>>, vector<2x16x128xf32>
    %2 = arith.truncf %1 : vector<2x16x128xf32> to vector<2x16x128xbf16>
    %c0_5 = arith.constant 0 : index
    %c0_6 = arith.constant 0 : index
    %c0_7 = arith.constant 0 : index
    %3 = vector.load %arg5[%c0_5, %c0_6, %c0_7] : memref<2x1x128xf32, #tpu.memory_space<vmem>>, vector<2x1x128xf32>
    %4 = vector.shape_cast %3 : vector<2x1x128xf32> to vector<2x128xf32>
    %5 = vector.shape_cast %0 : vector<2x8x128xf32> to vector<16x128xf32>
    %c0_8 = arith.constant 0 : index
    %c0_9 = arith.constant 0 : index
    %6 = vector.load %arg6[%c0_8, %c0_9] : memref<128x384xbf16, #tpu.memory_space<vmem>>, vector<128x384xbf16>
    %c0_10 = arith.constant 0 : index
    %c0_11 = arith.constant 0 : index
    %7 = vector.load %arg7[%c0_10, %c0_11] : memref<1x384xf32, #tpu.memory_space<vmem>>, vector<1x384xf32>
    %8 = arith.truncf %5 : vector<16x128xf32> to vector<16x128xbf16>
    %cst = arith.constant dense<0.000000e+00> : vector<16x384xf32>
    %9 = tpu.matmul %8, %6, %cst {dimension_numbers = #tpu.dot_dimension_numbers<[1], [0], [0], [1], [0, 0, 1, 1], [], []>} : vector<16x128xbf16>, vector<128x384xbf16>, vector<16x384xf32> -> vector<16x384xf32>
    %10 = vector.broadcast %7 : vector<1x384xf32> to vector<16x384xf32>
    %11 = arith.addf %9, %10 : vector<16x384xf32>
    %12 = vector.shape_cast %11 : vector<16x384xf32> to vector<2x8x384xf32>
    %c0_12 = arith.constant 0 : index
    %c0_13 = arith.constant 0 : index
    %13 = vector.load %arg8[%c0_12, %c0_13] : memref<128x384xbf16, #tpu.memory_space<vmem>>, vector<128x384xbf16>
    %c0_14 = arith.constant 0 : index
    %c0_15 = arith.constant 0 : index
    %14 = vector.load %arg9[%c0_14, %c0_15] : memref<1x384xf32, #tpu.memory_space<vmem>>, vector<1x384xf32>
    %cst_16 = arith.constant 0.000000e+00 : f32
    %15 = vector.broadcast %cst_16 : f32 to vector<2x128xf32>
    %16 = vector.extract_strided_slice %12 {offsets = [0, 0, 0], sizes = [2, 1, 384], strides = [1, 1, 1]} : vector<2x8x384xf32> to vector<2x1x384xf32>
    %17 = vector.shape_cast %16 : vector<2x1x384xf32> to vector<2x384xf32>
    %18 = arith.truncf %15 : vector<2x128xf32> to vector<2x128xbf16>
    %cst_17 = arith.constant dense<0.000000e+00> : vector<2x384xf32>
    %19 = tpu.matmul %18, %13, %cst_17 {dimension_numbers = #tpu.dot_dimension_numbers<[1], [0], [0], [1], [0, 0, 1, 1], [], []>} : vector<2x128xbf16>, vector<128x384xbf16>, vector<2x384xf32> -> vector<2x384xf32>
    %20 = vector.broadcast %14 : vector<1x384xf32> to vector<2x384xf32>
    %21 = arith.addf %19, %20 : vector<2x384xf32>
    %22 = vector.extract_strided_slice %17 {offsets = [0, 0], sizes = [2, 128], strides = [1, 1]} : vector<2x384xf32> to vector<2x128xf32>
    %23 = vector.extract_strided_slice %21 {offsets = [0, 0], sizes = [2, 128], strides = [1, 1]} : vector<2x384xf32> to vector<2x128xf32>
    %24 = arith.addf %22, %23 : vector<2x128xf32>
    %cst_18 = arith.constant 0.000000e+00 : f32
    %25 = vector.broadcast %cst_18 : f32 to vector<2x128xf32>
    %26 = arith.subf %25, %24 : vector<2x128xf32>
    %27 = math.exp %26 : vector<2x128xf32>
    %cst_19 = arith.constant 1.000000e+00 : f32
    %28 = vector.broadcast %cst_19 : f32 to vector<2x128xf32>
    %29 = arith.addf %28, %27 : vector<2x128xf32>
    %30 = tpu.reciprocal %29 {approx = true} : vector<2x128xf32> -> vector<2x128xf32>
    %31 = vector.extract_strided_slice %17 {offsets = [0, 128], sizes = [2, 128], strides = [1, 1]} : vector<2x384xf32> to vector<2x128xf32>
    %32 = vector.extract_strided_slice %21 {offsets = [0, 128], sizes = [2, 128], strides = [1, 1]} : vector<2x384xf32> to vector<2x128xf32>
    %33 = arith.addf %31, %32 : vector<2x128xf32>
    %cst_20 = arith.constant 0.000000e+00 : f32
    %34 = vector.broadcast %cst_20 : f32 to vector<2x128xf32>
    %35 = arith.subf %34, %33 : vector<2x128xf32>
    %36 = math.exp %35 : vector<2x128xf32>
    %cst_21 = arith.constant 1.000000e+00 : f32
    %37 = vector.broadcast %cst_21 : f32 to vector<2x128xf32>
    %38 = arith.addf %37, %36 : vector<2x128xf32>
    %39 = tpu.reciprocal %38 {approx = true} : vector<2x128xf32> -> vector<2x128xf32>
    %40 = vector.extract_strided_slice %17 {offsets = [0, 256], sizes = [2, 128], strides = [1, 1]} : vector<2x384xf32> to vector<2x128xf32>
    %41 = vector.extract_strided_slice %21 {offsets = [0, 256], sizes = [2, 128], strides = [1, 1]} : vector<2x384xf32> to vector<2x128xf32>
    %42 = arith.mulf %30, %41 : vector<2x128xf32>
    %43 = arith.addf %40, %42 : vector<2x128xf32>
    %44 = math.tanh %43 : vector<2x128xf32>
    %cst_22 = arith.constant 1.000000e+00 : f32
    %45 = vector.broadcast %cst_22 : f32 to vector<2x128xf32>
    %46 = arith.subf %45, %39 : vector<2x128xf32>
    %47 = arith.mulf %46, %44 : vector<2x128xf32>
    %48 = arith.mulf %39, %15 : vector<2x128xf32>
    %49 = arith.addf %47, %48 : vector<2x128xf32>
    %50 = vector.shape_cast %49 : vector<2x128xf32> to vector<2x1x128xf32>
    %c0_23 = arith.constant 0 : index
    %c0_24 = arith.constant 0 : index
    %c0_25 = arith.constant 0 : index
    %51 = vector.load %arg24[%c0_23, %c0_24, %c0_25] : memref<2x8x128xf32, #tpu.memory_space<vmem>>, vector<2x1x128xf32>
    tpu.vector_store %arg24[%c0_23, %c0_24, %c0_25], %50 {strides = array<i32>} : memref<2x8x128xf32, #tpu.memory_space<vmem>>, vector<2x1x128xf32>,
    %52 = vector.extract_strided_slice %12 {offsets = [0, 1, 0], sizes = [2, 1, 384], strides = [1, 1, 1]} : vector<2x8x384xf32> to vector<2x1x384xf32>
    %53 = vector.shape_cast %52 : vector<2x1x384xf32> to vector<2x384xf32>
    %54 = arith.truncf %49 : vector<2x128xf32> to vector<2x128xbf16>
    %cst_26 = arith.constant dense<0.000000e+00> : vector<2x384xf32>
    %55 = tpu.matmul %54, %13, %cst_26 {dimension_numbers = #tpu.dot_dimension_numbers<[1], [0], [0], [1], [0, 0, 1, 1], [], []>} : vector<2x128xbf16>, vector<128x384xbf16>, vector<2x384xf32> -> vector<2x384xf32>
    %56 = vector.broadcast %14 : vector<1x384xf32> to vector<2x384xf32>
    %57 = arith.addf %55, %56 : vector<2x384xf32>
    %58 = vector.extract_strided_slice %53 {offsets = [0, 0], sizes = [2, 128], strides = [1, 1]} : vector<2x384xf32> to vector<2x128xf32>
    %59 = vector.extract_strided_slice %57 {offsets = [0, 0], sizes = [2, 128], strides = [1, 1]} : vector<2x384xf32> to vector<2x128xf32>
    %60 = arith.addf %58, %59 : vector<2x128xf32>
    %cst_27 = arith.constant 0.000000e+00 : f32
    %61 = vector.broadcast %cst_27 : f32 to vector<2x128xf32>
    %62 = arith.subf %61, %60 : vector<2x128xf32>
    %63 = math.exp %62 : vector<2x128xf32>
    %cst_28 = arith.constant 1.000000e+00 : f32
    %64 = vector.broadcast %cst_28 : f32 to vector<2x128xf32>
    %65 = arith.addf %64, %63 : vector<2x128xf32>
    %66 = tpu.reciprocal %65 {approx = true} : vector<2x128xf32> -> vector<2x128xf32>
    %67 = vector.extract_strided_slice %53 {offsets = [0, 128], sizes = [2, 128], strides = [1, 1]} : vector<2x384xf32> to vector<2x128xf32>
    %68 = vector.extract_strided_slice %57 {offsets = [0, 128], sizes = [2, 128], strides = [1, 1]} : vector<2x384xf32> to vector<2x128xf32>
    %69 = arith.addf %67, %68 : vector<2x128xf32>
    %cst_29 = arith.constant 0.000000e+00 : f32
    %70 = vector.broadcast %cst_29 : f32 to vector<2x128xf32>
    %71 = arith.subf %70, %69 : vector<2x128xf32>
    %72 = math.exp %71 : vector<2x128xf32>
    %cst_30 = arith.constant 1.000000e+00 : f32
    %73 = vector.broadcast %cst_30 : f32 to vector<2x128xf32>
    %74 = arith.addf %73, %72 : vector<2x128xf32>
    %75 = tpu.reciprocal %74 {approx = true} : vector<2x128xf32> -> vector<2x128xf32>
    %76 = vector.extract_strided_slice %53 {offsets = [0, 256], sizes = [2, 128], strides = [1, 1]} : vector<2x384xf32> to vector<2x128xf32>
    %77 = vector.extract_strided_slice %57 {offsets = [0, 256], sizes = [2, 128], strides = [1, 1]} : vector<2x384xf32> to vector<2x128xf32>
    %78 = arith.mulf %66, %77 : vector<2x128xf32>
    %79 = arith.addf %76, %78 : vector<2x128xf32>
    %80 = math.tanh %79 : vector<2x128xf32>
    %cst_31 = arith.constant 1.000000e+00 : f32
    %81 = vector.broadcast %cst_31 : f32 to vector<2x128xf32>
    %82 = arith.subf %81, %75 : vector<2x128xf32>
    %83 = arith.mulf %82, %80 : vector<2x128xf32>
    %84 = arith.mulf %75, %49 : vector<2x128xf32>
    %85 = arith.addf %83, %84 : vector<2x128xf32>
    %86 = vector.shape_cast %85 : vector<2x128xf32> to vector<2x1x128xf32>
    %c0_32 = arith.constant 0 : index
    %c1 = arith.constant 1 : index
    %c0_33 = arith.constant 0 : index
    %87 = vector.load %arg24[%c0_32, %c1, %c0_33] : memref<2x8x128xf32, #tpu.memory_space<vmem>>, vector<2x1x128xf32>
    tpu.vector_store %arg24[%c0_32, %c1, %c0_33], %86 {strides = array<i32>} : memref<2x8x128xf32, #tpu.memory_space<vmem>>, vector<2x1x128xf32>,
    %88 = vector.extract_strided_slice %12 {offsets = [0, 2, 0], sizes = [2, 1, 384], strides = [1, 1, 1]} : vector<2x8x384xf32> to vector<2x1x384xf32>
    %89 = vector.shape_cast %88 : vector<2x1x384xf32> to vector<2x384xf32>
    %90 = arith.truncf %85 : vector<2x128xf32> to vector<2x128xbf16>
    %cst_34 = arith.constant dense<0.000000e+00> : vector<2x384xf32>
    %91 = tpu.matmul %90, %13, %cst_34 {dimension_numbers = #tpu.dot_dimension_numbers<[1], [0], [0], [1], [0, 0, 1, 1], [], []>} : vector<2x128xbf16>, vector<128x384xbf16>, vector<2x384xf32> -> vector<2x384xf32>
    %92 = vector.broadcast %14 : vector<1x384xf32> to vector<2x384xf32>
    %93 = arith.addf %91, %92 : vector<2x384xf32>
    %94 = vector.extract_strided_slice %89 {offsets = [0, 0], sizes = [2, 128], strides = [1, 1]} : vector<2x384xf32> to vector<2x128xf32>
    %95 = vector.extract_strided_slice %93 {offsets = [0, 0], sizes = [2, 128], strides = [1, 1]} : vector<2x384xf32> to vector<2x128xf32>
    %96 = arith.addf %94, %95 : vector<2x128xf32>
    %cst_35 = arith.constant 0.000000e+00 : f32
    %97 = vector.broadcast %cst_35 : f32 to vector<2x128xf32>
    %98 = arith.subf %97, %96 : vector<2x128xf32>
    %99 = math.exp %98 : vector<2x128xf32>
    %cst_36 = arith.constant 1.000000e+00 : f32
    %100 = vector.broadcast %cst_36 : f32 to vector<2x128xf32>
    %101 = arith.addf %100, %99 : vector<2x128xf32>
    %102 = tpu.reciprocal %101 {approx = true} : vector<2x128xf32> -> vector<2x128xf32>
    %103 = vector.extract_strided_slice %89 {offsets = [0, 128], sizes = [2, 128], strides = [1, 1]} : vector<2x384xf32> to vector<2x128xf32>
    %104 = vector.extract_strided_slice %93 {offsets = [0, 128], sizes = [2, 128], strides = [1, 1]} : vector<2x384xf32> to vector<2x128xf32>
    %105 = arith.addf %103, %104 : vector<2x128xf32>
    %cst_37 = arith.constant 0.000000e+00 : f32
    %106 = vector.broadcast %cst_37 : f32 to vector<2x128xf32>
    %107 = arith.subf %106, %105 : vector<2x128xf32>
    %108 = math.exp %107 : vector<2x128xf32>
    %cst_38 = arith.constant 1.000000e+00 : f32
    %109 = vector.broadcast %cst_38 : f32 to vector<2x128xf32>
    %110 = arith.addf %109, %108 : vector<2x128xf32>
    %111 = tpu.reciprocal %110 {approx = true} : vector<2x128xf32> -> vector<2x128xf32>
    %112 = vector.extract_strided_slice %89 {offsets = [0, 256], sizes = [2, 128], strides = [1, 1]} : vector<2x384xf32> to vector<2x128xf32>
    %113 = vector.extract_strided_slice %93 {offsets = [0, 256], sizes = [2, 128], strides = [1, 1]} : vector<2x384xf32> to vector<2x128xf32>
    %114 = arith.mulf %102, %113 : vector<2x128xf32>
    %115 = arith.addf %112, %114 : vector<2x128xf32>
    %116 = math.tanh %115 : vector<2x128xf32>
    %cst_39 = arith.constant 1.000000e+00 : f32
    %117 = vector.broadcast %cst_39 : f32 to vector<2x128xf32>
    %118 = arith.subf %117, %111 : vector<2x128xf32>
    %119 = arith.mulf %118, %116 : vector<2x128xf32>
    %120 = arith.mulf %111, %85 : vector<2x128xf32>
    %121 = arith.addf %119, %120 : vector<2x128xf32>
    %122 = vector.shape_cast %121 : vector<2x128xf32> to vector<2x1x128xf32>
    %c0_40 = arith.constant 0 : index
    %c2 = arith.constant 2 : index
    %c0_41 = arith.constant 0 : index
    %123 = vector.load %arg24[%c0_40, %c2, %c0_41] : memref<2x8x128xf32, #tpu.memory_space<vmem>>, vector<2x1x128xf32>
    tpu.vector_store %arg24[%c0_40, %c2, %c0_41], %122 {strides = array<i32>} : memref<2x8x128xf32, #tpu.memory_space<vmem>>, vector<2x1x128xf32>,
    %124 = vector.extract_strided_slice %12 {offsets = [0, 3, 0], sizes = [2, 1, 384], strides = [1, 1, 1]} : vector<2x8x384xf32> to vector<2x1x384xf32>
    %125 = vector.shape_cast %124 : vector<2x1x384xf32> to vector<2x384xf32>
    %126 = arith.truncf %121 : vector<2x128xf32> to vector<2x128xbf16>
    %cst_42 = arith.constant dense<0.000000e+00> : vector<2x384xf32>
    %127 = tpu.matmul %126, %13, %cst_42 {dimension_numbers = #tpu.dot_dimension_numbers<[1], [0], [0], [1], [0, 0, 1, 1], [], []>} : vector<2x128xbf16>, vector<128x384xbf16>, vector<2x384xf32> -> vector<2x384xf32>
    %128 = vector.broadcast %14 : vector<1x384xf32> to vector<2x384xf32>
    %129 = arith.addf %127, %128 : vector<2x384xf32>
    %130 = vector.extract_strided_slice %125 {offsets = [0, 0], sizes = [2, 128], strides = [1, 1]} : vector<2x384xf32> to vector<2x128xf32>
    %131 = vector.extract_strided_slice %129 {offsets = [0, 0], sizes = [2, 128], strides = [1, 1]} : vector<2x384xf32> to vector<2x128xf32>
    %132 = arith.addf %130, %131 : vector<2x128xf32>
    %cst_43 = arith.constant 0.000000e+00 : f32
    %133 = vector.broadcast %cst_43 : f32 to vector<2x128xf32>
    %134 = arith.subf %133, %132 : vector<2x128xf32>
    %135 = math.exp %134 : vector<2x128xf32>
    %cst_44 = arith.constant 1.000000e+00 : f32
    %136 = vector.broadcast %cst_44 : f32 to vector<2x128xf32>
    %137 = arith.addf %136, %135 : vector<2x128xf32>
    %138 = tpu.reciprocal %137 {approx = true} : vector<2x128xf32> -> vector<2x128xf32>
    %139 = vector.extract_strided_slice %125 {offsets = [0, 128], sizes = [2, 128], strides = [1, 1]} : vector<2x384xf32> to vector<2x128xf32>
    %140 = vector.extract_strided_slice %129 {offsets = [0, 128], sizes = [2, 128], strides = [1, 1]} : vector<2x384xf32> to vector<2x128xf32>
    %141 = arith.addf %139, %140 : vector<2x128xf32>
    %cst_45 = arith.constant 0.000000e+00 : f32
    %142 = vector.broadcast %cst_45 : f32 to vector<2x128xf32>
    %143 = arith.subf %142, %141 : vector<2x128xf32>
    %144 = math.exp %143 : vector<2x128xf32>
    %cst_46 = arith.constant 1.000000e+00 : f32
    %145 = vector.broadcast %cst_46 : f32 to vector<2x128xf32>
    %146 = arith.addf %145, %144 : vector<2x128xf32>
    %147 = tpu.reciprocal %146 {approx = true} : vector<2x128xf32> -> vector<2x128xf32>
    %148 = vector.extract_strided_slice %125 {offsets = [0, 256], sizes = [2, 128], strides = [1, 1]} : vector<2x384xf32> to vector<2x128xf32>
    %149 = vector.extract_strided_slice %129 {offsets = [0, 256], sizes = [2, 128], strides = [1, 1]} : vector<2x384xf32> to vector<2x128xf32>
    %150 = arith.mulf %138, %149 : vector<2x128xf32>
    %151 = arith.addf %148, %150 : vector<2x128xf32>
    %152 = math.tanh %151 : vector<2x128xf32>
    %cst_47 = arith.constant 1.000000e+00 : f32
    %153 = vector.broadcast %cst_47 : f32 to vector<2x128xf32>
    %154 = arith.subf %153, %147 : vector<2x128xf32>
    %155 = arith.mulf %154, %152 : vector<2x128xf32>
    %156 = arith.mulf %147, %121 : vector<2x128xf32>
    %157 = arith.addf %155, %156 : vector<2x128xf32>
    %158 = vector.shape_cast %157 : vector<2x128xf32> to vector<2x1x128xf32>
    %c0_48 = arith.constant 0 : index
    %c3 = arith.constant 3 : index
    %c0_49 = arith.constant 0 : index
    %159 = vector.load %arg24[%c0_48, %c3, %c0_49] : memref<2x8x128xf32, #tpu.memory_space<vmem>>, vector<2x1x128xf32>
    tpu.vector_store %arg24[%c0_48, %c3, %c0_49], %158 {strides = array<i32>} : memref<2x8x128xf32, #tpu.memory_space<vmem>>, vector<2x1x128xf32>,
    %160 = vector.extract_strided_slice %12 {offsets = [0, 4, 0], sizes = [2, 1, 384], strides = [1, 1, 1]} : vector<2x8x384xf32> to vector<2x1x384xf32>
    %161 = vector.shape_cast %160 : vector<2x1x384xf32> to vector<2x384xf32>
    %162 = arith.truncf %157 : vector<2x128xf32> to vector<2x128xbf16>
    %cst_50 = arith.constant dense<0.000000e+00> : vector<2x384xf32>
    %163 = tpu.matmul %162, %13, %cst_50 {dimension_numbers = #tpu.dot_dimension_numbers<[1], [0], [0], [1], [0, 0, 1, 1], [], []>} : vector<2x128xbf16>, vector<128x384xbf16>, vector<2x384xf32> -> vector<2x384xf32>
    %164 = vector.broadcast %14 : vector<1x384xf32> to vector<2x384xf32>
    %165 = arith.addf %163, %164 : vector<2x384xf32>
    %166 = vector.extract_strided_slice %161 {offsets = [0, 0], sizes = [2, 128], strides = [1, 1]} : vector<2x384xf32> to vector<2x128xf32>
    %167 = vector.extract_strided_slice %165 {offsets = [0, 0], sizes = [2, 128], strides = [1, 1]} : vector<2x384xf32> to vector<2x128xf32>
    %168 = arith.addf %166, %167 : vector<2x128xf32>
    %cst_51 = arith.constant 0.000000e+00 : f32
    %169 = vector.broadcast %cst_51 : f32 to vector<2x128xf32>
    %170 = arith.subf %169, %168 : vector<2x128xf32>
    %171 = math.exp %170 : vector<2x128xf32>
    %cst_52 = arith.constant 1.000000e+00 : f32
    %172 = vector.broadcast %cst_52 : f32 to vector<2x128xf32>
    %173 = arith.addf %172, %171 : vector<2x128xf32>
    %174 = tpu.reciprocal %173 {approx = true} : vector<2x128xf32> -> vector<2x128xf32>
    %175 = vector.extract_strided_slice %161 {offsets = [0, 128], sizes = [2, 128], strides = [1, 1]} : vector<2x384xf32> to vector<2x128xf32>
    %176 = vector.extract_strided_slice %165 {offsets = [0, 128], sizes = [2, 128], strides = [1, 1]} : vector<2x384xf32> to vector<2x128xf32>
    %177 = arith.addf %175, %176 : vector<2x128xf32>
    %cst_53 = arith.constant 0.000000e+00 : f32
    %178 = vector.broadcast %cst_53 : f32 to vector<2x128xf32>
    %179 = arith.subf %178, %177 : vector<2x128xf32>
    %180 = math.exp %179 : vector<2x128xf32>
    %cst_54 = arith.constant 1.000000e+00 : f32
    %181 = vector.broadcast %cst_54 : f32 to vector<2x128xf32>
    %182 = arith.addf %181, %180 : vector<2x128xf32>
    %183 = tpu.reciprocal %182 {approx = true} : vector<2x128xf32> -> vector<2x128xf32>
    %184 = vector.extract_strided_slice %161 {offsets = [0, 256], sizes = [2, 128], strides = [1, 1]} : vector<2x384xf32> to vector<2x128xf32>
    %185 = vector.extract_strided_slice %165 {offsets = [0, 256], sizes = [2, 128], strides = [1, 1]} : vector<2x384xf32> to vector<2x128xf32>
    %186 = arith.mulf %174, %185 : vector<2x128xf32>
    %187 = arith.addf %184, %186 : vector<2x128xf32>
    %188 = math.tanh %187 : vector<2x128xf32>
    %cst_55 = arith.constant 1.000000e+00 : f32
    %189 = vector.broadcast %cst_55 : f32 to vector<2x128xf32>
    %190 = arith.subf %189, %183 : vector<2x128xf32>
    %191 = arith.mulf %190, %188 : vector<2x128xf32>
    %192 = arith.mulf %183, %157 : vector<2x128xf32>
    %193 = arith.addf %191, %192 : vector<2x128xf32>
    %194 = vector.shape_cast %193 : vector<2x128xf32> to vector<2x1x128xf32>
    %c0_56 = arith.constant 0 : index
    %c4 = arith.constant 4 : index
    %c0_57 = arith.constant 0 : index
    %195 = vector.load %arg24[%c0_56, %c4, %c0_57] : memref<2x8x128xf32, #tpu.memory_space<vmem>>, vector<2x1x128xf32>
    tpu.vector_store %arg24[%c0_56, %c4, %c0_57], %194 {strides = array<i32>} : memref<2x8x128xf32, #tpu.memory_space<vmem>>, vector<2x1x128xf32>,
    %196 = vector.extract_strided_slice %12 {offsets = [0, 5, 0], sizes = [2, 1, 384], strides = [1, 1, 1]} : vector<2x8x384xf32> to vector<2x1x384xf32>
    %197 = vector.shape_cast %196 : vector<2x1x384xf32> to vector<2x384xf32>
    %198 = arith.truncf %193 : vector<2x128xf32> to vector<2x128xbf16>
    %cst_58 = arith.constant dense<0.000000e+00> : vector<2x384xf32>
    %199 = tpu.matmul %198, %13, %cst_58 {dimension_numbers = #tpu.dot_dimension_numbers<[1], [0], [0], [1], [0, 0, 1, 1], [], []>} : vector<2x128xbf16>, vector<128x384xbf16>, vector<2x384xf32> -> vector<2x384xf32>
    %200 = vector.broadcast %14 : vector<1x384xf32> to vector<2x384xf32>
    %201 = arith.addf %199, %200 : vector<2x384xf32>
    %202 = vector.extract_strided_slice %197 {offsets = [0, 0], sizes = [2, 128], strides = [1, 1]} : vector<2x384xf32> to vector<2x128xf32>
    %203 = vector.extract_strided_slice %201 {offsets = [0, 0], sizes = [2, 128], strides = [1, 1]} : vector<2x384xf32> to vector<2x128xf32>
    %204 = arith.addf %202, %203 : vector<2x128xf32>
    %cst_59 = arith.constant 0.000000e+00 : f32
    %205 = vector.broadcast %cst_59 : f32 to vector<2x128xf32>
    %206 = arith.subf %205, %204 : vector<2x128xf32>
    %207 = math.exp %206 : vector<2x128xf32>
    %cst_60 = arith.constant 1.000000e+00 : f32
    %208 = vector.broadcast %cst_60 : f32 to vector<2x128xf32>
    %209 = arith.addf %208, %207 : vector<2x128xf32>
    %210 = tpu.reciprocal %209 {approx = true} : vector<2x128xf32> -> vector<2x128xf32>
    %211 = vector.extract_strided_slice %197 {offsets = [0, 128], sizes = [2, 128], strides = [1, 1]} : vector<2x384xf32> to vector<2x128xf32>
    %212 = vector.extract_strided_slice %201 {offsets = [0, 128], sizes = [2, 128], strides = [1, 1]} : vector<2x384xf32> to vector<2x128xf32>
    %213 = arith.addf %211, %212 : vector<2x128xf32>
    %cst_61 = arith.constant 0.000000e+00 : f32
    %214 = vector.broadcast %cst_61 : f32 to vector<2x128xf32>
    %215 = arith.subf %214, %213 : vector<2x128xf32>
    %216 = math.exp %215 : vector<2x128xf32>
    %cst_62 = arith.constant 1.000000e+00 : f32
    %217 = vector.broadcast %cst_62 : f32 to vector<2x128xf32>
    %218 = arith.addf %217, %216 : vector<2x128xf32>
    %219 = tpu.reciprocal %218 {approx = true} : vector<2x128xf32> -> vector<2x128xf32>
    %220 = vector.extract_strided_slice %197 {offsets = [0, 256], sizes = [2, 128], strides = [1, 1]} : vector<2x384xf32> to vector<2x128xf32>
    %221 = vector.extract_strided_slice %201 {offsets = [0, 256], sizes = [2, 128], strides = [1, 1]} : vector<2x384xf32> to vector<2x128xf32>
    %222 = arith.mulf %210, %221 : vector<2x128xf32>
    %223 = arith.addf %220, %222 : vector<2x128xf32>
    %224 = math.tanh %223 : vector<2x128xf32>
    %cst_63 = arith.constant 1.000000e+00 : f32
    %225 = vector.broadcast %cst_63 : f32 to vector<2x128xf32>
    %226 = arith.subf %225, %219 : vector<2x128xf32>
    %227 = arith.mulf %226, %224 : vector<2x128xf32>
    %228 = arith.mulf %219, %193 : vector<2x128xf32>
    %229 = arith.addf %227, %228 : vector<2x128xf32>
    %230 = vector.shape_cast %229 : vector<2x128xf32> to vector<2x1x128xf32>
    %c0_64 = arith.constant 0 : index
    %c5 = arith.constant 5 : index
    %c0_65 = arith.constant 0 : index
    %231 = vector.load %arg24[%c0_64, %c5, %c0_65] : memref<2x8x128xf32, #tpu.memory_space<vmem>>, vector<2x1x128xf32>
    tpu.vector_store %arg24[%c0_64, %c5, %c0_65], %230 {strides = array<i32>} : memref<2x8x128xf32, #tpu.memory_space<vmem>>, vector<2x1x128xf32>,
    %232 = vector.extract_strided_slice %12 {offsets = [0, 6, 0], sizes = [2, 1, 384], strides = [1, 1, 1]} : vector<2x8x384xf32> to vector<2x1x384xf32>
    %233 = vector.shape_cast %232 : vector<2x1x384xf32> to vector<2x384xf32>
    %234 = arith.truncf %229 : vector<2x128xf32> to vector<2x128xbf16>
    %cst_66 = arith.constant dense<0.000000e+00> : vector<2x384xf32>
    %235 = tpu.matmul %234, %13, %cst_66 {dimension_numbers = #tpu.dot_dimension_numbers<[1], [0], [0], [1], [0, 0, 1, 1], [], []>} : vector<2x128xbf16>, vector<128x384xbf16>, vector<2x384xf32> -> vector<2x384xf32>
    %236 = vector.broadcast %14 : vector<1x384xf32> to vector<2x384xf32>
    %237 = arith.addf %235, %236 : vector<2x384xf32>
    %238 = vector.extract_strided_slice %233 {offsets = [0, 0], sizes = [2, 128], strides = [1, 1]} : vector<2x384xf32> to vector<2x128xf32>
    %239 = vector.extract_strided_slice %237 {offsets = [0, 0], sizes = [2, 128], strides = [1, 1]} : vector<2x384xf32> to vector<2x128xf32>
    %240 = arith.addf %238, %239 : vector<2x128xf32>
    %cst_67 = arith.constant 0.000000e+00 : f32
    %241 = vector.broadcast %cst_67 : f32 to vector<2x128xf32>
    %242 = arith.subf %241, %240 : vector<2x128xf32>
    %243 = math.exp %242 : vector<2x128xf32>
    %cst_68 = arith.constant 1.000000e+00 : f32
    %244 = vector.broadcast %cst_68 : f32 to vector<2x128xf32>
    %245 = arith.addf %244, %243 : vector<2x128xf32>
    %246 = tpu.reciprocal %245 {approx = true} : vector<2x128xf32> -> vector<2x128xf32>
    %247 = vector.extract_strided_slice %233 {offsets = [0, 128], sizes = [2, 128], strides = [1, 1]} : vector<2x384xf32> to vector<2x128xf32>
    %248 = vector.extract_strided_slice %237 {offsets = [0, 128], sizes = [2, 128], strides = [1, 1]} : vector<2x384xf32> to vector<2x128xf32>
    %249 = arith.addf %247, %248 : vector<2x128xf32>
    %cst_69 = arith.constant 0.000000e+00 : f32
    %250 = vector.broadcast %cst_69 : f32 to vector<2x128xf32>
    %251 = arith.subf %250, %249 : vector<2x128xf32>
    %252 = math.exp %251 : vector<2x128xf32>
    %cst_70 = arith.constant 1.000000e+00 : f32
    %253 = vector.broadcast %cst_70 : f32 to vector<2x128xf32>
    %254 = arith.addf %253, %252 : vector<2x128xf32>
    %255 = tpu.reciprocal %254 {approx = true} : vector<2x128xf32> -> vector<2x128xf32>
    %256 = vector.extract_strided_slice %233 {offsets = [0, 256], sizes = [2, 128], strides = [1, 1]} : vector<2x384xf32> to vector<2x128xf32>
    %257 = vector.extract_strided_slice %237 {offsets = [0, 256], sizes = [2, 128], strides = [1, 1]} : vector<2x384xf32> to vector<2x128xf32>
    %258 = arith.mulf %246, %257 : vector<2x128xf32>
    %259 = arith.addf %256, %258 : vector<2x128xf32>
    %260 = math.tanh %259 : vector<2x128xf32>
    %cst_71 = arith.constant 1.000000e+00 : f32
    %261 = vector.broadcast %cst_71 : f32 to vector<2x128xf32>
    %262 = arith.subf %261, %255 : vector<2x128xf32>
    %263 = arith.mulf %262, %260 : vector<2x128xf32>
    %264 = arith.mulf %255, %229 : vector<2x128xf32>
    %265 = arith.addf %263, %264 : vector<2x128xf32>
    %266 = vector.shape_cast %265 : vector<2x128xf32> to vector<2x1x128xf32>
    %c0_72 = arith.constant 0 : index
    %c6 = arith.constant 6 : index
    %c0_73 = arith.constant 0 : index
    %267 = vector.load %arg24[%c0_72, %c6, %c0_73] : memref<2x8x128xf32, #tpu.memory_space<vmem>>, vector<2x1x128xf32>
    tpu.vector_store %arg24[%c0_72, %c6, %c0_73], %266 {strides = array<i32>} : memref<2x8x128xf32, #tpu.memory_space<vmem>>, vector<2x1x128xf32>,
    %268 = vector.extract_strided_slice %12 {offsets = [0, 7, 0], sizes = [2, 1, 384], strides = [1, 1, 1]} : vector<2x8x384xf32> to vector<2x1x384xf32>
    %269 = vector.shape_cast %268 : vector<2x1x384xf32> to vector<2x384xf32>
    %270 = arith.truncf %265 : vector<2x128xf32> to vector<2x128xbf16>
    %cst_74 = arith.constant dense<0.000000e+00> : vector<2x384xf32>
    %271 = tpu.matmul %270, %13, %cst_74 {dimension_numbers = #tpu.dot_dimension_numbers<[1], [0], [0], [1], [0, 0, 1, 1], [], []>} : vector<2x128xbf16>, vector<128x384xbf16>, vector<2x384xf32> -> vector<2x384xf32>
    %272 = vector.broadcast %14 : vector<1x384xf32> to vector<2x384xf32>
    %273 = arith.addf %271, %272 : vector<2x384xf32>
    %274 = vector.extract_strided_slice %269 {offsets = [0, 0], sizes = [2, 128], strides = [1, 1]} : vector<2x384xf32> to vector<2x128xf32>
    %275 = vector.extract_strided_slice %273 {offsets = [0, 0], sizes = [2, 128], strides = [1, 1]} : vector<2x384xf32> to vector<2x128xf32>
    %276 = arith.addf %274, %275 : vector<2x128xf32>
    %cst_75 = arith.constant 0.000000e+00 : f32
    %277 = vector.broadcast %cst_75 : f32 to vector<2x128xf32>
    %278 = arith.subf %277, %276 : vector<2x128xf32>
    %279 = math.exp %278 : vector<2x128xf32>
    %cst_76 = arith.constant 1.000000e+00 : f32
    %280 = vector.broadcast %cst_76 : f32 to vector<2x128xf32>
    %281 = arith.addf %280, %279 : vector<2x128xf32>
    %282 = tpu.reciprocal %281 {approx = true} : vector<2x128xf32> -> vector<2x128xf32>
    %283 = vector.extract_strided_slice %269 {offsets = [0, 128], sizes = [2, 128], strides = [1, 1]} : vector<2x384xf32> to vector<2x128xf32>
    %284 = vector.extract_strided_slice %273 {offsets = [0, 128], sizes = [2, 128], strides = [1, 1]} : vector<2x384xf32> to vector<2x128xf32>
    %285 = arith.addf %283, %284 : vector<2x128xf32>
    %cst_77 = arith.constant 0.000000e+00 : f32
    %286 = vector.broadcast %cst_77 : f32 to vector<2x128xf32>
    %287 = arith.subf %286, %285 : vector<2x128xf32>
    %288 = math.exp %287 : vector<2x128xf32>
    %cst_78 = arith.constant 1.000000e+00 : f32
    %289 = vector.broadcast %cst_78 : f32 to vector<2x128xf32>
    %290 = arith.addf %289, %288 : vector<2x128xf32>
    %291 = tpu.reciprocal %290 {approx = true} : vector<2x128xf32> -> vector<2x128xf32>
    %292 = vector.extract_strided_slice %269 {offsets = [0, 256], sizes = [2, 128], strides = [1, 1]} : vector<2x384xf32> to vector<2x128xf32>
    %293 = vector.extract_strided_slice %273 {offsets = [0, 256], sizes = [2, 128], strides = [1, 1]} : vector<2x384xf32> to vector<2x128xf32>
    %294 = arith.mulf %282, %293 : vector<2x128xf32>
    %295 = arith.addf %292, %294 : vector<2x128xf32>
    %296 = math.tanh %295 : vector<2x128xf32>
    %cst_79 = arith.constant 1.000000e+00 : f32
    %297 = vector.broadcast %cst_79 : f32 to vector<2x128xf32>
    %298 = arith.subf %297, %291 : vector<2x128xf32>
    %299 = arith.mulf %298, %296 : vector<2x128xf32>
    %300 = arith.mulf %291, %265 : vector<2x128xf32>
    %301 = arith.addf %299, %300 : vector<2x128xf32>
    %302 = vector.shape_cast %301 : vector<2x128xf32> to vector<2x1x128xf32>
    %c0_80 = arith.constant 0 : index
    %c7 = arith.constant 7 : index
    %c0_81 = arith.constant 0 : index
    %303 = vector.load %arg24[%c0_80, %c7, %c0_81] : memref<2x8x128xf32, #tpu.memory_space<vmem>>, vector<2x1x128xf32>
    tpu.vector_store %arg24[%c0_80, %c7, %c0_81], %302 {strides = array<i32>} : memref<2x8x128xf32, #tpu.memory_space<vmem>>, vector<2x1x128xf32>,
    %c0_82 = arith.constant 0 : index
    %c0_83 = arith.constant 0 : index
    %c0_84 = arith.constant 0 : index
    %304 = vector.load %arg24[%c0_82, %c0_83, %c0_84] : memref<2x8x128xf32, #tpu.memory_space<vmem>>, vector<2x8x128xf32>
    %305 = vector.shape_cast %304 : vector<2x8x128xf32> to vector<16x128xf32>
    %c0_85 = arith.constant 0 : index
    %c0_86 = arith.constant 0 : index
    %306 = vector.load %arg12[%c0_85, %c0_86] : memref<128x128xbf16, #tpu.memory_space<vmem>>, vector<128x128xbf16>
    %c0_87 = arith.constant 0 : index
    %c0_88 = arith.constant 0 : index
    %307 = vector.load %arg13[%c0_87, %c0_88] : memref<1x128xf32, #tpu.memory_space<vmem>>, vector<1x128xf32>
    %308 = arith.truncf %4 : vector<2x128xf32> to vector<2x128xbf16>
    %cst_89 = arith.constant dense<0.000000e+00> : vector<2x128xf32>
    %309 = tpu.matmul %308, %306, %cst_89 {dimension_numbers = #tpu.dot_dimension_numbers<[1], [0], [0], [1], [0, 0, 1, 1], [], []>} : vector<2x128xbf16>, vector<128x128xbf16>, vector<2x128xf32> -> vector<2x128xf32>
    %310 = vector.broadcast %307 : vector<1x128xf32> to vector<2x128xf32>
    %311 = arith.addf %309, %310 : vector<2x128xf32>
    %c0_90 = arith.constant 0 : index
    %c0_91 = arith.constant 0 : index
    %312 = vector.load %arg10[%c0_90, %c0_91] : memref<128x128xbf16, #tpu.memory_space<vmem>>, vector<128x128xbf16>
    %c0_92 = arith.constant 0 : index
    %c0_93 = arith.constant 0 : index
    %313 = vector.load %arg11[%c0_92, %c0_93] : memref<1x128xf32, #tpu.memory_space<vmem>>, vector<1x128xf32>
    %314 = arith.truncf %305 : vector<16x128xf32> to vector<16x128xbf16>
    %cst_94 = arith.constant dense<0.000000e+00> : vector<16x128xf32>
    %315 = tpu.matmul %314, %312, %cst_94 {dimension_numbers = #tpu.dot_dimension_numbers<[1], [0], [0], [1], [0, 0, 1, 1], [], []>} : vector<16x128xbf16>, vector<128x128xbf16>, vector<16x128xf32> -> vector<16x128xf32>
    %316 = vector.broadcast %313 : vector<1x128xf32> to vector<16x128xf32>
    %317 = arith.addf %315, %316 : vector<16x128xf32>
    %318 = vector.shape_cast %317 : vector<16x128xf32> to vector<2x8x128xf32>
    %319 = vector.shape_cast %311 : vector<2x128xf32> to vector<2x1x128xf32>
    %320 = vector.broadcast %319 : vector<2x1x128xf32> to vector<2x8x128xf32>
    %321 = arith.addf %318, %320 : vector<2x8x128xf32>
    %322 = vector.shape_cast %1 : vector<2x16x128xf32> to vector<32x128xf32>
    %c0_95 = arith.constant 0 : index
    %c0_96 = arith.constant 0 : index
    %323 = vector.load %arg14[%c0_95, %c0_96] : memref<128x128xbf16, #tpu.memory_space<vmem>>, vector<128x128xbf16>
    %c0_97 = arith.constant 0 : index
    %c0_98 = arith.constant 0 : index
    %324 = vector.load %arg15[%c0_97, %c0_98] : memref<1x128xf32, #tpu.memory_space<vmem>>, vector<1x128xf32>
    %325 = arith.truncf %322 : vector<32x128xf32> to vector<32x128xbf16>
    %cst_99 = arith.constant dense<0.000000e+00> : vector<32x128xf32>
    %326 = tpu.matmul %325, %323, %cst_99 {dimension_numbers = #tpu.dot_dimension_numbers<[1], [0], [0], [1], [0, 0, 1, 1], [], []>} : vector<32x128xbf16>, vector<128x128xbf16>, vector<32x128xf32> -> vector<32x128xf32>
    %327 = vector.broadcast %324 : vector<1x128xf32> to vector<32x128xf32>
    %328 = arith.addf %326, %327 : vector<32x128xf32>
    %329 = vector.shape_cast %328 : vector<32x128xf32> to vector<2x16x128xf32>
    %330 = arith.truncf %321 : vector<2x8x128xf32> to vector<2x8x128xbf16>
    %331 = arith.truncf %329 : vector<2x16x128xf32> to vector<2x16x128xbf16>
    "tpu.trace_start"() <{level = 10 : i32, message = "btd,bsd->bts"}> : () -> ()
    %cst_100 = arith.constant dense<0.000000e+00> : vector<2x8x16xf32>
    %332 = tpu.matmul %330, %331, %cst_100 {dimension_numbers = #tpu.dot_dimension_numbers<[2], [2], [1], [1], [0, 0, 0, 1, 1, 1], [0], [0]>} : vector<2x8x128xbf16>, vector<2x16x128xbf16>, vector<2x8x16xf32> -> vector<2x8x16xf32>
    "tpu.trace_stop"() : () -> ()
    %c0_101 = arith.constant 0 : index
    %c0_102 = arith.constant 0 : index
    %c0_103 = arith.constant 0 : index
    %333 = vector.load %arg3[%c0_101, %c0_102, %c0_103] : memref<2x1x16xf32, #tpu.memory_space<vmem>>, vector<2x1x16xf32>
    %cst_104 = arith.constant 0.000000e+00 : f32
    %334 = vector.broadcast %cst_104 : f32 to vector<2x1x16xf32>
    %335 = arith.cmpf ogt, %333, %334 : vector<2x1x16xf32>
    %cst_105 = arith.constant -1.000000e+09 : f32
    %336 = vector.shape_cast %335 : vector<2x1x16xi1> to vector<2x1x16xi1>
    %337 = vector.broadcast %336 : vector<2x1x16xi1> to vector<2x8x16xi1>
    %338 = vector.broadcast %cst_105 : f32 to vector<2x8x16xf32>
    %339 = arith.select %337, %332, %338 : vector<2x8x16xi1>, vector<2x8x16xf32>
    %cst_106 = arith.constant dense<0xFF800000> : vector<2x8xf32>
    %340 = vector.multi_reduction <maximumf>, %339, %cst_106 [2] : vector<2x8x16xf32> to vector<2x8xf32>
    %341 = vector.shape_cast %340 : vector<2x8xf32> to vector<2x8x1xf32>
    %342 = vector.broadcast %341 : vector<2x8x1xf32> to vector<2x8x16xf32>
    %343 = arith.subf %339, %342 : vector<2x8x16xf32>
    %344 = math.exp %343 : vector<2x8x16xf32>
    %cst_107 = arith.constant dense<0.000000e+00> : vector<2x8xf32>
    %345 = vector.multi_reduction <add>, %344, %cst_107 [2] : vector<2x8x16xf32> to vector<2x8xf32>
    %346 = vector.shape_cast %345 : vector<2x8xf32> to vector<2x8x1xf32>
    %347 = tpu.reciprocal %346 {approx = true} : vector<2x8x1xf32> -> vector<2x8x1xf32>
    %348 = vector.broadcast %347 : vector<2x8x1xf32> to vector<2x8x16xf32>
    %349 = arith.mulf %344, %348 : vector<2x8x16xf32>
    %350 = arith.truncf %349 : vector<2x8x16xf32> to vector<2x8x16xbf16>
    "tpu.trace_start"() <{level = 10 : i32, message = "bts,bsd->btd"}> : () -> ()
    %cst_108 = arith.constant dense<0.000000e+00> : vector<2x8x128xf32>
    %351 = tpu.matmul %350, %2, %cst_108 {dimension_numbers = #tpu.dot_dimension_numbers<[2], [1], [1], [2], [0, 0, 0, 1, 1, 2], [0], [0]>} : vector<2x8x16xbf16>, vector<2x16x128xbf16>, vector<2x8x128xf32> -> vector<2x8x128xf32>
    "tpu.trace_stop"() : () -> ()
    %352 = vector.shape_cast %351 : vector<2x8x128xf32> to vector<16x128xf32>
    %353 = vector.shape_cast %0 : vector<2x8x128xf32> to vector<16x128xf32>
    %354 = vector.shape_cast %4 : vector<2x128xf32> to vector<2x1x128xf32>
    %355 = vector.shape_cast %354 : vector<2x1x128xf32> to vector<2x1x128xf32>
    %356 = vector.broadcast %355 : vector<2x1x128xf32> to vector<2x8x128xf32>
    %357 = vector.shape_cast %356 : vector<2x8x128xf32> to vector<16x128xf32>
    %358 = tpu.concatenate %305, %352, %357 in 1 : vector<16x128xf32>, vector<16x128xf32>, vector<16x128xf32> -> vector<16x384xf32>
    %c0_109 = arith.constant 0 : index
    %c0_110 = arith.constant 0 : index
    %359 = vector.load %arg16[%c0_109, %c0_110] : memref<384x256xbf16, #tpu.memory_space<vmem>>, vector<384x256xbf16>
    %c0_111 = arith.constant 0 : index
    %c0_112 = arith.constant 0 : index
    %360 = vector.load %arg17[%c0_111, %c0_112] : memref<1x256xf32, #tpu.memory_space<vmem>>, vector<1x256xf32>
    %361 = arith.truncf %358 : vector<16x384xf32> to vector<16x384xbf16>
    %cst_113 = arith.constant dense<0.000000e+00> : vector<16x256xf32>
    %362 = tpu.matmul %361, %359, %cst_113 {dimension_numbers = #tpu.dot_dimension_numbers<[1], [0], [0], [1], [0, 0, 1, 1], [], []>} : vector<16x384xbf16>, vector<384x256xbf16>, vector<16x256xf32> -> vector<16x256xf32>
    %363 = vector.broadcast %360 : vector<1x256xf32> to vector<16x256xf32>
    %364 = arith.addf %362, %363 : vector<16x256xf32>
    %365 = tpu.concatenate %305, %352, %353 in 1 : vector<16x128xf32>, vector<16x128xf32>, vector<16x128xf32> -> vector<16x384xf32>
    %c0_114 = arith.constant 0 : index
    %c0_115 = arith.constant 0 : index
    %366 = vector.load %arg18[%c0_114, %c0_115] : memref<384x1xbf16, #tpu.memory_space<vmem>>, vector<384x1xbf16>
    %c0_116 = arith.constant 0 : index
    %c0_117 = arith.constant 0 : index
    %367 = vector.load %arg19[%c0_116, %c0_117] : memref<1x1xf32, #tpu.memory_space<vmem>>, vector<1x1xf32>
    %368 = arith.truncf %365 : vector<16x384xf32> to vector<16x384xbf16>
    %cst_118 = arith.constant dense<0.000000e+00> : vector<16x1xf32>
    %369 = tpu.matmul %368, %366, %cst_118 {dimension_numbers = #tpu.dot_dimension_numbers<[1], [0], [0], [1], [0, 0, 1, 1], [], []>} : vector<16x384xbf16>, vector<384x1xbf16>, vector<16x1xf32> -> vector<16x1xf32>
    %370 = vector.broadcast %367 : vector<1x1xf32> to vector<16x1xf32>
    %371 = arith.addf %369, %370 : vector<16x1xf32>
    %cst_119 = arith.constant 0.000000e+00 : f32
    %372 = vector.broadcast %cst_119 : f32 to vector<16x1xf32>
    %373 = arith.subf %372, %371 : vector<16x1xf32>
    %374 = math.exp %373 : vector<16x1xf32>
    %cst_120 = arith.constant 1.000000e+00 : f32
    %375 = vector.broadcast %cst_120 : f32 to vector<16x1xf32>
    %376 = arith.addf %375, %374 : vector<16x1xf32>
    %377 = tpu.reciprocal %376 {approx = true} : vector<16x1xf32> -> vector<16x1xf32>
    %cst_121 = arith.constant dense<0xFF800000> : vector<16xf32>
    %378 = vector.multi_reduction <maximumf>, %364, %cst_121 [1] : vector<16x256xf32> to vector<16xf32>
    %379 = vector.shape_cast %378 : vector<16xf32> to vector<16x1xf32>
    %380 = vector.broadcast %379 : vector<16x1xf32> to vector<16x256xf32>
    %381 = arith.subf %364, %380 : vector<16x256xf32>
    %382 = math.exp %381 : vector<16x256xf32>
    %cst_122 = arith.constant dense<0.000000e+00> : vector<16xf32>
    %383 = vector.multi_reduction <add>, %382, %cst_122 [1] : vector<16x256xf32> to vector<16xf32>
    %384 = vector.shape_cast %383 : vector<16xf32> to vector<16x1xf32>
    %385 = tpu.reciprocal %384 {approx = true} : vector<16x1xf32> -> vector<16x1xf32>
    %386 = vector.broadcast %385 : vector<16x1xf32> to vector<16x256xf32>
    %387 = arith.mulf %382, %386 : vector<16x256xf32>
    %388 = vector.shape_cast %387 : vector<16x256xf32> to vector<2x8x256xf32>
    %c0_123 = arith.constant 0 : index
    %c0_124 = arith.constant 0 : index
    %c0_125 = arith.constant 0 : index
    %389 = vector.load %arg4[%c0_123, %c0_124, %c0_125] : memref<2x16x1xi32, #tpu.memory_space<vmem>>, vector<2x16x1xi32>
    %390 = tpu.iota {dimensions = array<i32: 2>} : vector<2x16x256xi32>
    %391 = vector.broadcast %389 : vector<2x16x1xi32> to vector<2x16x256xi32>
    %392 = arith.cmpi eq, %391, %390 : vector<2x16x256xi32>
    %393 = arith.extui %392 : vector<2x16x256xi1> to vector<2x16x256xi32>
    %394 = arith.sitofp %393 : vector<2x16x256xi32> to vector<2x16x256xf32>
    %395 = arith.truncf %394 : vector<2x16x256xf32> to vector<2x16x256xbf16>
    "tpu.trace_start"() <{level = 10 : i32, message = "bts,bsv->btv"}> : () -> ()
    %cst_126 = arith.constant dense<0.000000e+00> : vector<2x8x256xf32>
    %396 = tpu.matmul %350, %395, %cst_126 {dimension_numbers = #tpu.dot_dimension_numbers<[2], [1], [1], [2], [0, 0, 0, 1, 1, 2], [0], [0]>} : vector<2x8x16xbf16>, vector<2x16x256xbf16>, vector<2x8x256xf32> -> vector<2x8x256xf32>
    "tpu.trace_stop"() : () -> ()
    %397 = vector.shape_cast %377 : vector<16x1xf32> to vector<2x8x1xf32>
    %398 = vector.shape_cast %364 : vector<16x256xf32> to vector<2x8x256xf32>
    %c0_127 = arith.constant 0 : index
    %c0_128 = arith.constant 0 : index
    %c0_129 = arith.constant 0 : index
    %399 = vector.load %arg20[%c0_127, %c0_128, %c0_129] : memref<2x8x256xf32, #tpu.memory_space<vmem>>, vector<2x8x256xf32>
    tpu.vector_store %arg20[%c0_127, %c0_128, %c0_129], %398 {strides = array<i32>} : memref<2x8x256xf32, #tpu.memory_space<vmem>>, vector<2x8x256xf32>,
    %400 = vector.broadcast %397 : vector<2x8x1xf32> to vector<2x8x256xf32>
    %401 = arith.mulf %400, %388 : vector<2x8x256xf32>
    %cst_130 = arith.constant 1.000000e+00 : f32
    %402 = vector.broadcast %cst_130 : f32 to vector<2x8x1xf32>
    %403 = arith.subf %402, %397 : vector<2x8x1xf32>
    %404 = vector.broadcast %403 : vector<2x8x1xf32> to vector<2x8x256xf32>
    %405 = arith.mulf %404, %396 : vector<2x8x256xf32>
    %406 = arith.addf %401, %405 : vector<2x8x256xf32>
    %c0_131 = arith.constant 0 : index
    %c0_132 = arith.constant 0 : index
    %c0_133 = arith.constant 0 : index
    %407 = vector.load %arg21[%c0_131, %c0_132, %c0_133] : memref<2x8x256xf32, #tpu.memory_space<vmem>>, vector<2x8x256xf32>
    tpu.vector_store %arg21[%c0_131, %c0_132, %c0_133], %406 {strides = array<i32>} : memref<2x8x256xf32, #tpu.memory_space<vmem>>, vector<2x8x256xf32>,
    %c0_134 = arith.constant 0 : index
    %c0_135 = arith.constant 0 : index
    %c0_136 = arith.constant 0 : index
    %408 = vector.load %arg22[%c0_134, %c0_135, %c0_136] : memref<2x8x16xf32, #tpu.memory_space<vmem>>, vector<2x8x16xf32>
    tpu.vector_store %arg22[%c0_134, %c0_135, %c0_136], %349 {strides = array<i32>} : memref<2x8x16xf32, #tpu.memory_space<vmem>>, vector<2x8x16xf32>,
    %c0_137 = arith.constant 0 : index
    %c0_138 = arith.constant 0 : index
    %c0_139 = arith.constant 0 : index
    %409 = vector.load %arg23[%c0_137, %c0_138, %c0_139] : memref<2x8x1xf32, #tpu.memory_space<vmem>>, vector<2x8x1xf32>
    tpu.vector_store %arg23[%c0_137, %c0_138, %c0_139], %397 {strides = array<i32>} : memref<2x8x1xf32, #tpu.memory_space<vmem>>, vector<2x8x1xf32>,
    return
  }
  func.func @transform_0(%arg0: i32) -> (i32, i32, i32) {
    %c0_i32 = arith.constant 0 : i32
    %c0_i32_0 = arith.constant 0 : i32
    %c0_i32_1 = arith.constant 0 : i32
    return %arg0, %c0_i32, %c0_i32_0 : i32, i32, i32
  }
  func.func @transform_1(%arg0: i32) -> (i32, i32, i32) {
    %c0_i32 = arith.constant 0 : i32
    %c0_i32_0 = arith.constant 0 : i32
    %c0_i32_1 = arith.constant 0 : i32
    return %arg0, %c0_i32, %c0_i32_0 : i32, i32, i32
  }
  func.func @transform_2(%arg0: i32) -> (i32, i32, i32) {
    %c0_i32 = arith.constant 0 : i32
    %c0_i32_0 = arith.constant 0 : i32
    %c0_i32_1 = arith.constant 0 : i32
    return %arg0, %c0_i32, %c0_i32_0 : i32, i32, i32
  }
  func.func @transform_3(%arg0: i32) -> (i32, i32, i32) {
    %c0_i32 = arith.constant 0 : i32
    %c0_i32_0 = arith.constant 0 : i32
    %c0_i32_1 = arith.constant 0 : i32
    return %arg0, %c0_i32, %c0_i32_0 : i32, i32, i32
  }
  func.func @transform_4(%arg0: i32) -> (i32, i32, i32) {
    %c0_i32 = arith.constant 0 : i32
    %c0_i32_0 = arith.constant 0 : i32
    %c0_i32_1 = arith.constant 0 : i32
    return %arg0, %c0_i32, %c0_i32_0 : i32, i32, i32
  }
  func.func @transform_5(%arg0: i32) -> (i32, i32) {
    %c0_i32 = arith.constant 0 : i32
    %c0_i32_0 = arith.constant 0 : i32
    %c0_i32_1 = arith.constant 0 : i32
    return %c0_i32, %c0_i32_0 : i32, i32
  }
  func.func @transform_6(%arg0: i32) -> (i32, i32) {
    %c0_i32 = arith.constant 0 : i32
    %c0_i32_0 = arith.constant 0 : i32
    %c0_i32_1 = arith.constant 0 : i32
    return %c0_i32, %c0_i32_0 : i32, i32
  }
  func.func @transform_7(%arg0: i32) -> (i32, i32) {
    %c0_i32 = arith.constant 0 : i32
    %c0_i32_0 = arith.constant 0 : i32
    %c0_i32_1 = arith.constant 0 : i32
    return %c0_i32, %c0_i32_0 : i32, i32
  }
  func.func @transform_8(%arg0: i32) -> (i32, i32) {
    %c0_i32 = arith.constant 0 : i32
    %c0_i32_0 = arith.constant 0 : i32
    %c0_i32_1 = arith.constant 0 : i32
    return %c0_i32, %c0_i32_0 : i32, i32
  }
  func.func @transform_9(%arg0: i32) -> (i32, i32) {
    %c0_i32 = arith.constant 0 : i32
    %c0_i32_0 = arith.constant 0 : i32
    %c0_i32_1 = arith.constant 0 : i32
    return %c0_i32, %c0_i32_0 : i32, i32
  }
  func.func @transform_10(%arg0: i32) -> (i32, i32) {
    %c0_i32 = arith.constant 0 : i32
    %c0_i32_0 = arith.constant 0 : i32
    %c0_i32_1 = arith.constant 0 : i32
    return %c0_i32, %c0_i32_0 : i32, i32
  }
  func.func @transform_11(%arg0: i32) -> (i32, i32) {
    %c0_i32 = arith.constant 0 : i32
    %c0_i32_0 = arith.constant 0 : i32
    %c0_i32_1 = arith.constant 0 : i32
    return %c0_i32, %c0_i32_0 : i32, i32
  }
  func.func @transform_12(%arg0: i32) -> (i32, i32) {
    %c0_i32 = arith.constant 0 : i32
    %c0_i32_0 = arith.constant 0 : i32
    %c0_i32_1 = arith.constant 0 : i32
    return %c0_i32, %c0_i32_0 : i32, i32
  }
  func.func @transform_13(%arg0: i32) -> (i32, i32) {
    %c0_i32 = arith.constant 0 : i32
    %c0_i32_0 = arith.constant 0 : i32
    %c0_i32_1 = arith.constant 0 : i32
    return %c0_i32, %c0_i32_0 : i32, i32
  }
  func.func @transform_14(%arg0: i32) -> (i32, i32) {
    %c0_i32 = arith.constant 0 : i32
    %c0_i32_0 = arith.constant 0 : i32
    %c0_i32_1 = arith.constant 0 : i32
    return %c0_i32, %c0_i32_0 : i32, i32
  }
  func.func @transform_15(%arg0: i32) -> (i32, i32) {
    %c0_i32 = arith.constant 0 : i32
    %c0_i32_0 = arith.constant 0 : i32
    %c0_i32_1 = arith.constant 0 : i32
    return %c0_i32, %c0_i32_0 : i32, i32
  }
  func.func @transform_16(%arg0: i32) -> (i32, i32) {
    %c0_i32 = arith.constant 0 : i32
    %c0_i32_0 = arith.constant 0 : i32
    %c0_i32_1 = arith.constant 0 : i32
    return %c0_i32, %c0_i32_0 : i32, i32
  }
  func.func @transform_17(%arg0: i32) -> (i32, i32) {
    %c0_i32 = arith.constant 0 : i32
    %c0_i32_0 = arith.constant 0 : i32
    %c0_i32_1 = arith.constant 0 : i32
    return %c0_i32, %c0_i32_0 : i32, i32
  }
  func.func @transform_18(%arg0: i32) -> (i32, i32) {
    %c0_i32 = arith.constant 0 : i32
    %c0_i32_0 = arith.constant 0 : i32
    %c0_i32_1 = arith.constant 0 : i32
    return %c0_i32, %c0_i32_0 : i32, i32
  }
  func.func @transform_19(%arg0: i32) -> (i32, i32, i32) {
    %c0_i32 = arith.constant 0 : i32
    %c0_i32_0 = arith.constant 0 : i32
    %c0_i32_1 = arith.constant 0 : i32
    return %arg0, %c0_i32, %c0_i32_0 : i32, i32, i32
  }
  func.func @transform_20(%arg0: i32) -> (i32, i32, i32) {
    %c0_i32 = arith.constant 0 : i32
    %c0_i32_0 = arith.constant 0 : i32
    %c0_i32_1 = arith.constant 0 : i32
    return %arg0, %c0_i32, %c0_i32_0 : i32, i32, i32
  }
  func.func @transform_21(%arg0: i32) -> (i32, i32, i32) {
    %c0_i32 = arith.constant 0 : i32
    %c0_i32_0 = arith.constant 0 : i32
    %c0_i32_1 = arith.constant 0 : i32
    return %arg0, %c0_i32, %c0_i32_0 : i32, i32, i32
  }
  func.func @transform_22(%arg0: i32) -> (i32, i32, i32) {
    %c0_i32 = arith.constant 0 : i32
    %c0_i32_0 = arith.constant 0 : i32
    %c0_i32_1 = arith.constant 0 : i32
    return %arg0, %c0_i32, %c0_i32_0 : i32, i32, i32
  }
}

</mosaic_0001>

<llo_original>
// kernel: personalized_headline_forward.4
$region0: #{personalized_headline_forward.4}
  #allocation0 [shape = 'u32[]', space=smem, size = 0x4, offset = 0x4, fixed_abs, tag = 'smem constant byte address 0x4 - core index']
  #allocation1 [shape = 'u32[144,128]{1,0:T(1,128)}', space=vmem, size = 0x12000, scoped, tag = 'internal scratch']
  %s0 = inlined_call_operand.vmem [shape: f32[4,16,128], index: 0, kind: input, shape index: {}]
  %s1 = inlined_call_operand.vmem [shape: f32[4,1,16], index: 1, kind: input, shape index: {}]
  %s2 = inlined_call_operand.vmem [shape: bf16[128,384], index: 2, kind: input, shape index: {}]
  %s3 = inlined_call_operand.vmem [shape: f32[1,384], index: 3, kind: input, shape index: {}]
  %s4 = inlined_call_operand.vmem [shape: bf16[128,128], index: 4, kind: input, shape index: {}]
  %s5 = inlined_call_operand.vmem [shape: f32[1,128], index: 5, kind: input, shape index: {}]
  %s6 = inlined_call_operand.vmem [shape: f32[1,128], index: 6, kind: input, shape index: {}]
  %s7 = inlined_call_operand.vmem [shape: f32[1,128], index: 7, kind: input, shape index: {}]
  %s8 = inlined_call_operand.vmem [shape: bf16[128,256], index: 8, kind: input, shape index: {}]
  %s9 = inlined_call_operand.vmem [shape: f32[1,256], index: 9, kind: input, shape index: {}]
  %s10 = inlined_call_operand.vmem [shape: bf16[256,128], index: 10, kind: input, shape index: {}]
  %s11 = inlined_call_operand.vmem [shape: f32[1,128], index: 11, kind: input, shape index: {}]
  %s12 = inlined_call_operand.vmem [shape: f32[1,128], index: 12, kind: input, shape index: {}]
  %s13 = inlined_call_operand.vmem [shape: f32[1,128], index: 13, kind: input, shape index: {}]
  %s14 = inlined_call_operand.vmem [shape: f32[4,16,128], index: 14, kind: output, shape index: {}]
  %s15 = sld [smem:[#allocation0]]
  $region89: #{personalized_headline_forward.4} parent=0
    _
  %s17 = ssub.s32 1, %s15
  %s18 = scalar_select 0, %s17, %s15
  loop: start=0, step=1, limit=4
  $region2: #{personalized_headline_forward.4} parent=0 // loop_pre_header
    _
  $region3: #{personalized_headline_forward.4} parent=0 // loop_header
    %s20 = sphi 0, %s24
    %p21 = scmp.ge.s32.totalorder %s20, 4
    %s30 = sphi 0, %s32
    %s33 = sphi 0, %s30
    %s34 = sphi 0, %s33
    %s50 = sphi 0, %s34
    %s56 = sphi 0, %s58
    %s59 = sphi 0, %s56
    %s60 = sphi 0, %s59
    %s76 = sphi 0, %s60
    %s80 = sphi 0, %s80
    %s82 = sphi 0, %s80
    %s83 = sphi 0, %s82
    %s97 = sphi 0, %s83
    %s101 = sphi 0, %s101
    %s103 = sphi 0, %s101
    %s104 = sphi 0, %s103
    %s118 = sphi 0, %s104
    %s122 = sphi 0, %s122
    %s124 = sphi 0, %s122
    %s125 = sphi 0, %s124
    %s139 = sphi 0, %s125
    %s143 = sphi 0, %s143
    %s145 = sphi 0, %s143
    %s146 = sphi 0, %s145
    %s160 = sphi 0, %s146
    %s164 = sphi 0, %s164
    %s166 = sphi 0, %s164
    %s167 = sphi 0, %s166
    %s181 = sphi 0, %s167
    %s185 = sphi 0, %s185
    %s187 = sphi 0, %s185
    %s188 = sphi 0, %s187
    %s202 = sphi 0, %s188
    %s206 = sphi 0, %s206
    %s208 = sphi 0, %s206
    %s209 = sphi 0, %s208
    %s223 = sphi 0, %s209
    %s227 = sphi 0, %s227
    %s229 = sphi 0, %s227
    %s230 = sphi 0, %s229
    %s244 = sphi 0, %s230
    %s248 = sphi 0, %s248
    %s250 = sphi 0, %s248
    %s251 = sphi 0, %s250
    %s265 = sphi 0, %s251
    %s269 = sphi 0, %s269
    %s271 = sphi 0, %s269
    %s272 = sphi 0, %s271
    %s286 = sphi 0, %s272
    %s290 = sphi 0, %s290
    %s292 = sphi 0, %s290
    %s293 = sphi 0, %s292
    %s307 = sphi 0, %s293
    %s311 = sphi 0, %s311
    %s313 = sphi 0, %s311
    %s314 = sphi 0, %s313
    %s328 = sphi 0, %s314
    %s334 = sphi 0, %s336
    %s337 = sphi 0, %s334
    %s338 = sphi 0, %s337
    %s354 = sphi 0, %s338
  $region4: #{personalized_headline_forward.4} parent=0 // loop_header_branch
    %23 = sbr.rel (%p21) target = $region8
  $region5: #{personalized_headline_forward.4} parent=0 // loop_body
    %s25 = ssub.s32 %s20, 1
    %s26 = ssub.s32 %s20, 2
    %s27 = sadd.s32 %s20, 1
    %s28 = ssub.s32 %s20, %s27
    %p29 = scmp.eq.s32.totalorder %s28, 0
    %s31 = sadd.s32 %s30, 1
    %s32 = scalar_select %p29, %s30, %s31
    %p35 = pneg %p29
    %p36 = scmp.eq.s32.totalorder %s20, 1
    %p37 = por %p35, %p36
    %p38 = scmp.ne.s32.totalorder %s30, %s33
    %p39 = scmp.eq.s32.totalorder %s20, 0
    %p40 = por %p38, %p39
    %p41 = scmp.ne.s32.totalorder %s30, %s33
    %p42 = scmp.eq.s32.totalorder %s25, 1
    %p43 = por %p41, %p42
    %p44 = scmp.ne.s32.totalorder %s33, %s34
    %p45 = scmp.eq.s32.totalorder %s25, 0
    %p46 = por %p44, %p45
    %p47 = scmp.ne.s32.totalorder %s33, %s34
    %p48 = scmp.eq.s32.totalorder %s26, 1
    %p49 = por %p47, %p48
    %p51 = scmp.ne.s32.totalorder %s34, %s50
    %p52 = scmp.eq.s32.totalorder %s26, 0
    %p53 = por %p51, %p52
    %s54 = ssub.s32 %s20, %s27
    %p55 = scmp.eq.s32.totalorder %s54, 0
    %s57 = sadd.s32 %s56, 1
    %s58 = scalar_select %p55, %s56, %s57
    %p61 = pneg %p55
    %p62 = scmp.eq.s32.totalorder %s20, 1
    %p63 = por %p61, %p62
    %p64 = scmp.ne.s32.totalorder %s56, %s59
    %p65 = scmp.eq.s32.totalorder %s20, 0
    %p66 = por %p64, %p65
    %p67 = scmp.ne.s32.totalorder %s56, %s59
    %p68 = scmp.eq.s32.totalorder %s25, 1
    %p69 = por %p67, %p68
    %p70 = scmp.ne.s32.totalorder %s59, %s60
    %p71 = scmp.eq.s32.totalorder %s25, 0
    %p72 = por %p70, %p71
    %p73 = scmp.ne.s32.totalorder %s59, %s60
    %p74 = scmp.eq.s32.totalorder %s26, 1
    %p75 = por %p73, %p74
    %p77 = scmp.ne.s32.totalorder %s60, %s76
    %p78 = scmp.eq.s32.totalorder %s26, 0
    %p79 = por %p77, %p78
    %s81 = sadd.s32 %s80, 1
    %p84 = scmp.eq.s32.totalorder %s20, 1
    %p85 = scmp.ne.s32.totalorder %s80, %s82
    %p86 = scmp.eq.s32.totalorder %s20, 0
    %p87 = por %p85, %p86
    %p88 = scmp.ne.s32.totalorder %s80, %s82
    %p89 = scmp.eq.s32.totalorder %s25, 1
    %p90 = por %p88, %p89
    %p91 = scmp.ne.s32.totalorder %s82, %s83
    %p92 = scmp.eq.s32.totalorder %s25, 0
    %p93 = por %p91, %p92
    %p94 = scmp.ne.s32.totalorder %s82, %s83
    %p95 = scmp.eq.s32.totalorder %s26, 1
    %p96 = por %p94, %p95
    %p98 = scmp.ne.s32.totalorder %s83, %s97
    %p99 = scmp.eq.s32.totalorder %s26, 0
    %p100 = por %p98, %p99
    %s102 = sadd.s32 %s101, 1
    %p105 = scmp.eq.s32.totalorder %s20, 1
    %p106 = scmp.ne.s32.totalorder %s101, %s103
    %p107 = scmp.eq.s32.totalorder %s20, 0
    %p108 = por %p106, %p107
    %p109 = scmp.ne.s32.totalorder %s101, %s103
    %p110 = scmp.eq.s32.totalorder %s25, 1
    %p111 = por %p109, %p110
    %p112 = scmp.ne.s32.totalorder %s103, %s104
    %p113 = scmp.eq.s32.totalorder %s25, 0
    %p114 = por %p112, %p113
    %p115 = scmp.ne.s32.totalorder %s103, %s104
    %p116 = scmp.eq.s32.totalorder %s26, 1
    %p117 = por %p115, %p116
    %p119 = scmp.ne.s32.totalorder %s104, %s118
    %p120 = scmp.eq.s32.totalorder %s26, 0
    %p121 = por %p119, %p120
    %s123 = sadd.s32 %s122, 1
    %p126 = scmp.eq.s32.totalorder %s20, 1
    %p127 = scmp.ne.s32.totalorder %s122, %s124
    %p128 = scmp.eq.s32.totalorder %s20, 0
    %p129 = por %p127, %p128
    %p130 = scmp.ne.s32.totalorder %s122, %s124
    %p131 = scmp.eq.s32.totalorder %s25, 1
    %p132 = por %p130, %p131
    %p133 = scmp.ne.s32.totalorder %s124, %s125
    %p134 = scmp.eq.s32.totalorder %s25, 0
    %p135 = por %p133, %p134
    %p136 = scmp.ne.s32.totalorder %s124, %s125
    %p137 = scmp.eq.s32.totalorder %s26, 1
    %p138 = por %p136, %p137
    %p140 = scmp.ne.s32.totalorder %s125, %s139
    %p141 = scmp.eq.s32.totalorder %s26, 0
    %p142 = por %p140, %p141
    %s144 = sadd.s32 %s143, 1
    %p147 = scmp.eq.s32.totalorder %s20, 1
    %p148 = scmp.ne.s32.totalorder %s143, %s145
    %p149 = scmp.eq.s32.totalorder %s20, 0
    %p150 = por %p148, %p149
    %p151 = scmp.ne.s32.totalorder %s143, %s145
    %p152 = scmp.eq.s32.totalorder %s25, 1
    %p153 = por %p151, %p152
    %p154 = scmp.ne.s32.totalorder %s145, %s146
    %p155 = scmp.eq.s32.totalorder %s25, 0
    %p156 = por %p154, %p155
    %p157 = scmp.ne.s32.totalorder %s145, %s146
    %p158 = scmp.eq.s32.totalorder %s26, 1
    %p159 = por %p157, %p158
    %p161 = scmp.ne.s32.totalorder %s146, %s160
    %p162 = scmp.eq.s32.totalorder %s26, 0
    %p163 = por %p161, %p162
    %s165 = sadd.s32 %s164, 1
    %p168 = scmp.eq.s32.totalorder %s20, 1
    %p169 = scmp.ne.s32.totalorder %s164, %s166
    %p170 = scmp.eq.s32.totalorder %s20, 0
    %p171 = por %p169, %p170
    %p172 = scmp.ne.s32.totalorder %s164, %s166
    %p173 = scmp.eq.s32.totalorder %s25, 1
    %p174 = por %p172, %p173
    %p175 = scmp.ne.s32.totalorder %s166, %s167
    %p176 = scmp.eq.s32.totalorder %s25, 0
    %p177 = por %p175, %p176
    %p178 = scmp.ne.s32.totalorder %s166, %s167
    %p179 = scmp.eq.s32.totalorder %s26, 1
    %p180 = por %p178, %p179
    %p182 = scmp.ne.s32.totalorder %s167, %s181
    %p183 = scmp.eq.s32.totalorder %s26, 0
    %p184 = por %p182, %p183
    %s186 = sadd.s32 %s185, 1
    %p189 = scmp.eq.s32.totalorder %s20, 1
    %p190 = scmp.ne.s32.totalorder %s185, %s187
    %p191 = scmp.eq.s32.totalorder %s20, 0
    %p192 = por %p190, %p191
    %p193 = scmp.ne.s32.totalorder %s185, %s187
    %p194 = scmp.eq.s32.totalorder %s25, 1
    %p195 = por %p193, %p194
    %p196 = scmp.ne.s32.totalorder %s187, %s188
    %p197 = scmp.eq.s32.totalorder %s25, 0
    %p198 = por %p196, %p197
    %p199 = scmp.ne.s32.totalorder %s187, %s188
    %p200 = scmp.eq.s32.totalorder %s26, 1
    %p201 = por %p199, %p200
    %p203 = scmp.ne.s32.totalorder %s188, %s202
    %p204 = scmp.eq.s32.totalorder %s26, 0
    %p205 = por %p203, %p204
    %s207 = sadd.s32 %s206, 1
    %p210 = scmp.eq.s32.totalorder %s20, 1
    %p211 = scmp.ne.s32.totalorder %s206, %s208
    %p212 = scmp.eq.s32.totalorder %s20, 0
    %p213 = por %p211, %p212
    %p214 = scmp.ne.s32.totalorder %s206, %s208
    %p215 = scmp.eq.s32.totalorder %s25, 1
    %p216 = por %p214, %p215
    %p217 = scmp.ne.s32.totalorder %s208, %s209
    %p218 = scmp.eq.s32.totalorder %s25, 0
    %p219 = por %p217, %p218
    %p220 = scmp.ne.s32.totalorder %s208, %s209
    %p221 = scmp.eq.s32.totalorder %s26, 1
    %p222 = por %p220, %p221
    %p224 = scmp.ne.s32.totalorder %s209, %s223
    %p225 = scmp.eq.s32.totalorder %s26, 0
    %p226 = por %p224, %p225
    %s228 = sadd.s32 %s227, 1
    %p231 = scmp.eq.s32.totalorder %s20, 1
    %p232 = scmp.ne.s32.totalorder %s227, %s229
    %p233 = scmp.eq.s32.totalorder %s20, 0
    %p234 = por %p232, %p233
    %p235 = scmp.ne.s32.totalorder %s227, %s229
    %p236 = scmp.eq.s32.totalorder %s25, 1
    %p237 = por %p235, %p236
    %p238 = scmp.ne.s32.totalorder %s229, %s230
    %p239 = scmp.eq.s32.totalorder %s25, 0
    %p240 = por %p238, %p239
    %p241 = scmp.ne.s32.totalorder %s229, %s230
    %p242 = scmp.eq.s32.totalorder %s26, 1
    %p243 = por %p241, %p242
    %p245 = scmp.ne.s32.totalorder %s230, %s244
    %p246 = scmp.eq.s32.totalorder %s26, 0
    %p247 = por %p245, %p246
    %s249 = sadd.s32 %s248, 1
    %p252 = scmp.eq.s32.totalorder %s20, 1
    %p253 = scmp.ne.s32.totalorder %s248, %s250
    %p254 = scmp.eq.s32.totalorder %s20, 0
    %p255 = por %p253, %p254
    %p256 = scmp.ne.s32.totalorder %s248, %s250
    %p257 = scmp.eq.s32.totalorder %s25, 1
    %p258 = por %p256, %p257
    %p259 = scmp.ne.s32.totalorder %s250, %s251
    %p260 = scmp.eq.s32.totalorder %s25, 0
    %p261 = por %p259, %p260
    %p262 = scmp.ne.s32.totalorder %s250, %s251
    %p263 = scmp.eq.s32.totalorder %s26, 1
    %p264 = por %p262, %p263
    %p266 = scmp.ne.s32.totalorder %s251, %s265
    %p267 = scmp.eq.s32.totalorder %s26, 0
    %p268 = por %p266, %p267
    %s270 = sadd.s32 %s269, 1
    %p273 = scmp.eq.s32.totalorder %s20, 1
    %p274 = scmp.ne.s32.totalorder %s269, %s271
    %p275 = scmp.eq.s32.totalorder %s20, 0
    %p276 = por %p274, %p275
    %p277 = scmp.ne.s32.totalorder %s269, %s271
    %p278 = scmp.eq.s32.totalorder %s25, 1
    %p279 = por %p277, %p278
    %p280 = scmp.ne.s32.totalorder %s271, %s272
    %p281 = scmp.eq.s32.totalorder %s25, 0
    %p282 = por %p280, %p281
    %p283 = scmp.ne.s32.totalorder %s271, %s272
    %p284 = scmp.eq.s32.totalorder %s26, 1
    %p285 = por %p283, %p284
    %p287 = scmp.ne.s32.totalorder %s272, %s286
    %p288 = scmp.eq.s32.totalorder %s26, 0
    %p289 = por %p287, %p288
    %s291 = sadd.s32 %s290, 1
    %p294 = scmp.eq.s32.totalorder %s20, 1
    %p295 = scmp.ne.s32.totalorder %s290, %s292
    %p296 = scmp.eq.s32.totalorder %s20, 0
    %p297 = por %p295, %p296
    %p298 = scmp.ne.s32.totalorder %s290, %s292
    %p299 = scmp.eq.s32.totalorder %s25, 1
    %p300 = por %p298, %p299
    %p301 = scmp.ne.s32.totalorder %s292, %s293
    %p302 = scmp.eq.s32.totalorder %s25, 0
    %p303 = por %p301, %p302
    %p304 = scmp.ne.s32.totalorder %s292, %s293
    %p305 = scmp.eq.s32.totalorder %s26, 1
    %p306 = por %p304, %p305
    %p308 = scmp.ne.s32.totalorder %s293, %s307
    %p309 = scmp.eq.s32.totalorder %s26, 0
    %p310 = por %p308, %p309
    %s312 = sadd.s32 %s311, 1
    %p315 = scmp.eq.s32.totalorder %s20, 1
    %p316 = scmp.ne.s32.totalorder %s311, %s313
    %p317 = scmp.eq.s32.totalorder %s20, 0
    %p318 = por %p316, %p317
    %p319 = scmp.ne.s32.totalorder %s311, %s313
    %p320 = scmp.eq.s32.totalorder %s25, 1
    %p321 = por %p319, %p320
    %p322 = scmp.ne.s32.totalorder %s313, %s314
    %p323 = scmp.eq.s32.totalorder %s25, 0
    %p324 = por %p322, %p323
    %p325 = scmp.ne.s32.totalorder %s313, %s314
    %p326 = scmp.eq.s32.totalorder %s26, 1
    %p327 = por %p325, %p326
    %p329 = scmp.ne.s32.totalorder %s314, %s328
    %p330 = scmp.eq.s32.totalorder %s26, 0
    %p331 = por %p329, %p330
    %s332 = ssub.s32 %s20, %s27
    %p333 = scmp.eq.s32.totalorder %s332, 0
    %s335 = sadd.s32 %s334, 1
    %s336 = scalar_select %p333, %s334, %s335
    %p339 = pneg %p333
    %p340 = scmp.eq.s32.totalorder %s20, 1
    %p341 = por %p339, %p340
    %p342 = scmp.ne.s32.totalorder %s334, %s337
    %p343 = scmp.eq.s32.totalorder %s20, 0
    %p344 = por %p342, %p343
    %p345 = scmp.ne.s32.totalorder %s334, %s337
    %p346 = scmp.eq.s32.totalorder %s25, 1
    %p347 = por %p345, %p346
    %p348 = scmp.ne.s32.totalorder %s337, %s338
    %p349 = scmp.eq.s32.totalorder %s25, 0
    %p350 = por %p348, %p349
    %p351 = scmp.ne.s32.totalorder %s337, %s338
    %p352 = scmp.eq.s32.totalorder %s26, 1
    %p353 = por %p351, %p352
    %p355 = scmp.ne.s32.totalorder %s338, %s354
    %p356 = scmp.eq.s32.totalorder %s26, 0
    %p357 = por %p355, %p356
    %p358 = scmp.le.s32.totalorder 1, %s20
    %p359 = scmp.lt.s32.totalorder %s20, 3
    %p360 = pnand %p358, %p359
    %p361 = pneg %p360
    // Predicated region
    $region9: #{personalized_headline_forward.4} parent=5 // pred_check
      _
    $region10: #{personalized_headline_forward.4} parent=5 // pred_check_branch
      %363 = sbr.rel (%p360) target = $region12
    $region11: #{personalized_headline_forward.4} parent=5 // pred_region
      %s364 = ssub.s32 %s20, 1
      // Predicated region
      $region13: #{personalized_headline_forward.4} parent=11 // pred_check
        %p365 = pneg %p93
      $region14: #{personalized_headline_forward.4} parent=11 // pred_check_branch
        %367 = sbr.rel (%p365) target = $region16
      $region15: #{personalized_headline_forward.4} parent=11 // pred_region
        _
      $region16: #{personalized_headline_forward.4} parent=11 // pred_fallthru
        _
      // Predicated region
      $region17: #{personalized_headline_forward.4} parent=11 // pred_check
        %p368 = pneg %p114
      $region18: #{personalized_headline_forward.4} parent=11 // pred_check_branch
        %370 = sbr.rel (%p368) target = $region20
      $region19: #{personalized_headline_forward.4} parent=11 // pred_region
        _
      $region20: #{personalized_headline_forward.4} parent=11 // pred_fallthru
        _
      // Predicated region
      $region21: #{personalized_headline_forward.4} parent=11 // pred_check
        %p371 = pneg %p135
      $region22: #{personalized_headline_forward.4} parent=11 // pred_check_branch
        %373 = sbr.rel (%p371) target = $region24
      $region23: #{personalized_headline_forward.4} parent=11 // pred_region
        _
      $region24: #{personalized_headline_forward.4} parent=11 // pred_fallthru
        _
      // Predicated region
      $region25: #{personalized_headline_forward.4} parent=11 // pred_check
        %p374 = pneg %p156
      $region26: #{personalized_headline_forward.4} parent=11 // pred_check_branch
        %376 = sbr.rel (%p374) target = $region28
      $region27: #{personalized_headline_forward.4} parent=11 // pred_region
        _
      $region28: #{personalized_headline_forward.4} parent=11 // pred_fallthru
        _
      // Predicated region
      $region29: #{personalized_headline_forward.4} parent=11 // pred_check
        %p377 = pneg %p177
      $region30: #{personalized_headline_forward.4} parent=11 // pred_check_branch
        %379 = sbr.rel (%p377) target = $region32
      $region31: #{personalized_headline_forward.4} parent=11 // pred_region
        _
      $region32: #{personalized_headline_forward.4} parent=11 // pred_fallthru
        _
      // Predicated region
      $region33: #{personalized_headline_forward.4} parent=11 // pred_check
        %p380 = pneg %p198
      $region34: #{personalized_headline_forward.4} parent=11 // pred_check_branch
        %382 = sbr.rel (%p380) target = $region36
      $region35: #{personalized_headline_forward.4} parent=11 // pred_region
        _
      $region36: #{personalized_headline_forward.4} parent=11 // pred_fallthru
        _
      // Predicated region
      $region37: #{personalized_headline_forward.4} parent=11 // pred_check
        %p383 = pneg %p219
      $region38: #{personalized_headline_forward.4} parent=11 // pred_check_branch
        %385 = sbr.rel (%p383) target = $region40
      $region39: #{personalized_headline_forward.4} parent=11 // pred_region
        _
      $region40: #{personalized_headline_forward.4} parent=11 // pred_fallthru
        _
      // Predicated region
      $region41: #{personalized_headline_forward.4} parent=11 // pred_check
        %p386 = pneg %p240
      $region42: #{personalized_headline_forward.4} parent=11 // pred_check_branch
        %388 = sbr.rel (%p386) target = $region44
      $region43: #{personalized_headline_forward.4} parent=11 // pred_region
        _
      $region44: #{personalized_headline_forward.4} parent=11 // pred_fallthru
        _
      // Predicated region
      $region45: #{personalized_headline_forward.4} parent=11 // pred_check
        %p389 = pneg %p261
      $region46: #{personalized_headline_forward.4} parent=11 // pred_check_branch
        %391 = sbr.rel (%p389) target = $region48
      $region47: #{personalized_headline_forward.4} parent=11 // pred_region
        _
      $region48: #{personalized_headline_forward.4} parent=11 // pred_fallthru
        _
      // Predicated region
      $region49: #{personalized_headline_forward.4} parent=11 // pred_check
        %p392 = pneg %p282
      $region50: #{personalized_headline_forward.4} parent=11 // pred_check_branch
        %394 = sbr.rel (%p392) target = $region52
      $region51: #{personalized_headline_forward.4} parent=11 // pred_region
        _
      $region52: #{personalized_headline_forward.4} parent=11 // pred_fallthru
        _
      // Predicated region
      $region53: #{personalized_headline_forward.4} parent=11 // pred_check
        %p395 = pneg %p303
      $region54: #{personalized_headline_forward.4} parent=11 // pred_check_branch
        %397 = sbr.rel (%p395) target = $region56
      $region55: #{personalized_headline_forward.4} parent=11 // pred_region
        _
      $region56: #{personalized_headline_forward.4} parent=11 // pred_fallthru
        _
      // Predicated region
      $region57: #{personalized_headline_forward.4} parent=11 // pred_check
        %p398 = pneg %p324
      $region58: #{personalized_headline_forward.4} parent=11 // pred_check_branch
        %400 = sbr.rel (%p398) target = $region60
      $region59: #{personalized_headline_forward.4} parent=11 // pred_region
        _
      $region60: #{personalized_headline_forward.4} parent=11 // pred_fallthru
        _
    $region12: #{personalized_headline_forward.4} parent=5 // pred_fallthru
      _
    %p401 = scmp.lt.s32.totalorder %s20, 2
    // Predicated region
    $region61: #{personalized_headline_forward.4} parent=5 // pred_check
      %p402 = pneg %p401
    $region62: #{personalized_headline_forward.4} parent=5 // pred_check_branch
      %404 = sbr.rel (%p402) target = $region64
    $region63: #{personalized_headline_forward.4} parent=5 // pred_region
      // Predicated region
      $region65: #{personalized_headline_forward.4} parent=63 // pred_check
        %p405 = pneg %p40
      $region66: #{personalized_headline_forward.4} parent=63 // pred_check_branch
        %407 = sbr.rel (%p405) target = $region68
      $region67: #{personalized_headline_forward.4} parent=63 // pred_region
        %s408 = smul.u32 2, %s20
        %p409 = scmp.lt.s32.totalorder %s408, 3
        %s410 = scalar_select %p409, %s408, 3
        %s411 = smul.addr %s410, 2
        %s412 = smul.addr %s411, 8
        %s413 = scalar_lea.vmem %s0, %s412
        %s414 = smul.u32 2, %s20
      $region68: #{personalized_headline_forward.4} parent=63 // pred_fallthru
        _
      // Predicated region
      $region69: #{personalized_headline_forward.4} parent=63 // pred_check
        %p415 = pneg %p66
      $region70: #{personalized_headline_forward.4} parent=63 // pred_check_branch
        %417 = sbr.rel (%p415) target = $region72
      $region71: #{personalized_headline_forward.4} parent=63 // pred_region
        %s418 = smul.u32 2, %s20
        %p419 = scmp.lt.s32.totalorder %s418, 3
        %s420 = scalar_select %p419, %s418, 3
        %s421 = scalar_lea.vmem %s1, %s420
        %s422 = smul.u32 2, %s20
      $region72: #{personalized_headline_forward.4} parent=63 // pred_fallthru
        _
    $region64: #{personalized_headline_forward.4} parent=5 // pred_fallthru
      _
    %p423 = scmp.le.s32.totalorder 1, %s20
    %p424 = scmp.lt.s32.totalorder %s20, 3
    %p425 = pnand %p423, %p424
    %p426 = pneg %p425
    // Predicated region
    $region73: #{personalized_headline_forward.4} parent=5 // pred_check
      _
    $region74: #{personalized_headline_forward.4} parent=5 // pred_check_branch
      %428 = sbr.rel (%p425) target = $region76
    $region75: #{personalized_headline_forward.4} parent=5 // pred_region
      %s429 = ssub.s32 %s20, 1
      %s430 = smul.u32 2, %s25
      %p431 = scmp.lt.s32.totalorder %s430, 3
      %s432 = scalar_select %p431, %s430, 3
      %s433 = smul.addr %s432, 2
      %s434 = smul.addr %s433, 8
      %s435 = scalar_lea.vmem %s0, %s434
      %p436 = pneg %p46
      %p437 = pneg %p43
      %s438 = smul.u32 2, %s25
      %p439 = scmp.lt.s32.totalorder %s438, 3
      %s440 = scalar_select %p439, %s438, 3
      %s441 = scalar_lea.vmem %s1, %s440
      %p442 = pneg %p72
      %p443 = pneg %p69
      %p444 = pneg %p93
      %p445 = pneg %p90
      %p446 = pneg %p114
      %p447 = pneg %p111
      %p448 = pneg %p135
      %p449 = pneg %p132
      %p450 = pneg %p156
      %p451 = pneg %p153
      %p452 = pneg %p177
      %p453 = pneg %p174
      %p454 = pneg %p198
      %p455 = pneg %p195
      %p456 = pneg %p219
      %p457 = pneg %p216
      %p458 = pneg %p240
      %p459 = pneg %p237
      %p460 = pneg %p261
      %p461 = pneg %p258
      %p462 = pneg %p282
      %p463 = pneg %p279
      %p464 = pneg %p303
      %p465 = pneg %p300
      %p466 = pneg %p324
      %p467 = pneg %p321
      %p468 = pneg %p350
      %p469 = pneg %p347
      %s470 = smul.u32 2, %s25
      %p471 = scmp.lt.s32.totalorder %s470, 3
      %s472 = scalar_select %p471, %s470, 3
      %s473 = smul.addr %s472, 2
      %s474 = smul.addr %s473, 8
      %s475 = scalar_lea.vmem %s14, %s474
      %s476 = smul.u32 2, %s25
      %p477 = scmp.lt.s32.totalorder %s476, 3
      %s478 = scalar_select %p477, %s476, 3
      %s479 = smul.addr %s478, 2
      %s480 = smul.addr %s479, 8
      %s481 = scalar_lea.vmem %s0, %s480
      %s482 = smul.u32 2, %s25
      %s483 = smul.u32 2, %s25
      %p484 = scmp.lt.s32.totalorder %s483, 3
      %s485 = scalar_select %p484, %s483, 3
      %s486 = scalar_lea.vmem %s1, %s485
      %s487 = smul.u32 2, %s25
      %s488 = smul.u32 2, %s25
      %p489 = scmp.lt.s32.totalorder %s488, 3
      %s490 = scalar_select %p489, %s488, 3
      %s491 = smul.addr %s490, 2
      %s492 = smul.addr %s491, 8
      %s493 = scalar_lea.vmem %s14, %s492
      %s494 = smul.u32 2, %s25
      %v496 = vld [vmem:[%s481] sm:$0xff]
      %v497 = vld [vmem:[%s481 + $0x8] sm:$0xff]
      %v498 = vld [vmem:[%s481 + $0x10] sm:$0xff]
      %v499 = vld [vmem:[%s481 + $0x18] sm:$0xff]
      %v500 = vld [vmem:[%s2] sm:$0xff]
      %v501 = vld [vmem:[%s2 + $0x8] sm:$0xf]
      %v502 = vld [vmem:[%s2 + $0xc] sm:$0xff]
      %v503 = vld [vmem:[%s2 + $0x14] sm:$0xf]
      %v504 = vld [vmem:[%s2 + $0x18] sm:$0xff]
      %v505 = vld [vmem:[%s2 + $0x20] sm:$0xf]
      %v506 = vld [vmem:[%s2 + $0x24] sm:$0xff]
      %v507 = vld [vmem:[%s2 + $0x2c] sm:$0xf]
      %v508 = vld [vmem:[%s2 + $0x30] sm:$0xff]
      %v509 = vld [vmem:[%s2 + $0x38] sm:$0xf]
      %v510 = vld [vmem:[%s2 + $0x3c] sm:$0xff]
      %v511 = vld [vmem:[%s2 + $0x44] sm:$0xf]
      %v512 = vld [vmem:[%s2 + $0x48] sm:$0xff]
      %v513 = vld [vmem:[%s2 + $0x50] sm:$0xf]
      %v514 = vld [vmem:[%s2 + $0x54] sm:$0xff]
      %v515 = vld [vmem:[%s2 + $0x5c] sm:$0xf]
      %v516 = vld [vmem:[%s2 + $0x60] sm:$0xff]
      %v517 = vld [vmem:[%s2 + $0x68] sm:$0xf]
      %v518 = vld [vmem:[%s2 + $0x6c] sm:$0xff]
      %v519 = vld [vmem:[%s2 + $0x74] sm:$0xf]
      %v520 = vld [vmem:[%s2 + $0x78] sm:$0xff]
      %v521 = vld [vmem:[%s2 + $0x80] sm:$0xf]
      %v522 = vld [vmem:[%s2 + $0x84] sm:$0xff]
      %v523 = vld [vmem:[%s2 + $0x8c] sm:$0xf]
      %v524 = vld [vmem:[%s2 + $0x90] sm:$0xff]
      %v525 = vld [vmem:[%s2 + $0x98] sm:$0xf]
      %v526 = vld [vmem:[%s2 + $0x9c] sm:$0xff]
      %v527 = vld [vmem:[%s2 + $0xa4] sm:$0xf]
      %v528 = vld [vmem:[%s2 + $0xa8] sm:$0xff]
      %v529 = vld [vmem:[%s2 + $0xb0] sm:$0xf]
      %v530 = vld [vmem:[%s2 + $0xb4] sm:$0xff]
      %v531 = vld [vmem:[%s2 + $0xbc] sm:$0xf]
      %v532 = vld [vmem:[%s3] sm:$0x7]
      %v533 = vpack.c.bf16 %v497, %v496
      %v534 = vpack.c.bf16 %v499, %v498
      %v536 = vlaneseq
      %v537 = vshrl.u32 %v536, 7
      %v538 = vsub.s32 0, %v537
      %v539 = vrot.slane %v532, %v538
      %v540 = vlaneseq
      %v541 = vshrl.u32 %v540, 7
      %v542 = vsub.s32 1, %v541
      %v543 = vrot.slane %v532, %v542
      %v544 = vlaneseq
      %v545 = vshrl.u32 %v544, 7
      %v546 = vsub.s32 2, %v545
      %v547 = vrot.slane %v532, %v546
      %v583 = vunpack.c.l.b16 %v500
      %v584 = vunpack.c.h.b16 %v500
      %v585 = vunpack.c.l.b16 %v501
      %v586 = vunpack.c.l.b16 %v502
      %v587 = vunpack.c.h.b16 %v502
      %v588 = vunpack.c.l.b16 %v503
      %v589 = vunpack.c.l.b16 %v504
      %v590 = vunpack.c.h.b16 %v504
      %v591 = vunpack.c.l.b16 %v505
      %v592 = vunpack.c.l.b16 %v506
      %v593 = vunpack.c.h.b16 %v506
      %v594 = vunpack.c.l.b16 %v507
      %v595 = vunpack.c.l.b16 %v508
      %v596 = vunpack.c.h.b16 %v508
      %v597 = vunpack.c.l.b16 %v509
      %v598 = vunpack.c.l.b16 %v510
      %v599 = vunpack.c.h.b16 %v510
      %v600 = vunpack.c.l.b16 %v511
      %v601 = vunpack.c.l.b16 %v512
      %v602 = vunpack.c.h.b16 %v512
      %v603 = vunpack.c.l.b16 %v513
      %v604 = vunpack.c.l.b16 %v514
      %v605 = vunpack.c.h.b16 %v514
      %v606 = vunpack.c.l.b16 %v515
      %v607 = vunpack.c.l.b16 %v516
      %v608 = vunpack.c.h.b16 %v516
      %v609 = vunpack.c.l.b16 %v517
      %v610 = vunpack.c.l.b16 %v518
      %v611 = vunpack.c.h.b16 %v518
      %v612 = vunpack.c.l.b16 %v519
      %v613 = vunpack.c.l.b16 %v520
      %v614 = vunpack.c.h.b16 %v520
      %v615 = vunpack.c.l.b16 %v521
      %v616 = vunpack.c.l.b16 %v522
      %v617 = vunpack.c.h.b16 %v522
      %v618 = vunpack.c.l.b16 %v523
      %v619 = vunpack.c.l.b16 %v524
      %v620 = vunpack.c.h.b16 %v524
      %v621 = vunpack.c.l.b16 %v525
      %v622 = vunpack.c.l.b16 %v526
      %v623 = vunpack.c.h.b16 %v526
      %v624 = vunpack.c.l.b16 %v527
      %v625 = vunpack.c.l.b16 %v528
      %v626 = vunpack.c.h.b16 %v528
      %v627 = vunpack.c.l.b16 %v529
      %v628 = vunpack.c.l.b16 %v530
      %v629 = vunpack.c.h.b16 %v530
      %v630 = vunpack.c.l.b16 %v531
      %v631 = vpack.c.b16 %v586, %v583
      %v632 = vpack.c.b16 %v587, %v584
      %v633 = vpack.c.b16 %v588, %v585
      %v634 = vpack.c.b16 %v592, %v589
      %v635 = vpack.c.b16 %v593, %v590
      %v636 = vpack.c.b16 %v594, %v591
      %v637 = vpack.c.b16 %v598, %v595
      %v638 = vpack.c.b16 %v599, %v596
      %v639 = vpack.c.b16 %v600, %v597
      %v640 = vpack.c.b16 %v604, %v601
      %v641 = vpack.c.b16 %v605, %v602
      %v642 = vpack.c.b16 %v606, %v603
      %v643 = vpack.c.b16 %v610, %v607
      %v644 = vpack.c.b16 %v611, %v608
      %v645 = vpack.c.b16 %v612, %v609
      %v646 = vpack.c.b16 %v616, %v613
      %v647 = vpack.c.b16 %v617, %v614
      %v648 = vpack.c.b16 %v618, %v615
      %v649 = vpack.c.b16 %v622, %v619
      %v650 = vpack.c.b16 %v623, %v620
      %v651 = vpack.c.b16 %v624, %v621
      %v652 = vpack.c.b16 %v628, %v625
      %v653 = vpack.c.b16 %v629, %v626
      %v654 = vpack.c.b16 %v630, %v627
      %679 = vmatprep.subr.bf16.mxu0 %v632
      %680 = vmatpush1.bf16.msra.mxu0 %v631
      %681 = vmatprep.subr.bf16.mxu0 %v635
      %682 = vmatpush1.bf16.msra.mxu0 %v634
      %683 = vmatprep.subr.bf16.mxu0 %v638
      %684 = vmatpush1.bf16.msra.mxu0 %v637
      %685 = vmatprep.subr.bf16.mxu0 %v641
      %686 = vmatpush1.bf16.msra.mxu0 %v640
      %687 = vmatprep.subr.bf16.mxu0 %v644
      %688 = vmatpush1.bf16.msra.mxu0 %v643
      %689 = vmatprep.subr.bf16.mxu0 %v647
      %690 = vmatpush1.bf16.msra.mxu0 %v646
      %691 = vmatprep.subr.bf16.mxu0 %v650
      %692 = vmatpush1.bf16.msra.mxu0 %v649
      %693 = vmatprep.subr.bf16.mxu0 %v653
      %694 = vmatpush1.bf16.msra.mxu0 %v652
      %695 = vmatprep.subr.bf16.mxu0 0
      %696 = vmatpush1.bf16.msra.mxu0 0
      %697 = vmatprep.subr.bf16.mxu0 0
      %698 = vmatpush1.bf16.msra.mxu0 0
      %699 = vmatprep.subr.bf16.mxu0 0
      %700 = vmatpush1.bf16.msra.mxu0 0
      %701 = vmatprep.subr.bf16.mxu0 0
      %702 = vmatpush1.bf16.msra.mxu0 0
      %703 = vmatprep.subr.bf16.mxu0 0
      %704 = vmatpush1.bf16.msra.mxu0 0
      %705 = vmatprep.subr.bf16.mxu0 0
      %706 = vmatpush1.bf16.msra.mxu0 0
      %707 = vmatprep.subr.bf16.mxu0 0
      %708 = vmatpush1.bf16.msra.mxu0 0
      %709 = vmatprep.subr.bf16.mxu0 0
      %710 = vmatpush1.bf16.msra.mxu0 0
      %711 = vmatprep.mubr.bf16.mxu0 0
      %712 = vmatmul.mubr.bf16.gmra.mrb[0].mxu0 %v533
      %v713 = vpop.f32.mrb[0].mxu0
      %v714 = vadd.f32 %v539, %v713
      %v715 = vpop.f32.mrb[0].mxu0
      %v716 = vadd.f32 %v543, %v715
      %v717 = vpop.f32.mrb[0].mxu0
      %v718 = vadd.f32 %v539, %v717
      %v719 = vpop.f32.mrb[0].mxu0
      %v720 = vadd.f32 %v543, %v719
      %721 = vmatprep.mubr.bf16.mxu0 0
      %722 = vmatmul.mubr.bf16.gmra.mrb[0].mxu0 %v534
      %v723 = vpop.f32.mrb[0].mxu0
      %v724 = vadd.f32 %v539, %v723
      %v725 = vpop.f32.mrb[0].mxu0
      %v726 = vadd.f32 %v543, %v725
      %v727 = vpop.f32.mrb[0].mxu0
      %v728 = vadd.f32 %v539, %v727
      %v729 = vpop.f32.mrb[0].mxu0
      %v730 = vadd.f32 %v543, %v729
      %731 = vdwg.mxu0
      %732 = vmatprep.subr.bf16.mxu0 0
      %733 = vmatpush1.bf16.msra.mxu0 %v633
      %734 = vmatprep.subr.bf16.mxu0 0
      %735 = vmatpush1.bf16.msra.mxu0 %v636
      %736 = vmatprep.subr.bf16.mxu0 0
      %737 = vmatpush1.bf16.msra.mxu0 %v639
      %738 = vmatprep.subr.bf16.mxu0 0
      %739 = vmatpush1.bf16.msra.mxu0 %v642
      %740 = vmatprep.subr.bf16.mxu0 0
      %741 = vmatpush1.bf16.msra.mxu0 %v645
      %742 = vmatprep.subr.bf16.mxu0 0
      %743 = vmatpush1.bf16.msra.mxu0 %v648
      %744 = vmatprep.subr.bf16.mxu0 0
      %745 = vmatpush1.bf16.msra.mxu0 %v651
      %746 = vmatprep.subr.bf16.mxu0 0
      %747 = vmatpush1.bf16.msra.mxu0 %v654
      %748 = vmatprep.subr.bf16.mxu0 0
      %749 = vmatpush1.bf16.msra.mxu0 0
      %750 = vmatprep.subr.bf16.mxu0 0
      %751 = vmatpush1.bf16.msra.mxu0 0
      %752 = vmatprep.subr.bf16.mxu0 0
      %753 = vmatpush1.bf16.msra.mxu0 0
      %754 = vmatprep.subr.bf16.mxu0 0
      %755 = vmatpush1.bf16.msra.mxu0 0
      %756 = vmatprep.subr.bf16.mxu0 0
      %757 = vmatpush1.bf16.msra.mxu0 0
      %758 = vmatprep.subr.bf16.mxu0 0
      %759 = vmatpush1.bf16.msra.mxu0 0
      %760 = vmatprep.subr.bf16.mxu0 0
      %761 = vmatpush1.bf16.msra.mxu0 0
      %762 = vmatprep.subr.bf16.mxu0 0
      %763 = vmatpush1.bf16.msra.mxu0 0
      %764 = vmatprep.mubr.bf16.mxu0 0
      %765 = vmatmul.mubr.bf16.gmra.mrb[0].mxu0 %v533
      %v766 = vpop.f32.mrb[0].mxu0
      %v767 = vadd.f32 %v547, %v766
      %v768 = vpop.f32.mrb[0].mxu0
      %v769 = vpop.f32.mrb[0].mxu0
      %v770 = vadd.f32 %v547, %v769
      %v771 = vpop.f32.mrb[0].mxu0
      %772 = vmatprep.mubr.bf16.mxu0 0
      %773 = vmatmul.mubr.bf16.gmra.mrb[0].mxu0 %v534
      %v774 = vpop.f32.mrb[0].mxu0
      %v775 = vadd.f32 %v547, %v774
      %v776 = vpop.f32.mrb[0].mxu0
      %v777 = vpop.f32.mrb[0].mxu0
      %v778 = vadd.f32 %v547, %v777
      %v779 = vpop.f32.mrb[0].mxu0
      %780 = vdwg.mxu0
      %v781 = vpack.c.bf16 %v718, %v714
      %v782 = vpack.c.bf16 %v728, %v724
      %v783 = vpack.c.bf16 %v720, %v716
      %v784 = vpack.c.bf16 %v730, %v726
      %785 = vmatprep.subr.bf16.mxu0 0
      %786 = vmatpush1.bf16.xpose.msra.mxu0 %v783
      %787 = vmatprep.subr.bf16.mxu0 0
      %788 = vmatpush1.bf16.xpose.msra.mxu0 0
      %789 = vmatprep.subr.bf16.mxu0 0
      %790 = vmatpush1.bf16.xpose.msra.mxu0 0
      %791 = vmatprep.subr.bf16.mxu0 0
      %792 = vmatpush1.bf16.xpose.msra.mxu0 0
      %793 = vmatprep.subr.bf16.mxu0 0
      %794 = vmatpush1.bf16.xpose.msra.mxu0 0
      %795 = vmatprep.subr.bf16.mxu0 0
      %796 = vmatpush1.bf16.xpose.msra.mxu0 0
      %797 = vmatprep.subr.bf16.mxu0 0
      %798 = vmatpush1.bf16.xpose.msra.mxu0 0
      %799 = vmatprep.subr.bf16.mxu0 0
      %800 = vmatpush1.bf16.xpose.msra.mxu0 0
      %801 = vmatprep.subr.bf16.mxu0 0
      %802 = vmatpush1.bf16.xpose.msra.mxu0 0
      %803 = vmatprep.subr.bf16.mxu0 0
      %804 = vmatpush1.bf16.xpose.msra.mxu0 0
      %805 = vmatprep.subr.bf16.mxu0 0
      %806 = vmatpush1.bf16.xpose.msra.mxu0 0
      %807 = vmatprep.subr.bf16.mxu0 0
      %808 = vmatpush1.bf16.xpose.msra.mxu0 0
      %809 = vmatprep.subr.bf16.mxu0 0
      %810 = vmatpush1.bf16.xpose.msra.mxu0 0
      %811 = vmatprep.subr.bf16.mxu0 0
      %812 = vmatpush1.bf16.xpose.msra.mxu0 0
      %813 = vmatprep.subr.bf16.mxu0 0
      %814 = vmatpush1.bf16.xpose.msra.mxu0 0
      %815 = vmatprep.subr.bf16.mxu0 0
      %816 = vmatpush1.bf16.xpose.msra.mxu0 0
      %817 = vmatprep.mubr.bf16.mxu0 0
      %818 = vmatmul.mubr.bf16.gmra.mrb[0].mxu0 %v781
      %v819 = vpop.f32.mrb[0].mxu0
      %v820 = vadd.f32 0.0, %v819
      %v821 = vpop.f32.mrb[0].mxu0
      %v822 = vpop.f32.mrb[0].mxu0
      %v823 = vadd.f32 0.0, %v822
      %v824 = vpop.f32.mrb[0].mxu0
      %825 = vdwg.mxu0
      %826 = vmatprep.subr.bf16.mxu0 0
      %827 = vmatpush1.bf16.xpose.msra.mxu0 %v784
      %828 = vmatprep.subr.bf16.mxu0 0
      %829 = vmatpush1.bf16.xpose.msra.mxu0 0
      %830 = vmatprep.subr.bf16.mxu0 0
      %831 = vmatpush1.bf16.xpose.msra.mxu0 0
      %832 = vmatprep.subr.bf16.mxu0 0
      %833 = vmatpush1.bf16.xpose.msra.mxu0 0
      %834 = vmatprep.subr.bf16.mxu0 0
      %835 = vmatpush1.bf16.xpose.msra.mxu0 0
      %836 = vmatprep.subr.bf16.mxu0 0
      %837 = vmatpush1.bf16.xpose.msra.mxu0 0
      %838 = vmatprep.subr.bf16.mxu0 0
      %839 = vmatpush1.bf16.xpose.msra.mxu0 0
      %840 = vmatprep.subr.bf16.mxu0 0
      %841 = vmatpush1.bf16.xpose.msra.mxu0 0
      %842 = vmatprep.subr.bf16.mxu0 0
      %843 = vmatpush1.bf16.xpose.msra.mxu0 0
      %844 = vmatprep.subr.bf16.mxu0 0
      %845 = vmatpush1.bf16.xpose.msra.mxu0 0
      %846 = vmatprep.subr.bf16.mxu0 0
      %847 = vmatpush1.bf16.xpose.msra.mxu0 0
      %848 = vmatprep.subr.bf16.mxu0 0
      %849 = vmatpush1.bf16.xpose.msra.mxu0 0
      %850 = vmatprep.subr.bf16.mxu0 0
      %851 = vmatpush1.bf16.xpose.msra.mxu0 0
      %852 = vmatprep.subr.bf16.mxu0 0
      %853 = vmatpush1.bf16.xpose.msra.mxu0 0
      %854 = vmatprep.subr.bf16.mxu0 0
      %855 = vmatpush1.bf16.xpose.msra.mxu0 0
      %856 = vmatprep.subr.bf16.mxu0 0
      %857 = vmatpush1.bf16.xpose.msra.mxu0 0
      %858 = vmatprep.mubr.bf16.mxu0 0
      %859 = vmatmul.mubr.bf16.gmra.mrb[0].mxu0 %v782
      %v860 = vpop.f32.mrb[0].mxu0
      %v861 = vadd.f32 0.0, %v860
      %v862 = vpop.f32.mrb[0].mxu0
      %v863 = vpop.f32.mrb[0].mxu0
      %v864 = vadd.f32 0.0, %v863
      %v865 = vpop.f32.mrb[0].mxu0
      %866 = vdwg.mxu0
      %v867 = vld [vmem:[%s486] sm:$0x1]
      %v868 = vld [vmem:[%s486 + $0x1] sm:$0x1]
      %vm869 = vcmp.gt.f32.partialorder %v867, 0.0
      %vm870 = vcmp.gt.f32.partialorder %v868, 0.0
      %v871 = vsel %vm869, 1, 0
      %v872 = vsel %vm870, 1, 0
      %v873 = vlaneseq
      %v874 = vshrl.u32 %v873, 7
      %v875 = vsub.s32 0, %v874
      %v876 = vrot.slane %v871, %v875
      %v877 = vlaneseq
      %v878 = vshrl.u32 %v877, 7
      %v879 = vsub.s32 0, %v878
      %v880 = vrot.slane %v872, %v879
      %vm881 = vcmp.eq.s32.totalorder %v876, 1
      %vm882 = vcmp.eq.s32.totalorder %v880, 1
      %v883 = vsel %vm881, %v820, -1e+09
      %v884 = vsel %vm881, %v823, -1e+09
      %v885 = vsel %vm882, %v861, -1e+09
      %v886 = vsel %vm882, %v864, -1e+09
      %vm887 = vcmask 130048
      %v888 = vsel %vm887, %v883, -inf
      %889 = vmax.xlane.f32.xlu0 %v888
      %v890 = vpop.xlane.xlu0 %889
      %v891 = vsel %vm887, %v884, -inf
      %892 = vmax.xlane.f32.xlu0 %v891
      %v893 = vpop.xlane.xlu0 %892
      %v894 = vsel %vm887, %v885, -inf
      %895 = vmax.xlane.f32.xlu0 %v894
      %v896 = vpop.xlane.xlu0 %895
      %v897 = vsel %vm887, %v886, -inf
      %898 = vmax.xlane.f32.xlu0 %v897
      %v899 = vpop.xlane.xlu0 %898
      %v900 = vsub.f32 %v883, %v890
      %v901 = vsub.f32 %v884, %v893
      %v902 = vsub.f32 %v885, %v896
      %v903 = vsub.f32 %v886, %v899
      %v904 = vmul.f32 %v900, 1.442695
      %v905 = vpow.pop %v904
      %v906 = vmul.f32 %v901, 1.442695
      %v907 = vpow.pop %v906
      %v908 = vmul.f32 %v902, 1.442695
      %v909 = vpow.pop %v908
      %v910 = vmul.f32 %v903, 1.442695
      %v911 = vpow.pop %v910
      %v912 = vsel %vm887, %v905, 0.0
      %913 = vadd.xlane.f32.xlu0 %v912
      %v914 = vpop.xlane.xlu0 %913
      %v915 = vsel %vm887, %v907, 0.0
      %916 = vadd.xlane.f32.xlu0 %v915
      %v917 = vpop.xlane.xlu0 %916
      %v918 = vsel %vm887, %v909, 0.0
      %919 = vadd.xlane.f32.xlu0 %v918
      %v920 = vpop.xlane.xlu0 %919
      %v921 = vsel %vm887, %v911, 0.0
      %922 = vadd.xlane.f32.xlu0 %v921
      %v923 = vpop.xlane.xlu0 %922
      %v924 = vrcp.pop %v914
      %v925 = vrcp.pop %v917
      %v926 = vrcp.pop %v920
      %v927 = vrcp.pop %v923
      %v928 = vmul.f32 %v905, %v924
      %v929 = vmul.f32 %v907, %v925
      %v930 = vmul.f32 %v909, %v926
      %v931 = vmul.f32 %v911, %v927
      %v932 = vpack.c.bf16 %v929, %v928
      %v933 = vpack.c.bf16 %v931, %v930
      %v934 = vpack.c.bf16 %v770, %v767
      %v935 = vpack.c.bf16 %v778, %v775
      %v937 = vsel %vm887, %v932, 0
      %939 = vmatprep.subr.bf16.mxu0 0
      %940 = vmatpush1.bf16.msra.mxu0 %v934
      %941 = vmatprep.subr.bf16.mxu0 0
      %942 = vmatpush1.bf16.msra.mxu0 0
      %943 = vmatprep.subr.bf16.mxu0 0
      %944 = vmatpush1.bf16.msra.mxu0 0
      %945 = vmatprep.subr.bf16.mxu0 0
      %946 = vmatpush1.bf16.msra.mxu0 0
      %947 = vmatprep.subr.bf16.mxu0 0
      %948 = vmatpush1.bf16.msra.mxu0 0
      %949 = vmatprep.subr.bf16.mxu0 0
      %950 = vmatpush1.bf16.msra.mxu0 0
      %951 = vmatprep.subr.bf16.mxu0 0
      %952 = vmatpush1.bf16.msra.mxu0 0
      %953 = vmatprep.subr.bf16.mxu0 0
      %954 = vmatpush1.bf16.msra.mxu0 0
      %955 = vmatprep.subr.bf16.mxu0 0
      %956 = vmatpush1.bf16.msra.mxu0 0
      %957 = vmatprep.subr.bf16.mxu0 0
      %958 = vmatpush1.bf16.msra.mxu0 0
      %959 = vmatprep.subr.bf16.mxu0 0
      %960 = vmatpush1.bf16.msra.mxu0 0
      %961 = vmatprep.subr.bf16.mxu0 0
      %962 = vmatpush1.bf16.msra.mxu0 0
      %963 = vmatprep.subr.bf16.mxu0 0
      %964 = vmatpush1.bf16.msra.mxu0 0
      %965 = vmatprep.subr.bf16.mxu0 0
      %966 = vmatpush1.bf16.msra.mxu0 0
      %967 = vmatprep.subr.bf16.mxu0 0
      %968 = vmatpush1.bf16.msra.mxu0 0
      %969 = vmatprep.subr.bf16.mxu0 0
      %970 = vmatpush1.bf16.msra.mxu0 0
      %971 = vmatprep.mubr.bf16.mxu0 0
      %972 = vmatmul.mubr.bf16.gmra.mrb[0].mxu0 %v937
      %v973 = vpop.f32.mrb[0].mxu0
      %v974 = vadd.f32 0.0, %v973
      %v975 = vpop.f32.mrb[0].mxu0
      %v976 = vpop.f32.mrb[0].mxu0
      %v977 = vadd.f32 0.0, %v976
      %v978 = vpop.f32.mrb[0].mxu0
      %979 = vdwg.mxu0
      %v981 = vsel %vm887, %v933, 0
      %983 = vmatprep.subr.bf16.mxu0 0
      %984 = vmatpush1.bf16.msra.mxu0 %v935
      %985 = vmatprep.subr.bf16.mxu0 0
      %986 = vmatpush1.bf16.msra.mxu0 0
      %987 = vmatprep.subr.bf16.mxu0 0
      %988 = vmatpush1.bf16.msra.mxu0 0
      %989 = vmatprep.subr.bf16.mxu0 0
      %990 = vmatpush1.bf16.msra.mxu0 0
      %991 = vmatprep.subr.bf16.mxu0 0
      %992 = vmatpush1.bf16.msra.mxu0 0
      %993 = vmatprep.subr.bf16.mxu0 0
      %994 = vmatpush1.bf16.msra.mxu0 0
      %995 = vmatprep.subr.bf16.mxu0 0
      %996 = vmatpush1.bf16.msra.mxu0 0
      %997 = vmatprep.subr.bf16.mxu0 0
      %998 = vmatpush1.bf16.msra.mxu0 0
      %999 = vmatprep.subr.bf16.mxu0 0
      %1000 = vmatpush1.bf16.msra.mxu0 0
      %1001 = vmatprep.subr.bf16.mxu0 0
      %1002 = vmatpush1.bf16.msra.mxu0 0
      %1003 = vmatprep.subr.bf16.mxu0 0
      %1004 = vmatpush1.bf16.msra.mxu0 0
      %1005 = vmatprep.subr.bf16.mxu0 0
      %1006 = vmatpush1.bf16.msra.mxu0 0
      %1007 = vmatprep.subr.bf16.mxu0 0
      %1008 = vmatpush1.bf16.msra.mxu0 0
      %1009 = vmatprep.subr.bf16.mxu0 0
      %1010 = vmatpush1.bf16.msra.mxu0 0
      %1011 = vmatprep.subr.bf16.mxu0 0
      %1012 = vmatpush1.bf16.msra.mxu0 0
      %1013 = vmatprep.subr.bf16.mxu0 0
      %1014 = vmatpush1.bf16.msra.mxu0 0
      %1015 = vmatprep.mubr.bf16.mxu0 0
      %1016 = vmatmul.mubr.bf16.gmra.mrb[0].mxu0 %v981
      %v1017 = vpop.f32.mrb[0].mxu0
      %v1018 = vadd.f32 0.0, %v1017
      %v1019 = vpop.f32.mrb[0].mxu0
      %v1020 = vpop.f32.mrb[0].mxu0
      %v1021 = vadd.f32 0.0, %v1020
      %v1022 = vpop.f32.mrb[0].mxu0
      %1023 = vdwg.mxu0
      %v1024 = vld [vmem:[%s4] sm:$0xf]
      %v1025 = vld [vmem:[%s4 + $0x4] sm:$0xf]
      %v1026 = vld [vmem:[%s4 + $0x8] sm:$0xf]
      %v1027 = vld [vmem:[%s4 + $0xc] sm:$0xf]
      %v1028 = vld [vmem:[%s4 + $0x10] sm:$0xf]
      %v1029 = vld [vmem:[%s4 + $0x14] sm:$0xf]
      %v1030 = vld [vmem:[%s4 + $0x18] sm:$0xf]
      %v1031 = vld [vmem:[%s4 + $0x1c] sm:$0xf]
      %v1032 = vld [vmem:[%s4 + $0x20] sm:$0xf]
      %v1033 = vld [vmem:[%s4 + $0x24] sm:$0xf]
      %v1034 = vld [vmem:[%s4 + $0x28] sm:$0xf]
      %v1035 = vld [vmem:[%s4 + $0x2c] sm:$0xf]
      %v1036 = vld [vmem:[%s4 + $0x30] sm:$0xf]
      %v1037 = vld [vmem:[%s4 + $0x34] sm:$0xf]
      %v1038 = vld [vmem:[%s4 + $0x38] sm:$0xf]
      %v1039 = vld [vmem:[%s4 + $0x3c] sm:$0xf]
      %v1040 = vld [vmem:[%s5] sm:$0x1]
      %v1041 = vpack.c.bf16 %v977, %v974
      %v1042 = vpack.c.bf16 %v1021, %v1018
      %v1044 = vlaneseq
      %v1045 = vshrl.u32 %v1044, 7
      %v1046 = vsub.s32 0, %v1045
      %v1047 = vrot.slane %v1040, %v1046
      %v1065 = vunpack.c.l.b16 %v1024
      %v1066 = vunpack.c.l.b16 %v1025
      %v1067 = vunpack.c.l.b16 %v1026
      %v1068 = vunpack.c.l.b16 %v1027
      %v1069 = vunpack.c.l.b16 %v1028
      %v1070 = vunpack.c.l.b16 %v1029
      %v1071 = vunpack.c.l.b16 %v1030
      %v1072 = vunpack.c.l.b16 %v1031
      %v1073 = vunpack.c.l.b16 %v1032
      %v1074 = vunpack.c.l.b16 %v1033
      %v1075 = vunpack.c.l.b16 %v1034
      %v1076 = vunpack.c.l.b16 %v1035
      %v1077 = vunpack.c.l.b16 %v1036
      %v1078 = vunpack.c.l.b16 %v1037
      %v1079 = vunpack.c.l.b16 %v1038
      %v1080 = vunpack.c.l.b16 %v1039
      %v1081 = vpack.c.b16 %v1066, %v1065
      %v1082 = vpack.c.b16 %v1068, %v1067
      %v1083 = vpack.c.b16 %v1070, %v1069
      %v1084 = vpack.c.b16 %v1072, %v1071
      %v1085 = vpack.c.b16 %v1074, %v1073
      %v1086 = vpack.c.b16 %v1076, %v1075
      %v1087 = vpack.c.b16 %v1078, %v1077
      %v1088 = vpack.c.b16 %v1080, %v1079
      %1097 = vmatprep.subr.bf16.mxu0 0
      %1098 = vmatpush1.bf16.msra.mxu0 %v1081
      %1099 = vmatprep.subr.bf16.mxu0 0
      %1100 = vmatpush1.bf16.msra.mxu0 %v1082
      %1101 = vmatprep.subr.bf16.mxu0 0
      %1102 = vmatpush1.bf16.msra.mxu0 %v1083
      %1103 = vmatprep.subr.bf16.mxu0 0
      %1104 = vmatpush1.bf16.msra.mxu0 %v1084
      %1105 = vmatprep.subr.bf16.mxu0 0
      %1106 = vmatpush1.bf16.msra.mxu0 %v1085
      %1107 = vmatprep.subr.bf16.mxu0 0
      %1108 = vmatpush1.bf16.msra.mxu0 %v1086
      %1109 = vmatprep.subr.bf16.mxu0 0
      %1110 = vmatpush1.bf16.msra.mxu0 %v1087
      %1111 = vmatprep.subr.bf16.mxu0 0
      %1112 = vmatpush1.bf16.msra.mxu0 %v1088
      %1113 = vmatprep.subr.bf16.mxu0 0
      %1114 = vmatpush1.bf16.msra.mxu0 0
      %1115 = vmatprep.subr.bf16.mxu0 0
      %1116 = vmatpush1.bf16.msra.mxu0 0
      %1117 = vmatprep.subr.bf16.mxu0 0
      %1118 = vmatpush1.bf16.msra.mxu0 0
      %1119 = vmatprep.subr.bf16.mxu0 0
      %1120 = vmatpush1.bf16.msra.mxu0 0
      %1121 = vmatprep.subr.bf16.mxu0 0
      %1122 = vmatpush1.bf16.msra.mxu0 0
      %1123 = vmatprep.subr.bf16.mxu0 0
      %1124 = vmatpush1.bf16.msra.mxu0 0
      %1125 = vmatprep.subr.bf16.mxu0 0
      %1126 = vmatpush1.bf16.msra.mxu0 0
      %1127 = vmatprep.subr.bf16.mxu0 0
      %1128 = vmatpush1.bf16.msra.mxu0 0
      %1129 = vmatprep.mubr.bf16.mxu0 0
      %1130 = vmatmul.mubr.bf16.gmra.mrb[0].mxu0 %v1041
      %v1131 = vpop.f32.mrb[0].mxu0
      %v1132 = vadd.f32 %v1047, %v1131
      %v1133 = vpop.f32.mrb[0].mxu0
      %v1134 = vpop.f32.mrb[0].mxu0
      %v1135 = vadd.f32 %v1047, %v1134
      %v1136 = vpop.f32.mrb[0].mxu0
      %1137 = vmatprep.mubr.bf16.mxu0 0
      %1138 = vmatmul.mubr.bf16.gmra.mrb[0].mxu0 %v1042
      %v1139 = vpop.f32.mrb[0].mxu0
      %v1140 = vadd.f32 %v1047, %v1139
      %v1141 = vpop.f32.mrb[0].mxu0
      %v1142 = vpop.f32.mrb[0].mxu0
      %v1143 = vadd.f32 %v1047, %v1142
      %v1144 = vpop.f32.mrb[0].mxu0
      %1145 = vdwg.mxu0
      %v1146 = vadd.f32 %v496, %v1132
      %v1147 = vadd.f32 %v497, %v1135
      %v1148 = vadd.f32 %v498, %v1140
      %v1149 = vadd.f32 %v499, %v1143
      %v1150 = vld [vmem:[%s6] sm:$0x1]
      %v1151 = vld [vmem:[%s7] sm:$0x1]
      %1152 = vadd.xlane.f32.xlu0 %v1146
      %v1153 = vpop.xlane.xlu0 %1152
      %1154 = vadd.xlane.f32.xlu0 %v1147
      %v1155 = vpop.xlane.xlu0 %1154
      %1156 = vadd.xlane.f32.xlu0 %v1148
      %v1157 = vpop.xlane.xlu0 %1156
      %1158 = vadd.xlane.f32.xlu0 %v1149
      %v1159 = vpop.xlane.xlu0 %1158
      %v1160 = vrcp.pop 128.0
      %v1161 = vmul.f32 %v1153, %v1160
      %v1162 = vmul.f32 %v1155, %v1160
      %v1163 = vmul.f32 %v1157, %v1160
      %v1164 = vmul.f32 %v1159, %v1160
      %v1165 = vsub.f32 %v1146, %v1161
      %v1166 = vsub.f32 %v1147, %v1162
      %v1167 = vsub.f32 %v1148, %v1163
      %v1168 = vsub.f32 %v1149, %v1164
      %v1169 = vmul.f32 %v1165, %v1165
      %v1170 = vmul.f32 %v1166, %v1166
      %v1171 = vmul.f32 %v1167, %v1167
      %v1172 = vmul.f32 %v1168, %v1168
      %1173 = vadd.xlane.f32.xlu0 %v1169
      %v1174 = vpop.xlane.xlu0 %1173
      %1175 = vadd.xlane.f32.xlu0 %v1170
      %v1176 = vpop.xlane.xlu0 %1175
      %1177 = vadd.xlane.f32.xlu0 %v1171
      %v1178 = vpop.xlane.xlu0 %1177
      %1179 = vadd.xlane.f32.xlu0 %v1172
      %v1180 = vpop.xlane.xlu0 %1179
      %v1181 = vmul.f32 %v1174, %v1160
      %v1182 = vmul.f32 %v1176, %v1160
      %v1183 = vmul.f32 %v1178, %v1160
      %v1184 = vmul.f32 %v1180, %v1160
      %v1185 = vadd.f32 %v1181, 1e-05
      %v1186 = vadd.f32 %v1182, 1e-05
      %v1187 = vadd.f32 %v1183, 1e-05
      %v1188 = vadd.f32 %v1184, 1e-05
      %v1189 = vrsqrt.pop %v1185
      %v1190 = vrsqrt.pop %v1186
      %v1191 = vrsqrt.pop %v1187
      %v1192 = vrsqrt.pop %v1188
      %v1193 = vmul.f32 %v1165, %v1189
      %v1194 = vmul.f32 %v1166, %v1190
      %v1195 = vmul.f32 %v1167, %v1191
      %v1196 = vmul.f32 %v1168, %v1192
      %v1198 = vlaneseq
      %v1199 = vshrl.u32 %v1198, 7
      %v1200 = vsub.s32 0, %v1199
      %v1201 = vrot.slane %v1150, %v1200
      %v1203 = vmul.f32 %v1193, %v1201
      %v1204 = vmul.f32 %v1194, %v1201
      %v1205 = vmul.f32 %v1195, %v1201
      %v1206 = vmul.f32 %v1196, %v1201
      %v1208 = vlaneseq
      %v1209 = vshrl.u32 %v1208, 7
      %v1210 = vsub.s32 0, %v1209
      %v1211 = vrot.slane %v1151, %v1210
      %v1213 = vadd.f32 %v1203, %v1211
      %v1214 = vadd.f32 %v1204, %v1211
      %v1215 = vadd.f32 %v1205, %v1211
      %v1216 = vadd.f32 %v1206, %v1211
      %v1217 = vld [vmem:[%s8] sm:$0xff]
      %v1218 = vld [vmem:[%s8 + $0x8] sm:$0xff]
      %v1219 = vld [vmem:[%s8 + $0x10] sm:$0xff]
      %v1220 = vld [vmem:[%s8 + $0x18] sm:$0xff]
      %v1221 = vld [vmem:[%s8 + $0x20] sm:$0xff]
      %v1222 = vld [vmem:[%s8 + $0x28] sm:$0xff]
      %v1223 = vld [vmem:[%s8 + $0x30] sm:$0xff]
      %v1224 = vld [vmem:[%s8 + $0x38] sm:$0xff]
      %v1225 = vld [vmem:[%s8 + $0x40] sm:$0xff]
      %v1226 = vld [vmem:[%s8 + $0x48] sm:$0xff]
      %v1227 = vld [vmem:[%s8 + $0x50] sm:$0xff]
      %v1228 = vld [vmem:[%s8 + $0x58] sm:$0xff]
      %v1229 = vld [vmem:[%s8 + $0x60] sm:$0xff]
      %v1230 = vld [vmem:[%s8 + $0x68] sm:$0xff]
      %v1231 = vld [vmem:[%s8 + $0x70] sm:$0xff]
      %v1232 = vld [vmem:[%s8 + $0x78] sm:$0xff]
      %v1233 = vld [vmem:[%s9] sm:$0x3]
      %v1234 = vpack.c.bf16 %v1214, %v1213
      %v1235 = vpack.c.bf16 %v1216, %v1215
      %v1237 = vlaneseq
      %v1238 = vshrl.u32 %v1237, 7
      %v1239 = vsub.s32 0, %v1238
      %v1240 = vrot.slane %v1233, %v1239
      %v1241 = vlaneseq
      %v1242 = vshrl.u32 %v1241, 7
      %v1243 = vsub.s32 1, %v1242
      %v1244 = vrot.slane %v1233, %v1243
      %v1263 = vunpack.c.l.b16 %v1217
      %v1264 = vunpack.c.h.b16 %v1217
      %v1265 = vunpack.c.l.b16 %v1218
      %v1266 = vunpack.c.h.b16 %v1218
      %v1267 = vunpack.c.l.b16 %v1219
      %v1268 = vunpack.c.h.b16 %v1219
      %v1269 = vunpack.c.l.b16 %v1220
      %v1270 = vunpack.c.h.b16 %v1220
      %v1271 = vunpack.c.l.b16 %v1221
      %v1272 = vunpack.c.h.b16 %v1221
      %v1273 = vunpack.c.l.b16 %v1222
      %v1274 = vunpack.c.h.b16 %v1222
      %v1275 = vunpack.c.l.b16 %v1223
      %v1276 = vunpack.c.h.b16 %v1223
      %v1277 = vunpack.c.l.b16 %v1224
      %v1278 = vunpack.c.h.b16 %v1224
      %v1279 = vunpack.c.l.b16 %v1225
      %v1280 = vunpack.c.h.b16 %v1225
      %v1281 = vunpack.c.l.b16 %v1226
      %v1282 = vunpack.c.h.b16 %v1226
      %v1283 = vunpack.c.l.b16 %v1227
      %v1284 = vunpack.c.h.b16 %v1227
      %v1285 = vunpack.c.l.b16 %v1228
      %v1286 = vunpack.c.h.b16 %v1228
      %v1287 = vunpack.c.l.b16 %v1229
      %v1288 = vunpack.c.h.b16 %v1229
      %v1289 = vunpack.c.l.b16 %v1230
      %v1290 = vunpack.c.h.b16 %v1230
      %v1291 = vunpack.c.l.b16 %v1231
      %v1292 = vunpack.c.h.b16 %v1231
      %v1293 = vunpack.c.l.b16 %v1232
      %v1294 = vunpack.c.h.b16 %v1232
      %v1295 = vpack.c.b16 %v1265, %v1263
      %v1296 = vpack.c.b16 %v1266, %v1264
      %v1297 = vpack.c.b16 %v1269, %v1267
      %v1298 = vpack.c.b16 %v1270, %v1268
      %v1299 = vpack.c.b16 %v1273, %v1271
      %v1300 = vpack.c.b16 %v1274, %v1272
      %v1301 = vpack.c.b16 %v1277, %v1275
      %v1302 = vpack.c.b16 %v1278, %v1276
      %v1303 = vpack.c.b16 %v1281, %v1279
      %v1304 = vpack.c.b16 %v1282, %v1280
      %v1305 = vpack.c.b16 %v1285, %v1283
      %v1306 = vpack.c.b16 %v1286, %v1284
      %v1307 = vpack.c.b16 %v1289, %v1287
      %v1308 = vpack.c.b16 %v1290, %v1288
      %v1309 = vpack.c.b16 %v1293, %v1291
      %v1310 = vpack.c.b16 %v1294, %v1292
      %1327 = vmatprep.subr.bf16.mxu0 %v1296
      %1328 = vmatpush1.bf16.msra.mxu0 %v1295
      %1329 = vmatprep.subr.bf16.mxu0 %v1298
      %1330 = vmatpush1.bf16.msra.mxu0 %v1297
      %1331 = vmatprep.subr.bf16.mxu0 %v1300
      %1332 = vmatpush1.bf16.msra.mxu0 %v1299
      %1333 = vmatprep.subr.bf16.mxu0 %v1302
      %1334 = vmatpush1.bf16.msra.mxu0 %v1301
      %1335 = vmatprep.subr.bf16.mxu0 %v1304
      %1336 = vmatpush1.bf16.msra.mxu0 %v1303
      %1337 = vmatprep.subr.bf16.mxu0 %v1306
      %1338 = vmatpush1.bf16.msra.mxu0 %v1305
      %1339 = vmatprep.subr.bf16.mxu0 %v1308
      %1340 = vmatpush1.bf16.msra.mxu0 %v1307
      %1341 = vmatprep.subr.bf16.mxu0 %v1310
      %1342 = vmatpush1.bf16.msra.mxu0 %v1309
      %1343 = vmatprep.subr.bf16.mxu0 0
      %1344 = vmatpush1.bf16.msra.mxu0 0
      %1345 = vmatprep.subr.bf16.mxu0 0
      %1346 = vmatpush1.bf16.msra.mxu0 0
      %1347 = vmatprep.subr.bf16.mxu0 0
      %1348 = vmatpush1.bf16.msra.mxu0 0
      %1349 = vmatprep.subr.bf16.mxu0 0
      %1350 = vmatpush1.bf16.msra.mxu0 0
      %1351 = vmatprep.subr.bf16.mxu0 0
      %1352 = vmatpush1.bf16.msra.mxu0 0
      %1353 = vmatprep.subr.bf16.mxu0 0
      %1354 = vmatpush1.bf16.msra.mxu0 0
      %1355 = vmatprep.subr.bf16.mxu0 0
      %1356 = vmatpush1.bf16.msra.mxu0 0
      %1357 = vmatprep.subr.bf16.mxu0 0
      %1358 = vmatpush1.bf16.msra.mxu0 0
      %1359 = vmatprep.mubr.bf16.mxu0 0
      %1360 = vmatmul.mubr.bf16.gmra.mrb[0].mxu0 %v1234
      %v1361 = vpop.f32.mrb[0].mxu0
      %v1362 = vadd.f32 %v1240, %v1361
      %v1363 = vpop.f32.mrb[0].mxu0
      %v1364 = vadd.f32 %v1244, %v1363
      %v1365 = vpop.f32.mrb[0].mxu0
      %v1366 = vadd.f32 %v1240, %v1365
      %v1367 = vpop.f32.mrb[0].mxu0
      %v1368 = vadd.f32 %v1244, %v1367
      %1369 = vmatprep.mubr.bf16.mxu0 0
      %1370 = vmatmul.mubr.bf16.gmra.mrb[0].mxu0 %v1235
      %v1371 = vpop.f32.mrb[0].mxu0
      %v1372 = vadd.f32 %v1240, %v1371
      %v1373 = vpop.f32.mrb[0].mxu0
      %v1374 = vadd.f32 %v1244, %v1373
      %v1375 = vpop.f32.mrb[0].mxu0
      %v1376 = vadd.f32 %v1240, %v1375
      %v1377 = vpop.f32.mrb[0].mxu0
      %v1378 = vadd.f32 %v1244, %v1377
      %1379 = vdwg.mxu0
      %v1380 = vmax.f32 %v1362, 0.0
      %v1381 = vmax.f32 %v1364, 0.0
      %v1382 = vmax.f32 %v1366, 0.0
      %v1383 = vmax.f32 %v1368, 0.0
      %v1384 = vmax.f32 %v1372, 0.0
      %v1385 = vmax.f32 %v1374, 0.0
      %v1386 = vmax.f32 %v1376, 0.0
      %v1387 = vmax.f32 %v1378, 0.0
      %v1388 = vld [vmem:[%s10] sm:$0xf]
      %v1389 = vld [vmem:[%s10 + $0x4] sm:$0xf]
      %v1390 = vld [vmem:[%s10 + $0x8] sm:$0xf]
      %v1391 = vld [vmem:[%s10 + $0xc] sm:$0xf]
      %v1392 = vld [vmem:[%s10 + $0x10] sm:$0xf]
      %v1393 = vld [vmem:[%s10 + $0x14] sm:$0xf]
      %v1394 = vld [vmem:[%s10 + $0x18] sm:$0xf]
      %v1395 = vld [vmem:[%s10 + $0x1c] sm:$0xf]
      %v1396 = vld [vmem:[%s10 + $0x20] sm:$0xf]
      %v1397 = vld [vmem:[%s10 + $0x24] sm:$0xf]
      %v1398 = vld [vmem:[%s10 + $0x28] sm:$0xf]
      %v1399 = vld [vmem:[%s10 + $0x2c] sm:$0xf]
      %v1400 = vld [vmem:[%s10 + $0x30] sm:$0xf]
      %v1401 = vld [vmem:[%s10 + $0x34] sm:$0xf]
      %v1402 = vld [vmem:[%s10 + $0x38] sm:$0xf]
      %v1403 = vld [vmem:[%s10 + $0x3c] sm:$0xf]
      %v1404 = vld [vmem:[%s10 + $0x40] sm:$0xf]
      %v1405 = vld [vmem:[%s10 + $0x44] sm:$0xf]
      %v1406 = vld [vmem:[%s10 + $0x48] sm:$0xf]
      %v1407 = vld [vmem:[%s10 + $0x4c] sm:$0xf]
      %v1408 = vld [vmem:[%s10 + $0x50] sm:$0xf]
      %v1409 = vld [vmem:[%s10 + $0x54] sm:$0xf]
      %v1410 = vld [vmem:[%s10 + $0x58] sm:$0xf]
      %v1411 = vld [vmem:[%s10 + $0x5c] sm:$0xf]
      %v1412 = vld [vmem:[%s10 + $0x60] sm:$0xf]
      %v1413 = vld [vmem:[%s10 + $0x64] sm:$0xf]
      %v1414 = vld [vmem:[%s10 + $0x68] sm:$0xf]
      %v1415 = vld [vmem:[%s10 + $0x6c] sm:$0xf]
      %v1416 = vld [vmem:[%s10 + $0x70] sm:$0xf]
      %v1417 = vld [vmem:[%s10 + $0x74] sm:$0xf]
      %v1418 = vld [vmem:[%s10 + $0x78] sm:$0xf]
      %v1419 = vld [vmem:[%s10 + $0x7c] sm:$0xf]
      %v1420 = vld [vmem:[%s11] sm:$0x1]
      %v1421 = vpack.c.bf16 %v1382, %v1380
      %v1422 = vpack.c.bf16 %v1383, %v1381
      %v1423 = vpack.c.bf16 %v1386, %v1384
      %v1424 = vpack.c.bf16 %v1387, %v1385
      %v1426 = vlaneseq
      %v1427 = vshrl.u32 %v1426, 7
      %v1428 = vsub.s32 0, %v1427
      %v1429 = vrot.slane %v1420, %v1428
      %v1463 = vunpack.c.l.b16 %v1388
      %v1464 = vunpack.c.l.b16 %v1389
      %v1465 = vunpack.c.l.b16 %v1390
      %v1466 = vunpack.c.l.b16 %v1391
      %v1467 = vunpack.c.l.b16 %v1392
      %v1468 = vunpack.c.l.b16 %v1393
      %v1469 = vunpack.c.l.b16 %v1394
      %v1470 = vunpack.c.l.b16 %v1395
      %v1471 = vunpack.c.l.b16 %v1396
      %v1472 = vunpack.c.l.b16 %v1397
      %v1473 = vunpack.c.l.b16 %v1398
      %v1474 = vunpack.c.l.b16 %v1399
      %v1475 = vunpack.c.l.b16 %v1400
      %v1476 = vunpack.c.l.b16 %v1401
      %v1477 = vunpack.c.l.b16 %v1402
      %v1478 = vunpack.c.l.b16 %v1403
      %v1479 = vunpack.c.l.b16 %v1404
      %v1480 = vunpack.c.l.b16 %v1405
      %v1481 = vunpack.c.l.b16 %v1406
      %v1482 = vunpack.c.l.b16 %v1407
      %v1483 = vunpack.c.l.b16 %v1408
      %v1484 = vunpack.c.l.b16 %v1409
      %v1485 = vunpack.c.l.b16 %v1410
      %v1486 = vunpack.c.l.b16 %v1411
      %v1487 = vunpack.c.l.b16 %v1412
      %v1488 = vunpack.c.l.b16 %v1413
      %v1489 = vunpack.c.l.b16 %v1414
      %v1490 = vunpack.c.l.b16 %v1415
      %v1491 = vunpack.c.l.b16 %v1416
      %v1492 = vunpack.c.l.b16 %v1417
      %v1493 = vunpack.c.l.b16 %v1418
      %v1494 = vunpack.c.l.b16 %v1419
      %v1495 = vpack.c.b16 %v1464, %v1463
      %v1496 = vpack.c.b16 %v1466, %v1465
      %v1497 = vpack.c.b16 %v1468, %v1467
      %v1498 = vpack.c.b16 %v1470, %v1469
      %v1499 = vpack.c.b16 %v1472, %v1471
      %v1500 = vpack.c.b16 %v1474, %v1473
      %v1501 = vpack.c.b16 %v1476, %v1475
      %v1502 = vpack.c.b16 %v1478, %v1477
      %v1503 = vpack.c.b16 %v1480, %v1479
      %v1504 = vpack.c.b16 %v1482, %v1481
      %v1505 = vpack.c.b16 %v1484, %v1483
      %v1506 = vpack.c.b16 %v1486, %v1485
      %v1507 = vpack.c.b16 %v1488, %v1487
      %v1508 = vpack.c.b16 %v1490, %v1489
      %v1509 = vpack.c.b16 %v1492, %v1491
      %v1510 = vpack.c.b16 %v1494, %v1493
      %1527 = vmatprep.subr.bf16.mxu0 0
      %1528 = vmatpush1.bf16.msra.mxu0 %v1495
      %1529 = vmatprep.subr.bf16.mxu0 0
      %1530 = vmatpush1.bf16.msra.mxu0 %v1496
      %1531 = vmatprep.subr.bf16.mxu0 0
      %1532 = vmatpush1.bf16.msra.mxu0 %v1497
      %1533 = vmatprep.subr.bf16.mxu0 0
      %1534 = vmatpush1.bf16.msra.mxu0 %v1498
      %1535 = vmatprep.subr.bf16.mxu0 0
      %1536 = vmatpush1.bf16.msra.mxu0 %v1499
      %1537 = vmatprep.subr.bf16.mxu0 0
      %1538 = vmatpush1.bf16.msra.mxu0 %v1500
      %1539 = vmatprep.subr.bf16.mxu0 0
      %1540 = vmatpush1.bf16.msra.mxu0 %v1501
      %1541 = vmatprep.subr.bf16.mxu0 0
      %1542 = vmatpush1.bf16.msra.mxu0 %v1502
      %1543 = vmatprep.subr.bf16.mxu0 0
      %1544 = vmatpush1.bf16.msra.mxu0 %v1503
      %1545 = vmatprep.subr.bf16.mxu0 0
      %1546 = vmatpush1.bf16.msra.mxu0 %v1504
      %1547 = vmatprep.subr.bf16.mxu0 0
      %1548 = vmatpush1.bf16.msra.mxu0 %v1505
      %1549 = vmatprep.subr.bf16.mxu0 0
      %1550 = vmatpush1.bf16.msra.mxu0 %v1506
      %1551 = vmatprep.subr.bf16.mxu0 0
      %1552 = vmatpush1.bf16.msra.mxu0 %v1507
      %1553 = vmatprep.subr.bf16.mxu0 0
      %1554 = vmatpush1.bf16.msra.mxu0 %v1508
      %1555 = vmatprep.subr.bf16.mxu0 0
      %1556 = vmatpush1.bf16.msra.mxu0 %v1509
      %1557 = vmatprep.subr.bf16.mxu0 0
      %1558 = vmatpush1.bf16.msra.mxu0 %v1510
      %1559 = vmatprep.mubr.bf16.mxu0 %v1422
      %1560 = vmatmul.mubr.bf16.gmra.mrb[0].mxu0 %v1421
      %v1561 = vpop.f32.mrb[0].mxu0
      %v1562 = vadd.f32 %v1429, %v1561
      %v1563 = vpop.f32.mrb[0].mxu0
      %v1564 = vpop.f32.mrb[0].mxu0
      %v1565 = vadd.f32 %v1429, %v1564
      %v1566 = vpop.f32.mrb[0].mxu0
      %1567 = vmatprep.mubr.bf16.mxu0 %v1424
      %1568 = vmatmul.mubr.bf16.gmra.mrb[0].mxu0 %v1423
      %v1569 = vpop.f32.mrb[0].mxu0
      %v1570 = vadd.f32 %v1429, %v1569
      %v1571 = vpop.f32.mrb[0].mxu0
      %v1572 = vpop.f32.mrb[0].mxu0
      %v1573 = vadd.f32 %v1429, %v1572
      %v1574 = vpop.f32.mrb[0].mxu0
      %1575 = vdwg.mxu0
      %v1576 = vadd.f32 %v1213, %v1562
      %v1577 = vadd.f32 %v1214, %v1565
      %v1578 = vadd.f32 %v1215, %v1570
      %v1579 = vadd.f32 %v1216, %v1573
      %v1580 = vld [vmem:[%s12] sm:$0x1]
      %v1581 = vld [vmem:[%s13] sm:$0x1]
      %1582 = vadd.xlane.f32.xlu0 %v1576
      %v1583 = vpop.xlane.xlu0 %1582
      %1584 = vadd.xlane.f32.xlu0 %v1577
      %v1585 = vpop.xlane.xlu0 %1584
      %1586 = vadd.xlane.f32.xlu0 %v1578
      %v1587 = vpop.xlane.xlu0 %1586
      %1588 = vadd.xlane.f32.xlu0 %v1579
      %v1589 = vpop.xlane.xlu0 %1588
      %v1590 = vmul.f32 %v1583, %v1160
      %v1591 = vmul.f32 %v1585, %v1160
      %v1592 = vmul.f32 %v1587, %v1160
      %v1593 = vmul.f32 %v1589, %v1160
      %v1594 = vsub.f32 %v1576, %v1590
      %v1595 = vsub.f32 %v1577, %v1591
      %v1596 = vsub.f32 %v1578, %v1592
      %v1597 = vsub.f32 %v1579, %v1593
      %v1598 = vmul.f32 %v1594, %v1594
      %v1599 = vmul.f32 %v1595, %v1595
      %v1600 = vmul.f32 %v1596, %v1596
      %v1601 = vmul.f32 %v1597, %v1597
      %1602 = vadd.xlane.f32.xlu0 %v1598
      %v1603 = vpop.xlane.xlu0 %1602
      %1604 = vadd.xlane.f32.xlu0 %v1599
      %v1605 = vpop.xlane.xlu0 %1604
      %1606 = vadd.xlane.f32.xlu0 %v1600
      %v1607 = vpop.xlane.xlu0 %1606
      %1608 = vadd.xlane.f32.xlu0 %v1601
      %v1609 = vpop.xlane.xlu0 %1608
      %v1610 = vmul.f32 %v1603, %v1160
      %v1611 = vmul.f32 %v1605, %v1160
      %v1612 = vmul.f32 %v1607, %v1160
      %v1613 = vmul.f32 %v1609, %v1160
      %v1614 = vadd.f32 %v1610, 1e-05
      %v1615 = vadd.f32 %v1611, 1e-05
      %v1616 = vadd.f32 %v1612, 1e-05
      %v1617 = vadd.f32 %v1613, 1e-05
      %v1618 = vrsqrt.pop %v1614
      %v1619 = vrsqrt.pop %v1615
      %v1620 = vrsqrt.pop %v1616
      %v1621 = vrsqrt.pop %v1617
      %v1622 = vmul.f32 %v1594, %v1618
      %v1623 = vmul.f32 %v1595, %v1619
      %v1624 = vmul.f32 %v1596, %v1620
      %v1625 = vmul.f32 %v1597, %v1621
      %v1627 = vlaneseq
      %v1628 = vshrl.u32 %v1627, 7
      %v1629 = vsub.s32 0, %v1628
      %v1630 = vrot.slane %v1580, %v1629
      %v1632 = vmul.f32 %v1622, %v1630
      %v1633 = vmul.f32 %v1623, %v1630
      %v1634 = vmul.f32 %v1624, %v1630
      %v1635 = vmul.f32 %v1625, %v1630
      %v1637 = vlaneseq
      %v1638 = vshrl.u32 %v1637, 7
      %v1639 = vsub.s32 0, %v1638
      %v1640 = vrot.slane %v1581, %v1639
      %v1642 = vadd.f32 %v1632, %v1640
      %v1643 = vadd.f32 %v1633, %v1640
      %v1644 = vadd.f32 %v1634, %v1640
      %v1645 = vadd.f32 %v1635, %v1640
      %1646 = vst [vmem:[%s493] sm:$0xff] %v1642
      %1647 = vst [vmem:[%s493 + $0x8] sm:$0xff] %v1643
      %1648 = vst [vmem:[%s493 + $0x10] sm:$0xff] %v1644
      %1649 = vst [vmem:[%s493 + $0x18] sm:$0xff] %v1645
      %s1650 = smul.u32 2, %s25
      %p1651 = scmp.lt.s32.totalorder %s1650, 3
      %s1652 = scalar_select %p1651, %s1650, 3
      %s1653 = smul.addr %s1652, 2
      %s1654 = smul.addr %s1653, 8
      %s1655 = scalar_lea.vmem %s14, %s1654
      // Predicated region
      $region77: #{personalized_headline_forward.4} parent=75 // pred_check
        %p1656 = pneg %p347
      $region78: #{personalized_headline_forward.4} parent=75 // pred_check_branch
        %1658 = sbr.rel (%p1656) target = $region80
      $region79: #{personalized_headline_forward.4} parent=75 // pred_region
        %s1659 = smul.u32 2, %s25
      $region80: #{personalized_headline_forward.4} parent=75 // pred_fallthru
        _
    $region76: #{personalized_headline_forward.4} parent=5 // pred_fallthru
      _
    %p1660 = scmp.le.s32.totalorder 2, %s20
    // Predicated region
    $region81: #{personalized_headline_forward.4} parent=5 // pred_check
      %p1661 = pneg %p1660
    $region82: #{personalized_headline_forward.4} parent=5 // pred_check_branch
      %1663 = sbr.rel (%p1661) target = $region84
    $region83: #{personalized_headline_forward.4} parent=5 // pred_region
      %s1664 = ssub.s32 %s20, 2
      // Predicated region
      $region85: #{personalized_headline_forward.4} parent=83 // pred_check
        %p1665 = pneg %p353
      $region86: #{personalized_headline_forward.4} parent=83 // pred_check_branch
        %1667 = sbr.rel (%p1665) target = $region88
      $region87: #{personalized_headline_forward.4} parent=83 // pred_region
        %s1668 = smul.u32 2, %s26
        %p1669 = scmp.lt.s32.totalorder %s1668, 3
        %s1670 = scalar_select %p1669, %s1668, 3
        %s1671 = smul.addr %s1670, 2
        %s1672 = smul.addr %s1671, 8
        %s1673 = scalar_lea.vmem %s14, %s1672
      $region88: #{personalized_headline_forward.4} parent=83 // pred_fallthru
        _
    $region84: #{personalized_headline_forward.4} parent=5 // pred_fallthru
      _
  $region6: #{personalized_headline_forward.4} parent=0 // loop_footer
    %s24 = sadd.s32 1, %s20
  $region7: #{personalized_headline_forward.4} parent=0 // loop_footer_branch
    %19 = sbr.rel target = $region3
  $region8: #{personalized_headline_forward.4} parent=0 // loop_exit
    _

// kernel: personalized_headline_forward.3
$region0: #{personalized_headline_forward.3}
  #allocation0 [shape = 'u32[]', space=smem, size = 0x4, offset = 0x4, fixed_abs, tag = 'smem constant byte address 0x4 - core index']
  #allocation1 [shape = 'u32[144,128]{1,0:T(1,128)}', space=vmem, size = 0x12000, scoped, tag = 'internal scratch']
  %s0 = inlined_call_operand.vmem [shape: f32[4,4,8,128], index: 0, kind: input, shape index: {}]
  %s1 = inlined_call_operand.vmem [shape: f32[4,4,128], index: 1, kind: input, shape index: {}]
  %s2 = inlined_call_operand.vmem [shape: f32[4,4,1], index: 2, kind: input, shape index: {}]
  %s3 = inlined_call_operand.vmem [shape: bf16[384,128], index: 3, kind: input, shape index: {}]
  %s4 = inlined_call_operand.vmem [shape: f32[1,128], index: 4, kind: input, shape index: {}]
  %s5 = inlined_call_operand.vmem [shape: bf16[128,128], index: 5, kind: input, shape index: {}]
  %s6 = inlined_call_operand.vmem [shape: f32[1,128], index: 6, kind: input, shape index: {}]
  %s7 = inlined_call_operand.vmem [shape: bf16[128,1], index: 7, kind: input, shape index: {}]
  %s8 = inlined_call_operand.vmem [shape: bf16[128,128], index: 8, kind: input, shape index: {}]
  %s9 = inlined_call_operand.vmem [shape: f32[1,128], index: 9, kind: input, shape index: {}]
  %s10 = inlined_call_operand.vmem [shape: bf16[128,1], index: 10, kind: input, shape index: {}]
  %s11 = inlined_call_operand.vmem [shape: bf16[128,128], index: 11, kind: input, shape index: {}]
  %s12 = inlined_call_operand.vmem [shape: f32[1,128], index: 12, kind: input, shape index: {}]
  %s13 = inlined_call_operand.vmem [shape: f32[4,1,128], index: 13, kind: output, shape index: {}]
  %s14 = sld [smem:[#allocation0]]
  $region85: #{personalized_headline_forward.3} parent=0
    _
  %s16 = ssub.s32 1, %s14
  %s17 = scalar_select 0, %s16, %s14
  loop: start=0, step=1, limit=4
  $region2: #{personalized_headline_forward.3} parent=0 // loop_pre_header
    _
  $region3: #{personalized_headline_forward.3} parent=0 // loop_header
    %s19 = sphi 0, %s23
    %p20 = scmp.ge.s32.totalorder %s19, 4
    %s29 = sphi 0, %s31
    %s32 = sphi 0, %s29
    %s33 = sphi 0, %s32
    %s49 = sphi 0, %s33
    %s55 = sphi 0, %s57
    %s58 = sphi 0, %s55
    %s59 = sphi 0, %s58
    %s75 = sphi 0, %s59
    %s81 = sphi 0, %s83
    %s84 = sphi 0, %s81
    %s85 = sphi 0, %s84
    %s101 = sphi 0, %s85
    %s105 = sphi 0, %s105
    %s107 = sphi 0, %s105
    %s108 = sphi 0, %s107
    %s122 = sphi 0, %s108
    %s126 = sphi 0, %s126
    %s128 = sphi 0, %s126
    %s129 = sphi 0, %s128
    %s143 = sphi 0, %s129
    %s147 = sphi 0, %s147
    %s149 = sphi 0, %s147
    %s150 = sphi 0, %s149
    %s164 = sphi 0, %s150
    %s168 = sphi 0, %s168
    %s170 = sphi 0, %s168
    %s171 = sphi 0, %s170
    %s185 = sphi 0, %s171
    %s189 = sphi 0, %s189
    %s191 = sphi 0, %s189
    %s192 = sphi 0, %s191
    %s206 = sphi 0, %s192
    %s210 = sphi 0, %s210
    %s212 = sphi 0, %s210
    %s213 = sphi 0, %s212
    %s227 = sphi 0, %s213
    %s231 = sphi 0, %s231
    %s233 = sphi 0, %s231
    %s234 = sphi 0, %s233
    %s248 = sphi 0, %s234
    %s252 = sphi 0, %s252
    %s254 = sphi 0, %s252
    %s255 = sphi 0, %s254
    %s269 = sphi 0, %s255
    %s273 = sphi 0, %s273
    %s275 = sphi 0, %s273
    %s276 = sphi 0, %s275
    %s290 = sphi 0, %s276
    %s294 = sphi 0, %s294
    %s296 = sphi 0, %s294
    %s297 = sphi 0, %s296
    %s311 = sphi 0, %s297
    %s317 = sphi 0, %s319
    %s320 = sphi 0, %s317
    %s321 = sphi 0, %s320
    %s337 = sphi 0, %s321
  $region4: #{personalized_headline_forward.3} parent=0 // loop_header_branch
    %22 = sbr.rel (%p20) target = $region8
  $region5: #{personalized_headline_forward.3} parent=0 // loop_body
    %s24 = ssub.s32 %s19, 1
    %s25 = ssub.s32 %s19, 2
    %s26 = sadd.s32 %s19, 1
    %s27 = ssub.s32 %s19, %s26
    %p28 = scmp.eq.s32.totalorder %s27, 0
    %s30 = sadd.s32 %s29, 1
    %s31 = scalar_select %p28, %s29, %s30
    %p34 = pneg %p28
    %p35 = scmp.eq.s32.totalorder %s19, 1
    %p36 = por %p34, %p35
    %p37 = scmp.ne.s32.totalorder %s29, %s32
    %p38 = scmp.eq.s32.totalorder %s19, 0
    %p39 = por %p37, %p38
    %p40 = scmp.ne.s32.totalorder %s29, %s32
    %p41 = scmp.eq.s32.totalorder %s24, 1
    %p42 = por %p40, %p41
    %p43 = scmp.ne.s32.totalorder %s32, %s33
    %p44 = scmp.eq.s32.totalorder %s24, 0
    %p45 = por %p43, %p44
    %p46 = scmp.ne.s32.totalorder %s32, %s33
    %p47 = scmp.eq.s32.totalorder %s25, 1
    %p48 = por %p46, %p47
    %p50 = scmp.ne.s32.totalorder %s33, %s49
    %p51 = scmp.eq.s32.totalorder %s25, 0
    %p52 = por %p50, %p51
    %s53 = ssub.s32 %s19, %s26
    %p54 = scmp.eq.s32.totalorder %s53, 0
    %s56 = sadd.s32 %s55, 1
    %s57 = scalar_select %p54, %s55, %s56
    %p60 = pneg %p54
    %p61 = scmp.eq.s32.totalorder %s19, 1
    %p62 = por %p60, %p61
    %p63 = scmp.ne.s32.totalorder %s55, %s58
    %p64 = scmp.eq.s32.totalorder %s19, 0
    %p65 = por %p63, %p64
    %p66 = scmp.ne.s32.totalorder %s55, %s58
    %p67 = scmp.eq.s32.totalorder %s24, 1
    %p68 = por %p66, %p67
    %p69 = scmp.ne.s32.totalorder %s58, %s59
    %p70 = scmp.eq.s32.totalorder %s24, 0
    %p71 = por %p69, %p70
    %p72 = scmp.ne.s32.totalorder %s58, %s59
    %p73 = scmp.eq.s32.totalorder %s25, 1
    %p74 = por %p72, %p73
    %p76 = scmp.ne.s32.totalorder %s59, %s75
    %p77 = scmp.eq.s32.totalorder %s25, 0
    %p78 = por %p76, %p77
    %s79 = ssub.s32 %s19, %s26
    %p80 = scmp.eq.s32.totalorder %s79, 0
    %s82 = sadd.s32 %s81, 1
    %s83 = scalar_select %p80, %s81, %s82
    %p86 = pneg %p80
    %p87 = scmp.eq.s32.totalorder %s19, 1
    %p88 = por %p86, %p87
    %p89 = scmp.ne.s32.totalorder %s81, %s84
    %p90 = scmp.eq.s32.totalorder %s19, 0
    %p91 = por %p89, %p90
    %p92 = scmp.ne.s32.totalorder %s81, %s84
    %p93 = scmp.eq.s32.totalorder %s24, 1
    %p94 = por %p92, %p93
    %p95 = scmp.ne.s32.totalorder %s84, %s85
    %p96 = scmp.eq.s32.totalorder %s24, 0
    %p97 = por %p95, %p96
    %p98 = scmp.ne.s32.totalorder %s84, %s85
    %p99 = scmp.eq.s32.totalorder %s25, 1
    %p100 = por %p98, %p99
    %p102 = scmp.ne.s32.totalorder %s85, %s101
    %p103 = scmp.eq.s32.totalorder %s25, 0
    %p104 = por %p102, %p103
    %s106 = sadd.s32 %s105, 1
    %p109 = scmp.eq.s32.totalorder %s19, 1
    %p110 = scmp.ne.s32.totalorder %s105, %s107
    %p111 = scmp.eq.s32.totalorder %s19, 0
    %p112 = por %p110, %p111
    %p113 = scmp.ne.s32.totalorder %s105, %s107
    %p114 = scmp.eq.s32.totalorder %s24, 1
    %p115 = por %p113, %p114
    %p116 = scmp.ne.s32.totalorder %s107, %s108
    %p117 = scmp.eq.s32.totalorder %s24, 0
    %p118 = por %p116, %p117
    %p119 = scmp.ne.s32.totalorder %s107, %s108
    %p120 = scmp.eq.s32.totalorder %s25, 1
    %p121 = por %p119, %p120
    %p123 = scmp.ne.s32.totalorder %s108, %s122
    %p124 = scmp.eq.s32.totalorder %s25, 0
    %p125 = por %p123, %p124
    %s127 = sadd.s32 %s126, 1
    %p130 = scmp.eq.s32.totalorder %s19, 1
    %p131 = scmp.ne.s32.totalorder %s126, %s128
    %p132 = scmp.eq.s32.totalorder %s19, 0
    %p133 = por %p131, %p132
    %p134 = scmp.ne.s32.totalorder %s126, %s128
    %p135 = scmp.eq.s32.totalorder %s24, 1
    %p136 = por %p134, %p135
    %p137 = scmp.ne.s32.totalorder %s128, %s129
    %p138 = scmp.eq.s32.totalorder %s24, 0
    %p139 = por %p137, %p138
    %p140 = scmp.ne.s32.totalorder %s128, %s129
    %p141 = scmp.eq.s32.totalorder %s25, 1
    %p142 = por %p140, %p141
    %p144 = scmp.ne.s32.totalorder %s129, %s143
    %p145 = scmp.eq.s32.totalorder %s25, 0
    %p146 = por %p144, %p145
    %s148 = sadd.s32 %s147, 1
    %p151 = scmp.eq.s32.totalorder %s19, 1
    %p152 = scmp.ne.s32.totalorder %s147, %s149
    %p153 = scmp.eq.s32.totalorder %s19, 0
    %p154 = por %p152, %p153
    %p155 = scmp.ne.s32.totalorder %s147, %s149
    %p156 = scmp.eq.s32.totalorder %s24, 1
    %p157 = por %p155, %p156
    %p158 = scmp.ne.s32.totalorder %s149, %s150
    %p159 = scmp.eq.s32.totalorder %s24, 0
    %p160 = por %p158, %p159
    %p161 = scmp.ne.s32.totalorder %s149, %s150
    %p162 = scmp.eq.s32.totalorder %s25, 1
    %p163 = por %p161, %p162
    %p165 = scmp.ne.s32.totalorder %s150, %s164
    %p166 = scmp.eq.s32.totalorder %s25, 0
    %p167 = por %p165, %p166
    %s169 = sadd.s32 %s168, 1
    %p172 = scmp.eq.s32.totalorder %s19, 1
    %p173 = scmp.ne.s32.totalorder %s168, %s170
    %p174 = scmp.eq.s32.totalorder %s19, 0
    %p175 = por %p173, %p174
    %p176 = scmp.ne.s32.totalorder %s168, %s170
    %p177 = scmp.eq.s32.totalorder %s24, 1
    %p178 = por %p176, %p177
    %p179 = scmp.ne.s32.totalorder %s170, %s171
    %p180 = scmp.eq.s32.totalorder %s24, 0
    %p181 = por %p179, %p180
    %p182 = scmp.ne.s32.totalorder %s170, %s171
    %p183 = scmp.eq.s32.totalorder %s25, 1
    %p184 = por %p182, %p183
    %p186 = scmp.ne.s32.totalorder %s171, %s185
    %p187 = scmp.eq.s32.totalorder %s25, 0
    %p188 = por %p186, %p187
    %s190 = sadd.s32 %s189, 1
    %p193 = scmp.eq.s32.totalorder %s19, 1
    %p194 = scmp.ne.s32.totalorder %s189, %s191
    %p195 = scmp.eq.s32.totalorder %s19, 0
    %p196 = por %p194, %p195
    %p197 = scmp.ne.s32.totalorder %s189, %s191
    %p198 = scmp.eq.s32.totalorder %s24, 1
    %p199 = por %p197, %p198
    %p200 = scmp.ne.s32.totalorder %s191, %s192
    %p201 = scmp.eq.s32.totalorder %s24, 0
    %p202 = por %p200, %p201
    %p203 = scmp.ne.s32.totalorder %s191, %s192
    %p204 = scmp.eq.s32.totalorder %s25, 1
    %p205 = por %p203, %p204
    %p207 = scmp.ne.s32.totalorder %s192, %s206
    %p208 = scmp.eq.s32.totalorder %s25, 0
    %p209 = por %p207, %p208
    %s211 = sadd.s32 %s210, 1
    %p214 = scmp.eq.s32.totalorder %s19, 1
    %p215 = scmp.ne.s32.totalorder %s210, %s212
    %p216 = scmp.eq.s32.totalorder %s19, 0
    %p217 = por %p215, %p216
    %p218 = scmp.ne.s32.totalorder %s210, %s212
    %p219 = scmp.eq.s32.totalorder %s24, 1
    %p220 = por %p218, %p219
    %p221 = scmp.ne.s32.totalorder %s212, %s213
    %p222 = scmp.eq.s32.totalorder %s24, 0
    %p223 = por %p221, %p222
    %p224 = scmp.ne.s32.totalorder %s212, %s213
    %p225 = scmp.eq.s32.totalorder %s25, 1
    %p226 = por %p224, %p225
    %p228 = scmp.ne.s32.totalorder %s213, %s227
    %p229 = scmp.eq.s32.totalorder %s25, 0
    %p230 = por %p228, %p229
    %s232 = sadd.s32 %s231, 1
    %p235 = scmp.eq.s32.totalorder %s19, 1
    %p236 = scmp.ne.s32.totalorder %s231, %s233
    %p237 = scmp.eq.s32.totalorder %s19, 0
    %p238 = por %p236, %p237
    %p239 = scmp.ne.s32.totalorder %s231, %s233
    %p240 = scmp.eq.s32.totalorder %s24, 1
    %p241 = por %p239, %p240
    %p242 = scmp.ne.s32.totalorder %s233, %s234
    %p243 = scmp.eq.s32.totalorder %s24, 0
    %p244 = por %p242, %p243
    %p245 = scmp.ne.s32.totalorder %s233, %s234
    %p246 = scmp.eq.s32.totalorder %s25, 1
    %p247 = por %p245, %p246
    %p249 = scmp.ne.s32.totalorder %s234, %s248
    %p250 = scmp.eq.s32.totalorder %s25, 0
    %p251 = por %p249, %p250
    %s253 = sadd.s32 %s252, 1
    %p256 = scmp.eq.s32.totalorder %s19, 1
    %p257 = scmp.ne.s32.totalorder %s252, %s254
    %p258 = scmp.eq.s32.totalorder %s19, 0
    %p259 = por %p257, %p258
    %p260 = scmp.ne.s32.totalorder %s252, %s254
    %p261 = scmp.eq.s32.totalorder %s24, 1
    %p262 = por %p260, %p261
    %p263 = scmp.ne.s32.totalorder %s254, %s255
    %p264 = scmp.eq.s32.totalorder %s24, 0
    %p265 = por %p263, %p264
    %p266 = scmp.ne.s32.totalorder %s254, %s255
    %p267 = scmp.eq.s32.totalorder %s25, 1
    %p268 = por %p266, %p267
    %p270 = scmp.ne.s32.totalorder %s255, %s269
    %p271 = scmp.eq.s32.totalorder %s25, 0
    %p272 = por %p270, %p271
    %s274 = sadd.s32 %s273, 1
    %p277 = scmp.eq.s32.totalorder %s19, 1
    %p278 = scmp.ne.s32.totalorder %s273, %s275
    %p279 = scmp.eq.s32.totalorder %s19, 0
    %p280 = por %p278, %p279
    %p281 = scmp.ne.s32.totalorder %s273, %s275
    %p282 = scmp.eq.s32.totalorder %s24, 1
    %p283 = por %p281, %p282
    %p284 = scmp.ne.s32.totalorder %s275, %s276
    %p285 = scmp.eq.s32.totalorder %s24, 0
    %p286 = por %p284, %p285
    %p287 = scmp.ne.s32.totalorder %s275, %s276
    %p288 = scmp.eq.s32.totalorder %s25, 1
    %p289 = por %p287, %p288
    %p291 = scmp.ne.s32.totalorder %s276, %s290
    %p292 = scmp.eq.s32.totalorder %s25, 0
    %p293 = por %p291, %p292
    %s295 = sadd.s32 %s294, 1
    %p298 = scmp.eq.s32.totalorder %s19, 1
    %p299 = scmp.ne.s32.totalorder %s294, %s296
    %p300 = scmp.eq.s32.totalorder %s19, 0
    %p301 = por %p299, %p300
    %p302 = scmp.ne.s32.totalorder %s294, %s296
    %p303 = scmp.eq.s32.totalorder %s24, 1
    %p304 = por %p302, %p303
    %p305 = scmp.ne.s32.totalorder %s296, %s297
    %p306 = scmp.eq.s32.totalorder %s24, 0
    %p307 = por %p305, %p306
    %p308 = scmp.ne.s32.totalorder %s296, %s297
    %p309 = scmp.eq.s32.totalorder %s25, 1
    %p310 = por %p308, %p309
    %p312 = scmp.ne.s32.totalorder %s297, %s311
    %p313 = scmp.eq.s32.totalorder %s25, 0
    %p314 = por %p312, %p313
    %s315 = ssub.s32 %s19, %s26
    %p316 = scmp.eq.s32.totalorder %s315, 0
    %s318 = sadd.s32 %s317, 1
    %s319 = scalar_select %p316, %s317, %s318
    %p322 = pneg %p316
    %p323 = scmp.eq.s32.totalorder %s19, 1
    %p324 = por %p322, %p323
    %p325 = scmp.ne.s32.totalorder %s317, %s320
    %p326 = scmp.eq.s32.totalorder %s19, 0
    %p327 = por %p325, %p326
    %p328 = scmp.ne.s32.totalorder %s317, %s320
    %p329 = scmp.eq.s32.totalorder %s24, 1
    %p330 = por %p328, %p329
    %p331 = scmp.ne.s32.totalorder %s320, %s321
    %p332 = scmp.eq.s32.totalorder %s24, 0
    %p333 = por %p331, %p332
    %p334 = scmp.ne.s32.totalorder %s320, %s321
    %p335 = scmp.eq.s32.totalorder %s25, 1
    %p336 = por %p334, %p335
    %p338 = scmp.ne.s32.totalorder %s321, %s337
    %p339 = scmp.eq.s32.totalorder %s25, 0
    %p340 = por %p338, %p339
    %p341 = scmp.le.s32.totalorder 1, %s19
    %p342 = scmp.lt.s32.totalorder %s19, 3
    %p343 = pnand %p341, %p342
    %p344 = pneg %p343
    // Predicated region
    $region9: #{personalized_headline_forward.3} parent=5 // pred_check
      _
    $region10: #{personalized_headline_forward.3} parent=5 // pred_check_branch
      %346 = sbr.rel (%p343) target = $region12
    $region11: #{personalized_headline_forward.3} parent=5 // pred_region
      %s347 = ssub.s32 %s19, 1
      // Predicated region
      $region13: #{personalized_headline_forward.3} parent=11 // pred_check
        %p348 = pneg %p118
      $region14: #{personalized_headline_forward.3} parent=11 // pred_check_branch
        %350 = sbr.rel (%p348) target = $region16
      $region15: #{personalized_headline_forward.3} parent=11 // pred_region
        _
      $region16: #{personalized_headline_forward.3} parent=11 // pred_fallthru
        _
      // Predicated region
      $region17: #{personalized_headline_forward.3} parent=11 // pred_check
        %p351 = pneg %p139
      $region18: #{personalized_headline_forward.3} parent=11 // pred_check_branch
        %353 = sbr.rel (%p351) target = $region20
      $region19: #{personalized_headline_forward.3} parent=11 // pred_region
        _
      $region20: #{personalized_headline_forward.3} parent=11 // pred_fallthru
        _
      // Predicated region
      $region21: #{personalized_headline_forward.3} parent=11 // pred_check
        %p354 = pneg %p160
      $region22: #{personalized_headline_forward.3} parent=11 // pred_check_branch
        %356 = sbr.rel (%p354) target = $region24
      $region23: #{personalized_headline_forward.3} parent=11 // pred_region
        _
      $region24: #{personalized_headline_forward.3} parent=11 // pred_fallthru
        _
      // Predicated region
      $region25: #{personalized_headline_forward.3} parent=11 // pred_check
        %p357 = pneg %p181
      $region26: #{personalized_headline_forward.3} parent=11 // pred_check_branch
        %359 = sbr.rel (%p357) target = $region28
      $region27: #{personalized_headline_forward.3} parent=11 // pred_region
        _
      $region28: #{personalized_headline_forward.3} parent=11 // pred_fallthru
        _
      // Predicated region
      $region29: #{personalized_headline_forward.3} parent=11 // pred_check
        %p360 = pneg %p202
      $region30: #{personalized_headline_forward.3} parent=11 // pred_check_branch
        %362 = sbr.rel (%p360) target = $region32
      $region31: #{personalized_headline_forward.3} parent=11 // pred_region
        _
      $region32: #{personalized_headline_forward.3} parent=11 // pred_fallthru
        _
      // Predicated region
      $region33: #{personalized_headline_forward.3} parent=11 // pred_check
        %p363 = pneg %p223
      $region34: #{personalized_headline_forward.3} parent=11 // pred_check_branch
        %365 = sbr.rel (%p363) target = $region36
      $region35: #{personalized_headline_forward.3} parent=11 // pred_region
        _
      $region36: #{personalized_headline_forward.3} parent=11 // pred_fallthru
        _
      // Predicated region
      $region37: #{personalized_headline_forward.3} parent=11 // pred_check
        %p366 = pneg %p244
      $region38: #{personalized_headline_forward.3} parent=11 // pred_check_branch
        %368 = sbr.rel (%p366) target = $region40
      $region39: #{personalized_headline_forward.3} parent=11 // pred_region
        _
      $region40: #{personalized_headline_forward.3} parent=11 // pred_fallthru
        _
      // Predicated region
      $region41: #{personalized_headline_forward.3} parent=11 // pred_check
        %p369 = pneg %p265
      $region42: #{personalized_headline_forward.3} parent=11 // pred_check_branch
        %371 = sbr.rel (%p369) target = $region44
      $region43: #{personalized_headline_forward.3} parent=11 // pred_region
        _
      $region44: #{personalized_headline_forward.3} parent=11 // pred_fallthru
        _
      // Predicated region
      $region45: #{personalized_headline_forward.3} parent=11 // pred_check
        %p372 = pneg %p286
      $region46: #{personalized_headline_forward.3} parent=11 // pred_check_branch
        %374 = sbr.rel (%p372) target = $region48
      $region47: #{personalized_headline_forward.3} parent=11 // pred_region
        _
      $region48: #{personalized_headline_forward.3} parent=11 // pred_fallthru
        _
      // Predicated region
      $region49: #{personalized_headline_forward.3} parent=11 // pred_check
        %p375 = pneg %p307
      $region50: #{personalized_headline_forward.3} parent=11 // pred_check_branch
        %377 = sbr.rel (%p375) target = $region52
      $region51: #{personalized_headline_forward.3} parent=11 // pred_region
        _
      $region52: #{personalized_headline_forward.3} parent=11 // pred_fallthru
        _
    $region12: #{personalized_headline_forward.3} parent=5 // pred_fallthru
      _
    %p378 = scmp.lt.s32.totalorder %s19, 2
    // Predicated region
    $region53: #{personalized_headline_forward.3} parent=5 // pred_check
      %p379 = pneg %p378
    $region54: #{personalized_headline_forward.3} parent=5 // pred_check_branch
      %381 = sbr.rel (%p379) target = $region56
    $region55: #{personalized_headline_forward.3} parent=5 // pred_region
      // Predicated region
      $region57: #{personalized_headline_forward.3} parent=55 // pred_check
        %p382 = pneg %p39
      $region58: #{personalized_headline_forward.3} parent=55 // pred_check_branch
        %384 = sbr.rel (%p382) target = $region60
      $region59: #{personalized_headline_forward.3} parent=55 // pred_region
        %s385 = smul.u32 2, %s19
        %p386 = scmp.lt.s32.totalorder %s385, 3
        %s387 = scalar_select %p386, %s385, 3
        %s388 = smul.addr %s387, 4
        %s389 = smul.addr %s388, 8
        %s390 = scalar_lea.vmem %s0, %s389
        %s391 = smul.u32 2, %s19
      $region60: #{personalized_headline_forward.3} parent=55 // pred_fallthru
        _
      // Predicated region
      $region61: #{personalized_headline_forward.3} parent=55 // pred_check
        %p392 = pneg %p65
      $region62: #{personalized_headline_forward.3} parent=55 // pred_check_branch
        %394 = sbr.rel (%p392) target = $region64
      $region63: #{personalized_headline_forward.3} parent=55 // pred_region
        %s395 = smul.u32 2, %s19
        %p396 = scmp.lt.s32.totalorder %s395, 3
        %s397 = scalar_select %p396, %s395, 3
        %s398 = smul.addr %s397, 4
        %s399 = scalar_lea.vmem %s1, %s398
        %s400 = smul.u32 2, %s19
      $region64: #{personalized_headline_forward.3} parent=55 // pred_fallthru
        _
      // Predicated region
      $region65: #{personalized_headline_forward.3} parent=55 // pred_check
        %p401 = pneg %p91
      $region66: #{personalized_headline_forward.3} parent=55 // pred_check_branch
        %403 = sbr.rel (%p401) target = $region68
      $region67: #{personalized_headline_forward.3} parent=55 // pred_region
        %s404 = smul.u32 2, %s19
        %p405 = scmp.lt.s32.totalorder %s404, 3
        %s406 = scalar_select %p405, %s404, 3
        %s407 = smul.addr %s406, 4
        %s408 = scalar_lea.vmem %s2, %s407
        %s409 = smul.u32 2, %s19
      $region68: #{personalized_headline_forward.3} parent=55 // pred_fallthru
        _
    $region56: #{personalized_headline_forward.3} parent=5 // pred_fallthru
      _
    %p410 = scmp.le.s32.totalorder 1, %s19
    %p411 = scmp.lt.s32.totalorder %s19, 3
    %p412 = pnand %p410, %p411
    %p413 = pneg %p412
    // Predicated region
    $region69: #{personalized_headline_forward.3} parent=5 // pred_check
      _
    $region70: #{personalized_headline_forward.3} parent=5 // pred_check_branch
      %415 = sbr.rel (%p412) target = $region72
    $region71: #{personalized_headline_forward.3} parent=5 // pred_region
      %s416 = ssub.s32 %s19, 1
      %s417 = smul.u32 2, %s24
      %p418 = scmp.lt.s32.totalorder %s417, 3
      %s419 = scalar_select %p418, %s417, 3
      %s420 = smul.addr %s419, 4
      %s421 = smul.addr %s420, 8
      %s422 = scalar_lea.vmem %s0, %s421
      %p423 = pneg %p45
      %p424 = pneg %p42
      %s425 = smul.u32 2, %s24
      %p426 = scmp.lt.s32.totalorder %s425, 3
      %s427 = scalar_select %p426, %s425, 3
      %s428 = smul.addr %s427, 4
      %s429 = scalar_lea.vmem %s1, %s428
      %p430 = pneg %p71
      %p431 = pneg %p68
      %s432 = smul.u32 2, %s24
      %p433 = scmp.lt.s32.totalorder %s432, 3
      %s434 = scalar_select %p433, %s432, 3
      %s435 = smul.addr %s434, 4
      %s436 = scalar_lea.vmem %s2, %s435
      %p437 = pneg %p97
      %p438 = pneg %p94
      %p439 = pneg %p118
      %p440 = pneg %p115
      %p441 = pneg %p139
      %p442 = pneg %p136
      %p443 = pneg %p160
      %p444 = pneg %p157
      %p445 = pneg %p181
      %p446 = pneg %p178
      %p447 = pneg %p202
      %p448 = pneg %p199
      %p449 = pneg %p223
      %p450 = pneg %p220
      %p451 = pneg %p244
      %p452 = pneg %p241
      %p453 = pneg %p265
      %p454 = pneg %p262
      %p455 = pneg %p286
      %p456 = pneg %p283
      %p457 = pneg %p307
      %p458 = pneg %p304
      %p459 = pneg %p333
      %p460 = pneg %p330
      %s461 = smul.u32 2, %s24
      %p462 = scmp.lt.s32.totalorder %s461, 3
      %s463 = scalar_select %p462, %s461, 3
      %s464 = scalar_lea.vmem %s13, %s463
      %s465 = smul.u32 2, %s24
      %p466 = scmp.lt.s32.totalorder %s465, 3
      %s467 = scalar_select %p466, %s465, 3
      %s468 = smul.addr %s467, 4
      %s469 = smul.addr %s468, 8
      %s470 = scalar_lea.vmem %s0, %s469
      %s471 = smul.u32 2, %s24
      %s472 = smul.u32 2, %s24
      %p473 = scmp.lt.s32.totalorder %s472, 3
      %s474 = scalar_select %p473, %s472, 3
      %s475 = smul.addr %s474, 4
      %s476 = scalar_lea.vmem %s1, %s475
      %s477 = smul.u32 2, %s24
      %s478 = smul.u32 2, %s24
      %p479 = scmp.lt.s32.totalorder %s478, 3
      %s480 = scalar_select %p479, %s478, 3
      %s481 = smul.addr %s480, 4
      %s482 = scalar_lea.vmem %s2, %s481
      %s483 = smul.u32 2, %s24
      %s484 = smul.u32 2, %s24
      %p485 = scmp.lt.s32.totalorder %s484, 3
      %s486 = scalar_select %p485, %s484, 3
      %s487 = scalar_lea.vmem %s13, %s486
      %s488 = smul.u32 2, %s24
      %v490 = vld [vmem:[%s470] sm:$0xff]
      %v491 = vld [vmem:[%s470 + $0x8] sm:$0xff]
      %v492 = vld [vmem:[%s470 + $0x10] sm:$0xff]
      %v493 = vld [vmem:[%s470 + $0x18] sm:$0xff]
      %v494 = vld [vmem:[%s470 + $0x20] sm:$0xff]
      %v495 = vld [vmem:[%s470 + $0x28] sm:$0xff]
      %v496 = vld [vmem:[%s470 + $0x30] sm:$0xff]
      %v497 = vld [vmem:[%s470 + $0x38] sm:$0xff]
      %v498 = vlaneseq
      %v499 = vshrl.u32 %v498, 7
      %v500 = vrot.slane %v490, 7
      %v501 = vrot.slane %v491, 7
      %v502 = vrot.slane %v492, 7
      %v503 = vrot.slane %v493, 7
      %v504 = vrot.slane %v494, 7
      %v505 = vrot.slane %v495, 7
      %v506 = vrot.slane %v496, 7
      %v507 = vrot.slane %v497, 7
      %vm508 = vcmp.lt.s32.totalorder %v499, 1
      %v509 = vsel %vm508, %v506, %v507
      %v510 = vsel %vm508, %v505, %v506
      %v511 = vsel %vm508, %v504, %v505
      %v512 = vsel %vm508, %v503, %v504
      %v513 = vsel %vm508, %v502, %v503
      %v514 = vsel %vm508, %v501, %v502
      %v515 = vsel %vm508, %v500, %v501
      %v516 = vsel %vm508, %v507, %v500
      %vm517 = vcmp.eq.s32.totalorder %v499, 0
      %v518 = vsel %vm517, 0.0, %v516
      %v519 = vsel %vm517, 0.0, %v515
      %v520 = vsel %vm517, 0.0, %v514
      %v521 = vsel %vm517, 0.0, %v513
      %v522 = vsel %vm517, 0.0, %v512
      %v523 = vsel %vm517, 0.0, %v511
      %v524 = vsel %vm517, 0.0, %v510
      %v525 = vsel %vm517, 0.0, %v509
      %v526 = vrot.slane %v490, 1
      %v527 = vrot.slane %v491, 1
      %v528 = vrot.slane %v492, 1
      %v529 = vrot.slane %v493, 1
      %v530 = vrot.slane %v494, 1
      %v531 = vrot.slane %v495, 1
      %v532 = vrot.slane %v496, 1
      %v533 = vrot.slane %v497, 1
      %vm534 = vcmp.lt.s32.totalorder %v499, 7
      %v535 = vsel %vm534, %v532, %v533
      %v536 = vsel %vm534, %v531, %v532
      %v537 = vsel %vm534, %v530, %v531
      %v538 = vsel %vm534, %v529, %v530
      %v539 = vsel %vm534, %v528, %v529
      %v540 = vsel %vm534, %v527, %v528
      %v541 = vsel %vm534, %v526, %v527
      %v542 = vsel %vm534, %v533, %v526
      %vm543 = vcmp.eq.s32.totalorder %v499, 7
      %v544 = vsel %vm543, 0.0, %v541
      %v545 = vsel %vm543, 0.0, %v540
      %v546 = vsel %vm543, 0.0, %v539
      %v547 = vsel %vm543, 0.0, %v538
      %v548 = vsel %vm543, 0.0, %v537
      %v549 = vsel %vm543, 0.0, %v536
      %v550 = vsel %vm543, 0.0, %v535
      %v551 = vsel %vm543, 0.0, %v542
      %v552 = vld [vmem:[%s3] sm:$0xf]
      %v553 = vld [vmem:[%s3 + $0x4] sm:$0xf]
      %v554 = vld [vmem:[%s3 + $0x8] sm:$0xf]
      %v555 = vld [vmem:[%s3 + $0xc] sm:$0xf]
      %v556 = vld [vmem:[%s3 + $0x10] sm:$0xf]
      %v557 = vld [vmem:[%s3 + $0x14] sm:$0xf]
      %v558 = vld [vmem:[%s3 + $0x18] sm:$0xf]
      %v559 = vld [vmem:[%s3 + $0x1c] sm:$0xf]
      %v560 = vld [vmem:[%s3 + $0x20] sm:$0xf]
      %v561 = vld [vmem:[%s3 + $0x24] sm:$0xf]
      %v562 = vld [vmem:[%s3 + $0x28] sm:$0xf]
      %v563 = vld [vmem:[%s3 + $0x2c] sm:$0xf]
      %v564 = vld [vmem:[%s3 + $0x30] sm:$0xf]
      %v565 = vld [vmem:[%s3 + $0x34] sm:$0xf]
      %v566 = vld [vmem:[%s3 + $0x38] sm:$0xf]
      %v567 = vld [vmem:[%s3 + $0x3c] sm:$0xf]
      %v568 = vld [vmem:[%s3 + $0x40] sm:$0xf]
      %v569 = vld [vmem:[%s3 + $0x44] sm:$0xf]
      %v570 = vld [vmem:[%s3 + $0x48] sm:$0xf]
      %v571 = vld [vmem:[%s3 + $0x4c] sm:$0xf]
      %v572 = vld [vmem:[%s3 + $0x50] sm:$0xf]
      %v573 = vld [vmem:[%s3 + $0x54] sm:$0xf]
      %v574 = vld [vmem:[%s3 + $0x58] sm:$0xf]
      %v575 = vld [vmem:[%s3 + $0x5c] sm:$0xf]
      %v576 = vld [vmem:[%s3 + $0x60] sm:$0xf]
      %v577 = vld [vmem:[%s3 + $0x64] sm:$0xf]
      %v578 = vld [vmem:[%s3 + $0x68] sm:$0xf]
      %v579 = vld [vmem:[%s3 + $0x6c] sm:$0xf]
      %v580 = vld [vmem:[%s3 + $0x70] sm:$0xf]
      %v581 = vld [vmem:[%s3 + $0x74] sm:$0xf]
      %v582 = vld [vmem:[%s3 + $0x78] sm:$0xf]
      %v583 = vld [vmem:[%s3 + $0x7c] sm:$0xf]
      %v584 = vld [vmem:[%s3 + $0x80] sm:$0xf]
      %v585 = vld [vmem:[%s3 + $0x84] sm:$0xf]
      %v586 = vld [vmem:[%s3 + $0x88] sm:$0xf]
      %v587 = vld [vmem:[%s3 + $0x8c] sm:$0xf]
      %v588 = vld [vmem:[%s3 + $0x90] sm:$0xf]
      %v589 = vld [vmem:[%s3 + $0x94] sm:$0xf]
      %v590 = vld [vmem:[%s3 + $0x98] sm:$0xf]
      %v591 = vld [vmem:[%s3 + $0x9c] sm:$0xf]
      %v592 = vld [vmem:[%s3 + $0xa0] sm:$0xf]
      %v593 = vld [vmem:[%s3 + $0xa4] sm:$0xf]
      %v594 = vld [vmem:[%s3 + $0xa8] sm:$0xf]
      %v595 = vld [vmem:[%s3 + $0xac] sm:$0xf]
      %v596 = vld [vmem:[%s3 + $0xb0] sm:$0xf]
      %v597 = vld [vmem:[%s3 + $0xb4] sm:$0xf]
      %v598 = vld [vmem:[%s3 + $0xb8] sm:$0xf]
      %v599 = vld [vmem:[%s3 + $0xbc] sm:$0xf]
      %v600 = vpack.c.bf16 %v519, %v518
      %v601 = vpack.c.bf16 %v521, %v520
      %v602 = vpack.c.bf16 %v523, %v522
      %v603 = vpack.c.bf16 %v525, %v524
      %v604 = vpack.c.bf16 %v491, %v490
      %v605 = vpack.c.bf16 %v493, %v492
      %v606 = vpack.c.bf16 %v495, %v494
      %v607 = vpack.c.bf16 %v497, %v496
      %v624 = vunpack.c.l.b16 %v568
      %v625 = vunpack.c.l.b16 %v569
      %v626 = vunpack.c.l.b16 %v570
      %v627 = vunpack.c.l.b16 %v571
      %v628 = vunpack.c.l.b16 %v572
      %v629 = vunpack.c.l.b16 %v573
      %v630 = vunpack.c.l.b16 %v574
      %v631 = vunpack.c.l.b16 %v575
      %v632 = vunpack.c.l.b16 %v576
      %v633 = vunpack.c.l.b16 %v577
      %v634 = vunpack.c.l.b16 %v578
      %v635 = vunpack.c.l.b16 %v579
      %v636 = vunpack.c.l.b16 %v580
      %v637 = vunpack.c.l.b16 %v581
      %v638 = vunpack.c.l.b16 %v582
      %v639 = vunpack.c.l.b16 %v583
      %v640 = vpack.c.b16 %v625, %v624
      %v641 = vpack.c.b16 %v627, %v626
      %v642 = vpack.c.b16 %v629, %v628
      %v643 = vpack.c.b16 %v631, %v630
      %v644 = vpack.c.b16 %v633, %v632
      %v645 = vpack.c.b16 %v635, %v634
      %v646 = vpack.c.b16 %v637, %v636
      %v647 = vpack.c.b16 %v639, %v638
      %656 = vmatprep.subr.bf16.mxu0 0
      %657 = vmatpush1.bf16.msra.mxu0 %v640
      %658 = vmatprep.subr.bf16.mxu0 0
      %659 = vmatpush1.bf16.msra.mxu0 %v641
      %660 = vmatprep.subr.bf16.mxu0 0
      %661 = vmatpush1.bf16.msra.mxu0 %v642
      %662 = vmatprep.subr.bf16.mxu0 0
      %663 = vmatpush1.bf16.msra.mxu0 %v643
      %664 = vmatprep.subr.bf16.mxu0 0
      %665 = vmatpush1.bf16.msra.mxu0 %v644
      %666 = vmatprep.subr.bf16.mxu0 0
      %667 = vmatpush1.bf16.msra.mxu0 %v645
      %668 = vmatprep.subr.bf16.mxu0 0
      %669 = vmatpush1.bf16.msra.mxu0 %v646
      %670 = vmatprep.subr.bf16.mxu0 0
      %671 = vmatpush1.bf16.msra.mxu0 %v647
      %672 = vmatprep.subr.bf16.mxu0 0
      %673 = vmatpush1.bf16.msra.mxu0 0
      %674 = vmatprep.subr.bf16.mxu0 0
      %675 = vmatpush1.bf16.msra.mxu0 0
      %676 = vmatprep.subr.bf16.mxu0 0
      %677 = vmatpush1.bf16.msra.mxu0 0
      %678 = vmatprep.subr.bf16.mxu0 0
      %679 = vmatpush1.bf16.msra.mxu0 0
      %680 = vmatprep.subr.bf16.mxu0 0
      %681 = vmatpush1.bf16.msra.mxu0 0
      %682 = vmatprep.subr.bf16.mxu0 0
      %683 = vmatpush1.bf16.msra.mxu0 0
      %684 = vmatprep.subr.bf16.mxu0 0
      %685 = vmatpush1.bf16.msra.mxu0 0
      %686 = vmatprep.subr.bf16.mxu0 0
      %687 = vmatpush1.bf16.msra.mxu0 0
      %688 = vmatprep.mubr.bf16.mxu0 0
      %689 = vmatmul.mubr.bf16.gmra.mrb[0].mxu0 %v604
      %v690 = vpop.f32.mrb[0].mxu0
      %v691 = vadd.f32 0.0, %v690
      %v692 = vpop.f32.mrb[0].mxu0
      %v693 = vpop.f32.mrb[0].mxu0
      %v694 = vadd.f32 0.0, %v693
      %v695 = vpop.f32.mrb[0].mxu0
      %696 = vmatprep.mubr.bf16.mxu0 0
      %697 = vmatmul.mubr.bf16.gmra.mrb[0].mxu0 %v605
      %v698 = vpop.f32.mrb[0].mxu0
      %v699 = vadd.f32 0.0, %v698
      %v700 = vpop.f32.mrb[0].mxu0
      %v701 = vpop.f32.mrb[0].mxu0
      %v702 = vadd.f32 0.0, %v701
      %v703 = vpop.f32.mrb[0].mxu0
      %704 = vmatprep.mubr.bf16.mxu0 0
      %705 = vmatmul.mubr.bf16.gmra.mrb[0].mxu0 %v606
      %v706 = vpop.f32.mrb[0].mxu0
      %v707 = vadd.f32 0.0, %v706
      %v708 = vpop.f32.mrb[0].mxu0
      %v709 = vpop.f32.mrb[0].mxu0
      %v710 = vadd.f32 0.0, %v709
      %v711 = vpop.f32.mrb[0].mxu0
      %712 = vmatprep.mubr.bf16.mxu0 0
      %713 = vmatmul.mubr.bf16.gmra.mrb[0].mxu0 %v607
      %v714 = vpop.f32.mrb[0].mxu0
      %v715 = vadd.f32 0.0, %v714
      %v716 = vpop.f32.mrb[0].mxu0
      %v717 = vpop.f32.mrb[0].mxu0
      %v718 = vadd.f32 0.0, %v717
      %v719 = vpop.f32.mrb[0].mxu0
      %720 = vdwg.mxu0
      %v737 = vunpack.c.l.b16 %v552
      %v738 = vunpack.c.l.b16 %v553
      %v739 = vunpack.c.l.b16 %v554
      %v740 = vunpack.c.l.b16 %v555
      %v741 = vunpack.c.l.b16 %v556
      %v742 = vunpack.c.l.b16 %v557
      %v743 = vunpack.c.l.b16 %v558
      %v744 = vunpack.c.l.b16 %v559
      %v745 = vunpack.c.l.b16 %v560
      %v746 = vunpack.c.l.b16 %v561
      %v747 = vunpack.c.l.b16 %v562
      %v748 = vunpack.c.l.b16 %v563
      %v749 = vunpack.c.l.b16 %v564
      %v750 = vunpack.c.l.b16 %v565
      %v751 = vunpack.c.l.b16 %v566
      %v752 = vunpack.c.l.b16 %v567
      %v753 = vpack.c.b16 %v738, %v737
      %v754 = vpack.c.b16 %v740, %v739
      %v755 = vpack.c.b16 %v742, %v741
      %v756 = vpack.c.b16 %v744, %v743
      %v757 = vpack.c.b16 %v746, %v745
      %v758 = vpack.c.b16 %v748, %v747
      %v759 = vpack.c.b16 %v750, %v749
      %v760 = vpack.c.b16 %v752, %v751
      %769 = vmatprep.subr.bf16.mxu0 0
      %770 = vmatpush1.bf16.msra.mxu0 %v753
      %771 = vmatprep.subr.bf16.mxu0 0
      %772 = vmatpush1.bf16.msra.mxu0 %v754
      %773 = vmatprep.subr.bf16.mxu0 0
      %774 = vmatpush1.bf16.msra.mxu0 %v755
      %775 = vmatprep.subr.bf16.mxu0 0
      %776 = vmatpush1.bf16.msra.mxu0 %v756
      %777 = vmatprep.subr.bf16.mxu0 0
      %778 = vmatpush1.bf16.msra.mxu0 %v757
      %779 = vmatprep.subr.bf16.mxu0 0
      %780 = vmatpush1.bf16.msra.mxu0 %v758
      %781 = vmatprep.subr.bf16.mxu0 0
      %782 = vmatpush1.bf16.msra.mxu0 %v759
      %783 = vmatprep.subr.bf16.mxu0 0
      %784 = vmatpush1.bf16.msra.mxu0 %v760
      %785 = vmatprep.subr.bf16.mxu0 0
      %786 = vmatpush1.bf16.msra.mxu0 0
      %787 = vmatprep.subr.bf16.mxu0 0
      %788 = vmatpush1.bf16.msra.mxu0 0
      %789 = vmatprep.subr.bf16.mxu0 0
      %790 = vmatpush1.bf16.msra.mxu0 0
      %791 = vmatprep.subr.bf16.mxu0 0
      %792 = vmatpush1.bf16.msra.mxu0 0
      %793 = vmatprep.subr.bf16.mxu0 0
      %794 = vmatpush1.bf16.msra.mxu0 0
      %795 = vmatprep.subr.bf16.mxu0 0
      %796 = vmatpush1.bf16.msra.mxu0 0
      %797 = vmatprep.subr.bf16.mxu0 0
      %798 = vmatpush1.bf16.msra.mxu0 0
      %799 = vmatprep.subr.bf16.mxu0 0
      %800 = vmatpush1.bf16.msra.mxu0 0
      %801 = vmatprep.mubr.bf16.mxu0 0
      %802 = vmatmul.mubr.bf16.gmra.mrb[0].mxu0 %v600
      %v803 = vpop.f32.mrb[0].mxu0
      %v804 = vadd.f32 %v691, %v803
      %v805 = vpop.f32.mrb[0].mxu0
      %v806 = vpop.f32.mrb[0].mxu0
      %v807 = vadd.f32 %v694, %v806
      %v808 = vpop.f32.mrb[0].mxu0
      %809 = vmatprep.mubr.bf16.mxu0 0
      %810 = vmatmul.mubr.bf16.gmra.mrb[0].mxu0 %v601
      %v811 = vpop.f32.mrb[0].mxu0
      %v812 = vadd.f32 %v699, %v811
      %v813 = vpop.f32.mrb[0].mxu0
      %v814 = vpop.f32.mrb[0].mxu0
      %v815 = vadd.f32 %v702, %v814
      %v816 = vpop.f32.mrb[0].mxu0
      %817 = vmatprep.mubr.bf16.mxu0 0
      %818 = vmatmul.mubr.bf16.gmra.mrb[0].mxu0 %v602
      %v819 = vpop.f32.mrb[0].mxu0
      %v820 = vadd.f32 %v707, %v819
      %v821 = vpop.f32.mrb[0].mxu0
      %v822 = vpop.f32.mrb[0].mxu0
      %v823 = vadd.f32 %v710, %v822
      %v824 = vpop.f32.mrb[0].mxu0
      %825 = vmatprep.mubr.bf16.mxu0 0
      %826 = vmatmul.mubr.bf16.gmra.mrb[0].mxu0 %v603
      %v827 = vpop.f32.mrb[0].mxu0
      %v828 = vadd.f32 %v715, %v827
      %v829 = vpop.f32.mrb[0].mxu0
      %v830 = vpop.f32.mrb[0].mxu0
      %v831 = vadd.f32 %v718, %v830
      %v832 = vpop.f32.mrb[0].mxu0
      %833 = vdwg.mxu0
      %v834 = vpack.c.bf16 %v545, %v544
      %v835 = vpack.c.bf16 %v547, %v546
      %v836 = vpack.c.bf16 %v549, %v548
      %v837 = vpack.c.bf16 %v551, %v550
      %v854 = vunpack.c.l.b16 %v584
      %v855 = vunpack.c.l.b16 %v585
      %v856 = vunpack.c.l.b16 %v586
      %v857 = vunpack.c.l.b16 %v587
      %v858 = vunpack.c.l.b16 %v588
      %v859 = vunpack.c.l.b16 %v589
      %v860 = vunpack.c.l.b16 %v590
      %v861 = vunpack.c.l.b16 %v591
      %v862 = vunpack.c.l.b16 %v592
      %v863 = vunpack.c.l.b16 %v593
      %v864 = vunpack.c.l.b16 %v594
      %v865 = vunpack.c.l.b16 %v595
      %v866 = vunpack.c.l.b16 %v596
      %v867 = vunpack.c.l.b16 %v597
      %v868 = vunpack.c.l.b16 %v598
      %v869 = vunpack.c.l.b16 %v599
      %v870 = vpack.c.b16 %v855, %v854
      %v871 = vpack.c.b16 %v857, %v856
      %v872 = vpack.c.b16 %v859, %v858
      %v873 = vpack.c.b16 %v861, %v860
      %v874 = vpack.c.b16 %v863, %v862
      %v875 = vpack.c.b16 %v865, %v864
      %v876 = vpack.c.b16 %v867, %v866
      %v877 = vpack.c.b16 %v869, %v868
      %886 = vmatprep.subr.bf16.mxu0 0
      %887 = vmatpush1.bf16.msra.mxu0 %v870
      %888 = vmatprep.subr.bf16.mxu0 0
      %889 = vmatpush1.bf16.msra.mxu0 %v871
      %890 = vmatprep.subr.bf16.mxu0 0
      %891 = vmatpush1.bf16.msra.mxu0 %v872
      %892 = vmatprep.subr.bf16.mxu0 0
      %893 = vmatpush1.bf16.msra.mxu0 %v873
      %894 = vmatprep.subr.bf16.mxu0 0
      %895 = vmatpush1.bf16.msra.mxu0 %v874
      %896 = vmatprep.subr.bf16.mxu0 0
      %897 = vmatpush1.bf16.msra.mxu0 %v875
      %898 = vmatprep.subr.bf16.mxu0 0
      %899 = vmatpush1.bf16.msra.mxu0 %v876
      %900 = vmatprep.subr.bf16.mxu0 0
      %901 = vmatpush1.bf16.msra.mxu0 %v877
      %902 = vmatprep.subr.bf16.mxu0 0
      %903 = vmatpush1.bf16.msra.mxu0 0
      %904 = vmatprep.subr.bf16.mxu0 0
      %905 = vmatpush1.bf16.msra.mxu0 0
      %906 = vmatprep.subr.bf16.mxu0 0
      %907 = vmatpush1.bf16.msra.mxu0 0
      %908 = vmatprep.subr.bf16.mxu0 0
      %909 = vmatpush1.bf16.msra.mxu0 0
      %910 = vmatprep.subr.bf16.mxu0 0
      %911 = vmatpush1.bf16.msra.mxu0 0
      %912 = vmatprep.subr.bf16.mxu0 0
      %913 = vmatpush1.bf16.msra.mxu0 0
      %914 = vmatprep.subr.bf16.mxu0 0
      %915 = vmatpush1.bf16.msra.mxu0 0
      %916 = vmatprep.subr.bf16.mxu0 0
      %917 = vmatpush1.bf16.msra.mxu0 0
      %918 = vmatprep.mubr.bf16.mxu0 0
      %919 = vmatmul.mubr.bf16.gmra.mrb[0].mxu0 %v834
      %v920 = vpop.f32.mrb[0].mxu0
      %v921 = vadd.f32 0.0, %v920
      %v922 = vpop.f32.mrb[0].mxu0
      %v923 = vpop.f32.mrb[0].mxu0
      %v924 = vadd.f32 0.0, %v923
      %v925 = vpop.f32.mrb[0].mxu0
      %926 = vmatprep.mubr.bf16.mxu0 0
      %927 = vmatmul.mubr.bf16.gmra.mrb[0].mxu0 %v835
      %v928 = vpop.f32.mrb[0].mxu0
      %v929 = vadd.f32 0.0, %v928
      %v930 = vpop.f32.mrb[0].mxu0
      %v931 = vpop.f32.mrb[0].mxu0
      %v932 = vadd.f32 0.0, %v931
      %v933 = vpop.f32.mrb[0].mxu0
      %934 = vmatprep.mubr.bf16.mxu0 0
      %935 = vmatmul.mubr.bf16.gmra.mrb[0].mxu0 %v836
      %v936 = vpop.f32.mrb[0].mxu0
      %v937 = vadd.f32 0.0, %v936
      %v938 = vpop.f32.mrb[0].mxu0
      %v939 = vpop.f32.mrb[0].mxu0
      %v940 = vadd.f32 0.0, %v939
      %v941 = vpop.f32.mrb[0].mxu0
      %942 = vmatprep.mubr.bf16.mxu0 0
      %943 = vmatmul.mubr.bf16.gmra.mrb[0].mxu0 %v837
      %v944 = vpop.f32.mrb[0].mxu0
      %v945 = vadd.f32 0.0, %v944
      %v946 = vpop.f32.mrb[0].mxu0
      %v947 = vpop.f32.mrb[0].mxu0
      %v948 = vadd.f32 0.0, %v947
      %v949 = vpop.f32.mrb[0].mxu0
      %950 = vdwg.mxu0
      %v951 = vadd.f32 %v804, %v921
      %v952 = vadd.f32 %v807, %v924
      %v953 = vadd.f32 %v812, %v929
      %v954 = vadd.f32 %v815, %v932
      %v955 = vadd.f32 %v820, %v937
      %v956 = vadd.f32 %v823, %v940
      %v957 = vadd.f32 %v828, %v945
      %v958 = vadd.f32 %v831, %v948
      %v959 = vld [vmem:[%s4] sm:$0x1]
      %v961 = vlaneseq
      %v962 = vshrl.u32 %v961, 7
      %v963 = vsub.s32 0, %v962
      %v964 = vrot.slane %v959, %v963
      %v966 = vadd.f32 %v951, %v964
      %v967 = vadd.f32 %v952, %v964
      %v968 = vadd.f32 %v953, %v964
      %v969 = vadd.f32 %v954, %v964
      %v970 = vadd.f32 %v955, %v964
      %v971 = vadd.f32 %v956, %v964
      %v972 = vadd.f32 %v957, %v964
      %v973 = vadd.f32 %v958, %v964
      %v974 = vmax.f32 %v966, 0.0
      %v975 = vmax.f32 %v967, 0.0
      %v976 = vmax.f32 %v968, 0.0
      %v977 = vmax.f32 %v969, 0.0
      %v978 = vmax.f32 %v970, 0.0
      %v979 = vmax.f32 %v971, 0.0
      %v980 = vmax.f32 %v972, 0.0
      %v981 = vmax.f32 %v973, 0.0
      %v982 = vld [vmem:[%s5] sm:$0xf]
      %v983 = vld [vmem:[%s5 + $0x4] sm:$0xf]
      %v984 = vld [vmem:[%s5 + $0x8] sm:$0xf]
      %v985 = vld [vmem:[%s5 + $0xc] sm:$0xf]
      %v986 = vld [vmem:[%s5 + $0x10] sm:$0xf]
      %v987 = vld [vmem:[%s5 + $0x14] sm:$0xf]
      %v988 = vld [vmem:[%s5 + $0x18] sm:$0xf]
      %v989 = vld [vmem:[%s5 + $0x1c] sm:$0xf]
      %v990 = vld [vmem:[%s5 + $0x20] sm:$0xf]
      %v991 = vld [vmem:[%s5 + $0x24] sm:$0xf]
      %v992 = vld [vmem:[%s5 + $0x28] sm:$0xf]
      %v993 = vld [vmem:[%s5 + $0x2c] sm:$0xf]
      %v994 = vld [vmem:[%s5 + $0x30] sm:$0xf]
      %v995 = vld [vmem:[%s5 + $0x34] sm:$0xf]
      %v996 = vld [vmem:[%s5 + $0x38] sm:$0xf]
      %v997 = vld [vmem:[%s5 + $0x3c] sm:$0xf]
      %v998 = vld [vmem:[%s6] sm:$0x1]
      %v999 = vpack.c.bf16 %v975, %v974
      %v1000 = vpack.c.bf16 %v977, %v976
      %v1001 = vpack.c.bf16 %v979, %v978
      %v1002 = vpack.c.bf16 %v981, %v980
      %v1004 = vlaneseq
      %v1005 = vshrl.u32 %v1004, 7
      %v1006 = vsub.s32 0, %v1005
      %v1007 = vrot.slane %v998, %v1006
      %v1025 = vunpack.c.l.b16 %v982
      %v1026 = vunpack.c.l.b16 %v983
      %v1027 = vunpack.c.l.b16 %v984
      %v1028 = vunpack.c.l.b16 %v985
      %v1029 = vunpack.c.l.b16 %v986
      %v1030 = vunpack.c.l.b16 %v987
      %v1031 = vunpack.c.l.b16 %v988
      %v1032 = vunpack.c.l.b16 %v989
      %v1033 = vunpack.c.l.b16 %v990
      %v1034 = vunpack.c.l.b16 %v991
      %v1035 = vunpack.c.l.b16 %v992
      %v1036 = vunpack.c.l.b16 %v993
      %v1037 = vunpack.c.l.b16 %v994
      %v1038 = vunpack.c.l.b16 %v995
      %v1039 = vunpack.c.l.b16 %v996
      %v1040 = vunpack.c.l.b16 %v997
      %v1041 = vpack.c.b16 %v1026, %v1025
      %v1042 = vpack.c.b16 %v1028, %v1027
      %v1043 = vpack.c.b16 %v1030, %v1029
      %v1044 = vpack.c.b16 %v1032, %v1031
      %v1045 = vpack.c.b16 %v1034, %v1033
      %v1046 = vpack.c.b16 %v1036, %v1035
      %v1047 = vpack.c.b16 %v1038, %v1037
      %v1048 = vpack.c.b16 %v1040, %v1039
      %1057 = vmatprep.subr.bf16.mxu0 0
      %1058 = vmatpush1.bf16.msra.mxu0 %v1041
      %1059 = vmatprep.subr.bf16.mxu0 0
      %1060 = vmatpush1.bf16.msra.mxu0 %v1042
      %1061 = vmatprep.subr.bf16.mxu0 0
      %1062 = vmatpush1.bf16.msra.mxu0 %v1043
      %1063 = vmatprep.subr.bf16.mxu0 0
      %1064 = vmatpush1.bf16.msra.mxu0 %v1044
      %1065 = vmatprep.subr.bf16.mxu0 0
      %1066 = vmatpush1.bf16.msra.mxu0 %v1045
      %1067 = vmatprep.subr.bf16.mxu0 0
      %1068 = vmatpush1.bf16.msra.mxu0 %v1046
      %1069 = vmatprep.subr.bf16.mxu0 0
      %1070 = vmatpush1.bf16.msra.mxu0 %v1047
      %1071 = vmatprep.subr.bf16.mxu0 0
      %1072 = vmatpush1.bf16.msra.mxu0 %v1048
      %1073 = vmatprep.subr.bf16.mxu0 0
      %1074 = vmatpush1.bf16.msra.mxu0 0
      %1075 = vmatprep.subr.bf16.mxu0 0
      %1076 = vmatpush1.bf16.msra.mxu0 0
      %1077 = vmatprep.subr.bf16.mxu0 0
      %1078 = vmatpush1.bf16.msra.mxu0 0
      %1079 = vmatprep.subr.bf16.mxu0 0
      %1080 = vmatpush1.bf16.msra.mxu0 0
      %1081 = vmatprep.subr.bf16.mxu0 0
      %1082 = vmatpush1.bf16.msra.mxu0 0
      %1083 = vmatprep.subr.bf16.mxu0 0
      %1084 = vmatpush1.bf16.msra.mxu0 0
      %1085 = vmatprep.subr.bf16.mxu0 0
      %1086 = vmatpush1.bf16.msra.mxu0 0
      %1087 = vmatprep.subr.bf16.mxu0 0
      %1088 = vmatpush1.bf16.msra.mxu0 0
      %1089 = vmatprep.mubr.bf16.mxu0 0
      %1090 = vmatmul.mubr.bf16.gmra.mrb[0].mxu0 %v999
      %v1091 = vpop.f32.mrb[0].mxu0
      %v1092 = vadd.f32 %v1007, %v1091
      %v1093 = vpop.f32.mrb[0].mxu0
      %v1094 = vpop.f32.mrb[0].mxu0
      %v1095 = vadd.f32 %v1007, %v1094
      %v1096 = vpop.f32.mrb[0].mxu0
      %1097 = vmatprep.mubr.bf16.mxu0 0
      %1098 = vmatmul.mubr.bf16.gmra.mrb[0].mxu0 %v1000
      %v1099 = vpop.f32.mrb[0].mxu0
      %v1100 = vadd.f32 %v1007, %v1099
      %v1101 = vpop.f32.mrb[0].mxu0
      %v1102 = vpop.f32.mrb[0].mxu0
      %v1103 = vadd.f32 %v1007, %v1102
      %v1104 = vpop.f32.mrb[0].mxu0
      %1105 = vmatprep.mubr.bf16.mxu0 0
      %1106 = vmatmul.mubr.bf16.gmra.mrb[0].mxu0 %v1001
      %v1107 = vpop.f32.mrb[0].mxu0
      %v1108 = vadd.f32 %v1007, %v1107
      %v1109 = vpop.f32.mrb[0].mxu0
      %v1110 = vpop.f32.mrb[0].mxu0
      %v1111 = vadd.f32 %v1007, %v1110
      %v1112 = vpop.f32.mrb[0].mxu0
      %1113 = vmatprep.mubr.bf16.mxu0 0
      %1114 = vmatmul.mubr.bf16.gmra.mrb[0].mxu0 %v1002
      %v1115 = vpop.f32.mrb[0].mxu0
      %v1116 = vadd.f32 %v1007, %v1115
      %v1117 = vpop.f32.mrb[0].mxu0
      %v1118 = vpop.f32.mrb[0].mxu0
      %v1119 = vadd.f32 %v1007, %v1118
      %v1120 = vpop.f32.mrb[0].mxu0
      %1121 = vdwg.mxu0
      %v1122 = vtanh.pop %v1092
      %v1123 = vtanh.pop %v1095
      %v1124 = vtanh.pop %v1100
      %v1125 = vtanh.pop %v1103
      %v1126 = vtanh.pop %v1108
      %v1127 = vtanh.pop %v1111
      %v1128 = vtanh.pop %v1116
      %v1129 = vtanh.pop %v1119
      %v1130 = vld [vmem:[%s7] sm:$0xf]
      %v1131 = vld [vmem:[%s7 + $0x4] sm:$0xf]
      %v1132 = vld [vmem:[%s7 + $0x8] sm:$0xf]
      %v1133 = vld [vmem:[%s7 + $0xc] sm:$0xf]
      %v1134 = vld [vmem:[%s7 + $0x10] sm:$0xf]
      %v1135 = vld [vmem:[%s7 + $0x14] sm:$0xf]
      %v1136 = vld [vmem:[%s7 + $0x18] sm:$0xf]
      %v1137 = vld [vmem:[%s7 + $0x1c] sm:$0xf]
      %v1138 = vld [vmem:[%s7 + $0x20] sm:$0xf]
      %v1139 = vld [vmem:[%s7 + $0x24] sm:$0xf]
      %v1140 = vld [vmem:[%s7 + $0x28] sm:$0xf]
      %v1141 = vld [vmem:[%s7 + $0x2c] sm:$0xf]
      %v1142 = vld [vmem:[%s7 + $0x30] sm:$0xf]
      %v1143 = vld [vmem:[%s7 + $0x34] sm:$0xf]
      %v1144 = vld [vmem:[%s7 + $0x38] sm:$0xf]
      %v1145 = vld [vmem:[%s7 + $0x3c] sm:$0xf]
      %v1146 = vpack.c.bf16 %v1123, %v1122
      %v1147 = vpack.c.bf16 %v1125, %v1124
      %v1148 = vpack.c.bf16 %v1127, %v1126
      %v1149 = vpack.c.bf16 %v1129, %v1128
      %v1166 = vunpack.c.l.b16 %v1130
      %v1167 = vunpack.c.l.b16 %v1131
      %v1168 = vunpack.c.l.b16 %v1132
      %v1169 = vunpack.c.l.b16 %v1133
      %v1170 = vunpack.c.l.b16 %v1134
      %v1171 = vunpack.c.l.b16 %v1135
      %v1172 = vunpack.c.l.b16 %v1136
      %v1173 = vunpack.c.l.b16 %v1137
      %v1174 = vunpack.c.l.b16 %v1138
      %v1175 = vunpack.c.l.b16 %v1139
      %v1176 = vunpack.c.l.b16 %v1140
      %v1177 = vunpack.c.l.b16 %v1141
      %v1178 = vunpack.c.l.b16 %v1142
      %v1179 = vunpack.c.l.b16 %v1143
      %v1180 = vunpack.c.l.b16 %v1144
      %v1181 = vunpack.c.l.b16 %v1145
      %v1182 = vpack.c.b16 %v1167, %v1166
      %v1183 = vpack.c.b16 %v1169, %v1168
      %v1184 = vpack.c.b16 %v1171, %v1170
      %v1185 = vpack.c.b16 %v1173, %v1172
      %v1186 = vpack.c.b16 %v1175, %v1174
      %v1187 = vpack.c.b16 %v1177, %v1176
      %v1188 = vpack.c.b16 %v1179, %v1178
      %v1189 = vpack.c.b16 %v1181, %v1180
      %1198 = vmatprep.subr.bf16.mxu0 0
      %1199 = vmatpush1.bf16.msra.mxu0 %v1182
      %1200 = vmatprep.subr.bf16.mxu0 0
      %1201 = vmatpush1.bf16.msra.mxu0 %v1183
      %1202 = vmatprep.subr.bf16.mxu0 0
      %1203 = vmatpush1.bf16.msra.mxu0 %v1184
      %1204 = vmatprep.subr.bf16.mxu0 0
      %1205 = vmatpush1.bf16.msra.mxu0 %v1185
      %1206 = vmatprep.subr.bf16.mxu0 0
      %1207 = vmatpush1.bf16.msra.mxu0 %v1186
      %1208 = vmatprep.subr.bf16.mxu0 0
      %1209 = vmatpush1.bf16.msra.mxu0 %v1187
      %1210 = vmatprep.subr.bf16.mxu0 0
      %1211 = vmatpush1.bf16.msra.mxu0 %v1188
      %1212 = vmatprep.subr.bf16.mxu0 0
      %1213 = vmatpush1.bf16.msra.mxu0 %v1189
      %1214 = vmatprep.subr.bf16.mxu0 0
      %1215 = vmatpush1.bf16.msra.mxu0 0
      %1216 = vmatprep.subr.bf16.mxu0 0
      %1217 = vmatpush1.bf16.msra.mxu0 0
      %1218 = vmatprep.subr.bf16.mxu0 0
      %1219 = vmatpush1.bf16.msra.mxu0 0
      %1220 = vmatprep.subr.bf16.mxu0 0
      %1221 = vmatpush1.bf16.msra.mxu0 0
      %1222 = vmatprep.subr.bf16.mxu0 0
      %1223 = vmatpush1.bf16.msra.mxu0 0
      %1224 = vmatprep.subr.bf16.mxu0 0
      %1225 = vmatpush1.bf16.msra.mxu0 0
      %1226 = vmatprep.subr.bf16.mxu0 0
      %1227 = vmatpush1.bf16.msra.mxu0 0
      %1228 = vmatprep.subr.bf16.mxu0 0
      %1229 = vmatpush1.bf16.msra.mxu0 0
      %1230 = vmatprep.mubr.bf16.mxu0 0
      %1231 = vmatmul.mubr.bf16.gmra.mrb[0].mxu0 %v1146
      %v1232 = vpop.f32.mrb[0].mxu0
      %v1233 = vadd.f32 0.0, %v1232
      %v1234 = vpop.f32.mrb[0].mxu0
      %v1235 = vpop.f32.mrb[0].mxu0
      %v1236 = vadd.f32 0.0, %v1235
      %v1237 = vpop.f32.mrb[0].mxu0
      %1238 = vmatprep.mubr.bf16.mxu0 0
      %1239 = vmatmul.mubr.bf16.gmra.mrb[0].mxu0 %v1147
      %v1240 = vpop.f32.mrb[0].mxu0
      %v1241 = vadd.f32 0.0, %v1240
      %v1242 = vpop.f32.mrb[0].mxu0
      %v1243 = vpop.f32.mrb[0].mxu0
      %v1244 = vadd.f32 0.0, %v1243
      %v1245 = vpop.f32.mrb[0].mxu0
      %1246 = vmatprep.mubr.bf16.mxu0 0
      %1247 = vmatmul.mubr.bf16.gmra.mrb[0].mxu0 %v1148
      %v1248 = vpop.f32.mrb[0].mxu0
      %v1249 = vadd.f32 0.0, %v1248
      %v1250 = vpop.f32.mrb[0].mxu0
      %v1251 = vpop.f32.mrb[0].mxu0
      %v1252 = vadd.f32 0.0, %v1251
      %v1253 = vpop.f32.mrb[0].mxu0
      %1254 = vmatprep.mubr.bf16.mxu0 0
      %1255 = vmatmul.mubr.bf16.gmra.mrb[0].mxu0 %v1149
      %v1256 = vpop.f32.mrb[0].mxu0
      %v1257 = vadd.f32 0.0, %v1256
      %v1258 = vpop.f32.mrb[0].mxu0
      %v1259 = vpop.f32.mrb[0].mxu0
      %v1260 = vadd.f32 0.0, %v1259
      %v1261 = vpop.f32.mrb[0].mxu0
      %1262 = vdwg.mxu0
      %1271 = vset.pattern.permute.xlu0 0
      %1272 = vperm.xlu0 %1271, %v1233
      %v1273 = vpop.permute.xlu0 %1272
      %1274 = vset.pattern.permute.xlu0 0
      %1275 = vperm.xlu0 %1274, %v1236
      %v1276 = vpop.permute.xlu0 %1275
      %1277 = vset.pattern.permute.xlu0 0
      %1278 = vperm.xlu0 %1277, %v1241
      %v1279 = vpop.permute.xlu0 %1278
      %1280 = vset.pattern.permute.xlu0 0
      %1281 = vperm.xlu0 %1280, %v1244
      %v1282 = vpop.permute.xlu0 %1281
      %1283 = vset.pattern.permute.xlu0 0
      %1284 = vperm.xlu0 %1283, %v1249
      %v1285 = vpop.permute.xlu0 %1284
      %1286 = vset.pattern.permute.xlu0 0
      %1287 = vperm.xlu0 %1286, %v1252
      %v1288 = vpop.permute.xlu0 %1287
      %1289 = vset.pattern.permute.xlu0 0
      %1290 = vperm.xlu0 %1289, %v1257
      %v1291 = vpop.permute.xlu0 %1290
      %1292 = vset.pattern.permute.xlu0 0
      %1293 = vperm.xlu0 %1292, %v1260
      %v1294 = vpop.permute.xlu0 %1293
      %v1295 = vlaneseq
      %v1296 = vand.u32 %v1295, 127
      %v1297 = vlaneseq
      %v1298 = vshrl.u32 %v1297, 7
      %v1299 = vsub.s32 %v1296, %v1298
      %v1300 = vrot.slane %v1273, %v1299
      %v1301 = vlaneseq
      %v1302 = vshrl.u32 %v1301, 7
      %v1303 = vsub.s32 %v1296, %v1302
      %v1304 = vrot.slane %v1276, %v1303
      %v1305 = vlaneseq
      %v1306 = vshrl.u32 %v1305, 7
      %v1307 = vsub.s32 %v1296, %v1306
      %v1308 = vrot.slane %v1279, %v1307
      %v1309 = vlaneseq
      %v1310 = vshrl.u32 %v1309, 7
      %v1311 = vsub.s32 %v1296, %v1310
      %v1312 = vrot.slane %v1282, %v1311
      %v1313 = vlaneseq
      %v1314 = vshrl.u32 %v1313, 7
      %v1315 = vsub.s32 %v1296, %v1314
      %v1316 = vrot.slane %v1285, %v1315
      %v1317 = vlaneseq
      %v1318 = vshrl.u32 %v1317, 7
      %v1319 = vsub.s32 %v1296, %v1318
      %v1320 = vrot.slane %v1288, %v1319
      %v1321 = vlaneseq
      %v1322 = vshrl.u32 %v1321, 7
      %v1323 = vsub.s32 %v1296, %v1322
      %v1324 = vrot.slane %v1291, %v1323
      %v1325 = vlaneseq
      %v1326 = vshrl.u32 %v1325, 7
      %v1327 = vsub.s32 %v1296, %v1326
      %v1328 = vrot.slane %v1294, %v1327
      %vm1329 = vcmask 1041409
      %v1330 = vsel %vm1329, %v1304, %v1300
      %vm1331 = vcmask 1042434
      %v1332 = vsel %vm1331, %v1308, %v1330
      %vm1333 = vcmask 1043459
      %v1334 = vsel %vm1333, %v1312, %v1332
      %v1335 = vsel %vm1329, %v1320, %v1316
      %v1336 = vsel %vm1331, %v1324, %v1335
      %v1337 = vsel %vm1333, %v1328, %v1336
      %vm1340 = vcmask 60416
      %v1341 = vsel %vm1340, %v1334, -inf
      %1342 = vmax.xlane.f32.xlu0 %v1341
      %v1343 = vpop.xlane.xlu0 %1342
      %v1344 = vsel %vm1340, %v1337, -inf
      %1345 = vmax.xlane.f32.xlu0 %v1344
      %v1346 = vpop.xlane.xlu0 %1345
      %v1349 = vlaneseq
      %v1350 = vshrl.u32 %v1349, 7
      %v1351 = vsub.s32 0, %v1350
      %v1352 = vrot.slane %v1343, %v1351
      %v1353 = vlaneseq
      %v1354 = vshrl.u32 %v1353, 7
      %v1355 = vsub.s32 1, %v1354
      %v1356 = vrot.slane %v1343, %v1355
      %v1357 = vlaneseq
      %v1358 = vshrl.u32 %v1357, 7
      %v1359 = vsub.s32 2, %v1358
      %v1360 = vrot.slane %v1343, %v1359
      %v1361 = vlaneseq
      %v1362 = vshrl.u32 %v1361, 7
      %v1363 = vsub.s32 3, %v1362
      %v1364 = vrot.slane %v1343, %v1363
      %v1365 = vlaneseq
      %v1366 = vshrl.u32 %v1365, 7
      %v1367 = vsub.s32 0, %v1366
      %v1368 = vrot.slane %v1346, %v1367
      %v1369 = vlaneseq
      %v1370 = vshrl.u32 %v1369, 7
      %v1371 = vsub.s32 1, %v1370
      %v1372 = vrot.slane %v1346, %v1371
      %v1373 = vlaneseq
      %v1374 = vshrl.u32 %v1373, 7
      %v1375 = vsub.s32 2, %v1374
      %v1376 = vrot.slane %v1346, %v1375
      %v1377 = vlaneseq
      %v1378 = vshrl.u32 %v1377, 7
      %v1379 = vsub.s32 3, %v1378
      %v1380 = vrot.slane %v1346, %v1379
      %v1389 = vsub.f32 %v1233, %v1352
      %v1390 = vsub.f32 %v1236, %v1356
      %v1391 = vsub.f32 %v1241, %v1360
      %v1392 = vsub.f32 %v1244, %v1364
      %v1393 = vsub.f32 %v1249, %v1368
      %v1394 = vsub.f32 %v1252, %v1372
      %v1395 = vsub.f32 %v1257, %v1376
      %v1396 = vsub.f32 %v1260, %v1380
      %v1397 = vmul.f32 %v1389, 1.442695
      %v1398 = vpow.pop %v1397
      %v1399 = vmul.f32 %v1390, 1.442695
      %v1400 = vpow.pop %v1399
      %v1401 = vmul.f32 %v1391, 1.442695
      %v1402 = vpow.pop %v1401
      %v1403 = vmul.f32 %v1392, 1.442695
      %v1404 = vpow.pop %v1403
      %v1405 = vmul.f32 %v1393, 1.442695
      %v1406 = vpow.pop %v1405
      %v1407 = vmul.f32 %v1394, 1.442695
      %v1408 = vpow.pop %v1407
      %v1409 = vmul.f32 %v1395, 1.442695
      %v1410 = vpow.pop %v1409
      %v1411 = vmul.f32 %v1396, 1.442695
      %v1412 = vpow.pop %v1411
      %1421 = vset.pattern.permute.xlu0 0
      %1422 = vperm.xlu0 %1421, %v1398
      %v1423 = vpop.permute.xlu0 %1422
      %1424 = vset.pattern.permute.xlu0 0
      %1425 = vperm.xlu0 %1424, %v1400
      %v1426 = vpop.permute.xlu0 %1425
      %1427 = vset.pattern.permute.xlu0 0
      %1428 = vperm.xlu0 %1427, %v1402
      %v1429 = vpop.permute.xlu0 %1428
      %1430 = vset.pattern.permute.xlu0 0
      %1431 = vperm.xlu0 %1430, %v1404
      %v1432 = vpop.permute.xlu0 %1431
      %1433 = vset.pattern.permute.xlu0 0
      %1434 = vperm.xlu0 %1433, %v1406
      %v1435 = vpop.permute.xlu0 %1434
      %1436 = vset.pattern.permute.xlu0 0
      %1437 = vperm.xlu0 %1436, %v1408
      %v1438 = vpop.permute.xlu0 %1437
      %1439 = vset.pattern.permute.xlu0 0
      %1440 = vperm.xlu0 %1439, %v1410
      %v1441 = vpop.permute.xlu0 %1440
      %1442 = vset.pattern.permute.xlu0 0
      %1443 = vperm.xlu0 %1442, %v1412
      %v1444 = vpop.permute.xlu0 %1443
      %v1445 = vlaneseq
      %v1446 = vshrl.u32 %v1445, 7
      %v1447 = vsub.s32 %v1296, %v1446
      %v1448 = vrot.slane %v1423, %v1447
      %v1449 = vlaneseq
      %v1450 = vshrl.u32 %v1449, 7
      %v1451 = vsub.s32 %v1296, %v1450
      %v1452 = vrot.slane %v1426, %v1451
      %v1453 = vlaneseq
      %v1454 = vshrl.u32 %v1453, 7
      %v1455 = vsub.s32 %v1296, %v1454
      %v1456 = vrot.slane %v1429, %v1455
      %v1457 = vlaneseq
      %v1458 = vshrl.u32 %v1457, 7
      %v1459 = vsub.s32 %v1296, %v1458
      %v1460 = vrot.slane %v1432, %v1459
      %v1461 = vlaneseq
      %v1462 = vshrl.u32 %v1461, 7
      %v1463 = vsub.s32 %v1296, %v1462
      %v1464 = vrot.slane %v1435, %v1463
      %v1465 = vlaneseq
      %v1466 = vshrl.u32 %v1465, 7
      %v1467 = vsub.s32 %v1296, %v1466
      %v1468 = vrot.slane %v1438, %v1467
      %v1469 = vlaneseq
      %v1470 = vshrl.u32 %v1469, 7
      %v1471 = vsub.s32 %v1296, %v1470
      %v1472 = vrot.slane %v1441, %v1471
      %v1473 = vlaneseq
      %v1474 = vshrl.u32 %v1473, 7
      %v1475 = vsub.s32 %v1296, %v1474
      %v1476 = vrot.slane %v1444, %v1475
      %v1477 = vsel %vm1329, %v1452, %v1448
      %v1478 = vsel %vm1331, %v1456, %v1477
      %v1479 = vsel %vm1333, %v1460, %v1478
      %v1480 = vsel %vm1329, %v1468, %v1464
      %v1481 = vsel %vm1331, %v1472, %v1480
      %v1482 = vsel %vm1333, %v1476, %v1481
      %v1485 = vsel %vm1340, %v1479, 0.0
      %1486 = vadd.xlane.f32.xlu0 %v1485
      %v1487 = vpop.xlane.xlu0 %1486
      %v1488 = vsel %vm1340, %v1482, 0.0
      %1489 = vadd.xlane.f32.xlu0 %v1488
      %v1490 = vpop.xlane.xlu0 %1489
      %v1491 = vrcp.pop %v1487
      %v1492 = vrcp.pop %v1490
      %v1495 = vlaneseq
      %v1496 = vshrl.u32 %v1495, 7
      %v1497 = vsub.s32 0, %v1496
      %v1498 = vrot.slane %v1491, %v1497
      %v1499 = vlaneseq
      %v1500 = vshrl.u32 %v1499, 7
      %v1501 = vsub.s32 1, %v1500
      %v1502 = vrot.slane %v1491, %v1501
      %v1503 = vlaneseq
      %v1504 = vshrl.u32 %v1503, 7
      %v1505 = vsub.s32 2, %v1504
      %v1506 = vrot.slane %v1491, %v1505
      %v1507 = vlaneseq
      %v1508 = vshrl.u32 %v1507, 7
      %v1509 = vsub.s32 3, %v1508
      %v1510 = vrot.slane %v1491, %v1509
      %v1511 = vlaneseq
      %v1512 = vshrl.u32 %v1511, 7
      %v1513 = vsub.s32 0, %v1512
      %v1514 = vrot.slane %v1492, %v1513
      %v1515 = vlaneseq
      %v1516 = vshrl.u32 %v1515, 7
      %v1517 = vsub.s32 1, %v1516
      %v1518 = vrot.slane %v1492, %v1517
      %v1519 = vlaneseq
      %v1520 = vshrl.u32 %v1519, 7
      %v1521 = vsub.s32 2, %v1520
      %v1522 = vrot.slane %v1492, %v1521
      %v1523 = vlaneseq
      %v1524 = vshrl.u32 %v1523, 7
      %v1525 = vsub.s32 3, %v1524
      %v1526 = vrot.slane %v1492, %v1525
      %v1535 = vmul.f32 %v1398, %v1498
      %v1536 = vmul.f32 %v1400, %v1502
      %v1537 = vmul.f32 %v1402, %v1506
      %v1538 = vmul.f32 %v1404, %v1510
      %v1539 = vmul.f32 %v1406, %v1514
      %v1540 = vmul.f32 %v1408, %v1518
      %v1541 = vmul.f32 %v1410, %v1522
      %v1542 = vmul.f32 %v1412, %v1526
      %1544 = vset.pattern.permute.xlu0 0
      %1545 = vperm.xlu0 %1544, %v1535
      %v1546 = vpop.permute.xlu0 %1545
      %1549 = vset.pattern.permute.xlu0 0
      %1550 = vperm.xlu0 %1549, %v1536
      %v1551 = vpop.permute.xlu0 %1550
      %1554 = vset.pattern.permute.xlu0 0
      %1555 = vperm.xlu0 %1554, %v1537
      %v1556 = vpop.permute.xlu0 %1555
      %1559 = vset.pattern.permute.xlu0 0
      %1560 = vperm.xlu0 %1559, %v1538
      %v1561 = vpop.permute.xlu0 %1560
      %1564 = vset.pattern.permute.xlu0 0
      %1565 = vperm.xlu0 %1564, %v1539
      %v1566 = vpop.permute.xlu0 %1565
      %1569 = vset.pattern.permute.xlu0 0
      %1570 = vperm.xlu0 %1569, %v1540
      %v1571 = vpop.permute.xlu0 %1570
      %1574 = vset.pattern.permute.xlu0 0
      %1575 = vperm.xlu0 %1574, %v1541
      %v1576 = vpop.permute.xlu0 %1575
      %1579 = vset.pattern.permute.xlu0 0
      %1580 = vperm.xlu0 %1579, %v1542
      %v1581 = vpop.permute.xlu0 %1580
      %v1583 = vmul.f32 %v1546, %v974
      %v1584 = vmul.f32 %v1551, %v975
      %v1585 = vmul.f32 %v1556, %v976
      %v1586 = vmul.f32 %v1561, %v977
      %v1587 = vmul.f32 %v1566, %v978
      %v1588 = vmul.f32 %v1571, %v979
      %v1589 = vmul.f32 %v1576, %v980
      %v1590 = vmul.f32 %v1581, %v981
      %v1591 = vrot.slane %v1583, 4
      %v1592 = vadd.f32 %v1583, %v1591
      %v1593 = vrot.slane %v1592, 2
      %v1594 = vadd.f32 %v1592, %v1593
      %v1595 = vrot.slane %v1594, 1
      %v1596 = vadd.f32 %v1594, %v1595
      %v1597 = vrot.slane %v1584, 4
      %v1598 = vadd.f32 %v1584, %v1597
      %v1599 = vrot.slane %v1598, 2
      %v1600 = vadd.f32 %v1598, %v1599
      %v1601 = vrot.slane %v1600, 1
      %v1602 = vadd.f32 %v1600, %v1601
      %v1603 = vrot.slane %v1585, 4
      %v1604 = vadd.f32 %v1585, %v1603
      %v1605 = vrot.slane %v1604, 2
      %v1606 = vadd.f32 %v1604, %v1605
      %v1607 = vrot.slane %v1606, 1
      %v1608 = vadd.f32 %v1606, %v1607
      %v1609 = vrot.slane %v1586, 4
      %v1610 = vadd.f32 %v1586, %v1609
      %v1611 = vrot.slane %v1610, 2
      %v1612 = vadd.f32 %v1610, %v1611
      %v1613 = vrot.slane %v1612, 1
      %v1614 = vadd.f32 %v1612, %v1613
      %v1615 = vrot.slane %v1587, 4
      %v1616 = vadd.f32 %v1587, %v1615
      %v1617 = vrot.slane %v1616, 2
      %v1618 = vadd.f32 %v1616, %v1617
      %v1619 = vrot.slane %v1618, 1
      %v1620 = vadd.f32 %v1618, %v1619
      %v1621 = vrot.slane %v1588, 4
      %v1622 = vadd.f32 %v1588, %v1621
      %v1623 = vrot.slane %v1622, 2
      %v1624 = vadd.f32 %v1622, %v1623
      %v1625 = vrot.slane %v1624, 1
      %v1626 = vadd.f32 %v1624, %v1625
      %v1627 = vrot.slane %v1589, 4
      %v1628 = vadd.f32 %v1589, %v1627
      %v1629 = vrot.slane %v1628, 2
      %v1630 = vadd.f32 %v1628, %v1629
      %v1631 = vrot.slane %v1630, 1
      %v1632 = vadd.f32 %v1630, %v1631
      %v1633 = vrot.slane %v1590, 4
      %v1634 = vadd.f32 %v1590, %v1633
      %v1635 = vrot.slane %v1634, 2
      %v1636 = vadd.f32 %v1634, %v1635
      %v1637 = vrot.slane %v1636, 1
      %v1638 = vadd.f32 %v1636, %v1637
      %v1639 = vld [vmem:[%s476] sm:$0xf]
      %v1640 = vld [vmem:[%s476 + $0x4] sm:$0xf]
      %v1643 = vrot.slane %v1639, 1
      %v1644 = vrot.slane %v1639, 2
      %v1645 = vrot.slane %v1639, 3
      %v1646 = vrot.slane %v1640, 1
      %v1647 = vrot.slane %v1640, 2
      %v1648 = vrot.slane %v1640, 3
      %v1657 = vadd.f32 %v1596, %v1639
      %v1658 = vadd.f32 %v1602, %v1643
      %v1659 = vadd.f32 %v1608, %v1644
      %v1660 = vadd.f32 %v1614, %v1645
      %v1661 = vadd.f32 %v1620, %v1640
      %v1662 = vadd.f32 %v1626, %v1646
      %v1663 = vadd.f32 %v1632, %v1647
      %v1664 = vadd.f32 %v1638, %v1648
      %v1665 = vld [vmem:[%s8] sm:$0xf]
      %v1666 = vld [vmem:[%s8 + $0x4] sm:$0xf]
      %v1667 = vld [vmem:[%s8 + $0x8] sm:$0xf]
      %v1668 = vld [vmem:[%s8 + $0xc] sm:$0xf]
      %v1669 = vld [vmem:[%s8 + $0x10] sm:$0xf]
      %v1670 = vld [vmem:[%s8 + $0x14] sm:$0xf]
      %v1671 = vld [vmem:[%s8 + $0x18] sm:$0xf]
      %v1672 = vld [vmem:[%s8 + $0x1c] sm:$0xf]
      %v1673 = vld [vmem:[%s8 + $0x20] sm:$0xf]
      %v1674 = vld [vmem:[%s8 + $0x24] sm:$0xf]
      %v1675 = vld [vmem:[%s8 + $0x28] sm:$0xf]
      %v1676 = vld [vmem:[%s8 + $0x2c] sm:$0xf]
      %v1677 = vld [vmem:[%s8 + $0x30] sm:$0xf]
      %v1678 = vld [vmem:[%s8 + $0x34] sm:$0xf]
      %v1679 = vld [vmem:[%s8 + $0x38] sm:$0xf]
      %v1680 = vld [vmem:[%s8 + $0x3c] sm:$0xf]
      %v1681 = vld [vmem:[%s9] sm:$0x1]
      %v1682 = vpack.c.bf16 %v1657, %v1657
      %v1683 = vpack.c.bf16 %v1658, %v1658
      %v1684 = vpack.c.bf16 %v1659, %v1659
      %v1685 = vpack.c.bf16 %v1660, %v1660
      %v1686 = vpack.c.bf16 %v1661, %v1661
      %v1687 = vpack.c.bf16 %v1662, %v1662
      %v1688 = vpack.c.bf16 %v1663, %v1663
      %v1689 = vpack.c.bf16 %v1664, %v1664
      %v1691 = vlaneseq
      %v1692 = vshrl.u32 %v1691, 7
      %v1693 = vsub.s32 0, %v1692
      %v1694 = vrot.slane %v1681, %v1693
      %v1704 = vunpack.c.l.b16 %v1682
      %v1705 = vunpack.c.l.b16 %v1683
      %v1706 = vunpack.c.l.b16 %v1684
      %v1707 = vunpack.c.l.b16 %v1685
      %v1708 = vunpack.c.l.b16 %v1686
      %v1709 = vunpack.c.l.b16 %v1687
      %v1710 = vunpack.c.l.b16 %v1688
      %v1711 = vunpack.c.l.b16 %v1689
      %v1712 = vrot.slane %v1705, 7
      %v1713 = vsel %vm1329, %v1712, %v1704
      %v1714 = vrot.slane %v1706, 6
      %v1715 = vsel %vm1331, %v1714, %v1713
      %v1716 = vrot.slane %v1707, 5
      %v1717 = vsel %vm1333, %v1716, %v1715
      %v1718 = vrot.slane %v1708, 4
      %vm1719 = vcmask 1044484
      %v1720 = vsel %vm1719, %v1718, %v1717
      %v1721 = vrot.slane %v1709, 3
      %vm1722 = vcmask 1045509
      %v1723 = vsel %vm1722, %v1721, %v1720
      %v1724 = vrot.slane %v1710, 2
      %vm1725 = vcmask 1046534
      %v1726 = vsel %vm1725, %v1724, %v1723
      %v1727 = vrot.slane %v1711, 1
      %vm1728 = vcmask 1047559
      %v1729 = vsel %vm1728, %v1727, %v1726
      %v1730 = vpack.c.b16 %v1729, %v1729
      %v1748 = vunpack.c.l.b16 %v1665
      %v1749 = vunpack.c.l.b16 %v1666
      %v1750 = vunpack.c.l.b16 %v1667
      %v1751 = vunpack.c.l.b16 %v1668
      %v1752 = vunpack.c.l.b16 %v1669
      %v1753 = vunpack.c.l.b16 %v1670
      %v1754 = vunpack.c.l.b16 %v1671
      %v1755 = vunpack.c.l.b16 %v1672
      %v1756 = vunpack.c.l.b16 %v1673
      %v1757 = vunpack.c.l.b16 %v1674
      %v1758 = vunpack.c.l.b16 %v1675
      %v1759 = vunpack.c.l.b16 %v1676
      %v1760 = vunpack.c.l.b16 %v1677
      %v1761 = vunpack.c.l.b16 %v1678
      %v1762 = vunpack.c.l.b16 %v1679
      %v1763 = vunpack.c.l.b16 %v1680
      %v1764 = vpack.c.b16 %v1749, %v1748
      %v1765 = vpack.c.b16 %v1751, %v1750
      %v1766 = vpack.c.b16 %v1753, %v1752
      %v1767 = vpack.c.b16 %v1755, %v1754
      %v1768 = vpack.c.b16 %v1757, %v1756
      %v1769 = vpack.c.b16 %v1759, %v1758
      %v1770 = vpack.c.b16 %v1761, %v1760
      %v1771 = vpack.c.b16 %v1763, %v1762
      %1780 = vmatprep.subr.bf16.mxu0 0
      %1781 = vmatpush1.bf16.msra.mxu0 %v1764
      %1782 = vmatprep.subr.bf16.mxu0 0
      %1783 = vmatpush1.bf16.msra.mxu0 %v1765
      %1784 = vmatprep.subr.bf16.mxu0 0
      %1785 = vmatpush1.bf16.msra.mxu0 %v1766
      %1786 = vmatprep.subr.bf16.mxu0 0
      %1787 = vmatpush1.bf16.msra.mxu0 %v1767
      %1788 = vmatprep.subr.bf16.mxu0 0
      %1789 = vmatpush1.bf16.msra.mxu0 %v1768
      %1790 = vmatprep.subr.bf16.mxu0 0
      %1791 = vmatpush1.bf16.msra.mxu0 %v1769
      %1792 = vmatprep.subr.bf16.mxu0 0
      %1793 = vmatpush1.bf16.msra.mxu0 %v1770
      %1794 = vmatprep.subr.bf16.mxu0 0
      %1795 = vmatpush1.bf16.msra.mxu0 %v1771
      %1796 = vmatprep.subr.bf16.mxu0 0
      %1797 = vmatpush1.bf16.msra.mxu0 0
      %1798 = vmatprep.subr.bf16.mxu0 0
      %1799 = vmatpush1.bf16.msra.mxu0 0
      %1800 = vmatprep.subr.bf16.mxu0 0
      %1801 = vmatpush1.bf16.msra.mxu0 0
      %1802 = vmatprep.subr.bf16.mxu0 0
      %1803 = vmatpush1.bf16.msra.mxu0 0
      %1804 = vmatprep.subr.bf16.mxu0 0
      %1805 = vmatpush1.bf16.msra.mxu0 0
      %1806 = vmatprep.subr.bf16.mxu0 0
      %1807 = vmatpush1.bf16.msra.mxu0 0
      %1808 = vmatprep.subr.bf16.mxu0 0
      %1809 = vmatpush1.bf16.msra.mxu0 0
      %1810 = vmatprep.subr.bf16.mxu0 0
      %1811 = vmatpush1.bf16.msra.mxu0 0
      %1812 = vmatprep.mubr.bf16.mxu0 0
      %1813 = vmatmul.mubr.bf16.gmra.mrb[0].mxu0 %v1730
      %v1814 = vpop.f32.mrb[0].mxu0
      %v1815 = vadd.f32 %v1694, %v1814
      %v1816 = vpop.f32.mrb[0].mxu0
      %v1817 = vpop.f32.mrb[0].mxu0
      %v1818 = vpop.f32.mrb[0].mxu0
      %1819 = vdwg.mxu0
      %v1820 = vtanh.pop %v1815
      %v1821 = vld [vmem:[%s10] sm:$0xf]
      %v1822 = vld [vmem:[%s10 + $0x4] sm:$0xf]
      %v1823 = vld [vmem:[%s10 + $0x8] sm:$0xf]
      %v1824 = vld [vmem:[%s10 + $0xc] sm:$0xf]
      %v1825 = vld [vmem:[%s10 + $0x10] sm:$0xf]
      %v1826 = vld [vmem:[%s10 + $0x14] sm:$0xf]
      %v1827 = vld [vmem:[%s10 + $0x18] sm:$0xf]
      %v1828 = vld [vmem:[%s10 + $0x1c] sm:$0xf]
      %v1829 = vld [vmem:[%s10 + $0x20] sm:$0xf]
      %v1830 = vld [vmem:[%s10 + $0x24] sm:$0xf]
      %v1831 = vld [vmem:[%s10 + $0x28] sm:$0xf]
      %v1832 = vld [vmem:[%s10 + $0x2c] sm:$0xf]
      %v1833 = vld [vmem:[%s10 + $0x30] sm:$0xf]
      %v1834 = vld [vmem:[%s10 + $0x34] sm:$0xf]
      %v1835 = vld [vmem:[%s10 + $0x38] sm:$0xf]
      %v1836 = vld [vmem:[%s10 + $0x3c] sm:$0xf]
      %v1837 = vpack.c.bf16 %v1820, %v1820
      %v1854 = vunpack.c.l.b16 %v1821
      %v1855 = vunpack.c.l.b16 %v1822
      %v1856 = vunpack.c.l.b16 %v1823
      %v1857 = vunpack.c.l.b16 %v1824
      %v1858 = vunpack.c.l.b16 %v1825
      %v1859 = vunpack.c.l.b16 %v1826
      %v1860 = vunpack.c.l.b16 %v1827
      %v1861 = vunpack.c.l.b16 %v1828
      %v1862 = vunpack.c.l.b16 %v1829
      %v1863 = vunpack.c.l.b16 %v1830
      %v1864 = vunpack.c.l.b16 %v1831
      %v1865 = vunpack.c.l.b16 %v1832
      %v1866 = vunpack.c.l.b16 %v1833
      %v1867 = vunpack.c.l.b16 %v1834
      %v1868 = vunpack.c.l.b16 %v1835
      %v1869 = vunpack.c.l.b16 %v1836
      %v1870 = vpack.c.b16 %v1855, %v1854
      %v1871 = vpack.c.b16 %v1857, %v1856
      %v1872 = vpack.c.b16 %v1859, %v1858
      %v1873 = vpack.c.b16 %v1861, %v1860
      %v1874 = vpack.c.b16 %v1863, %v1862
      %v1875 = vpack.c.b16 %v1865, %v1864
      %v1876 = vpack.c.b16 %v1867, %v1866
      %v1877 = vpack.c.b16 %v1869, %v1868
      %1886 = vmatprep.subr.bf16.mxu0 0
      %1887 = vmatpush1.bf16.msra.mxu0 %v1870
      %1888 = vmatprep.subr.bf16.mxu0 0
      %1889 = vmatpush1.bf16.msra.mxu0 %v1871
      %1890 = vmatprep.subr.bf16.mxu0 0
      %1891 = vmatpush1.bf16.msra.mxu0 %v1872
      %1892 = vmatprep.subr.bf16.mxu0 0
      %1893 = vmatpush1.bf16.msra.mxu0 %v1873
      %1894 = vmatprep.subr.bf16.mxu0 0
      %1895 = vmatpush1.bf16.msra.mxu0 %v1874
      %1896 = vmatprep.subr.bf16.mxu0 0
      %1897 = vmatpush1.bf16.msra.mxu0 %v1875
      %1898 = vmatprep.subr.bf16.mxu0 0
      %1899 = vmatpush1.bf16.msra.mxu0 %v1876
      %1900 = vmatprep.subr.bf16.mxu0 0
      %1901 = vmatpush1.bf16.msra.mxu0 %v1877
      %1902 = vmatprep.subr.bf16.mxu0 0
      %1903 = vmatpush1.bf16.msra.mxu0 0
      %1904 = vmatprep.subr.bf16.mxu0 0
      %1905 = vmatpush1.bf16.msra.mxu0 0
      %1906 = vmatprep.subr.bf16.mxu0 0
      %1907 = vmatpush1.bf16.msra.mxu0 0
      %1908 = vmatprep.subr.bf16.mxu0 0
      %1909 = vmatpush1.bf16.msra.mxu0 0
      %1910 = vmatprep.subr.bf16.mxu0 0
      %1911 = vmatpush1.bf16.msra.mxu0 0
      %1912 = vmatprep.subr.bf16.mxu0 0
      %1913 = vmatpush1.bf16.msra.mxu0 0
      %1914 = vmatprep.subr.bf16.mxu0 0
      %1915 = vmatpush1.bf16.msra.mxu0 0
      %1916 = vmatprep.subr.bf16.mxu0 0
      %1917 = vmatpush1.bf16.msra.mxu0 0
      %1918 = vmatprep.mubr.bf16.mxu0 0
      %1919 = vmatmul.mubr.bf16.gmra.mrb[0].mxu0 %v1837
      %v1920 = vpop.f32.mrb[0].mxu0
      %v1921 = vadd.f32 0.0, %v1920
      %v1922 = vpop.f32.mrb[0].mxu0
      %v1923 = vpop.f32.mrb[0].mxu0
      %v1924 = vpop.f32.mrb[0].mxu0
      %1925 = vdwg.mxu0
      %v1927 = vcombine.high %v1921, %v1921
      %v1929 = vld [vmem:[%s482] sm:$0xf]
      %v1930 = vld [vmem:[%s482 + $0x4] sm:$0xf]
      %vm1931 = vcmp.gt.f32.partialorder %v1929, 0.0
      %vm1932 = vcmp.gt.f32.partialorder %v1930, 0.0
      %v1933 = vsel %vm1931, %v1921, -1e+09
      %v1934 = vsel %vm1932, %v1927, -1e+09
      %vm1935 = vcmask 3072
      %v1936 = vsel %vm1935, %v1933, -inf
      %v1937 = vrot.slane %v1936, 4
      %v1938 = vmax.f32 %v1936, %v1937
      %v1939 = vrot.slane %v1938, 2
      %v1940 = vmax.f32 %v1938, %v1939
      %v1941 = vrot.slane %v1940, 1
      %v1942 = vmax.f32 %v1940, %v1941
      %v1943 = vsel %vm1935, %v1934, -inf
      %v1944 = vrot.slane %v1943, 4
      %v1945 = vmax.f32 %v1943, %v1944
      %v1946 = vrot.slane %v1945, 2
      %v1947 = vmax.f32 %v1945, %v1946
      %v1948 = vrot.slane %v1947, 1
      %v1949 = vmax.f32 %v1947, %v1948
      %v1950 = vsub.f32 %v1933, %v1942
      %v1951 = vsub.f32 %v1934, %v1949
      %v1952 = vmul.f32 %v1950, 1.442695
      %v1953 = vpow.pop %v1952
      %v1954 = vmul.f32 %v1951, 1.442695
      %v1955 = vpow.pop %v1954
      %v1956 = vsel %vm1935, %v1953, 0.0
      %v1957 = vrot.slane %v1956, 4
      %v1958 = vadd.f32 %v1956, %v1957
      %v1959 = vrot.slane %v1958, 2
      %v1960 = vadd.f32 %v1958, %v1959
      %v1961 = vrot.slane %v1960, 1
      %v1962 = vadd.f32 %v1960, %v1961
      %v1963 = vsel %vm1935, %v1955, 0.0
      %v1964 = vrot.slane %v1963, 4
      %v1965 = vadd.f32 %v1963, %v1964
      %v1966 = vrot.slane %v1965, 2
      %v1967 = vadd.f32 %v1965, %v1966
      %v1968 = vrot.slane %v1967, 1
      %v1969 = vadd.f32 %v1967, %v1968
      %v1970 = vrcp.pop %v1962
      %v1971 = vrcp.pop %v1969
      %v1972 = vmul.f32 %v1953, %v1970
      %v1973 = vmul.f32 %v1955, %v1971
      %1975 = vset.pattern.permute.xlu0 0
      %1976 = vperm.xlu0 %1975, %v1972
      %v1977 = vpop.permute.xlu0 %1976
      %1980 = vset.pattern.permute.xlu0 0
      %1981 = vperm.xlu0 %1980, %v1973
      %v1982 = vpop.permute.xlu0 %1981
      %v1992 = vrot.slane %v1658, 7
      %v1993 = vsel %vm1329, %v1992, %v1657
      %v1994 = vrot.slane %v1659, 6
      %v1995 = vsel %vm1331, %v1994, %v1993
      %v1996 = vrot.slane %v1660, 5
      %v1997 = vsel %vm1333, %v1996, %v1995
      %v1998 = vrot.slane %v1662, 7
      %v1999 = vsel %vm1329, %v1998, %v1661
      %v2000 = vrot.slane %v1663, 6
      %v2001 = vsel %vm1331, %v2000, %v1999
      %v2002 = vrot.slane %v1664, 5
      %v2003 = vsel %vm1333, %v2002, %v2001
      %v2006 = vmul.f32 %v1977, %v1997
      %v2007 = vmul.f32 %v1982, %v2003
      %vm2008 = vcmask 1043456
      %v2009 = vsel %vm2008, %v2006, 0.0
      %v2010 = vrot.slane %v2009, 4
      %v2011 = vadd.f32 %v2009, %v2010
      %v2012 = vrot.slane %v2011, 2
      %v2013 = vadd.f32 %v2011, %v2012
      %v2014 = vrot.slane %v2013, 1
      %v2015 = vadd.f32 %v2013, %v2014
      %v2016 = vsel %vm2008, %v2007, 0.0
      %v2017 = vrot.slane %v2016, 4
      %v2018 = vadd.f32 %v2016, %v2017
      %v2019 = vrot.slane %v2018, 2
      %v2020 = vadd.f32 %v2018, %v2019
      %v2021 = vrot.slane %v2020, 1
      %v2022 = vadd.f32 %v2020, %v2021
      %v2023 = vld [vmem:[%s11] sm:$0xf]
      %v2024 = vld [vmem:[%s11 + $0x4] sm:$0xf]
      %v2025 = vld [vmem:[%s11 + $0x8] sm:$0xf]
      %v2026 = vld [vmem:[%s11 + $0xc] sm:$0xf]
      %v2027 = vld [vmem:[%s11 + $0x10] sm:$0xf]
      %v2028 = vld [vmem:[%s11 + $0x14] sm:$0xf]
      %v2029 = vld [vmem:[%s11 + $0x18] sm:$0xf]
      %v2030 = vld [vmem:[%s11 + $0x1c] sm:$0xf]
      %v2031 = vld [vmem:[%s11 + $0x20] sm:$0xf]
      %v2032 = vld [vmem:[%s11 + $0x24] sm:$0xf]
      %v2033 = vld [vmem:[%s11 + $0x28] sm:$0xf]
      %v2034 = vld [vmem:[%s11 + $0x2c] sm:$0xf]
      %v2035 = vld [vmem:[%s11 + $0x30] sm:$0xf]
      %v2036 = vld [vmem:[%s11 + $0x34] sm:$0xf]
      %v2037 = vld [vmem:[%s11 + $0x38] sm:$0xf]
      %v2038 = vld [vmem:[%s11 + $0x3c] sm:$0xf]
      %v2039 = vld [vmem:[%s12] sm:$0x1]
      %v2040 = vpack.c.bf16 %v2015, %v2015
      %v2041 = vpack.c.bf16 %v2022, %v2022
      %v2043 = vlaneseq
      %v2044 = vshrl.u32 %v2043, 7
      %v2045 = vsub.s32 0, %v2044
      %v2046 = vrot.slane %v2039, %v2045
      %v2050 = vunpack.c.l.b16 %v2040
      %v2051 = vunpack.c.l.b16 %v2041
      %v2052 = vsel %vm1329, %v2051, %v2050
      %v2053 = vpack.c.b16 %v2052, %v2052
      %v2071 = vunpack.c.l.b16 %v2023
      %v2072 = vunpack.c.l.b16 %v2024
      %v2073 = vunpack.c.l.b16 %v2025
      %v2074 = vunpack.c.l.b16 %v2026
      %v2075 = vunpack.c.l.b16 %v2027
      %v2076 = vunpack.c.l.b16 %v2028
      %v2077 = vunpack.c.l.b16 %v2029
      %v2078 = vunpack.c.l.b16 %v2030
      %v2079 = vunpack.c.l.b16 %v2031
      %v2080 = vunpack.c.l.b16 %v2032
      %v2081 = vunpack.c.l.b16 %v2033
      %v2082 = vunpack.c.l.b16 %v2034
      %v2083 = vunpack.c.l.b16 %v2035
      %v2084 = vunpack.c.l.b16 %v2036
      %v2085 = vunpack.c.l.b16 %v2037
      %v2086 = vunpack.c.l.b16 %v2038
      %v2087 = vpack.c.b16 %v2072, %v2071
      %v2088 = vpack.c.b16 %v2074, %v2073
      %v2089 = vpack.c.b16 %v2076, %v2075
      %v2090 = vpack.c.b16 %v2078, %v2077
      %v2091 = vpack.c.b16 %v2080, %v2079
      %v2092 = vpack.c.b16 %v2082, %v2081
      %v2093 = vpack.c.b16 %v2084, %v2083
      %v2094 = vpack.c.b16 %v2086, %v2085
      %2103 = vmatprep.subr.bf16.mxu0 0
      %2104 = vmatpush1.bf16.msra.mxu0 %v2087
      %2105 = vmatprep.subr.bf16.mxu0 0
      %2106 = vmatpush1.bf16.msra.mxu0 %v2088
      %2107 = vmatprep.subr.bf16.mxu0 0
      %2108 = vmatpush1.bf16.msra.mxu0 %v2089
      %2109 = vmatprep.subr.bf16.mxu0 0
      %2110 = vmatpush1.bf16.msra.mxu0 %v2090
      %2111 = vmatprep.subr.bf16.mxu0 0
      %2112 = vmatpush1.bf16.msra.mxu0 %v2091
      %2113 = vmatprep.subr.bf16.mxu0 0
      %2114 = vmatpush1.bf16.msra.mxu0 %v2092
      %2115 = vmatprep.subr.bf16.mxu0 0
      %2116 = vmatpush1.bf16.msra.mxu0 %v2093
      %2117 = vmatprep.subr.bf16.mxu0 0
      %2118 = vmatpush1.bf16.msra.mxu0 %v2094
      %2119 = vmatprep.subr.bf16.mxu0 0
      %2120 = vmatpush1.bf16.msra.mxu0 0
      %2121 = vmatprep.subr.bf16.mxu0 0
      %2122 = vmatpush1.bf16.msra.mxu0 0
      %2123 = vmatprep.subr.bf16.mxu0 0
      %2124 = vmatpush1.bf16.msra.mxu0 0
      %2125 = vmatprep.subr.bf16.mxu0 0
      %2126 = vmatpush1.bf16.msra.mxu0 0
      %2127 = vmatprep.subr.bf16.mxu0 0
      %2128 = vmatpush1.bf16.msra.mxu0 0
      %2129 = vmatprep.subr.bf16.mxu0 0
      %2130 = vmatpush1.bf16.msra.mxu0 0
      %2131 = vmatprep.subr.bf16.mxu0 0
      %2132 = vmatpush1.bf16.msra.mxu0 0
      %2133 = vmatprep.subr.bf16.mxu0 0
      %2134 = vmatpush1.bf16.msra.mxu0 0
      %2135 = vmatprep.mubr.bf16.mxu0 0
      %2136 = vmatmul.mubr.bf16.gmra.mrb[0].mxu0 %v2053
      %v2137 = vpop.f32.mrb[0].mxu0
      %v2138 = vadd.f32 %v2046, %v2137
      %v2139 = vpop.f32.mrb[0].mxu0
      %v2140 = vpop.f32.mrb[0].mxu0
      %v2141 = vpop.f32.mrb[0].mxu0
      %2142 = vdwg.mxu0
      %v2143 = vtanh.pop %v2138
      %v2146 = vunpack.c.l.s4 1966171168
      %v2147 = vunpack.c.0.s8 %v2146
      %v2148 = vlaneseq
      %v2149 = vshrl.u32 %v2148, 7
      %v2150 = vsub.s32 %v2147, %v2149
      %v2151 = vrot.slane %v2143, %v2150
      %v2152 = vcombine.high %v2151, %v2151
      %v2154 = vunpack.c.l.s4 1966171168
      %v2155 = vunpack.c.0.s8 %v2154
      %v2156 = vlaneseq
      %v2157 = vshrl.u32 %v2156, 7
      %v2158 = vsub.s32 %v2155, %v2157
      %v2159 = vrot.slane %v2151, %v2158
      %v2161 = vunpack.c.l.s4 1966171168
      %v2162 = vunpack.c.0.s8 %v2161
      %v2163 = vlaneseq
      %v2164 = vshrl.u32 %v2163, 7
      %v2165 = vsub.s32 %v2162, %v2164
      %v2166 = vrot.slane %v2152, %v2165
      %2169 = vst [vmem:[%s487] sm:$0x1] %v2159
      %2170 = vst [vmem:[%s487 + $0x1] sm:$0x1] %v2166
      %s2171 = smul.u32 2, %s24
      %p2172 = scmp.lt.s32.totalorder %s2171, 3
      %s2173 = scalar_select %p2172, %s2171, 3
      %s2174 = scalar_lea.vmem %s13, %s2173
      // Predicated region
      $region73: #{personalized_headline_forward.3} parent=71 // pred_check
        %p2175 = pneg %p330
      $region74: #{personalized_headline_forward.3} parent=71 // pred_check_branch
        %2177 = sbr.rel (%p2175) target = $region76
      $region75: #{personalized_headline_forward.3} parent=71 // pred_region
        %s2178 = smul.u32 2, %s24
      $region76: #{personalized_headline_forward.3} parent=71 // pred_fallthru
        _
    $region72: #{personalized_headline_forward.3} parent=5 // pred_fallthru
      _
    %p2179 = scmp.le.s32.totalorder 2, %s19
    // Predicated region
    $region77: #{personalized_headline_forward.3} parent=5 // pred_check
      %p2180 = pneg %p2179
    $region78: #{personalized_headline_forward.3} parent=5 // pred_check_branch
      %2182 = sbr.rel (%p2180) target = $region80
    $region79: #{personalized_headline_forward.3} parent=5 // pred_region
      %s2183 = ssub.s32 %s19, 2
      // Predicated region
      $region81: #{personalized_headline_forward.3} parent=79 // pred_check
        %p2184 = pneg %p336
      $region82: #{personalized_headline_forward.3} parent=79 // pred_check_branch
        %2186 = sbr.rel (%p2184) target = $region84
      $region83: #{personalized_headline_forward.3} parent=79 // pred_region
        %s2187 = smul.u32 2, %s25
        %p2188 = scmp.lt.s32.totalorder %s2187, 3
        %s2189 = scalar_select %p2188, %s2187, 3
        %s2190 = scalar_lea.vmem %s13, %s2189
      $region84: #{personalized_headline_forward.3} parent=79 // pred_fallthru
        _
    $region80: #{personalized_headline_forward.3} parent=5 // pred_fallthru
      _
  $region6: #{personalized_headline_forward.3} parent=0 // loop_footer
    %s23 = sadd.s32 1, %s19
  $region7: #{personalized_headline_forward.3} parent=0 // loop_footer_branch
    %18 = sbr.rel target = $region3
  $region8: #{personalized_headline_forward.3} parent=0 // loop_exit
    _

// kernel: personalized_headline_forward.5
$region0: #{personalized_headline_forward.5}
  #allocation0 [shape = 'u32[]', space=smem, size = 0x4, offset = 0x4, fixed_abs, tag = 'smem constant byte address 0x4 - core index']
  #allocation1 [shape = 'u32[144,128]{1,0:T(1,128)}', space=vmem, size = 0x12000, scoped, tag = 'internal scratch']
  #allocation2 [shape = 'f32[2,8,128]{2,1,0:T(8,128)}', space=vmem, size = 0x2000, scoped, tag = 'scratch operand']
  #allocation3 [shape = 'f32[1,1]{1,0:T(1,128)S(1)}', space=vmem, size = 0x200, scoped, tag = 'scoped memory for personalized_headline_forward.5']
  %s0 = inlined_call_operand.vmem [shape: f32[4,8,128], index: 0, kind: input, shape index: {}]
  %s1 = inlined_call_operand.vmem [shape: f32[4,16,128], index: 1, kind: input, shape index: {}]
  %s2 = inlined_call_operand.vmem [shape: f32[4,1,16], index: 2, kind: input, shape index: {}]
  %s3 = inlined_call_operand.vmem [shape: s32[4,16,1], index: 3, kind: input, shape index: {}]
  %s4 = inlined_call_operand.vmem [shape: f32[4,1,128], index: 4, kind: input, shape index: {}]
  %s5 = inlined_call_operand.vmem [shape: bf16[128,384], index: 5, kind: input, shape index: {}]
  %s6 = inlined_call_operand.vmem [shape: f32[1,384], index: 6, kind: input, shape index: {}]
  %s7 = inlined_call_operand.vmem [shape: bf16[128,384], index: 7, kind: input, shape index: {}]
  %s8 = inlined_call_operand.vmem [shape: f32[1,384], index: 8, kind: input, shape index: {}]
  %s9 = inlined_call_operand.vmem [shape: bf16[128,128], index: 9, kind: input, shape index: {}]
  %s10 = inlined_call_operand.vmem [shape: f32[1,128], index: 10, kind: input, shape index: {}]
  %s11 = inlined_call_operand.vmem [shape: bf16[128,128], index: 11, kind: input, shape index: {}]
  %s12 = inlined_call_operand.vmem [shape: f32[1,128], index: 12, kind: input, shape index: {}]
  %s13 = inlined_call_operand.vmem [shape: bf16[128,128], index: 13, kind: input, shape index: {}]
  %s14 = inlined_call_operand.vmem [shape: f32[1,128], index: 14, kind: input, shape index: {}]
  %s15 = inlined_call_operand.vmem [shape: bf16[384,256], index: 15, kind: input, shape index: {}]
  %s16 = inlined_call_operand.vmem [shape: f32[1,256], index: 16, kind: input, shape index: {}]
  %s17 = inlined_call_operand.vmem [shape: bf16[384,1], index: 17, kind: input, shape index: {}]
  %s18 = inlined_call_operand.<no memory space> [shape: f32[1,1], index: 18, kind: input, shape index: {}]
  %s19 = inlined_call_operand.vmem [shape: f32[4,8,256], index: 19, kind: output, shape index: {0}]
  %s20 = inlined_call_operand.vmem [shape: f32[4,8,256], index: 20, kind: output, shape index: {1}]
  %s21 = inlined_call_operand.vmem [shape: f32[4,8,16], index: 21, kind: output, shape index: {2}]
  %s22 = inlined_call_operand.vmem [shape: f32[4,8,1], index: 22, kind: output, shape index: {3}]
  %23 = xla_tuple %s19, %s20, %s21, %s22
  %s24 = sld [smem:[#allocation0]]
  $region133: #{personalized_headline_forward.5} parent=0
    _
  %s26 = ssub.s32 1, %s24
  %s27 = scalar_select 0, %s26, %s24
  %v28 = vstv %s18
  %29 = vst [vmem:[#allocation3] sm:$0x1] %v28
  loop: start=0, step=1, limit=4
  $region2: #{personalized_headline_forward.5} parent=0 // loop_pre_header
    _
  $region3: #{personalized_headline_forward.5} parent=0 // loop_header
    %s31 = sphi 0, %s35
    %p32 = scmp.ge.s32.totalorder %s31, 4
    %s41 = sphi 0, %s43
    %s44 = sphi 0, %s41
    %s45 = sphi 0, %s44
    %s61 = sphi 0, %s45
    %s67 = sphi 0, %s69
    %s70 = sphi 0, %s67
    %s71 = sphi 0, %s70
    %s87 = sphi 0, %s71
    %s93 = sphi 0, %s95
    %s96 = sphi 0, %s93
    %s97 = sphi 0, %s96
    %s113 = sphi 0, %s97
    %s119 = sphi 0, %s121
    %s122 = sphi 0, %s119
    %s123 = sphi 0, %s122
    %s139 = sphi 0, %s123
    %s145 = sphi 0, %s147
    %s148 = sphi 0, %s145
    %s149 = sphi 0, %s148
    %s165 = sphi 0, %s149
    %s169 = sphi 0, %s169
    %s171 = sphi 0, %s169
    %s172 = sphi 0, %s171
    %s186 = sphi 0, %s172
    %s190 = sphi 0, %s190
    %s192 = sphi 0, %s190
    %s193 = sphi 0, %s192
    %s207 = sphi 0, %s193
    %s211 = sphi 0, %s211
    %s213 = sphi 0, %s211
    %s214 = sphi 0, %s213
    %s228 = sphi 0, %s214
    %s232 = sphi 0, %s232
    %s234 = sphi 0, %s232
    %s235 = sphi 0, %s234
    %s249 = sphi 0, %s235
    %s253 = sphi 0, %s253
    %s255 = sphi 0, %s253
    %s256 = sphi 0, %s255
    %s270 = sphi 0, %s256
    %s274 = sphi 0, %s274
    %s276 = sphi 0, %s274
    %s277 = sphi 0, %s276
    %s291 = sphi 0, %s277
    %s295 = sphi 0, %s295
    %s297 = sphi 0, %s295
    %s298 = sphi 0, %s297
    %s312 = sphi 0, %s298
    %s316 = sphi 0, %s316
    %s318 = sphi 0, %s316
    %s319 = sphi 0, %s318
    %s333 = sphi 0, %s319
    %s337 = sphi 0, %s337
    %s339 = sphi 0, %s337
    %s340 = sphi 0, %s339
    %s354 = sphi 0, %s340
    %s358 = sphi 0, %s358
    %s360 = sphi 0, %s358
    %s361 = sphi 0, %s360
    %s375 = sphi 0, %s361
    %s379 = sphi 0, %s379
    %s381 = sphi 0, %s379
    %s382 = sphi 0, %s381
    %s396 = sphi 0, %s382
    %s400 = sphi 0, %s400
    %s402 = sphi 0, %s400
    %s403 = sphi 0, %s402
    %s417 = sphi 0, %s403
    %s421 = sphi 0, %s421
    %s423 = sphi 0, %s421
    %s424 = sphi 0, %s423
    %s438 = sphi 0, %s424
    %s442 = sphi 0, %s442
    %s444 = sphi 0, %s442
    %s445 = sphi 0, %s444
    %s459 = sphi 0, %s445
    %s465 = sphi 0, %s467
    %s468 = sphi 0, %s465
    %s469 = sphi 0, %s468
    %s485 = sphi 0, %s469
    %s491 = sphi 0, %s493
    %s494 = sphi 0, %s491
    %s495 = sphi 0, %s494
    %s511 = sphi 0, %s495
    %s517 = sphi 0, %s519
    %s520 = sphi 0, %s517
    %s521 = sphi 0, %s520
    %s537 = sphi 0, %s521
    %s543 = sphi 0, %s545
    %s546 = sphi 0, %s543
    %s547 = sphi 0, %s546
    %s563 = sphi 0, %s547
  $region4: #{personalized_headline_forward.5} parent=0 // loop_header_branch
    %34 = sbr.rel (%p32) target = $region8
  $region5: #{personalized_headline_forward.5} parent=0 // loop_body
    %s36 = ssub.s32 %s31, 1
    %s37 = ssub.s32 %s31, 2
    %s38 = sadd.s32 %s31, 1
    %s39 = ssub.s32 %s31, %s38
    %p40 = scmp.eq.s32.totalorder %s39, 0
    %s42 = sadd.s32 %s41, 1
    %s43 = scalar_select %p40, %s41, %s42
    %p46 = pneg %p40
    %p47 = scmp.eq.s32.totalorder %s31, 1
    %p48 = por %p46, %p47
    %p49 = scmp.ne.s32.totalorder %s41, %s44
    %p50 = scmp.eq.s32.totalorder %s31, 0
    %p51 = por %p49, %p50
    %p52 = scmp.ne.s32.totalorder %s41, %s44
    %p53 = scmp.eq.s32.totalorder %s36, 1
    %p54 = por %p52, %p53
    %p55 = scmp.ne.s32.totalorder %s44, %s45
    %p56 = scmp.eq.s32.totalorder %s36, 0
    %p57 = por %p55, %p56
    %p58 = scmp.ne.s32.totalorder %s44, %s45
    %p59 = scmp.eq.s32.totalorder %s37, 1
    %p60 = por %p58, %p59
    %p62 = scmp.ne.s32.totalorder %s45, %s61
    %p63 = scmp.eq.s32.totalorder %s37, 0
    %p64 = por %p62, %p63
    %s65 = ssub.s32 %s31, %s38
    %p66 = scmp.eq.s32.totalorder %s65, 0
    %s68 = sadd.s32 %s67, 1
    %s69 = scalar_select %p66, %s67, %s68
    %p72 = pneg %p66
    %p73 = scmp.eq.s32.totalorder %s31, 1
    %p74 = por %p72, %p73
    %p75 = scmp.ne.s32.totalorder %s67, %s70
    %p76 = scmp.eq.s32.totalorder %s31, 0
    %p77 = por %p75, %p76
    %p78 = scmp.ne.s32.totalorder %s67, %s70
    %p79 = scmp.eq.s32.totalorder %s36, 1
    %p80 = por %p78, %p79
    %p81 = scmp.ne.s32.totalorder %s70, %s71
    %p82 = scmp.eq.s32.totalorder %s36, 0
    %p83 = por %p81, %p82
    %p84 = scmp.ne.s32.totalorder %s70, %s71
    %p85 = scmp.eq.s32.totalorder %s37, 1
    %p86 = por %p84, %p85
    %p88 = scmp.ne.s32.totalorder %s71, %s87
    %p89 = scmp.eq.s32.totalorder %s37, 0
    %p90 = por %p88, %p89
    %s91 = ssub.s32 %s31, %s38
    %p92 = scmp.eq.s32.totalorder %s91, 0
    %s94 = sadd.s32 %s93, 1
    %s95 = scalar_select %p92, %s93, %s94
    %p98 = pneg %p92
    %p99 = scmp.eq.s32.totalorder %s31, 1
    %p100 = por %p98, %p99
    %p101 = scmp.ne.s32.totalorder %s93, %s96
    %p102 = scmp.eq.s32.totalorder %s31, 0
    %p103 = por %p101, %p102
    %p104 = scmp.ne.s32.totalorder %s93, %s96
    %p105 = scmp.eq.s32.totalorder %s36, 1
    %p106 = por %p104, %p105
    %p107 = scmp.ne.s32.totalorder %s96, %s97
    %p108 = scmp.eq.s32.totalorder %s36, 0
    %p109 = por %p107, %p108
    %p110 = scmp.ne.s32.totalorder %s96, %s97
    %p111 = scmp.eq.s32.totalorder %s37, 1
    %p112 = por %p110, %p111
    %p114 = scmp.ne.s32.totalorder %s97, %s113
    %p115 = scmp.eq.s32.totalorder %s37, 0
    %p116 = por %p114, %p115
    %s117 = ssub.s32 %s31, %s38
    %p118 = scmp.eq.s32.totalorder %s117, 0
    %s120 = sadd.s32 %s119, 1
    %s121 = scalar_select %p118, %s119, %s120
    %p124 = pneg %p118
    %p125 = scmp.eq.s32.totalorder %s31, 1
    %p126 = por %p124, %p125
    %p127 = scmp.ne.s32.totalorder %s119, %s122
    %p128 = scmp.eq.s32.totalorder %s31, 0
    %p129 = por %p127, %p128
    %p130 = scmp.ne.s32.totalorder %s119, %s122
    %p131 = scmp.eq.s32.totalorder %s36, 1
    %p132 = por %p130, %p131
    %p133 = scmp.ne.s32.totalorder %s122, %s123
    %p134 = scmp.eq.s32.totalorder %s36, 0
    %p135 = por %p133, %p134
    %p136 = scmp.ne.s32.totalorder %s122, %s123
    %p137 = scmp.eq.s32.totalorder %s37, 1
    %p138 = por %p136, %p137
    %p140 = scmp.ne.s32.totalorder %s123, %s139
    %p141 = scmp.eq.s32.totalorder %s37, 0
    %p142 = por %p140, %p141
    %s143 = ssub.s32 %s31, %s38
    %p144 = scmp.eq.s32.totalorder %s143, 0
    %s146 = sadd.s32 %s145, 1
    %s147 = scalar_select %p144, %s145, %s146
    %p150 = pneg %p144
    %p151 = scmp.eq.s32.totalorder %s31, 1
    %p152 = por %p150, %p151
    %p153 = scmp.ne.s32.totalorder %s145, %s148
    %p154 = scmp.eq.s32.totalorder %s31, 0
    %p155 = por %p153, %p154
    %p156 = scmp.ne.s32.totalorder %s145, %s148
    %p157 = scmp.eq.s32.totalorder %s36, 1
    %p158 = por %p156, %p157
    %p159 = scmp.ne.s32.totalorder %s148, %s149
    %p160 = scmp.eq.s32.totalorder %s36, 0
    %p161 = por %p159, %p160
    %p162 = scmp.ne.s32.totalorder %s148, %s149
    %p163 = scmp.eq.s32.totalorder %s37, 1
    %p164 = por %p162, %p163
    %p166 = scmp.ne.s32.totalorder %s149, %s165
    %p167 = scmp.eq.s32.totalorder %s37, 0
    %p168 = por %p166, %p167
    %s170 = sadd.s32 %s169, 1
    %p173 = scmp.eq.s32.totalorder %s31, 1
    %p174 = scmp.ne.s32.totalorder %s169, %s171
    %p175 = scmp.eq.s32.totalorder %s31, 0
    %p176 = por %p174, %p175
    %p177 = scmp.ne.s32.totalorder %s169, %s171
    %p178 = scmp.eq.s32.totalorder %s36, 1
    %p179 = por %p177, %p178
    %p180 = scmp.ne.s32.totalorder %s171, %s172
    %p181 = scmp.eq.s32.totalorder %s36, 0
    %p182 = por %p180, %p181
    %p183 = scmp.ne.s32.totalorder %s171, %s172
    %p184 = scmp.eq.s32.totalorder %s37, 1
    %p185 = por %p183, %p184
    %p187 = scmp.ne.s32.totalorder %s172, %s186
    %p188 = scmp.eq.s32.totalorder %s37, 0
    %p189 = por %p187, %p188
    %s191 = sadd.s32 %s190, 1
    %p194 = scmp.eq.s32.totalorder %s31, 1
    %p195 = scmp.ne.s32.totalorder %s190, %s192
    %p196 = scmp.eq.s32.totalorder %s31, 0
    %p197 = por %p195, %p196
    %p198 = scmp.ne.s32.totalorder %s190, %s192
    %p199 = scmp.eq.s32.totalorder %s36, 1
    %p200 = por %p198, %p199
    %p201 = scmp.ne.s32.totalorder %s192, %s193
    %p202 = scmp.eq.s32.totalorder %s36, 0
    %p203 = por %p201, %p202
    %p204 = scmp.ne.s32.totalorder %s192, %s193
    %p205 = scmp.eq.s32.totalorder %s37, 1
    %p206 = por %p204, %p205
    %p208 = scmp.ne.s32.totalorder %s193, %s207
    %p209 = scmp.eq.s32.totalorder %s37, 0
    %p210 = por %p208, %p209
    %s212 = sadd.s32 %s211, 1
    %p215 = scmp.eq.s32.totalorder %s31, 1
    %p216 = scmp.ne.s32.totalorder %s211, %s213
    %p217 = scmp.eq.s32.totalorder %s31, 0
    %p218 = por %p216, %p217
    %p219 = scmp.ne.s32.totalorder %s211, %s213
    %p220 = scmp.eq.s32.totalorder %s36, 1
    %p221 = por %p219, %p220
    %p222 = scmp.ne.s32.totalorder %s213, %s214
    %p223 = scmp.eq.s32.totalorder %s36, 0
    %p224 = por %p222, %p223
    %p225 = scmp.ne.s32.totalorder %s213, %s214
    %p226 = scmp.eq.s32.totalorder %s37, 1
    %p227 = por %p225, %p226
    %p229 = scmp.ne.s32.totalorder %s214, %s228
    %p230 = scmp.eq.s32.totalorder %s37, 0
    %p231 = por %p229, %p230
    %s233 = sadd.s32 %s232, 1
    %p236 = scmp.eq.s32.totalorder %s31, 1
    %p237 = scmp.ne.s32.totalorder %s232, %s234
    %p238 = scmp.eq.s32.totalorder %s31, 0
    %p239 = por %p237, %p238
    %p240 = scmp.ne.s32.totalorder %s232, %s234
    %p241 = scmp.eq.s32.totalorder %s36, 1
    %p242 = por %p240, %p241
    %p243 = scmp.ne.s32.totalorder %s234, %s235
    %p244 = scmp.eq.s32.totalorder %s36, 0
    %p245 = por %p243, %p244
    %p246 = scmp.ne.s32.totalorder %s234, %s235
    %p247 = scmp.eq.s32.totalorder %s37, 1
    %p248 = por %p246, %p247
    %p250 = scmp.ne.s32.totalorder %s235, %s249
    %p251 = scmp.eq.s32.totalorder %s37, 0
    %p252 = por %p250, %p251
    %s254 = sadd.s32 %s253, 1
    %p257 = scmp.eq.s32.totalorder %s31, 1
    %p258 = scmp.ne.s32.totalorder %s253, %s255
    %p259 = scmp.eq.s32.totalorder %s31, 0
    %p260 = por %p258, %p259
    %p261 = scmp.ne.s32.totalorder %s253, %s255
    %p262 = scmp.eq.s32.totalorder %s36, 1
    %p263 = por %p261, %p262
    %p264 = scmp.ne.s32.totalorder %s255, %s256
    %p265 = scmp.eq.s32.totalorder %s36, 0
    %p266 = por %p264, %p265
    %p267 = scmp.ne.s32.totalorder %s255, %s256
    %p268 = scmp.eq.s32.totalorder %s37, 1
    %p269 = por %p267, %p268
    %p271 = scmp.ne.s32.totalorder %s256, %s270
    %p272 = scmp.eq.s32.totalorder %s37, 0
    %p273 = por %p271, %p272
    %s275 = sadd.s32 %s274, 1
    %p278 = scmp.eq.s32.totalorder %s31, 1
    %p279 = scmp.ne.s32.totalorder %s274, %s276
    %p280 = scmp.eq.s32.totalorder %s31, 0
    %p281 = por %p279, %p280
    %p282 = scmp.ne.s32.totalorder %s274, %s276
    %p283 = scmp.eq.s32.totalorder %s36, 1
    %p284 = por %p282, %p283
    %p285 = scmp.ne.s32.totalorder %s276, %s277
    %p286 = scmp.eq.s32.totalorder %s36, 0
    %p287 = por %p285, %p286
    %p288 = scmp.ne.s32.totalorder %s276, %s277
    %p289 = scmp.eq.s32.totalorder %s37, 1
    %p290 = por %p288, %p289
    %p292 = scmp.ne.s32.totalorder %s277, %s291
    %p293 = scmp.eq.s32.totalorder %s37, 0
    %p294 = por %p292, %p293
    %s296 = sadd.s32 %s295, 1
    %p299 = scmp.eq.s32.totalorder %s31, 1
    %p300 = scmp.ne.s32.totalorder %s295, %s297
    %p301 = scmp.eq.s32.totalorder %s31, 0
    %p302 = por %p300, %p301
    %p303 = scmp.ne.s32.totalorder %s295, %s297
    %p304 = scmp.eq.s32.totalorder %s36, 1
    %p305 = por %p303, %p304
    %p306 = scmp.ne.s32.totalorder %s297, %s298
    %p307 = scmp.eq.s32.totalorder %s36, 0
    %p308 = por %p306, %p307
    %p309 = scmp.ne.s32.totalorder %s297, %s298
    %p310 = scmp.eq.s32.totalorder %s37, 1
    %p311 = por %p309, %p310
    %p313 = scmp.ne.s32.totalorder %s298, %s312
    %p314 = scmp.eq.s32.totalorder %s37, 0
    %p315 = por %p313, %p314
    %s317 = sadd.s32 %s316, 1
    %p320 = scmp.eq.s32.totalorder %s31, 1
    %p321 = scmp.ne.s32.totalorder %s316, %s318
    %p322 = scmp.eq.s32.totalorder %s31, 0
    %p323 = por %p321, %p322
    %p324 = scmp.ne.s32.totalorder %s316, %s318
    %p325 = scmp.eq.s32.totalorder %s36, 1
    %p326 = por %p324, %p325
    %p327 = scmp.ne.s32.totalorder %s318, %s319
    %p328 = scmp.eq.s32.totalorder %s36, 0
    %p329 = por %p327, %p328
    %p330 = scmp.ne.s32.totalorder %s318, %s319
    %p331 = scmp.eq.s32.totalorder %s37, 1
    %p332 = por %p330, %p331
    %p334 = scmp.ne.s32.totalorder %s319, %s333
    %p335 = scmp.eq.s32.totalorder %s37, 0
    %p336 = por %p334, %p335
    %s338 = sadd.s32 %s337, 1
    %p341 = scmp.eq.s32.totalorder %s31, 1
    %p342 = scmp.ne.s32.totalorder %s337, %s339
    %p343 = scmp.eq.s32.totalorder %s31, 0
    %p344 = por %p342, %p343
    %p345 = scmp.ne.s32.totalorder %s337, %s339
    %p346 = scmp.eq.s32.totalorder %s36, 1
    %p347 = por %p345, %p346
    %p348 = scmp.ne.s32.totalorder %s339, %s340
    %p349 = scmp.eq.s32.totalorder %s36, 0
    %p350 = por %p348, %p349
    %p351 = scmp.ne.s32.totalorder %s339, %s340
    %p352 = scmp.eq.s32.totalorder %s37, 1
    %p353 = por %p351, %p352
    %p355 = scmp.ne.s32.totalorder %s340, %s354
    %p356 = scmp.eq.s32.totalorder %s37, 0
    %p357 = por %p355, %p356
    %s359 = sadd.s32 %s358, 1
    %p362 = scmp.eq.s32.totalorder %s31, 1
    %p363 = scmp.ne.s32.totalorder %s358, %s360
    %p364 = scmp.eq.s32.totalorder %s31, 0
    %p365 = por %p363, %p364
    %p366 = scmp.ne.s32.totalorder %s358, %s360
    %p367 = scmp.eq.s32.totalorder %s36, 1
    %p368 = por %p366, %p367
    %p369 = scmp.ne.s32.totalorder %s360, %s361
    %p370 = scmp.eq.s32.totalorder %s36, 0
    %p371 = por %p369, %p370
    %p372 = scmp.ne.s32.totalorder %s360, %s361
    %p373 = scmp.eq.s32.totalorder %s37, 1
    %p374 = por %p372, %p373
    %p376 = scmp.ne.s32.totalorder %s361, %s375
    %p377 = scmp.eq.s32.totalorder %s37, 0
    %p378 = por %p376, %p377
    %s380 = sadd.s32 %s379, 1
    %p383 = scmp.eq.s32.totalorder %s31, 1
    %p384 = scmp.ne.s32.totalorder %s379, %s381
    %p385 = scmp.eq.s32.totalorder %s31, 0
    %p386 = por %p384, %p385
    %p387 = scmp.ne.s32.totalorder %s379, %s381
    %p388 = scmp.eq.s32.totalorder %s36, 1
    %p389 = por %p387, %p388
    %p390 = scmp.ne.s32.totalorder %s381, %s382
    %p391 = scmp.eq.s32.totalorder %s36, 0
    %p392 = por %p390, %p391
    %p393 = scmp.ne.s32.totalorder %s381, %s382
    %p394 = scmp.eq.s32.totalorder %s37, 1
    %p395 = por %p393, %p394
    %p397 = scmp.ne.s32.totalorder %s382, %s396
    %p398 = scmp.eq.s32.totalorder %s37, 0
    %p399 = por %p397, %p398
    %s401 = sadd.s32 %s400, 1
    %p404 = scmp.eq.s32.totalorder %s31, 1
    %p405 = scmp.ne.s32.totalorder %s400, %s402
    %p406 = scmp.eq.s32.totalorder %s31, 0
    %p407 = por %p405, %p406
    %p408 = scmp.ne.s32.totalorder %s400, %s402
    %p409 = scmp.eq.s32.totalorder %s36, 1
    %p410 = por %p408, %p409
    %p411 = scmp.ne.s32.totalorder %s402, %s403
    %p412 = scmp.eq.s32.totalorder %s36, 0
    %p413 = por %p411, %p412
    %p414 = scmp.ne.s32.totalorder %s402, %s403
    %p415 = scmp.eq.s32.totalorder %s37, 1
    %p416 = por %p414, %p415
    %p418 = scmp.ne.s32.totalorder %s403, %s417
    %p419 = scmp.eq.s32.totalorder %s37, 0
    %p420 = por %p418, %p419
    %s422 = sadd.s32 %s421, 1
    %p425 = scmp.eq.s32.totalorder %s31, 1
    %p426 = scmp.ne.s32.totalorder %s421, %s423
    %p427 = scmp.eq.s32.totalorder %s31, 0
    %p428 = por %p426, %p427
    %p429 = scmp.ne.s32.totalorder %s421, %s423
    %p430 = scmp.eq.s32.totalorder %s36, 1
    %p431 = por %p429, %p430
    %p432 = scmp.ne.s32.totalorder %s423, %s424
    %p433 = scmp.eq.s32.totalorder %s36, 0
    %p434 = por %p432, %p433
    %p435 = scmp.ne.s32.totalorder %s423, %s424
    %p436 = scmp.eq.s32.totalorder %s37, 1
    %p437 = por %p435, %p436
    %p439 = scmp.ne.s32.totalorder %s424, %s438
    %p440 = scmp.eq.s32.totalorder %s37, 0
    %p441 = por %p439, %p440
    %s443 = sadd.s32 %s442, 1
    %p446 = scmp.eq.s32.totalorder %s31, 1
    %p447 = scmp.ne.s32.totalorder %s442, %s444
    %p448 = scmp.eq.s32.totalorder %s31, 0
    %p449 = por %p447, %p448
    %p450 = scmp.ne.s32.totalorder %s442, %s444
    %p451 = scmp.eq.s32.totalorder %s36, 1
    %p452 = por %p450, %p451
    %p453 = scmp.ne.s32.totalorder %s444, %s445
    %p454 = scmp.eq.s32.totalorder %s36, 0
    %p455 = por %p453, %p454
    %p456 = scmp.ne.s32.totalorder %s444, %s445
    %p457 = scmp.eq.s32.totalorder %s37, 1
    %p458 = por %p456, %p457
    %p460 = scmp.ne.s32.totalorder %s445, %s459
    %p461 = scmp.eq.s32.totalorder %s37, 0
    %p462 = por %p460, %p461
    %s463 = ssub.s32 %s31, %s38
    %p464 = scmp.eq.s32.totalorder %s463, 0
    %s466 = sadd.s32 %s465, 1
    %s467 = scalar_select %p464, %s465, %s466
    %p470 = pneg %p464
    %p471 = scmp.eq.s32.totalorder %s31, 1
    %p472 = por %p470, %p471
    %p473 = scmp.ne.s32.totalorder %s465, %s468
    %p474 = scmp.eq.s32.totalorder %s31, 0
    %p475 = por %p473, %p474
    %p476 = scmp.ne.s32.totalorder %s465, %s468
    %p477 = scmp.eq.s32.totalorder %s36, 1
    %p478 = por %p476, %p477
    %p479 = scmp.ne.s32.totalorder %s468, %s469
    %p480 = scmp.eq.s32.totalorder %s36, 0
    %p481 = por %p479, %p480
    %p482 = scmp.ne.s32.totalorder %s468, %s469
    %p483 = scmp.eq.s32.totalorder %s37, 1
    %p484 = por %p482, %p483
    %p486 = scmp.ne.s32.totalorder %s469, %s485
    %p487 = scmp.eq.s32.totalorder %s37, 0
    %p488 = por %p486, %p487
    %s489 = ssub.s32 %s31, %s38
    %p490 = scmp.eq.s32.totalorder %s489, 0
    %s492 = sadd.s32 %s491, 1
    %s493 = scalar_select %p490, %s491, %s492
    %p496 = pneg %p490
    %p497 = scmp.eq.s32.totalorder %s31, 1
    %p498 = por %p496, %p497
    %p499 = scmp.ne.s32.totalorder %s491, %s494
    %p500 = scmp.eq.s32.totalorder %s31, 0
    %p501 = por %p499, %p500
    %p502 = scmp.ne.s32.totalorder %s491, %s494
    %p503 = scmp.eq.s32.totalorder %s36, 1
    %p504 = por %p502, %p503
    %p505 = scmp.ne.s32.totalorder %s494, %s495
    %p506 = scmp.eq.s32.totalorder %s36, 0
    %p507 = por %p505, %p506
    %p508 = scmp.ne.s32.totalorder %s494, %s495
    %p509 = scmp.eq.s32.totalorder %s37, 1
    %p510 = por %p508, %p509
    %p512 = scmp.ne.s32.totalorder %s495, %s511
    %p513 = scmp.eq.s32.totalorder %s37, 0
    %p514 = por %p512, %p513
    %s515 = ssub.s32 %s31, %s38
    %p516 = scmp.eq.s32.totalorder %s515, 0
    %s518 = sadd.s32 %s517, 1
    %s519 = scalar_select %p516, %s517, %s518
    %p522 = pneg %p516
    %p523 = scmp.eq.s32.totalorder %s31, 1
    %p524 = por %p522, %p523
    %p525 = scmp.ne.s32.totalorder %s517, %s520
    %p526 = scmp.eq.s32.totalorder %s31, 0
    %p527 = por %p525, %p526
    %p528 = scmp.ne.s32.totalorder %s517, %s520
    %p529 = scmp.eq.s32.totalorder %s36, 1
    %p530 = por %p528, %p529
    %p531 = scmp.ne.s32.totalorder %s520, %s521
    %p532 = scmp.eq.s32.totalorder %s36, 0
    %p533 = por %p531, %p532
    %p534 = scmp.ne.s32.totalorder %s520, %s521
    %p535 = scmp.eq.s32.totalorder %s37, 1
    %p536 = por %p534, %p535
    %p538 = scmp.ne.s32.totalorder %s521, %s537
    %p539 = scmp.eq.s32.totalorder %s37, 0
    %p540 = por %p538, %p539
    %s541 = ssub.s32 %s31, %s38
    %p542 = scmp.eq.s32.totalorder %s541, 0
    %s544 = sadd.s32 %s543, 1
    %s545 = scalar_select %p542, %s543, %s544
    %p548 = pneg %p542
    %p549 = scmp.eq.s32.totalorder %s31, 1
    %p550 = por %p548, %p549
    %p551 = scmp.ne.s32.totalorder %s543, %s546
    %p552 = scmp.eq.s32.totalorder %s31, 0
    %p553 = por %p551, %p552
    %p554 = scmp.ne.s32.totalorder %s543, %s546
    %p555 = scmp.eq.s32.totalorder %s36, 1
    %p556 = por %p554, %p555
    %p557 = scmp.ne.s32.totalorder %s546, %s547
    %p558 = scmp.eq.s32.totalorder %s36, 0
    %p559 = por %p557, %p558
    %p560 = scmp.ne.s32.totalorder %s546, %s547
    %p561 = scmp.eq.s32.totalorder %s37, 1
    %p562 = por %p560, %p561
    %p564 = scmp.ne.s32.totalorder %s547, %s563
    %p565 = scmp.eq.s32.totalorder %s37, 0
    %p566 = por %p564, %p565
    %p567 = scmp.le.s32.totalorder 1, %s31
    %p568 = scmp.lt.s32.totalorder %s31, 3
    %p569 = pnand %p567, %p568
    %p570 = pneg %p569
    // Predicated region
    $region9: #{personalized_headline_forward.5} parent=5 // pred_check
      _
    $region10: #{personalized_headline_forward.5} parent=5 // pred_check_branch
      %572 = sbr.rel (%p569) target = $region12
    $region11: #{personalized_headline_forward.5} parent=5 // pred_region
      %s573 = ssub.s32 %s31, 1
      // Predicated region
      $region13: #{personalized_headline_forward.5} parent=11 // pred_check
        %p574 = pneg %p182
      $region14: #{personalized_headline_forward.5} parent=11 // pred_check_branch
        %576 = sbr.rel (%p574) target = $region16
      $region15: #{personalized_headline_forward.5} parent=11 // pred_region
        _
      $region16: #{personalized_headline_forward.5} parent=11 // pred_fallthru
        _
      // Predicated region
      $region17: #{personalized_headline_forward.5} parent=11 // pred_check
        %p577 = pneg %p203
      $region18: #{personalized_headline_forward.5} parent=11 // pred_check_branch
        %579 = sbr.rel (%p577) target = $region20
      $region19: #{personalized_headline_forward.5} parent=11 // pred_region
        _
      $region20: #{personalized_headline_forward.5} parent=11 // pred_fallthru
        _
      // Predicated region
      $region21: #{personalized_headline_forward.5} parent=11 // pred_check
        %p580 = pneg %p224
      $region22: #{personalized_headline_forward.5} parent=11 // pred_check_branch
        %582 = sbr.rel (%p580) target = $region24
      $region23: #{personalized_headline_forward.5} parent=11 // pred_region
        _
      $region24: #{personalized_headline_forward.5} parent=11 // pred_fallthru
        _
      // Predicated region
      $region25: #{personalized_headline_forward.5} parent=11 // pred_check
        %p583 = pneg %p245
      $region26: #{personalized_headline_forward.5} parent=11 // pred_check_branch
        %585 = sbr.rel (%p583) target = $region28
      $region27: #{personalized_headline_forward.5} parent=11 // pred_region
        _
      $region28: #{personalized_headline_forward.5} parent=11 // pred_fallthru
        _
      // Predicated region
      $region29: #{personalized_headline_forward.5} parent=11 // pred_check
        %p586 = pneg %p266
      $region30: #{personalized_headline_forward.5} parent=11 // pred_check_branch
        %588 = sbr.rel (%p586) target = $region32
      $region31: #{personalized_headline_forward.5} parent=11 // pred_region
        _
      $region32: #{personalized_headline_forward.5} parent=11 // pred_fallthru
        _
      // Predicated region
      $region33: #{personalized_headline_forward.5} parent=11 // pred_check
        %p589 = pneg %p287
      $region34: #{personalized_headline_forward.5} parent=11 // pred_check_branch
        %591 = sbr.rel (%p589) target = $region36
      $region35: #{personalized_headline_forward.5} parent=11 // pred_region
        _
      $region36: #{personalized_headline_forward.5} parent=11 // pred_fallthru
        _
      // Predicated region
      $region37: #{personalized_headline_forward.5} parent=11 // pred_check
        %p592 = pneg %p308
      $region38: #{personalized_headline_forward.5} parent=11 // pred_check_branch
        %594 = sbr.rel (%p592) target = $region40
      $region39: #{personalized_headline_forward.5} parent=11 // pred_region
        _
      $region40: #{personalized_headline_forward.5} parent=11 // pred_fallthru
        _
      // Predicated region
      $region41: #{personalized_headline_forward.5} parent=11 // pred_check
        %p595 = pneg %p329
      $region42: #{personalized_headline_forward.5} parent=11 // pred_check_branch
        %597 = sbr.rel (%p595) target = $region44
      $region43: #{personalized_headline_forward.5} parent=11 // pred_region
        _
      $region44: #{personalized_headline_forward.5} parent=11 // pred_fallthru
        _
      // Predicated region
      $region45: #{personalized_headline_forward.5} parent=11 // pred_check
        %p598 = pneg %p350
      $region46: #{personalized_headline_forward.5} parent=11 // pred_check_branch
        %600 = sbr.rel (%p598) target = $region48
      $region47: #{personalized_headline_forward.5} parent=11 // pred_region
        _
      $region48: #{personalized_headline_forward.5} parent=11 // pred_fallthru
        _
      // Predicated region
      $region49: #{personalized_headline_forward.5} parent=11 // pred_check
        %p601 = pneg %p371
      $region50: #{personalized_headline_forward.5} parent=11 // pred_check_branch
        %603 = sbr.rel (%p601) target = $region52
      $region51: #{personalized_headline_forward.5} parent=11 // pred_region
        _
      $region52: #{personalized_headline_forward.5} parent=11 // pred_fallthru
        _
      // Predicated region
      $region53: #{personalized_headline_forward.5} parent=11 // pred_check
        %p604 = pneg %p392
      $region54: #{personalized_headline_forward.5} parent=11 // pred_check_branch
        %606 = sbr.rel (%p604) target = $region56
      $region55: #{personalized_headline_forward.5} parent=11 // pred_region
        _
      $region56: #{personalized_headline_forward.5} parent=11 // pred_fallthru
        _
      // Predicated region
      $region57: #{personalized_headline_forward.5} parent=11 // pred_check
        %p607 = pneg %p413
      $region58: #{personalized_headline_forward.5} parent=11 // pred_check_branch
        %609 = sbr.rel (%p607) target = $region60
      $region59: #{personalized_headline_forward.5} parent=11 // pred_region
        _
      $region60: #{personalized_headline_forward.5} parent=11 // pred_fallthru
        _
      // Predicated region
      $region61: #{personalized_headline_forward.5} parent=11 // pred_check
        %p610 = pneg %p434
      $region62: #{personalized_headline_forward.5} parent=11 // pred_check_branch
        %612 = sbr.rel (%p610) target = $region64
      $region63: #{personalized_headline_forward.5} parent=11 // pred_region
        _
      $region64: #{personalized_headline_forward.5} parent=11 // pred_fallthru
        _
      // Predicated region
      $region65: #{personalized_headline_forward.5} parent=11 // pred_check
        %p613 = pneg %p455
      $region66: #{personalized_headline_forward.5} parent=11 // pred_check_branch
        %615 = sbr.rel (%p613) target = $region68
      $region67: #{personalized_headline_forward.5} parent=11 // pred_region
        _
      $region68: #{personalized_headline_forward.5} parent=11 // pred_fallthru
        _
    $region12: #{personalized_headline_forward.5} parent=5 // pred_fallthru
      _
    %p616 = scmp.lt.s32.totalorder %s31, 2
    // Predicated region
    $region69: #{personalized_headline_forward.5} parent=5 // pred_check
      %p617 = pneg %p616
    $region70: #{personalized_headline_forward.5} parent=5 // pred_check_branch
      %619 = sbr.rel (%p617) target = $region72
    $region71: #{personalized_headline_forward.5} parent=5 // pred_region
      // Predicated region
      $region73: #{personalized_headline_forward.5} parent=71 // pred_check
        %p620 = pneg %p51
      $region74: #{personalized_headline_forward.5} parent=71 // pred_check_branch
        %622 = sbr.rel (%p620) target = $region76
      $region75: #{personalized_headline_forward.5} parent=71 // pred_region
        %s623 = smul.u32 2, %s31
        %p624 = scmp.lt.s32.totalorder %s623, 3
        %s625 = scalar_select %p624, %s623, 3
        %s626 = smul.addr %s625, 8
        %s627 = scalar_lea.vmem %s0, %s626
        %s628 = smul.u32 2, %s31
      $region76: #{personalized_headline_forward.5} parent=71 // pred_fallthru
        _
      // Predicated region
      $region77: #{personalized_headline_forward.5} parent=71 // pred_check
        %p629 = pneg %p77
      $region78: #{personalized_headline_forward.5} parent=71 // pred_check_branch
        %631 = sbr.rel (%p629) target = $region80
      $region79: #{personalized_headline_forward.5} parent=71 // pred_region
        %s632 = smul.u32 2, %s31
        %p633 = scmp.lt.s32.totalorder %s632, 3
        %s634 = scalar_select %p633, %s632, 3
        %s635 = smul.addr %s634, 2
        %s636 = smul.addr %s635, 8
        %s637 = scalar_lea.vmem %s1, %s636
        %s638 = smul.u32 2, %s31
      $region80: #{personalized_headline_forward.5} parent=71 // pred_fallthru
        _
      // Predicated region
      $region81: #{personalized_headline_forward.5} parent=71 // pred_check
        %p639 = pneg %p103
      $region82: #{personalized_headline_forward.5} parent=71 // pred_check_branch
        %641 = sbr.rel (%p639) target = $region84
      $region83: #{personalized_headline_forward.5} parent=71 // pred_region
        %s642 = smul.u32 2, %s31
        %p643 = scmp.lt.s32.totalorder %s642, 3
        %s644 = scalar_select %p643, %s642, 3
        %s645 = scalar_lea.vmem %s2, %s644
        %s646 = smul.u32 2, %s31
      $region84: #{personalized_headline_forward.5} parent=71 // pred_fallthru
        _
      // Predicated region
      $region85: #{personalized_headline_forward.5} parent=71 // pred_check
        %p647 = pneg %p129
      $region86: #{personalized_headline_forward.5} parent=71 // pred_check_branch
        %649 = sbr.rel (%p647) target = $region88
      $region87: #{personalized_headline_forward.5} parent=71 // pred_region
        %s650 = smul.u32 2, %s31
        %p651 = scmp.lt.s32.totalorder %s650, 3
        %s652 = scalar_select %p651, %s650, 3
        %s653 = smul.addr %s652, 2
        %s654 = smul.addr %s653, 8
        %s655 = scalar_lea.vmem %s3, %s654
        %s656 = smul.u32 2, %s31
      $region88: #{personalized_headline_forward.5} parent=71 // pred_fallthru
        _
      // Predicated region
      $region89: #{personalized_headline_forward.5} parent=71 // pred_check
        %p657 = pneg %p155
      $region90: #{personalized_headline_forward.5} parent=71 // pred_check_branch
        %659 = sbr.rel (%p657) target = $region92
      $region91: #{personalized_headline_forward.5} parent=71 // pred_region
        %s660 = smul.u32 2, %s31
        %p661 = scmp.lt.s32.totalorder %s660, 3
        %s662 = scalar_select %p661, %s660, 3
        %s663 = scalar_lea.vmem %s4, %s662
        %s664 = smul.u32 2, %s31
      $region92: #{personalized_headline_forward.5} parent=71 // pred_fallthru
        _
    $region72: #{personalized_headline_forward.5} parent=5 // pred_fallthru
      _
    %p665 = scmp.le.s32.totalorder 1, %s31
    %p666 = scmp.lt.s32.totalorder %s31, 3
    %p667 = pnand %p665, %p666
    %p668 = pneg %p667
    // Predicated region
    $region93: #{personalized_headline_forward.5} parent=5 // pred_check
      _
    $region94: #{personalized_headline_forward.5} parent=5 // pred_check_branch
      %670 = sbr.rel (%p667) target = $region96
    $region95: #{personalized_headline_forward.5} parent=5 // pred_region
      %s671 = ssub.s32 %s31, 1
      %s672 = smul.u32 2, %s36
      %p673 = scmp.lt.s32.totalorder %s672, 3
      %s674 = scalar_select %p673, %s672, 3
      %s675 = smul.addr %s674, 8
      %s676 = scalar_lea.vmem %s0, %s675
      %p677 = pneg %p57
      %p678 = pneg %p54
      %s679 = smul.u32 2, %s36
      %p680 = scmp.lt.s32.totalorder %s679, 3
      %s681 = scalar_select %p680, %s679, 3
      %s682 = smul.addr %s681, 2
      %s683 = smul.addr %s682, 8
      %s684 = scalar_lea.vmem %s1, %s683
      %p685 = pneg %p83
      %p686 = pneg %p80
      %s687 = smul.u32 2, %s36
      %p688 = scmp.lt.s32.totalorder %s687, 3
      %s689 = scalar_select %p688, %s687, 3
      %s690 = scalar_lea.vmem %s2, %s689
      %p691 = pneg %p109
      %p692 = pneg %p106
      %s693 = smul.u32 2, %s36
      %p694 = scmp.lt.s32.totalorder %s693, 3
      %s695 = scalar_select %p694, %s693, 3
      %s696 = smul.addr %s695, 2
      %s697 = smul.addr %s696, 8
      %s698 = scalar_lea.vmem %s3, %s697
      %p699 = pneg %p135
      %p700 = pneg %p132
      %s701 = smul.u32 2, %s36
      %p702 = scmp.lt.s32.totalorder %s701, 3
      %s703 = scalar_select %p702, %s701, 3
      %s704 = scalar_lea.vmem %s4, %s703
      %p705 = pneg %p161
      %p706 = pneg %p158
      %p707 = pneg %p182
      %p708 = pneg %p179
      %p709 = pneg %p203
      %p710 = pneg %p200
      %p711 = pneg %p224
      %p712 = pneg %p221
      %p713 = pneg %p245
      %p714 = pneg %p242
      %p715 = pneg %p266
      %p716 = pneg %p263
      %p717 = pneg %p287
      %p718 = pneg %p284
      %p719 = pneg %p308
      %p720 = pneg %p305
      %p721 = pneg %p329
      %p722 = pneg %p326
      %p723 = pneg %p350
      %p724 = pneg %p347
      %p725 = pneg %p371
      %p726 = pneg %p368
      %p727 = pneg %p392
      %p728 = pneg %p389
      %p729 = pneg %p413
      %p730 = pneg %p410
      %p731 = pneg %p434
      %p732 = pneg %p431
      %p733 = pneg %p455
      %p734 = pneg %p452
      %p735 = pneg %p481
      %p736 = pneg %p478
      %s737 = smul.u32 2, %s36
      %p738 = scmp.lt.s32.totalorder %s737, 3
      %s739 = scalar_select %p738, %s737, 3
      %s740 = smul.addr %s739, 2
      %s741 = smul.addr %s740, 8
      %s742 = scalar_lea.vmem %s19, %s741
      %p743 = pneg %p507
      %p744 = pneg %p504
      %s745 = smul.u32 2, %s36
      %p746 = scmp.lt.s32.totalorder %s745, 3
      %s747 = scalar_select %p746, %s745, 3
      %s748 = smul.addr %s747, 2
      %s749 = smul.addr %s748, 8
      %s750 = scalar_lea.vmem %s20, %s749
      %p751 = pneg %p533
      %p752 = pneg %p530
      %s753 = smul.u32 2, %s36
      %p754 = scmp.lt.s32.totalorder %s753, 3
      %s755 = scalar_select %p754, %s753, 3
      %s756 = smul.addr %s755, 8
      %s757 = scalar_lea.vmem %s21, %s756
      %p758 = pneg %p559
      %p759 = pneg %p556
      %s760 = smul.u32 2, %s36
      %p761 = scmp.lt.s32.totalorder %s760, 3
      %s762 = scalar_select %p761, %s760, 3
      %s763 = smul.addr %s762, 8
      %s764 = scalar_lea.vmem %s22, %s763
      %s765 = smul.u32 2, %s36
      %p766 = scmp.lt.s32.totalorder %s765, 3
      %s767 = scalar_select %p766, %s765, 3
      %s768 = smul.addr %s767, 8
      %s769 = scalar_lea.vmem %s0, %s768
      %s770 = smul.u32 2, %s36
      %s771 = smul.u32 2, %s36
      %p772 = scmp.lt.s32.totalorder %s771, 3
      %s773 = scalar_select %p772, %s771, 3
      %s774 = smul.addr %s773, 2
      %s775 = smul.addr %s774, 8
      %s776 = scalar_lea.vmem %s1, %s775
      %s777 = smul.u32 2, %s36
      %s778 = smul.u32 2, %s36
      %p779 = scmp.lt.s32.totalorder %s778, 3
      %s780 = scalar_select %p779, %s778, 3
      %s781 = scalar_lea.vmem %s2, %s780
      %s782 = smul.u32 2, %s36
      %s783 = smul.u32 2, %s36
      %p784 = scmp.lt.s32.totalorder %s783, 3
      %s785 = scalar_select %p784, %s783, 3
      %s786 = smul.addr %s785, 2
      %s787 = smul.addr %s786, 8
      %s788 = scalar_lea.vmem %s3, %s787
      %s789 = smul.u32 2, %s36
      %s790 = smul.u32 2, %s36
      %p791 = scmp.lt.s32.totalorder %s790, 3
      %s792 = scalar_select %p791, %s790, 3
      %s793 = scalar_lea.vmem %s4, %s792
      %s794 = smul.u32 2, %s36
      %s795 = smul.u32 2, %s36
      %p796 = scmp.lt.s32.totalorder %s795, 3
      %s797 = scalar_select %p796, %s795, 3
      %s798 = smul.addr %s797, 2
      %s799 = smul.addr %s798, 8
      %s800 = scalar_lea.vmem %s19, %s799
      %s801 = smul.u32 2, %s36
      %s802 = smul.u32 2, %s36
      %p803 = scmp.lt.s32.totalorder %s802, 3
      %s804 = scalar_select %p803, %s802, 3
      %s805 = smul.addr %s804, 2
      %s806 = smul.addr %s805, 8
      %s807 = scalar_lea.vmem %s20, %s806
      %s808 = smul.u32 2, %s36
      %s809 = smul.u32 2, %s36
      %p810 = scmp.lt.s32.totalorder %s809, 3
      %s811 = scalar_select %p810, %s809, 3
      %s812 = smul.addr %s811, 8
      %s813 = scalar_lea.vmem %s21, %s812
      %s814 = smul.u32 2, %s36
      %s815 = smul.u32 2, %s36
      %p816 = scmp.lt.s32.totalorder %s815, 3
      %s817 = scalar_select %p816, %s815, 3
      %s818 = smul.addr %s817, 8
      %s819 = scalar_lea.vmem %s22, %s818
      %s820 = smul.u32 2, %s36
      %v822 = vld [vmem:[%s769] sm:$0xff]
      %v823 = vld [vmem:[%s769 + $0x8] sm:$0xff]
      %v824 = vld [vmem:[%s776] sm:$0xff]
      %v825 = vld [vmem:[%s776 + $0x8] sm:$0xff]
      %v826 = vld [vmem:[%s776 + $0x10] sm:$0xff]
      %v827 = vld [vmem:[%s776 + $0x18] sm:$0xff]
      %v828 = vpack.c.bf16 %v825, %v824
      %v829 = vpack.c.bf16 %v827, %v826
      %v830 = vld [vmem:[%s793] sm:$0x1]
      %v831 = vld [vmem:[%s793 + $0x1] sm:$0x1]
      %v832 = vld [vmem:[%s5] sm:$0xff]
      %v833 = vld [vmem:[%s5 + $0x8] sm:$0xf]
      %v834 = vld [vmem:[%s5 + $0xc] sm:$0xff]
      %v835 = vld [vmem:[%s5 + $0x14] sm:$0xf]
      %v836 = vld [vmem:[%s5 + $0x18] sm:$0xff]
      %v837 = vld [vmem:[%s5 + $0x20] sm:$0xf]
      %v838 = vld [vmem:[%s5 + $0x24] sm:$0xff]
      %v839 = vld [vmem:[%s5 + $0x2c] sm:$0xf]
      %v840 = vld [vmem:[%s5 + $0x30] sm:$0xff]
      %v841 = vld [vmem:[%s5 + $0x38] sm:$0xf]
      %v842 = vld [vmem:[%s5 + $0x3c] sm:$0xff]
      %v843 = vld [vmem:[%s5 + $0x44] sm:$0xf]
      %v844 = vld [vmem:[%s5 + $0x48] sm:$0xff]
      %v845 = vld [vmem:[%s5 + $0x50] sm:$0xf]
      %v846 = vld [vmem:[%s5 + $0x54] sm:$0xff]
      %v847 = vld [vmem:[%s5 + $0x5c] sm:$0xf]
      %v848 = vld [vmem:[%s5 + $0x60] sm:$0xff]
      %v849 = vld [vmem:[%s5 + $0x68] sm:$0xf]
      %v850 = vld [vmem:[%s5 + $0x6c] sm:$0xff]
      %v851 = vld [vmem:[%s5 + $0x74] sm:$0xf]
      %v852 = vld [vmem:[%s5 + $0x78] sm:$0xff]
      %v853 = vld [vmem:[%s5 + $0x80] sm:$0xf]
      %v854 = vld [vmem:[%s5 + $0x84] sm:$0xff]
      %v855 = vld [vmem:[%s5 + $0x8c] sm:$0xf]
      %v856 = vld [vmem:[%s5 + $0x90] sm:$0xff]
      %v857 = vld [vmem:[%s5 + $0x98] sm:$0xf]
      %v858 = vld [vmem:[%s5 + $0x9c] sm:$0xff]
      %v859 = vld [vmem:[%s5 + $0xa4] sm:$0xf]
      %v860 = vld [vmem:[%s5 + $0xa8] sm:$0xff]
      %v861 = vld [vmem:[%s5 + $0xb0] sm:$0xf]
      %v862 = vld [vmem:[%s5 + $0xb4] sm:$0xff]
      %v863 = vld [vmem:[%s5 + $0xbc] sm:$0xf]
      %v864 = vld [vmem:[%s6] sm:$0x7]
      %v865 = vpack.c.bf16 %v823, %v822
      %v867 = vlaneseq
      %v868 = vshrl.u32 %v867, 7
      %v869 = vsub.s32 0, %v868
      %v870 = vrot.slane %v864, %v869
      %v871 = vlaneseq
      %v872 = vshrl.u32 %v871, 7
      %v873 = vsub.s32 1, %v872
      %v874 = vrot.slane %v864, %v873
      %v875 = vlaneseq
      %v876 = vshrl.u32 %v875, 7
      %v877 = vsub.s32 2, %v876
      %v878 = vrot.slane %v864, %v877
      %v914 = vunpack.c.l.b16 %v832
      %v915 = vunpack.c.h.b16 %v832
      %v916 = vunpack.c.l.b16 %v833
      %v917 = vunpack.c.l.b16 %v834
      %v918 = vunpack.c.h.b16 %v834
      %v919 = vunpack.c.l.b16 %v835
      %v920 = vunpack.c.l.b16 %v836
      %v921 = vunpack.c.h.b16 %v836
      %v922 = vunpack.c.l.b16 %v837
      %v923 = vunpack.c.l.b16 %v838
      %v924 = vunpack.c.h.b16 %v838
      %v925 = vunpack.c.l.b16 %v839
      %v926 = vunpack.c.l.b16 %v840
      %v927 = vunpack.c.h.b16 %v840
      %v928 = vunpack.c.l.b16 %v841
      %v929 = vunpack.c.l.b16 %v842
      %v930 = vunpack.c.h.b16 %v842
      %v931 = vunpack.c.l.b16 %v843
      %v932 = vunpack.c.l.b16 %v844
      %v933 = vunpack.c.h.b16 %v844
      %v934 = vunpack.c.l.b16 %v845
      %v935 = vunpack.c.l.b16 %v846
      %v936 = vunpack.c.h.b16 %v846
      %v937 = vunpack.c.l.b16 %v847
      %v938 = vunpack.c.l.b16 %v848
      %v939 = vunpack.c.h.b16 %v848
      %v940 = vunpack.c.l.b16 %v849
      %v941 = vunpack.c.l.b16 %v850
      %v942 = vunpack.c.h.b16 %v850
      %v943 = vunpack.c.l.b16 %v851
      %v944 = vunpack.c.l.b16 %v852
      %v945 = vunpack.c.h.b16 %v852
      %v946 = vunpack.c.l.b16 %v853
      %v947 = vunpack.c.l.b16 %v854
      %v948 = vunpack.c.h.b16 %v854
      %v949 = vunpack.c.l.b16 %v855
      %v950 = vunpack.c.l.b16 %v856
      %v951 = vunpack.c.h.b16 %v856
      %v952 = vunpack.c.l.b16 %v857
      %v953 = vunpack.c.l.b16 %v858
      %v954 = vunpack.c.h.b16 %v858
      %v955 = vunpack.c.l.b16 %v859
      %v956 = vunpack.c.l.b16 %v860
      %v957 = vunpack.c.h.b16 %v860
      %v958 = vunpack.c.l.b16 %v861
      %v959 = vunpack.c.l.b16 %v862
      %v960 = vunpack.c.h.b16 %v862
      %v961 = vunpack.c.l.b16 %v863
      %v962 = vpack.c.b16 %v917, %v914
      %v963 = vpack.c.b16 %v918, %v915
      %v964 = vpack.c.b16 %v919, %v916
      %v965 = vpack.c.b16 %v923, %v920
      %v966 = vpack.c.b16 %v924, %v921
      %v967 = vpack.c.b16 %v925, %v922
      %v968 = vpack.c.b16 %v929, %v926
      %v969 = vpack.c.b16 %v930, %v927
      %v970 = vpack.c.b16 %v931, %v928
      %v971 = vpack.c.b16 %v935, %v932
      %v972 = vpack.c.b16 %v936, %v933
      %v973 = vpack.c.b16 %v937, %v934
      %v974 = vpack.c.b16 %v941, %v938
      %v975 = vpack.c.b16 %v942, %v939
      %v976 = vpack.c.b16 %v943, %v940
      %v977 = vpack.c.b16 %v947, %v944
      %v978 = vpack.c.b16 %v948, %v945
      %v979 = vpack.c.b16 %v949, %v946
      %v980 = vpack.c.b16 %v953, %v950
      %v981 = vpack.c.b16 %v954, %v951
      %v982 = vpack.c.b16 %v955, %v952
      %v983 = vpack.c.b16 %v959, %v956
      %v984 = vpack.c.b16 %v960, %v957
      %v985 = vpack.c.b16 %v961, %v958
      %1010 = vmatprep.subr.bf16.mxu0 %v963
      %1011 = vmatpush1.bf16.msra.mxu0 %v962
      %1012 = vmatprep.subr.bf16.mxu0 %v966
      %1013 = vmatpush1.bf16.msra.mxu0 %v965
      %1014 = vmatprep.subr.bf16.mxu0 %v969
      %1015 = vmatpush1.bf16.msra.mxu0 %v968
      %1016 = vmatprep.subr.bf16.mxu0 %v972
      %1017 = vmatpush1.bf16.msra.mxu0 %v971
      %1018 = vmatprep.subr.bf16.mxu0 %v975
      %1019 = vmatpush1.bf16.msra.mxu0 %v974
      %1020 = vmatprep.subr.bf16.mxu0 %v978
      %1021 = vmatpush1.bf16.msra.mxu0 %v977
      %1022 = vmatprep.subr.bf16.mxu0 %v981
      %1023 = vmatpush1.bf16.msra.mxu0 %v980
      %1024 = vmatprep.subr.bf16.mxu0 %v984
      %1025 = vmatpush1.bf16.msra.mxu0 %v983
      %1026 = vmatprep.subr.bf16.mxu0 0
      %1027 = vmatpush1.bf16.msra.mxu0 0
      %1028 = vmatprep.subr.bf16.mxu0 0
      %1029 = vmatpush1.bf16.msra.mxu0 0
      %1030 = vmatprep.subr.bf16.mxu0 0
      %1031 = vmatpush1.bf16.msra.mxu0 0
      %1032 = vmatprep.subr.bf16.mxu0 0
      %1033 = vmatpush1.bf16.msra.mxu0 0
      %1034 = vmatprep.subr.bf16.mxu0 0
      %1035 = vmatpush1.bf16.msra.mxu0 0
      %1036 = vmatprep.subr.bf16.mxu0 0
      %1037 = vmatpush1.bf16.msra.mxu0 0
      %1038 = vmatprep.subr.bf16.mxu0 0
      %1039 = vmatpush1.bf16.msra.mxu0 0
      %1040 = vmatprep.subr.bf16.mxu0 0
      %1041 = vmatpush1.bf16.msra.mxu0 0
      %1042 = vmatprep.mubr.bf16.mxu0 0
      %1043 = vmatmul.mubr.bf16.gmra.mrb[0].mxu0 %v865
      %v1044 = vpop.f32.mrb[0].mxu0
      %v1045 = vadd.f32 %v870, %v1044
      %v1046 = vpop.f32.mrb[0].mxu0
      %v1047 = vadd.f32 %v874, %v1046
      %v1048 = vpop.f32.mrb[0].mxu0
      %v1049 = vadd.f32 %v870, %v1048
      %v1050 = vpop.f32.mrb[0].mxu0
      %v1051 = vadd.f32 %v874, %v1050
      %1052 = vdwg.mxu0
      %1053 = vmatprep.subr.bf16.mxu0 0
      %1054 = vmatpush1.bf16.msra.mxu0 %v964
      %1055 = vmatprep.subr.bf16.mxu0 0
      %1056 = vmatpush1.bf16.msra.mxu0 %v967
      %1057 = vmatprep.subr.bf16.mxu0 0
      %1058 = vmatpush1.bf16.msra.mxu0 %v970
      %1059 = vmatprep.subr.bf16.mxu0 0
      %1060 = vmatpush1.bf16.msra.mxu0 %v973
      %1061 = vmatprep.subr.bf16.mxu0 0
      %1062 = vmatpush1.bf16.msra.mxu0 %v976
      %1063 = vmatprep.subr.bf16.mxu0 0
      %1064 = vmatpush1.bf16.msra.mxu0 %v979
      %1065 = vmatprep.subr.bf16.mxu0 0
      %1066 = vmatpush1.bf16.msra.mxu0 %v982
      %1067 = vmatprep.subr.bf16.mxu0 0
      %1068 = vmatpush1.bf16.msra.mxu0 %v985
      %1069 = vmatprep.subr.bf16.mxu0 0
      %1070 = vmatpush1.bf16.msra.mxu0 0
      %1071 = vmatprep.subr.bf16.mxu0 0
      %1072 = vmatpush1.bf16.msra.mxu0 0
      %1073 = vmatprep.subr.bf16.mxu0 0
      %1074 = vmatpush1.bf16.msra.mxu0 0
      %1075 = vmatprep.subr.bf16.mxu0 0
      %1076 = vmatpush1.bf16.msra.mxu0 0
      %1077 = vmatprep.subr.bf16.mxu0 0
      %1078 = vmatpush1.bf16.msra.mxu0 0
      %1079 = vmatprep.subr.bf16.mxu0 0
      %1080 = vmatpush1.bf16.msra.mxu0 0
      %1081 = vmatprep.subr.bf16.mxu0 0
      %1082 = vmatpush1.bf16.msra.mxu0 0
      %1083 = vmatprep.subr.bf16.mxu0 0
      %1084 = vmatpush1.bf16.msra.mxu0 0
      %1085 = vmatprep.mubr.bf16.mxu0 0
      %1086 = vmatmul.mubr.bf16.gmra.mrb[0].mxu0 %v865
      %v1087 = vpop.f32.mrb[0].mxu0
      %v1088 = vadd.f32 %v878, %v1087
      %v1089 = vpop.f32.mrb[0].mxu0
      %v1090 = vpop.f32.mrb[0].mxu0
      %v1091 = vadd.f32 %v878, %v1090
      %v1092 = vpop.f32.mrb[0].mxu0
      %1093 = vdwg.mxu0
      %v1094 = vld [vmem:[%s7] sm:$0xff]
      %v1095 = vld [vmem:[%s7 + $0x8] sm:$0xf]
      %v1096 = vld [vmem:[%s7 + $0xc] sm:$0xff]
      %v1097 = vld [vmem:[%s7 + $0x14] sm:$0xf]
      %v1098 = vld [vmem:[%s7 + $0x18] sm:$0xff]
      %v1099 = vld [vmem:[%s7 + $0x20] sm:$0xf]
      %v1100 = vld [vmem:[%s7 + $0x24] sm:$0xff]
      %v1101 = vld [vmem:[%s7 + $0x2c] sm:$0xf]
      %v1102 = vld [vmem:[%s7 + $0x30] sm:$0xff]
      %v1103 = vld [vmem:[%s7 + $0x38] sm:$0xf]
      %v1104 = vld [vmem:[%s7 + $0x3c] sm:$0xff]
      %v1105 = vld [vmem:[%s7 + $0x44] sm:$0xf]
      %v1106 = vld [vmem:[%s7 + $0x48] sm:$0xff]
      %v1107 = vld [vmem:[%s7 + $0x50] sm:$0xf]
      %v1108 = vld [vmem:[%s7 + $0x54] sm:$0xff]
      %v1109 = vld [vmem:[%s7 + $0x5c] sm:$0xf]
      %v1110 = vld [vmem:[%s7 + $0x60] sm:$0xff]
      %v1111 = vld [vmem:[%s7 + $0x68] sm:$0xf]
      %v1112 = vld [vmem:[%s7 + $0x6c] sm:$0xff]
      %v1113 = vld [vmem:[%s7 + $0x74] sm:$0xf]
      %v1114 = vld [vmem:[%s7 + $0x78] sm:$0xff]
      %v1115 = vld [vmem:[%s7 + $0x80] sm:$0xf]
      %v1116 = vld [vmem:[%s7 + $0x84] sm:$0xff]
      %v1117 = vld [vmem:[%s7 + $0x8c] sm:$0xf]
      %v1118 = vld [vmem:[%s7 + $0x90] sm:$0xff]
      %v1119 = vld [vmem:[%s7 + $0x98] sm:$0xf]
      %v1120 = vld [vmem:[%s7 + $0x9c] sm:$0xff]
      %v1121 = vld [vmem:[%s7 + $0xa4] sm:$0xf]
      %v1122 = vld [vmem:[%s7 + $0xa8] sm:$0xff]
      %v1123 = vld [vmem:[%s7 + $0xb0] sm:$0xf]
      %v1124 = vld [vmem:[%s7 + $0xb4] sm:$0xff]
      %v1125 = vld [vmem:[%s7 + $0xbc] sm:$0xf]
      %v1126 = vld [vmem:[%s8] sm:$0x7]
      %v1128 = vlaneseq
      %v1129 = vshrl.u32 %v1128, 7
      %v1130 = vsub.s32 0, %v1129
      %v1131 = vrot.slane %v1126, %v1130
      %v1132 = vlaneseq
      %v1133 = vshrl.u32 %v1132, 7
      %v1134 = vsub.s32 1, %v1133
      %v1135 = vrot.slane %v1126, %v1134
      %v1136 = vlaneseq
      %v1137 = vshrl.u32 %v1136, 7
      %v1138 = vsub.s32 2, %v1137
      %v1139 = vrot.slane %v1126, %v1138
      %v1175 = vunpack.c.l.b16 %v1094
      %v1176 = vunpack.c.h.b16 %v1094
      %v1177 = vunpack.c.l.b16 %v1095
      %v1178 = vunpack.c.l.b16 %v1096
      %v1179 = vunpack.c.h.b16 %v1096
      %v1180 = vunpack.c.l.b16 %v1097
      %v1181 = vunpack.c.l.b16 %v1098
      %v1182 = vunpack.c.h.b16 %v1098
      %v1183 = vunpack.c.l.b16 %v1099
      %v1184 = vunpack.c.l.b16 %v1100
      %v1185 = vunpack.c.h.b16 %v1100
      %v1186 = vunpack.c.l.b16 %v1101
      %v1187 = vunpack.c.l.b16 %v1102
      %v1188 = vunpack.c.h.b16 %v1102
      %v1189 = vunpack.c.l.b16 %v1103
      %v1190 = vunpack.c.l.b16 %v1104
      %v1191 = vunpack.c.h.b16 %v1104
      %v1192 = vunpack.c.l.b16 %v1105
      %v1193 = vunpack.c.l.b16 %v1106
      %v1194 = vunpack.c.h.b16 %v1106
      %v1195 = vunpack.c.l.b16 %v1107
      %v1196 = vunpack.c.l.b16 %v1108
      %v1197 = vunpack.c.h.b16 %v1108
      %v1198 = vunpack.c.l.b16 %v1109
      %v1199 = vunpack.c.l.b16 %v1110
      %v1200 = vunpack.c.h.b16 %v1110
      %v1201 = vunpack.c.l.b16 %v1111
      %v1202 = vunpack.c.l.b16 %v1112
      %v1203 = vunpack.c.h.b16 %v1112
      %v1204 = vunpack.c.l.b16 %v1113
      %v1205 = vunpack.c.l.b16 %v1114
      %v1206 = vunpack.c.h.b16 %v1114
      %v1207 = vunpack.c.l.b16 %v1115
      %v1208 = vunpack.c.l.b16 %v1116
      %v1209 = vunpack.c.h.b16 %v1116
      %v1210 = vunpack.c.l.b16 %v1117
      %v1211 = vunpack.c.l.b16 %v1118
      %v1212 = vunpack.c.h.b16 %v1118
      %v1213 = vunpack.c.l.b16 %v1119
      %v1214 = vunpack.c.l.b16 %v1120
      %v1215 = vunpack.c.h.b16 %v1120
      %v1216 = vunpack.c.l.b16 %v1121
      %v1217 = vunpack.c.l.b16 %v1122
      %v1218 = vunpack.c.h.b16 %v1122
      %v1219 = vunpack.c.l.b16 %v1123
      %v1220 = vunpack.c.l.b16 %v1124
      %v1221 = vunpack.c.h.b16 %v1124
      %v1222 = vunpack.c.l.b16 %v1125
      %v1223 = vpack.c.b16 %v1178, %v1175
      %v1224 = vpack.c.b16 %v1179, %v1176
      %v1225 = vpack.c.b16 %v1180, %v1177
      %v1226 = vpack.c.b16 %v1184, %v1181
      %v1227 = vpack.c.b16 %v1185, %v1182
      %v1228 = vpack.c.b16 %v1186, %v1183
      %v1229 = vpack.c.b16 %v1190, %v1187
      %v1230 = vpack.c.b16 %v1191, %v1188
      %v1231 = vpack.c.b16 %v1192, %v1189
      %v1232 = vpack.c.b16 %v1196, %v1193
      %v1233 = vpack.c.b16 %v1197, %v1194
      %v1234 = vpack.c.b16 %v1198, %v1195
      %v1235 = vpack.c.b16 %v1202, %v1199
      %v1236 = vpack.c.b16 %v1203, %v1200
      %v1237 = vpack.c.b16 %v1204, %v1201
      %v1238 = vpack.c.b16 %v1208, %v1205
      %v1239 = vpack.c.b16 %v1209, %v1206
      %v1240 = vpack.c.b16 %v1210, %v1207
      %v1241 = vpack.c.b16 %v1214, %v1211
      %v1242 = vpack.c.b16 %v1215, %v1212
      %v1243 = vpack.c.b16 %v1216, %v1213
      %v1244 = vpack.c.b16 %v1220, %v1217
      %v1245 = vpack.c.b16 %v1221, %v1218
      %v1246 = vpack.c.b16 %v1222, %v1219
      %1271 = vmatprep.subr.bf16.mxu0 %v1224
      %1272 = vmatpush1.bf16.msra.mxu0 %v1223
      %1273 = vmatprep.subr.bf16.mxu0 %v1227
      %1274 = vmatpush1.bf16.msra.mxu0 %v1226
      %1275 = vmatprep.subr.bf16.mxu0 %v1230
      %1276 = vmatpush1.bf16.msra.mxu0 %v1229
      %1277 = vmatprep.subr.bf16.mxu0 %v1233
      %1278 = vmatpush1.bf16.msra.mxu0 %v1232
      %1279 = vmatprep.subr.bf16.mxu0 %v1236
      %1280 = vmatpush1.bf16.msra.mxu0 %v1235
      %1281 = vmatprep.subr.bf16.mxu0 %v1239
      %1282 = vmatpush1.bf16.msra.mxu0 %v1238
      %1283 = vmatprep.subr.bf16.mxu0 %v1242
      %1284 = vmatpush1.bf16.msra.mxu0 %v1241
      %1285 = vmatprep.subr.bf16.mxu0 %v1245
      %1286 = vmatpush1.bf16.msra.mxu0 %v1244
      %1287 = vmatprep.subr.bf16.mxu0 0
      %1288 = vmatpush1.bf16.msra.mxu0 0
      %1289 = vmatprep.subr.bf16.mxu0 0
      %1290 = vmatpush1.bf16.msra.mxu0 0
      %1291 = vmatprep.subr.bf16.mxu0 0
      %1292 = vmatpush1.bf16.msra.mxu0 0
      %1293 = vmatprep.subr.bf16.mxu0 0
      %1294 = vmatpush1.bf16.msra.mxu0 0
      %1295 = vmatprep.subr.bf16.mxu0 0
      %1296 = vmatpush1.bf16.msra.mxu0 0
      %1297 = vmatprep.subr.bf16.mxu0 0
      %1298 = vmatpush1.bf16.msra.mxu0 0
      %1299 = vmatprep.subr.bf16.mxu0 0
      %1300 = vmatpush1.bf16.msra.mxu0 0
      %1301 = vmatprep.subr.bf16.mxu0 0
      %1302 = vmatpush1.bf16.msra.mxu0 0
      %1303 = vmatprep.mubr.bf16.mxu0 0
      %1304 = vmatmul.mubr.bf16.gmra.mrb[0].mxu0 0
      %v1305 = vpop.f32.mrb[0].mxu0
      %v1306 = vadd.f32 %v1131, %v1305
      %v1307 = vpop.f32.mrb[0].mxu0
      %v1308 = vadd.f32 %v1135, %v1307
      %v1309 = vpop.f32.mrb[0].mxu0
      %v1310 = vpop.f32.mrb[0].mxu0
      %1311 = vdwg.mxu0
      %1312 = vmatprep.subr.bf16.mxu0 0
      %1313 = vmatpush1.bf16.msra.mxu0 %v1225
      %1314 = vmatprep.subr.bf16.mxu0 0
      %1315 = vmatpush1.bf16.msra.mxu0 %v1228
      %1316 = vmatprep.subr.bf16.mxu0 0
      %1317 = vmatpush1.bf16.msra.mxu0 %v1231
      %1318 = vmatprep.subr.bf16.mxu0 0
      %1319 = vmatpush1.bf16.msra.mxu0 %v1234
      %1320 = vmatprep.subr.bf16.mxu0 0
      %1321 = vmatpush1.bf16.msra.mxu0 %v1237
      %1322 = vmatprep.subr.bf16.mxu0 0
      %1323 = vmatpush1.bf16.msra.mxu0 %v1240
      %1324 = vmatprep.subr.bf16.mxu0 0
      %1325 = vmatpush1.bf16.msra.mxu0 %v1243
      %1326 = vmatprep.subr.bf16.mxu0 0
      %1327 = vmatpush1.bf16.msra.mxu0 %v1246
      %1328 = vmatprep.subr.bf16.mxu0 0
      %1329 = vmatpush1.bf16.msra.mxu0 0
      %1330 = vmatprep.subr.bf16.mxu0 0
      %1331 = vmatpush1.bf16.msra.mxu0 0
      %1332 = vmatprep.subr.bf16.mxu0 0
      %1333 = vmatpush1.bf16.msra.mxu0 0
      %1334 = vmatprep.subr.bf16.mxu0 0
      %1335 = vmatpush1.bf16.msra.mxu0 0
      %1336 = vmatprep.subr.bf16.mxu0 0
      %1337 = vmatpush1.bf16.msra.mxu0 0
      %1338 = vmatprep.subr.bf16.mxu0 0
      %1339 = vmatpush1.bf16.msra.mxu0 0
      %1340 = vmatprep.subr.bf16.mxu0 0
      %1341 = vmatpush1.bf16.msra.mxu0 0
      %1342 = vmatprep.subr.bf16.mxu0 0
      %1343 = vmatpush1.bf16.msra.mxu0 0
      %1344 = vmatprep.mubr.bf16.mxu0 0
      %1345 = vmatmul.mubr.bf16.gmra.mrb[0].mxu0 0
      %v1346 = vpop.f32.mrb[0].mxu0
      %v1347 = vadd.f32 %v1139, %v1346
      %v1348 = vpop.f32.mrb[0].mxu0
      %v1349 = vpop.f32.mrb[0].mxu0
      %v1350 = vpop.f32.mrb[0].mxu0
      %1351 = vdwg.mxu0
      %v1353 = vrot.slane %v1306, 1
      %v1356 = vadd.f32 %v1045, %v1306
      %v1357 = vadd.f32 %v1049, %v1353
      %v1358 = vsub.f32 0.0, %v1356
      %v1359 = vsub.f32 0.0, %v1357
      %v1360 = vmul.f32 %v1358, 1.442695
      %v1361 = vpow.pop %v1360
      %v1362 = vmul.f32 %v1359, 1.442695
      %v1363 = vpow.pop %v1362
      %v1364 = vadd.f32 %v1361, 1.0
      %v1365 = vadd.f32 %v1363, 1.0
      %v1366 = vrcp.pop %v1364
      %v1367 = vrcp.pop %v1365
      %v1369 = vrot.slane %v1308, 1
      %v1372 = vadd.f32 %v1047, %v1308
      %v1373 = vadd.f32 %v1051, %v1369
      %v1374 = vsub.f32 0.0, %v1372
      %v1375 = vsub.f32 0.0, %v1373
      %v1376 = vmul.f32 %v1374, 1.442695
      %v1377 = vpow.pop %v1376
      %v1378 = vmul.f32 %v1375, 1.442695
      %v1379 = vpow.pop %v1378
      %v1380 = vadd.f32 %v1377, 1.0
      %v1381 = vadd.f32 %v1379, 1.0
      %v1382 = vrcp.pop %v1380
      %v1383 = vrcp.pop %v1381
      %v1385 = vrot.slane %v1347, 1
      %v1388 = vmul.f32 %v1366, %v1347
      %v1389 = vmul.f32 %v1367, %v1385
      %v1390 = vadd.f32 %v1088, %v1388
      %v1391 = vadd.f32 %v1091, %v1389
      %v1392 = vtanh.pop %v1390
      %v1393 = vtanh.pop %v1391
      %v1394 = vsub.f32 1.0, %v1382
      %v1395 = vsub.f32 1.0, %v1383
      %v1396 = vmul.f32 %v1394, %v1392
      %v1397 = vmul.f32 %v1395, %v1393
      %v1398 = vmul.f32 %v1382, 0.0
      %v1399 = vmul.f32 %v1383, 0.0
      %v1400 = vadd.f32 %v1396, %v1398
      %v1401 = vadd.f32 %v1397, %v1399
      %1402 = vst [vmem:[#allocation2] sm:$0x1] %v1400
      %1403 = vst [vmem:[#allocation2 + $0x8] sm:$0x1] %v1401
      %v1404 = vpack.c.bf16 %v1400, %v1400
      %v1405 = vpack.c.bf16 %v1401, %v1401
      %v1408 = vunpack.c.l.b16 %v1404
      %v1409 = vunpack.c.l.b16 %v1405
      %v1410 = vrot.slane %v1409, 7
      %vm1411 = vcmask 1041409
      %v1412 = vsel %vm1411, %v1410, %v1408
      %v1413 = vpack.c.b16 %v1412, %v1412
      %1415 = vmatprep.subr.bf16.mxu0 %v1224
      %1416 = vmatpush1.bf16.msra.mxu0 %v1223
      %1417 = vmatprep.subr.bf16.mxu0 %v1227
      %1418 = vmatpush1.bf16.msra.mxu0 %v1226
      %1419 = vmatprep.subr.bf16.mxu0 %v1230
      %1420 = vmatpush1.bf16.msra.mxu0 %v1229
      %1421 = vmatprep.subr.bf16.mxu0 %v1233
      %1422 = vmatpush1.bf16.msra.mxu0 %v1232
      %1423 = vmatprep.subr.bf16.mxu0 %v1236
      %1424 = vmatpush1.bf16.msra.mxu0 %v1235
      %1425 = vmatprep.subr.bf16.mxu0 %v1239
      %1426 = vmatpush1.bf16.msra.mxu0 %v1238
      %1427 = vmatprep.subr.bf16.mxu0 %v1242
      %1428 = vmatpush1.bf16.msra.mxu0 %v1241
      %1429 = vmatprep.subr.bf16.mxu0 %v1245
      %1430 = vmatpush1.bf16.msra.mxu0 %v1244
      %1431 = vmatprep.subr.bf16.mxu0 0
      %1432 = vmatpush1.bf16.msra.mxu0 0
      %1433 = vmatprep.subr.bf16.mxu0 0
      %1434 = vmatpush1.bf16.msra.mxu0 0
      %1435 = vmatprep.subr.bf16.mxu0 0
      %1436 = vmatpush1.bf16.msra.mxu0 0
      %1437 = vmatprep.subr.bf16.mxu0 0
      %1438 = vmatpush1.bf16.msra.mxu0 0
      %1439 = vmatprep.subr.bf16.mxu0 0
      %1440 = vmatpush1.bf16.msra.mxu0 0
      %1441 = vmatprep.subr.bf16.mxu0 0
      %1442 = vmatpush1.bf16.msra.mxu0 0
      %1443 = vmatprep.subr.bf16.mxu0 0
      %1444 = vmatpush1.bf16.msra.mxu0 0
      %1445 = vmatprep.subr.bf16.mxu0 0
      %1446 = vmatpush1.bf16.msra.mxu0 0
      %1447 = vmatprep.mubr.bf16.mxu0 0
      %1448 = vmatmul.mubr.bf16.gmra.mrb[0].mxu0 %v1413
      %v1449 = vpop.f32.mrb[0].mxu0
      %v1450 = vadd.f32 %v1131, %v1449
      %v1451 = vpop.f32.mrb[0].mxu0
      %v1452 = vadd.f32 %v1135, %v1451
      %v1453 = vpop.f32.mrb[0].mxu0
      %v1454 = vpop.f32.mrb[0].mxu0
      %1455 = vdwg.mxu0
      %1456 = vmatprep.subr.bf16.mxu0 0
      %1457 = vmatpush1.bf16.msra.mxu0 %v1225
      %1458 = vmatprep.subr.bf16.mxu0 0
      %1459 = vmatpush1.bf16.msra.mxu0 %v1228
      %1460 = vmatprep.subr.bf16.mxu0 0
      %1461 = vmatpush1.bf16.msra.mxu0 %v1231
      %1462 = vmatprep.subr.bf16.mxu0 0
      %1463 = vmatpush1.bf16.msra.mxu0 %v1234
      %1464 = vmatprep.subr.bf16.mxu0 0
      %1465 = vmatpush1.bf16.msra.mxu0 %v1237
      %1466 = vmatprep.subr.bf16.mxu0 0
      %1467 = vmatpush1.bf16.msra.mxu0 %v1240
      %1468 = vmatprep.subr.bf16.mxu0 0
      %1469 = vmatpush1.bf16.msra.mxu0 %v1243
      %1470 = vmatprep.subr.bf16.mxu0 0
      %1471 = vmatpush1.bf16.msra.mxu0 %v1246
      %1472 = vmatprep.subr.bf16.mxu0 0
      %1473 = vmatpush1.bf16.msra.mxu0 0
      %1474 = vmatprep.subr.bf16.mxu0 0
      %1475 = vmatpush1.bf16.msra.mxu0 0
      %1476 = vmatprep.subr.bf16.mxu0 0
      %1477 = vmatpush1.bf16.msra.mxu0 0
      %1478 = vmatprep.subr.bf16.mxu0 0
      %1479 = vmatpush1.bf16.msra.mxu0 0
      %1480 = vmatprep.subr.bf16.mxu0 0
      %1481 = vmatpush1.bf16.msra.mxu0 0
      %1482 = vmatprep.subr.bf16.mxu0 0
      %1483 = vmatpush1.bf16.msra.mxu0 0
      %1484 = vmatprep.subr.bf16.mxu0 0
      %1485 = vmatpush1.bf16.msra.mxu0 0
      %1486 = vmatprep.subr.bf16.mxu0 0
      %1487 = vmatpush1.bf16.msra.mxu0 0
      %1488 = vmatprep.mubr.bf16.mxu0 0
      %1489 = vmatmul.mubr.bf16.gmra.mrb[0].mxu0 %v1413
      %v1490 = vpop.f32.mrb[0].mxu0
      %v1491 = vadd.f32 %v1139, %v1490
      %v1492 = vpop.f32.mrb[0].mxu0
      %v1493 = vpop.f32.mrb[0].mxu0
      %v1494 = vpop.f32.mrb[0].mxu0
      %1495 = vdwg.mxu0
      %v1497 = vrot.slane %v1450, 7
      %v1500 = vadd.f32 %v1045, %v1497
      %v1501 = vadd.f32 %v1049, %v1450
      %v1502 = vsub.f32 0.0, %v1500
      %v1503 = vsub.f32 0.0, %v1501
      %v1504 = vmul.f32 %v1502, 1.442695
      %v1505 = vpow.pop %v1504
      %v1506 = vmul.f32 %v1503, 1.442695
      %v1507 = vpow.pop %v1506
      %v1508 = vadd.f32 %v1505, 1.0
      %v1509 = vadd.f32 %v1507, 1.0
      %v1510 = vrcp.pop %v1508
      %v1511 = vrcp.pop %v1509
      %v1513 = vrot.slane %v1452, 7
      %v1516 = vadd.f32 %v1047, %v1513
      %v1517 = vadd.f32 %v1051, %v1452
      %v1518 = vsub.f32 0.0, %v1516
      %v1519 = vsub.f32 0.0, %v1517
      %v1520 = vmul.f32 %v1518, 1.442695
      %v1521 = vpow.pop %v1520
      %v1522 = vmul.f32 %v1519, 1.442695
      %v1523 = vpow.pop %v1522
      %v1524 = vadd.f32 %v1521, 1.0
      %v1525 = vadd.f32 %v1523, 1.0
      %v1526 = vrcp.pop %v1524
      %v1527 = vrcp.pop %v1525
      %v1529 = vrot.slane %v1491, 7
      %v1532 = vmul.f32 %v1510, %v1529
      %v1533 = vmul.f32 %v1511, %v1491
      %v1534 = vadd.f32 %v1088, %v1532
      %v1535 = vadd.f32 %v1091, %v1533
      %v1536 = vtanh.pop %v1534
      %v1537 = vtanh.pop %v1535
      %v1538 = vsub.f32 1.0, %v1526
      %v1539 = vsub.f32 1.0, %v1527
      %v1540 = vmul.f32 %v1538, %v1536
      %v1541 = vmul.f32 %v1539, %v1537
      %v1544 = vrot.slane %v1400, 7
      %v1545 = vrot.slane %v1401, 7
      %v1548 = vmul.f32 %v1526, %v1544
      %v1549 = vmul.f32 %v1527, %v1545
      %v1550 = vadd.f32 %v1540, %v1548
      %v1551 = vadd.f32 %v1541, %v1549
      %1552 = vst [vmem:[#allocation2] sm:$0x2] %v1550
      %1553 = vst [vmem:[#allocation2 + $0x8] sm:$0x2] %v1551
      %v1554 = vpack.c.bf16 %v1550, %v1550
      %v1555 = vpack.c.bf16 %v1551, %v1551
      %v1558 = vunpack.c.l.b16 %v1554
      %v1559 = vunpack.c.l.b16 %v1555
      %v1560 = vrot.slane %v1558, 1
      %v1561 = vsel %vm1411, %v1559, %v1560
      %v1562 = vpack.c.b16 %v1561, %v1561
      %1564 = vmatprep.subr.bf16.mxu0 %v1224
      %1565 = vmatpush1.bf16.msra.mxu0 %v1223
      %1566 = vmatprep.subr.bf16.mxu0 %v1227
      %1567 = vmatpush1.bf16.msra.mxu0 %v1226
      %1568 = vmatprep.subr.bf16.mxu0 %v1230
      %1569 = vmatpush1.bf16.msra.mxu0 %v1229
      %1570 = vmatprep.subr.bf16.mxu0 %v1233
      %1571 = vmatpush1.bf16.msra.mxu0 %v1232
      %1572 = vmatprep.subr.bf16.mxu0 %v1236
      %1573 = vmatpush1.bf16.msra.mxu0 %v1235
      %1574 = vmatprep.subr.bf16.mxu0 %v1239
      %1575 = vmatpush1.bf16.msra.mxu0 %v1238
      %1576 = vmatprep.subr.bf16.mxu0 %v1242
      %1577 = vmatpush1.bf16.msra.mxu0 %v1241
      %1578 = vmatprep.subr.bf16.mxu0 %v1245
      %1579 = vmatpush1.bf16.msra.mxu0 %v1244
      %1580 = vmatprep.subr.bf16.mxu0 0
      %1581 = vmatpush1.bf16.msra.mxu0 0
      %1582 = vmatprep.subr.bf16.mxu0 0
      %1583 = vmatpush1.bf16.msra.mxu0 0
      %1584 = vmatprep.subr.bf16.mxu0 0
      %1585 = vmatpush1.bf16.msra.mxu0 0
      %1586 = vmatprep.subr.bf16.mxu0 0
      %1587 = vmatpush1.bf16.msra.mxu0 0
      %1588 = vmatprep.subr.bf16.mxu0 0
      %1589 = vmatpush1.bf16.msra.mxu0 0
      %1590 = vmatprep.subr.bf16.mxu0 0
      %1591 = vmatpush1.bf16.msra.mxu0 0
      %1592 = vmatprep.subr.bf16.mxu0 0
      %1593 = vmatpush1.bf16.msra.mxu0 0
      %1594 = vmatprep.subr.bf16.mxu0 0
      %1595 = vmatpush1.bf16.msra.mxu0 0
      %1596 = vmatprep.mubr.bf16.mxu0 0
      %1597 = vmatmul.mubr.bf16.gmra.mrb[0].mxu0 %v1562
      %v1598 = vpop.f32.mrb[0].mxu0
      %v1599 = vadd.f32 %v1131, %v1598
      %v1600 = vpop.f32.mrb[0].mxu0
      %v1601 = vadd.f32 %v1135, %v1600
      %v1602 = vpop.f32.mrb[0].mxu0
      %v1603 = vpop.f32.mrb[0].mxu0
      %1604 = vdwg.mxu0
      %1605 = vmatprep.subr.bf16.mxu0 0
      %1606 = vmatpush1.bf16.msra.mxu0 %v1225
      %1607 = vmatprep.subr.bf16.mxu0 0
      %1608 = vmatpush1.bf16.msra.mxu0 %v1228
      %1609 = vmatprep.subr.bf16.mxu0 0
      %1610 = vmatpush1.bf16.msra.mxu0 %v1231
      %1611 = vmatprep.subr.bf16.mxu0 0
      %1612 = vmatpush1.bf16.msra.mxu0 %v1234
      %1613 = vmatprep.subr.bf16.mxu0 0
      %1614 = vmatpush1.bf16.msra.mxu0 %v1237
      %1615 = vmatprep.subr.bf16.mxu0 0
      %1616 = vmatpush1.bf16.msra.mxu0 %v1240
      %1617 = vmatprep.subr.bf16.mxu0 0
      %1618 = vmatpush1.bf16.msra.mxu0 %v1243
      %1619 = vmatprep.subr.bf16.mxu0 0
      %1620 = vmatpush1.bf16.msra.mxu0 %v1246
      %1621 = vmatprep.subr.bf16.mxu0 0
      %1622 = vmatpush1.bf16.msra.mxu0 0
      %1623 = vmatprep.subr.bf16.mxu0 0
      %1624 = vmatpush1.bf16.msra.mxu0 0
      %1625 = vmatprep.subr.bf16.mxu0 0
      %1626 = vmatpush1.bf16.msra.mxu0 0
      %1627 = vmatprep.subr.bf16.mxu0 0
      %1628 = vmatpush1.bf16.msra.mxu0 0
      %1629 = vmatprep.subr.bf16.mxu0 0
      %1630 = vmatpush1.bf16.msra.mxu0 0
      %1631 = vmatprep.subr.bf16.mxu0 0
      %1632 = vmatpush1.bf16.msra.mxu0 0
      %1633 = vmatprep.subr.bf16.mxu0 0
      %1634 = vmatpush1.bf16.msra.mxu0 0
      %1635 = vmatprep.subr.bf16.mxu0 0
      %1636 = vmatpush1.bf16.msra.mxu0 0
      %1637 = vmatprep.mubr.bf16.mxu0 0
      %1638 = vmatmul.mubr.bf16.gmra.mrb[0].mxu0 %v1562
      %v1639 = vpop.f32.mrb[0].mxu0
      %v1640 = vadd.f32 %v1139, %v1639
      %v1641 = vpop.f32.mrb[0].mxu0
      %v1642 = vpop.f32.mrb[0].mxu0
      %v1643 = vpop.f32.mrb[0].mxu0
      %1644 = vdwg.mxu0
      %v1646 = vrot.slane %v1599, 6
      %v1647 = vrot.slane %v1599, 7
      %v1650 = vadd.f32 %v1045, %v1646
      %v1651 = vadd.f32 %v1049, %v1647
      %v1652 = vsub.f32 0.0, %v1650
      %v1653 = vsub.f32 0.0, %v1651
      %v1654 = vmul.f32 %v1652, 1.442695
      %v1655 = vpow.pop %v1654
      %v1656 = vmul.f32 %v1653, 1.442695
      %v1657 = vpow.pop %v1656
      %v1658 = vadd.f32 %v1655, 1.0
      %v1659 = vadd.f32 %v1657, 1.0
      %v1660 = vrcp.pop %v1658
      %v1661 = vrcp.pop %v1659
      %v1663 = vrot.slane %v1601, 6
      %v1664 = vrot.slane %v1601, 7
      %v1667 = vadd.f32 %v1047, %v1663
      %v1668 = vadd.f32 %v1051, %v1664
      %v1669 = vsub.f32 0.0, %v1667
      %v1670 = vsub.f32 0.0, %v1668
      %v1671 = vmul.f32 %v1669, 1.442695
      %v1672 = vpow.pop %v1671
      %v1673 = vmul.f32 %v1670, 1.442695
      %v1674 = vpow.pop %v1673
      %v1675 = vadd.f32 %v1672, 1.0
      %v1676 = vadd.f32 %v1674, 1.0
      %v1677 = vrcp.pop %v1675
      %v1678 = vrcp.pop %v1676
      %v1680 = vrot.slane %v1640, 6
      %v1681 = vrot.slane %v1640, 7
      %v1684 = vmul.f32 %v1660, %v1680
      %v1685 = vmul.f32 %v1661, %v1681
      %v1686 = vadd.f32 %v1088, %v1684
      %v1687 = vadd.f32 %v1091, %v1685
      %v1688 = vtanh.pop %v1686
      %v1689 = vtanh.pop %v1687
      %v1690 = vsub.f32 1.0, %v1677
      %v1691 = vsub.f32 1.0, %v1678
      %v1692 = vmul.f32 %v1690, %v1688
      %v1693 = vmul.f32 %v1691, %v1689
      %v1696 = vrot.slane %v1550, 7
      %v1697 = vrot.slane %v1551, 7
      %v1700 = vmul.f32 %v1677, %v1696
      %v1701 = vmul.f32 %v1678, %v1697
      %v1702 = vadd.f32 %v1692, %v1700
      %v1703 = vadd.f32 %v1693, %v1701
      %1704 = vst [vmem:[#allocation2] sm:$0x4] %v1702
      %1705 = vst [vmem:[#allocation2 + $0x8] sm:$0x4] %v1703
      %v1706 = vpack.c.bf16 %v1702, %v1702
      %v1707 = vpack.c.bf16 %v1703, %v1703
      %v1710 = vunpack.c.l.b16 %v1706
      %v1711 = vunpack.c.l.b16 %v1707
      %v1712 = vrot.slane %v1710, 2
      %v1713 = vrot.slane %v1711, 1
      %v1714 = vsel %vm1411, %v1713, %v1712
      %v1715 = vpack.c.b16 %v1714, %v1714
      %1717 = vmatprep.subr.bf16.mxu0 %v1224
      %1718 = vmatpush1.bf16.msra.mxu0 %v1223
      %1719 = vmatprep.subr.bf16.mxu0 %v1227
      %1720 = vmatpush1.bf16.msra.mxu0 %v1226
      %1721 = vmatprep.subr.bf16.mxu0 %v1230
      %1722 = vmatpush1.bf16.msra.mxu0 %v1229
      %1723 = vmatprep.subr.bf16.mxu0 %v1233
      %1724 = vmatpush1.bf16.msra.mxu0 %v1232
      %1725 = vmatprep.subr.bf16.mxu0 %v1236
      %1726 = vmatpush1.bf16.msra.mxu0 %v1235
      %1727 = vmatprep.subr.bf16.mxu0 %v1239
      %1728 = vmatpush1.bf16.msra.mxu0 %v1238
      %1729 = vmatprep.subr.bf16.mxu0 %v1242
      %1730 = vmatpush1.bf16.msra.mxu0 %v1241
      %1731 = vmatprep.subr.bf16.mxu0 %v1245
      %1732 = vmatpush1.bf16.msra.mxu0 %v1244
      %1733 = vmatprep.subr.bf16.mxu0 0
      %1734 = vmatpush1.bf16.msra.mxu0 0
      %1735 = vmatprep.subr.bf16.mxu0 0
      %1736 = vmatpush1.bf16.msra.mxu0 0
      %1737 = vmatprep.subr.bf16.mxu0 0
      %1738 = vmatpush1.bf16.msra.mxu0 0
      %1739 = vmatprep.subr.bf16.mxu0 0
      %1740 = vmatpush1.bf16.msra.mxu0 0
      %1741 = vmatprep.subr.bf16.mxu0 0
      %1742 = vmatpush1.bf16.msra.mxu0 0
      %1743 = vmatprep.subr.bf16.mxu0 0
      %1744 = vmatpush1.bf16.msra.mxu0 0
      %1745 = vmatprep.subr.bf16.mxu0 0
      %1746 = vmatpush1.bf16.msra.mxu0 0
      %1747 = vmatprep.subr.bf16.mxu0 0
      %1748 = vmatpush1.bf16.msra.mxu0 0
      %1749 = vmatprep.mubr.bf16.mxu0 0
      %1750 = vmatmul.mubr.bf16.gmra.mrb[0].mxu0 %v1715
      %v1751 = vpop.f32.mrb[0].mxu0
      %v1752 = vadd.f32 %v1131, %v1751
      %v1753 = vpop.f32.mrb[0].mxu0
      %v1754 = vadd.f32 %v1135, %v1753
      %v1755 = vpop.f32.mrb[0].mxu0
      %v1756 = vpop.f32.mrb[0].mxu0
      %1757 = vdwg.mxu0
      %1758 = vmatprep.subr.bf16.mxu0 0
      %1759 = vmatpush1.bf16.msra.mxu0 %v1225
      %1760 = vmatprep.subr.bf16.mxu0 0
      %1761 = vmatpush1.bf16.msra.mxu0 %v1228
      %1762 = vmatprep.subr.bf16.mxu0 0
      %1763 = vmatpush1.bf16.msra.mxu0 %v1231
      %1764 = vmatprep.subr.bf16.mxu0 0
      %1765 = vmatpush1.bf16.msra.mxu0 %v1234
      %1766 = vmatprep.subr.bf16.mxu0 0
      %1767 = vmatpush1.bf16.msra.mxu0 %v1237
      %1768 = vmatprep.subr.bf16.mxu0 0
      %1769 = vmatpush1.bf16.msra.mxu0 %v1240
      %1770 = vmatprep.subr.bf16.mxu0 0
      %1771 = vmatpush1.bf16.msra.mxu0 %v1243
      %1772 = vmatprep.subr.bf16.mxu0 0
      %1773 = vmatpush1.bf16.msra.mxu0 %v1246
      %1774 = vmatprep.subr.bf16.mxu0 0
      %1775 = vmatpush1.bf16.msra.mxu0 0
      %1776 = vmatprep.subr.bf16.mxu0 0
      %1777 = vmatpush1.bf16.msra.mxu0 0
      %1778 = vmatprep.subr.bf16.mxu0 0
      %1779 = vmatpush1.bf16.msra.mxu0 0
      %1780 = vmatprep.subr.bf16.mxu0 0
      %1781 = vmatpush1.bf16.msra.mxu0 0
      %1782 = vmatprep.subr.bf16.mxu0 0
      %1783 = vmatpush1.bf16.msra.mxu0 0
      %1784 = vmatprep.subr.bf16.mxu0 0
      %1785 = vmatpush1.bf16.msra.mxu0 0
      %1786 = vmatprep.subr.bf16.mxu0 0
      %1787 = vmatpush1.bf16.msra.mxu0 0
      %1788 = vmatprep.subr.bf16.mxu0 0
      %1789 = vmatpush1.bf16.msra.mxu0 0
      %1790 = vmatprep.mubr.bf16.mxu0 0
      %1791 = vmatmul.mubr.bf16.gmra.mrb[0].mxu0 %v1715
      %v1792 = vpop.f32.mrb[0].mxu0
      %v1793 = vadd.f32 %v1139, %v1792
      %v1794 = vpop.f32.mrb[0].mxu0
      %v1795 = vpop.f32.mrb[0].mxu0
      %v1796 = vpop.f32.mrb[0].mxu0
      %1797 = vdwg.mxu0
      %v1799 = vrot.slane %v1752, 5
      %v1800 = vrot.slane %v1752, 6
      %v1803 = vadd.f32 %v1045, %v1799
      %v1804 = vadd.f32 %v1049, %v1800
      %v1805 = vsub.f32 0.0, %v1803
      %v1806 = vsub.f32 0.0, %v1804
      %v1807 = vmul.f32 %v1805, 1.442695
      %v1808 = vpow.pop %v1807
      %v1809 = vmul.f32 %v1806, 1.442695
      %v1810 = vpow.pop %v1809
      %v1811 = vadd.f32 %v1808, 1.0
      %v1812 = vadd.f32 %v1810, 1.0
      %v1813 = vrcp.pop %v1811
      %v1814 = vrcp.pop %v1812
      %v1816 = vrot.slane %v1754, 5
      %v1817 = vrot.slane %v1754, 6
      %v1820 = vadd.f32 %v1047, %v1816
      %v1821 = vadd.f32 %v1051, %v1817
      %v1822 = vsub.f32 0.0, %v1820
      %v1823 = vsub.f32 0.0, %v1821
      %v1824 = vmul.f32 %v1822, 1.442695
      %v1825 = vpow.pop %v1824
      %v1826 = vmul.f32 %v1823, 1.442695
      %v1827 = vpow.pop %v1826
      %v1828 = vadd.f32 %v1825, 1.0
      %v1829 = vadd.f32 %v1827, 1.0
      %v1830 = vrcp.pop %v1828
      %v1831 = vrcp.pop %v1829
      %v1833 = vrot.slane %v1793, 5
      %v1834 = vrot.slane %v1793, 6
      %v1837 = vmul.f32 %v1813, %v1833
      %v1838 = vmul.f32 %v1814, %v1834
      %v1839 = vadd.f32 %v1088, %v1837
      %v1840 = vadd.f32 %v1091, %v1838
      %v1841 = vtanh.pop %v1839
      %v1842 = vtanh.pop %v1840
      %v1843 = vsub.f32 1.0, %v1830
      %v1844 = vsub.f32 1.0, %v1831
      %v1845 = vmul.f32 %v1843, %v1841
      %v1846 = vmul.f32 %v1844, %v1842
      %v1849 = vrot.slane %v1702, 7
      %v1850 = vrot.slane %v1703, 7
      %v1853 = vmul.f32 %v1830, %v1849
      %v1854 = vmul.f32 %v1831, %v1850
      %v1855 = vadd.f32 %v1845, %v1853
      %v1856 = vadd.f32 %v1846, %v1854
      %1857 = vst [vmem:[#allocation2] sm:$0x8] %v1855
      %1858 = vst [vmem:[#allocation2 + $0x8] sm:$0x8] %v1856
      %v1859 = vpack.c.bf16 %v1855, %v1855
      %v1860 = vpack.c.bf16 %v1856, %v1856
      %v1863 = vunpack.c.l.b16 %v1859
      %v1864 = vunpack.c.l.b16 %v1860
      %v1865 = vrot.slane %v1863, 3
      %v1866 = vrot.slane %v1864, 2
      %v1867 = vsel %vm1411, %v1866, %v1865
      %v1868 = vpack.c.b16 %v1867, %v1867
      %1870 = vmatprep.subr.bf16.mxu0 %v1224
      %1871 = vmatpush1.bf16.msra.mxu0 %v1223
      %1872 = vmatprep.subr.bf16.mxu0 %v1227
      %1873 = vmatpush1.bf16.msra.mxu0 %v1226
      %1874 = vmatprep.subr.bf16.mxu0 %v1230
      %1875 = vmatpush1.bf16.msra.mxu0 %v1229
      %1876 = vmatprep.subr.bf16.mxu0 %v1233
      %1877 = vmatpush1.bf16.msra.mxu0 %v1232
      %1878 = vmatprep.subr.bf16.mxu0 %v1236
      %1879 = vmatpush1.bf16.msra.mxu0 %v1235
      %1880 = vmatprep.subr.bf16.mxu0 %v1239
      %1881 = vmatpush1.bf16.msra.mxu0 %v1238
      %1882 = vmatprep.subr.bf16.mxu0 %v1242
      %1883 = vmatpush1.bf16.msra.mxu0 %v1241
      %1884 = vmatprep.subr.bf16.mxu0 %v1245
      %1885 = vmatpush1.bf16.msra.mxu0 %v1244
      %1886 = vmatprep.subr.bf16.mxu0 0
      %1887 = vmatpush1.bf16.msra.mxu0 0
      %1888 = vmatprep.subr.bf16.mxu0 0
      %1889 = vmatpush1.bf16.msra.mxu0 0
      %1890 = vmatprep.subr.bf16.mxu0 0
      %1891 = vmatpush1.bf16.msra.mxu0 0
      %1892 = vmatprep.subr.bf16.mxu0 0
      %1893 = vmatpush1.bf16.msra.mxu0 0
      %1894 = vmatprep.subr.bf16.mxu0 0
      %1895 = vmatpush1.bf16.msra.mxu0 0
      %1896 = vmatprep.subr.bf16.mxu0 0
      %1897 = vmatpush1.bf16.msra.mxu0 0
      %1898 = vmatprep.subr.bf16.mxu0 0
      %1899 = vmatpush1.bf16.msra.mxu0 0
      %1900 = vmatprep.subr.bf16.mxu0 0
      %1901 = vmatpush1.bf16.msra.mxu0 0
      %1902 = vmatprep.mubr.bf16.mxu0 0
      %1903 = vmatmul.mubr.bf16.gmra.mrb[0].mxu0 %v1868
      %v1904 = vpop.f32.mrb[0].mxu0
      %v1905 = vadd.f32 %v1131, %v1904
      %v1906 = vpop.f32.mrb[0].mxu0
      %v1907 = vadd.f32 %v1135, %v1906
      %v1908 = vpop.f32.mrb[0].mxu0
      %v1909 = vpop.f32.mrb[0].mxu0
      %1910 = vdwg.mxu0
      %1911 = vmatprep.subr.bf16.mxu0 0
      %1912 = vmatpush1.bf16.msra.mxu0 %v1225
      %1913 = vmatprep.subr.bf16.mxu0 0
      %1914 = vmatpush1.bf16.msra.mxu0 %v1228
      %1915 = vmatprep.subr.bf16.mxu0 0
      %1916 = vmatpush1.bf16.msra.mxu0 %v1231
      %1917 = vmatprep.subr.bf16.mxu0 0
      %1918 = vmatpush1.bf16.msra.mxu0 %v1234
      %1919 = vmatprep.subr.bf16.mxu0 0
      %1920 = vmatpush1.bf16.msra.mxu0 %v1237
      %1921 = vmatprep.subr.bf16.mxu0 0
      %1922 = vmatpush1.bf16.msra.mxu0 %v1240
      %1923 = vmatprep.subr.bf16.mxu0 0
      %1924 = vmatpush1.bf16.msra.mxu0 %v1243
      %1925 = vmatprep.subr.bf16.mxu0 0
      %1926 = vmatpush1.bf16.msra.mxu0 %v1246
      %1927 = vmatprep.subr.bf16.mxu0 0
      %1928 = vmatpush1.bf16.msra.mxu0 0
      %1929 = vmatprep.subr.bf16.mxu0 0
      %1930 = vmatpush1.bf16.msra.mxu0 0
      %1931 = vmatprep.subr.bf16.mxu0 0
      %1932 = vmatpush1.bf16.msra.mxu0 0
      %1933 = vmatprep.subr.bf16.mxu0 0
      %1934 = vmatpush1.bf16.msra.mxu0 0
      %1935 = vmatprep.subr.bf16.mxu0 0
      %1936 = vmatpush1.bf16.msra.mxu0 0
      %1937 = vmatprep.subr.bf16.mxu0 0
      %1938 = vmatpush1.bf16.msra.mxu0 0
      %1939 = vmatprep.subr.bf16.mxu0 0
      %1940 = vmatpush1.bf16.msra.mxu0 0
      %1941 = vmatprep.subr.bf16.mxu0 0
      %1942 = vmatpush1.bf16.msra.mxu0 0
      %1943 = vmatprep.mubr.bf16.mxu0 0
      %1944 = vmatmul.mubr.bf16.gmra.mrb[0].mxu0 %v1868
      %v1945 = vpop.f32.mrb[0].mxu0
      %v1946 = vadd.f32 %v1139, %v1945
      %v1947 = vpop.f32.mrb[0].mxu0
      %v1948 = vpop.f32.mrb[0].mxu0
      %v1949 = vpop.f32.mrb[0].mxu0
      %1950 = vdwg.mxu0
      %v1952 = vrot.slane %v1905, 4
      %v1953 = vrot.slane %v1905, 5
      %v1956 = vadd.f32 %v1045, %v1952
      %v1957 = vadd.f32 %v1049, %v1953
      %v1958 = vsub.f32 0.0, %v1956
      %v1959 = vsub.f32 0.0, %v1957
      %v1960 = vmul.f32 %v1958, 1.442695
      %v1961 = vpow.pop %v1960
      %v1962 = vmul.f32 %v1959, 1.442695
      %v1963 = vpow.pop %v1962
      %v1964 = vadd.f32 %v1961, 1.0
      %v1965 = vadd.f32 %v1963, 1.0
      %v1966 = vrcp.pop %v1964
      %v1967 = vrcp.pop %v1965
      %v1969 = vrot.slane %v1907, 4
      %v1970 = vrot.slane %v1907, 5
      %v1973 = vadd.f32 %v1047, %v1969
      %v1974 = vadd.f32 %v1051, %v1970
      %v1975 = vsub.f32 0.0, %v1973
      %v1976 = vsub.f32 0.0, %v1974
      %v1977 = vmul.f32 %v1975, 1.442695
      %v1978 = vpow.pop %v1977
      %v1979 = vmul.f32 %v1976, 1.442695
      %v1980 = vpow.pop %v1979
      %v1981 = vadd.f32 %v1978, 1.0
      %v1982 = vadd.f32 %v1980, 1.0
      %v1983 = vrcp.pop %v1981
      %v1984 = vrcp.pop %v1982
      %v1986 = vrot.slane %v1946, 4
      %v1987 = vrot.slane %v1946, 5
      %v1990 = vmul.f32 %v1966, %v1986
      %v1991 = vmul.f32 %v1967, %v1987
      %v1992 = vadd.f32 %v1088, %v1990
      %v1993 = vadd.f32 %v1091, %v1991
      %v1994 = vtanh.pop %v1992
      %v1995 = vtanh.pop %v1993
      %v1996 = vsub.f32 1.0, %v1983
      %v1997 = vsub.f32 1.0, %v1984
      %v1998 = vmul.f32 %v1996, %v1994
      %v1999 = vmul.f32 %v1997, %v1995
      %v2002 = vrot.slane %v1855, 7
      %v2003 = vrot.slane %v1856, 7
      %v2006 = vmul.f32 %v1983, %v2002
      %v2007 = vmul.f32 %v1984, %v2003
      %v2008 = vadd.f32 %v1998, %v2006
      %v2009 = vadd.f32 %v1999, %v2007
      %2010 = vst [vmem:[#allocation2] sm:$0x10] %v2008
      %2011 = vst [vmem:[#allocation2 + $0x8] sm:$0x10] %v2009
      %v2012 = vpack.c.bf16 %v2008, %v2008
      %v2013 = vpack.c.bf16 %v2009, %v2009
      %v2016 = vunpack.c.l.b16 %v2012
      %v2017 = vunpack.c.l.b16 %v2013
      %v2018 = vrot.slane %v2016, 4
      %v2019 = vrot.slane %v2017, 3
      %v2020 = vsel %vm1411, %v2019, %v2018
      %v2021 = vpack.c.b16 %v2020, %v2020
      %2023 = vmatprep.subr.bf16.mxu0 %v1224
      %2024 = vmatpush1.bf16.msra.mxu0 %v1223
      %2025 = vmatprep.subr.bf16.mxu0 %v1227
      %2026 = vmatpush1.bf16.msra.mxu0 %v1226
      %2027 = vmatprep.subr.bf16.mxu0 %v1230
      %2028 = vmatpush1.bf16.msra.mxu0 %v1229
      %2029 = vmatprep.subr.bf16.mxu0 %v1233
      %2030 = vmatpush1.bf16.msra.mxu0 %v1232
      %2031 = vmatprep.subr.bf16.mxu0 %v1236
      %2032 = vmatpush1.bf16.msra.mxu0 %v1235
      %2033 = vmatprep.subr.bf16.mxu0 %v1239
      %2034 = vmatpush1.bf16.msra.mxu0 %v1238
      %2035 = vmatprep.subr.bf16.mxu0 %v1242
      %2036 = vmatpush1.bf16.msra.mxu0 %v1241
      %2037 = vmatprep.subr.bf16.mxu0 %v1245
      %2038 = vmatpush1.bf16.msra.mxu0 %v1244
      %2039 = vmatprep.subr.bf16.mxu0 0
      %2040 = vmatpush1.bf16.msra.mxu0 0
      %2041 = vmatprep.subr.bf16.mxu0 0
      %2042 = vmatpush1.bf16.msra.mxu0 0
      %2043 = vmatprep.subr.bf16.mxu0 0
      %2044 = vmatpush1.bf16.msra.mxu0 0
      %2045 = vmatprep.subr.bf16.mxu0 0
      %2046 = vmatpush1.bf16.msra.mxu0 0
      %2047 = vmatprep.subr.bf16.mxu0 0
      %2048 = vmatpush1.bf16.msra.mxu0 0
      %2049 = vmatprep.subr.bf16.mxu0 0
      %2050 = vmatpush1.bf16.msra.mxu0 0
      %2051 = vmatprep.subr.bf16.mxu0 0
      %2052 = vmatpush1.bf16.msra.mxu0 0
      %2053 = vmatprep.subr.bf16.mxu0 0
      %2054 = vmatpush1.bf16.msra.mxu0 0
      %2055 = vmatprep.mubr.bf16.mxu0 0
      %2056 = vmatmul.mubr.bf16.gmra.mrb[0].mxu0 %v2021
      %v2057 = vpop.f32.mrb[0].mxu0
      %v2058 = vadd.f32 %v1131, %v2057
      %v2059 = vpop.f32.mrb[0].mxu0
      %v2060 = vadd.f32 %v1135, %v2059
      %v2061 = vpop.f32.mrb[0].mxu0
      %v2062 = vpop.f32.mrb[0].mxu0
      %2063 = vdwg.mxu0
      %2064 = vmatprep.subr.bf16.mxu0 0
      %2065 = vmatpush1.bf16.msra.mxu0 %v1225
      %2066 = vmatprep.subr.bf16.mxu0 0
      %2067 = vmatpush1.bf16.msra.mxu0 %v1228
      %2068 = vmatprep.subr.bf16.mxu0 0
      %2069 = vmatpush1.bf16.msra.mxu0 %v1231
      %2070 = vmatprep.subr.bf16.mxu0 0
      %2071 = vmatpush1.bf16.msra.mxu0 %v1234
      %2072 = vmatprep.subr.bf16.mxu0 0
      %2073 = vmatpush1.bf16.msra.mxu0 %v1237
      %2074 = vmatprep.subr.bf16.mxu0 0
      %2075 = vmatpush1.bf16.msra.mxu0 %v1240
      %2076 = vmatprep.subr.bf16.mxu0 0
      %2077 = vmatpush1.bf16.msra.mxu0 %v1243
      %2078 = vmatprep.subr.bf16.mxu0 0
      %2079 = vmatpush1.bf16.msra.mxu0 %v1246
      %2080 = vmatprep.subr.bf16.mxu0 0
      %2081 = vmatpush1.bf16.msra.mxu0 0
      %2082 = vmatprep.subr.bf16.mxu0 0
      %2083 = vmatpush1.bf16.msra.mxu0 0
      %2084 = vmatprep.subr.bf16.mxu0 0
      %2085 = vmatpush1.bf16.msra.mxu0 0
      %2086 = vmatprep.subr.bf16.mxu0 0
      %2087 = vmatpush1.bf16.msra.mxu0 0
      %2088 = vmatprep.subr.bf16.mxu0 0
      %2089 = vmatpush1.bf16.msra.mxu0 0
      %2090 = vmatprep.subr.bf16.mxu0 0
      %2091 = vmatpush1.bf16.msra.mxu0 0
      %2092 = vmatprep.subr.bf16.mxu0 0
      %2093 = vmatpush1.bf16.msra.mxu0 0
      %2094 = vmatprep.subr.bf16.mxu0 0
      %2095 = vmatpush1.bf16.msra.mxu0 0
      %2096 = vmatprep.mubr.bf16.mxu0 0
      %2097 = vmatmul.mubr.bf16.gmra.mrb[0].mxu0 %v2021
      %v2098 = vpop.f32.mrb[0].mxu0
      %v2099 = vadd.f32 %v1139, %v2098
      %v2100 = vpop.f32.mrb[0].mxu0
      %v2101 = vpop.f32.mrb[0].mxu0
      %v2102 = vpop.f32.mrb[0].mxu0
      %2103 = vdwg.mxu0
      %v2105 = vrot.slane %v2058, 3
      %v2106 = vrot.slane %v2058, 4
      %v2109 = vadd.f32 %v1045, %v2105
      %v2110 = vadd.f32 %v1049, %v2106
      %v2111 = vsub.f32 0.0, %v2109
      %v2112 = vsub.f32 0.0, %v2110
      %v2113 = vmul.f32 %v2111, 1.442695
      %v2114 = vpow.pop %v2113
      %v2115 = vmul.f32 %v2112, 1.442695
      %v2116 = vpow.pop %v2115
      %v2117 = vadd.f32 %v2114, 1.0
      %v2118 = vadd.f32 %v2116, 1.0
      %v2119 = vrcp.pop %v2117
      %v2120 = vrcp.pop %v2118
      %v2122 = vrot.slane %v2060, 3
      %v2123 = vrot.slane %v2060, 4
      %v2126 = vadd.f32 %v1047, %v2122
      %v2127 = vadd.f32 %v1051, %v2123
      %v2128 = vsub.f32 0.0, %v2126
      %v2129 = vsub.f32 0.0, %v2127
      %v2130 = vmul.f32 %v2128, 1.442695
      %v2131 = vpow.pop %v2130
      %v2132 = vmul.f32 %v2129, 1.442695
      %v2133 = vpow.pop %v2132
      %v2134 = vadd.f32 %v2131, 1.0
      %v2135 = vadd.f32 %v2133, 1.0
      %v2136 = vrcp.pop %v2134
      %v2137 = vrcp.pop %v2135
      %v2139 = vrot.slane %v2099, 3
      %v2140 = vrot.slane %v2099, 4
      %v2143 = vmul.f32 %v2119, %v2139
      %v2144 = vmul.f32 %v2120, %v2140
      %v2145 = vadd.f32 %v1088, %v2143
      %v2146 = vadd.f32 %v1091, %v2144
      %v2147 = vtanh.pop %v2145
      %v2148 = vtanh.pop %v2146
      %v2149 = vsub.f32 1.0, %v2136
      %v2150 = vsub.f32 1.0, %v2137
      %v2151 = vmul.f32 %v2149, %v2147
      %v2152 = vmul.f32 %v2150, %v2148
      %v2155 = vrot.slane %v2008, 7
      %v2156 = vrot.slane %v2009, 7
      %v2159 = vmul.f32 %v2136, %v2155
      %v2160 = vmul.f32 %v2137, %v2156
      %v2161 = vadd.f32 %v2151, %v2159
      %v2162 = vadd.f32 %v2152, %v2160
      %2163 = vst [vmem:[#allocation2] sm:$0x20] %v2161
      %2164 = vst [vmem:[#allocation2 + $0x8] sm:$0x20] %v2162
      %v2165 = vpack.c.bf16 %v2161, %v2161
      %v2166 = vpack.c.bf16 %v2162, %v2162
      %v2169 = vunpack.c.l.b16 %v2165
      %v2170 = vunpack.c.l.b16 %v2166
      %v2171 = vrot.slane %v2169, 5
      %v2172 = vrot.slane %v2170, 4
      %v2173 = vsel %vm1411, %v2172, %v2171
      %v2174 = vpack.c.b16 %v2173, %v2173
      %2176 = vmatprep.subr.bf16.mxu0 %v1224
      %2177 = vmatpush1.bf16.msra.mxu0 %v1223
      %2178 = vmatprep.subr.bf16.mxu0 %v1227
      %2179 = vmatpush1.bf16.msra.mxu0 %v1226
      %2180 = vmatprep.subr.bf16.mxu0 %v1230
      %2181 = vmatpush1.bf16.msra.mxu0 %v1229
      %2182 = vmatprep.subr.bf16.mxu0 %v1233
      %2183 = vmatpush1.bf16.msra.mxu0 %v1232
      %2184 = vmatprep.subr.bf16.mxu0 %v1236
      %2185 = vmatpush1.bf16.msra.mxu0 %v1235
      %2186 = vmatprep.subr.bf16.mxu0 %v1239
      %2187 = vmatpush1.bf16.msra.mxu0 %v1238
      %2188 = vmatprep.subr.bf16.mxu0 %v1242
      %2189 = vmatpush1.bf16.msra.mxu0 %v1241
      %2190 = vmatprep.subr.bf16.mxu0 %v1245
      %2191 = vmatpush1.bf16.msra.mxu0 %v1244
      %2192 = vmatprep.subr.bf16.mxu0 0
      %2193 = vmatpush1.bf16.msra.mxu0 0
      %2194 = vmatprep.subr.bf16.mxu0 0
      %2195 = vmatpush1.bf16.msra.mxu0 0
      %2196 = vmatprep.subr.bf16.mxu0 0
      %2197 = vmatpush1.bf16.msra.mxu0 0
      %2198 = vmatprep.subr.bf16.mxu0 0
      %2199 = vmatpush1.bf16.msra.mxu0 0
      %2200 = vmatprep.subr.bf16.mxu0 0
      %2201 = vmatpush1.bf16.msra.mxu0 0
      %2202 = vmatprep.subr.bf16.mxu0 0
      %2203 = vmatpush1.bf16.msra.mxu0 0
      %2204 = vmatprep.subr.bf16.mxu0 0
      %2205 = vmatpush1.bf16.msra.mxu0 0
      %2206 = vmatprep.subr.bf16.mxu0 0
      %2207 = vmatpush1.bf16.msra.mxu0 0
      %2208 = vmatprep.mubr.bf16.mxu0 0
      %2209 = vmatmul.mubr.bf16.gmra.mrb[0].mxu0 %v2174
      %v2210 = vpop.f32.mrb[0].mxu0
      %v2211 = vadd.f32 %v1131, %v2210
      %v2212 = vpop.f32.mrb[0].mxu0
      %v2213 = vadd.f32 %v1135, %v2212
      %v2214 = vpop.f32.mrb[0].mxu0
      %v2215 = vpop.f32.mrb[0].mxu0
      %2216 = vdwg.mxu0
      %2217 = vmatprep.subr.bf16.mxu0 0
      %2218 = vmatpush1.bf16.msra.mxu0 %v1225
      %2219 = vmatprep.subr.bf16.mxu0 0
      %2220 = vmatpush1.bf16.msra.mxu0 %v1228
      %2221 = vmatprep.subr.bf16.mxu0 0
      %2222 = vmatpush1.bf16.msra.mxu0 %v1231
      %2223 = vmatprep.subr.bf16.mxu0 0
      %2224 = vmatpush1.bf16.msra.mxu0 %v1234
      %2225 = vmatprep.subr.bf16.mxu0 0
      %2226 = vmatpush1.bf16.msra.mxu0 %v1237
      %2227 = vmatprep.subr.bf16.mxu0 0
      %2228 = vmatpush1.bf16.msra.mxu0 %v1240
      %2229 = vmatprep.subr.bf16.mxu0 0
      %2230 = vmatpush1.bf16.msra.mxu0 %v1243
      %2231 = vmatprep.subr.bf16.mxu0 0
      %2232 = vmatpush1.bf16.msra.mxu0 %v1246
      %2233 = vmatprep.subr.bf16.mxu0 0
      %2234 = vmatpush1.bf16.msra.mxu0 0
      %2235 = vmatprep.subr.bf16.mxu0 0
      %2236 = vmatpush1.bf16.msra.mxu0 0
      %2237 = vmatprep.subr.bf16.mxu0 0
      %2238 = vmatpush1.bf16.msra.mxu0 0
      %2239 = vmatprep.subr.bf16.mxu0 0
      %2240 = vmatpush1.bf16.msra.mxu0 0
      %2241 = vmatprep.subr.bf16.mxu0 0
      %2242 = vmatpush1.bf16.msra.mxu0 0
      %2243 = vmatprep.subr.bf16.mxu0 0
      %2244 = vmatpush1.bf16.msra.mxu0 0
      %2245 = vmatprep.subr.bf16.mxu0 0
      %2246 = vmatpush1.bf16.msra.mxu0 0
      %2247 = vmatprep.subr.bf16.mxu0 0
      %2248 = vmatpush1.bf16.msra.mxu0 0
      %2249 = vmatprep.mubr.bf16.mxu0 0
      %2250 = vmatmul.mubr.bf16.gmra.mrb[0].mxu0 %v2174
      %v2251 = vpop.f32.mrb[0].mxu0
      %v2252 = vadd.f32 %v1139, %v2251
      %v2253 = vpop.f32.mrb[0].mxu0
      %v2254 = vpop.f32.mrb[0].mxu0
      %v2255 = vpop.f32.mrb[0].mxu0
      %2256 = vdwg.mxu0
      %v2258 = vrot.slane %v2211, 2
      %v2259 = vrot.slane %v2211, 3
      %v2262 = vadd.f32 %v1045, %v2258
      %v2263 = vadd.f32 %v1049, %v2259
      %v2264 = vsub.f32 0.0, %v2262
      %v2265 = vsub.f32 0.0, %v2263
      %v2266 = vmul.f32 %v2264, 1.442695
      %v2267 = vpow.pop %v2266
      %v2268 = vmul.f32 %v2265, 1.442695
      %v2269 = vpow.pop %v2268
      %v2270 = vadd.f32 %v2267, 1.0
      %v2271 = vadd.f32 %v2269, 1.0
      %v2272 = vrcp.pop %v2270
      %v2273 = vrcp.pop %v2271
      %v2275 = vrot.slane %v2213, 2
      %v2276 = vrot.slane %v2213, 3
      %v2279 = vadd.f32 %v1047, %v2275
      %v2280 = vadd.f32 %v1051, %v2276
      %v2281 = vsub.f32 0.0, %v2279
      %v2282 = vsub.f32 0.0, %v2280
      %v2283 = vmul.f32 %v2281, 1.442695
      %v2284 = vpow.pop %v2283
      %v2285 = vmul.f32 %v2282, 1.442695
      %v2286 = vpow.pop %v2285
      %v2287 = vadd.f32 %v2284, 1.0
      %v2288 = vadd.f32 %v2286, 1.0
      %v2289 = vrcp.pop %v2287
      %v2290 = vrcp.pop %v2288
      %v2292 = vrot.slane %v2252, 2
      %v2293 = vrot.slane %v2252, 3
      %v2296 = vmul.f32 %v2272, %v2292
      %v2297 = vmul.f32 %v2273, %v2293
      %v2298 = vadd.f32 %v1088, %v2296
      %v2299 = vadd.f32 %v1091, %v2297
      %v2300 = vtanh.pop %v2298
      %v2301 = vtanh.pop %v2299
      %v2302 = vsub.f32 1.0, %v2289
      %v2303 = vsub.f32 1.0, %v2290
      %v2304 = vmul.f32 %v2302, %v2300
      %v2305 = vmul.f32 %v2303, %v2301
      %v2308 = vrot.slane %v2161, 7
      %v2309 = vrot.slane %v2162, 7
      %v2312 = vmul.f32 %v2289, %v2308
      %v2313 = vmul.f32 %v2290, %v2309
      %v2314 = vadd.f32 %v2304, %v2312
      %v2315 = vadd.f32 %v2305, %v2313
      %2316 = vst [vmem:[#allocation2] sm:$0x40] %v2314
      %2317 = vst [vmem:[#allocation2 + $0x8] sm:$0x40] %v2315
      %v2318 = vpack.c.bf16 %v2314, %v2314
      %v2319 = vpack.c.bf16 %v2315, %v2315
      %v2322 = vunpack.c.l.b16 %v2318
      %v2323 = vunpack.c.l.b16 %v2319
      %v2324 = vrot.slane %v2322, 6
      %v2325 = vrot.slane %v2323, 5
      %v2326 = vsel %vm1411, %v2325, %v2324
      %v2327 = vpack.c.b16 %v2326, %v2326
      %2329 = vmatprep.subr.bf16.mxu0 %v1224
      %2330 = vmatpush1.bf16.msra.mxu0 %v1223
      %2331 = vmatprep.subr.bf16.mxu0 %v1227
      %2332 = vmatpush1.bf16.msra.mxu0 %v1226
      %2333 = vmatprep.subr.bf16.mxu0 %v1230
      %2334 = vmatpush1.bf16.msra.mxu0 %v1229
      %2335 = vmatprep.subr.bf16.mxu0 %v1233
      %2336 = vmatpush1.bf16.msra.mxu0 %v1232
      %2337 = vmatprep.subr.bf16.mxu0 %v1236
      %2338 = vmatpush1.bf16.msra.mxu0 %v1235
      %2339 = vmatprep.subr.bf16.mxu0 %v1239
      %2340 = vmatpush1.bf16.msra.mxu0 %v1238
      %2341 = vmatprep.subr.bf16.mxu0 %v1242
      %2342 = vmatpush1.bf16.msra.mxu0 %v1241
      %2343 = vmatprep.subr.bf16.mxu0 %v1245
      %2344 = vmatpush1.bf16.msra.mxu0 %v1244
      %2345 = vmatprep.subr.bf16.mxu0 0
      %2346 = vmatpush1.bf16.msra.mxu0 0
      %2347 = vmatprep.subr.bf16.mxu0 0
      %2348 = vmatpush1.bf16.msra.mxu0 0
      %2349 = vmatprep.subr.bf16.mxu0 0
      %2350 = vmatpush1.bf16.msra.mxu0 0
      %2351 = vmatprep.subr.bf16.mxu0 0
      %2352 = vmatpush1.bf16.msra.mxu0 0
      %2353 = vmatprep.subr.bf16.mxu0 0
      %2354 = vmatpush1.bf16.msra.mxu0 0
      %2355 = vmatprep.subr.bf16.mxu0 0
      %2356 = vmatpush1.bf16.msra.mxu0 0
      %2357 = vmatprep.subr.bf16.mxu0 0
      %2358 = vmatpush1.bf16.msra.mxu0 0
      %2359 = vmatprep.subr.bf16.mxu0 0
      %2360 = vmatpush1.bf16.msra.mxu0 0
      %2361 = vmatprep.mubr.bf16.mxu0 0
      %2362 = vmatmul.mubr.bf16.gmra.mrb[0].mxu0 %v2327
      %v2363 = vpop.f32.mrb[0].mxu0
      %v2364 = vadd.f32 %v1131, %v2363
      %v2365 = vpop.f32.mrb[0].mxu0
      %v2366 = vadd.f32 %v1135, %v2365
      %v2367 = vpop.f32.mrb[0].mxu0
      %v2368 = vpop.f32.mrb[0].mxu0
      %2369 = vdwg.mxu0
      %2370 = vmatprep.subr.bf16.mxu0 0
      %2371 = vmatpush1.bf16.msra.mxu0 %v1225
      %2372 = vmatprep.subr.bf16.mxu0 0
      %2373 = vmatpush1.bf16.msra.mxu0 %v1228
      %2374 = vmatprep.subr.bf16.mxu0 0
      %2375 = vmatpush1.bf16.msra.mxu0 %v1231
      %2376 = vmatprep.subr.bf16.mxu0 0
      %2377 = vmatpush1.bf16.msra.mxu0 %v1234
      %2378 = vmatprep.subr.bf16.mxu0 0
      %2379 = vmatpush1.bf16.msra.mxu0 %v1237
      %2380 = vmatprep.subr.bf16.mxu0 0
      %2381 = vmatpush1.bf16.msra.mxu0 %v1240
      %2382 = vmatprep.subr.bf16.mxu0 0
      %2383 = vmatpush1.bf16.msra.mxu0 %v1243
      %2384 = vmatprep.subr.bf16.mxu0 0
      %2385 = vmatpush1.bf16.msra.mxu0 %v1246
      %2386 = vmatprep.subr.bf16.mxu0 0
      %2387 = vmatpush1.bf16.msra.mxu0 0
      %2388 = vmatprep.subr.bf16.mxu0 0
      %2389 = vmatpush1.bf16.msra.mxu0 0
      %2390 = vmatprep.subr.bf16.mxu0 0
      %2391 = vmatpush1.bf16.msra.mxu0 0
      %2392 = vmatprep.subr.bf16.mxu0 0
      %2393 = vmatpush1.bf16.msra.mxu0 0
      %2394 = vmatprep.subr.bf16.mxu0 0
      %2395 = vmatpush1.bf16.msra.mxu0 0
      %2396 = vmatprep.subr.bf16.mxu0 0
      %2397 = vmatpush1.bf16.msra.mxu0 0
      %2398 = vmatprep.subr.bf16.mxu0 0
      %2399 = vmatpush1.bf16.msra.mxu0 0
      %2400 = vmatprep.subr.bf16.mxu0 0
      %2401 = vmatpush1.bf16.msra.mxu0 0
      %2402 = vmatprep.mubr.bf16.mxu0 0
      %2403 = vmatmul.mubr.bf16.gmra.mrb[0].mxu0 %v2327
      %v2404 = vpop.f32.mrb[0].mxu0
      %v2405 = vadd.f32 %v1139, %v2404
      %v2406 = vpop.f32.mrb[0].mxu0
      %v2407 = vpop.f32.mrb[0].mxu0
      %v2408 = vpop.f32.mrb[0].mxu0
      %2409 = vdwg.mxu0
      %v2411 = vrot.slane %v2364, 1
      %v2412 = vrot.slane %v2364, 2
      %v2415 = vadd.f32 %v1045, %v2411
      %v2416 = vadd.f32 %v1049, %v2412
      %v2417 = vsub.f32 0.0, %v2415
      %v2418 = vsub.f32 0.0, %v2416
      %v2419 = vmul.f32 %v2417, 1.442695
      %v2420 = vpow.pop %v2419
      %v2421 = vmul.f32 %v2418, 1.442695
      %v2422 = vpow.pop %v2421
      %v2423 = vadd.f32 %v2420, 1.0
      %v2424 = vadd.f32 %v2422, 1.0
      %v2425 = vrcp.pop %v2423
      %v2426 = vrcp.pop %v2424
      %v2428 = vrot.slane %v2366, 1
      %v2429 = vrot.slane %v2366, 2
      %v2432 = vadd.f32 %v1047, %v2428
      %v2433 = vadd.f32 %v1051, %v2429
      %v2434 = vsub.f32 0.0, %v2432
      %v2435 = vsub.f32 0.0, %v2433
      %v2436 = vmul.f32 %v2434, 1.442695
      %v2437 = vpow.pop %v2436
      %v2438 = vmul.f32 %v2435, 1.442695
      %v2439 = vpow.pop %v2438
      %v2440 = vadd.f32 %v2437, 1.0
      %v2441 = vadd.f32 %v2439, 1.0
      %v2442 = vrcp.pop %v2440
      %v2443 = vrcp.pop %v2441
      %v2445 = vrot.slane %v2405, 1
      %v2446 = vrot.slane %v2405, 2
      %v2449 = vmul.f32 %v2425, %v2445
      %v2450 = vmul.f32 %v2426, %v2446
      %v2451 = vadd.f32 %v1088, %v2449
      %v2452 = vadd.f32 %v1091, %v2450
      %v2453 = vtanh.pop %v2451
      %v2454 = vtanh.pop %v2452
      %v2455 = vsub.f32 1.0, %v2442
      %v2456 = vsub.f32 1.0, %v2443
      %v2457 = vmul.f32 %v2455, %v2453
      %v2458 = vmul.f32 %v2456, %v2454
      %v2461 = vrot.slane %v2314, 7
      %v2462 = vrot.slane %v2315, 7
      %v2465 = vmul.f32 %v2442, %v2461
      %v2466 = vmul.f32 %v2443, %v2462
      %v2467 = vadd.f32 %v2457, %v2465
      %v2468 = vadd.f32 %v2458, %v2466
      %2469 = vst [vmem:[#allocation2] sm:$0x80] %v2467
      %2470 = vst [vmem:[#allocation2 + $0x8] sm:$0x80] %v2468
      %v2471 = vld [vmem:[#allocation2] sm:$0xff]
      %v2472 = vld [vmem:[#allocation2 + $0x8] sm:$0xff]
      %v2473 = vld [vmem:[%s11] sm:$0xf]
      %v2474 = vld [vmem:[%s11 + $0x4] sm:$0xf]
      %v2475 = vld [vmem:[%s11 + $0x8] sm:$0xf]
      %v2476 = vld [vmem:[%s11 + $0xc] sm:$0xf]
      %v2477 = vld [vmem:[%s11 + $0x10] sm:$0xf]
      %v2478 = vld [vmem:[%s11 + $0x14] sm:$0xf]
      %v2479 = vld [vmem:[%s11 + $0x18] sm:$0xf]
      %v2480 = vld [vmem:[%s11 + $0x1c] sm:$0xf]
      %v2481 = vld [vmem:[%s11 + $0x20] sm:$0xf]
      %v2482 = vld [vmem:[%s11 + $0x24] sm:$0xf]
      %v2483 = vld [vmem:[%s11 + $0x28] sm:$0xf]
      %v2484 = vld [vmem:[%s11 + $0x2c] sm:$0xf]
      %v2485 = vld [vmem:[%s11 + $0x30] sm:$0xf]
      %v2486 = vld [vmem:[%s11 + $0x34] sm:$0xf]
      %v2487 = vld [vmem:[%s11 + $0x38] sm:$0xf]
      %v2488 = vld [vmem:[%s11 + $0x3c] sm:$0xf]
      %v2489 = vld [vmem:[%s12] sm:$0x1]
      %v2490 = vpack.c.bf16 %v830, %v830
      %v2491 = vpack.c.bf16 %v831, %v831
      %v2493 = vlaneseq
      %v2494 = vshrl.u32 %v2493, 7
      %v2495 = vsub.s32 0, %v2494
      %v2496 = vrot.slane %v2489, %v2495
      %v2500 = vunpack.c.l.b16 %v2490
      %v2501 = vunpack.c.l.b16 %v2491
      %v2502 = vrot.slane %v2501, 7
      %v2503 = vsel %vm1411, %v2502, %v2500
      %v2504 = vpack.c.b16 %v2503, %v2503
      %v2522 = vunpack.c.l.b16 %v2473
      %v2523 = vunpack.c.l.b16 %v2474
      %v2524 = vunpack.c.l.b16 %v2475
      %v2525 = vunpack.c.l.b16 %v2476
      %v2526 = vunpack.c.l.b16 %v2477
      %v2527 = vunpack.c.l.b16 %v2478
      %v2528 = vunpack.c.l.b16 %v2479
      %v2529 = vunpack.c.l.b16 %v2480
      %v2530 = vunpack.c.l.b16 %v2481
      %v2531 = vunpack.c.l.b16 %v2482
      %v2532 = vunpack.c.l.b16 %v2483
      %v2533 = vunpack.c.l.b16 %v2484
      %v2534 = vunpack.c.l.b16 %v2485
      %v2535 = vunpack.c.l.b16 %v2486
      %v2536 = vunpack.c.l.b16 %v2487
      %v2537 = vunpack.c.l.b16 %v2488
      %v2538 = vpack.c.b16 %v2523, %v2522
      %v2539 = vpack.c.b16 %v2525, %v2524
      %v2540 = vpack.c.b16 %v2527, %v2526
      %v2541 = vpack.c.b16 %v2529, %v2528
      %v2542 = vpack.c.b16 %v2531, %v2530
      %v2543 = vpack.c.b16 %v2533, %v2532
      %v2544 = vpack.c.b16 %v2535, %v2534
      %v2545 = vpack.c.b16 %v2537, %v2536
      %2554 = vmatprep.subr.bf16.mxu0 0
      %2555 = vmatpush1.bf16.msra.mxu0 %v2538
      %2556 = vmatprep.subr.bf16.mxu0 0
      %2557 = vmatpush1.bf16.msra.mxu0 %v2539
      %2558 = vmatprep.subr.bf16.mxu0 0
      %2559 = vmatpush1.bf16.msra.mxu0 %v2540
      %2560 = vmatprep.subr.bf16.mxu0 0
      %2561 = vmatpush1.bf16.msra.mxu0 %v2541
      %2562 = vmatprep.subr.bf16.mxu0 0
      %2563 = vmatpush1.bf16.msra.mxu0 %v2542
      %2564 = vmatprep.subr.bf16.mxu0 0
      %2565 = vmatpush1.bf16.msra.mxu0 %v2543
      %2566 = vmatprep.subr.bf16.mxu0 0
      %2567 = vmatpush1.bf16.msra.mxu0 %v2544
      %2568 = vmatprep.subr.bf16.mxu0 0
      %2569 = vmatpush1.bf16.msra.mxu0 %v2545
      %2570 = vmatprep.subr.bf16.mxu0 0
      %2571 = vmatpush1.bf16.msra.mxu0 0
      %2572 = vmatprep.subr.bf16.mxu0 0
      %2573 = vmatpush1.bf16.msra.mxu0 0
      %2574 = vmatprep.subr.bf16.mxu0 0
      %2575 = vmatpush1.bf16.msra.mxu0 0
      %2576 = vmatprep.subr.bf16.mxu0 0
      %2577 = vmatpush1.bf16.msra.mxu0 0
      %2578 = vmatprep.subr.bf16.mxu0 0
      %2579 = vmatpush1.bf16.msra.mxu0 0
      %2580 = vmatprep.subr.bf16.mxu0 0
      %2581 = vmatpush1.bf16.msra.mxu0 0
      %2582 = vmatprep.subr.bf16.mxu0 0
      %2583 = vmatpush1.bf16.msra.mxu0 0
      %2584 = vmatprep.subr.bf16.mxu0 0
      %2585 = vmatpush1.bf16.msra.mxu0 0
      %2586 = vmatprep.mubr.bf16.mxu0 0
      %2587 = vmatmul.mubr.bf16.gmra.mrb[0].mxu0 %v2504
      %v2588 = vpop.f32.mrb[0].mxu0
      %v2589 = vadd.f32 %v2496, %v2588
      %v2590 = vpop.f32.mrb[0].mxu0
      %v2591 = vpop.f32.mrb[0].mxu0
      %v2592 = vpop.f32.mrb[0].mxu0
      %2593 = vdwg.mxu0
      %v2594 = vld [vmem:[%s9] sm:$0xf]
      %v2595 = vld [vmem:[%s9 + $0x4] sm:$0xf]
      %v2596 = vld [vmem:[%s9 + $0x8] sm:$0xf]
      %v2597 = vld [vmem:[%s9 + $0xc] sm:$0xf]
      %v2598 = vld [vmem:[%s9 + $0x10] sm:$0xf]
      %v2599 = vld [vmem:[%s9 + $0x14] sm:$0xf]
      %v2600 = vld [vmem:[%s9 + $0x18] sm:$0xf]
      %v2601 = vld [vmem:[%s9 + $0x1c] sm:$0xf]
      %v2602 = vld [vmem:[%s9 + $0x20] sm:$0xf]
      %v2603 = vld [vmem:[%s9 + $0x24] sm:$0xf]
      %v2604 = vld [vmem:[%s9 + $0x28] sm:$0xf]
      %v2605 = vld [vmem:[%s9 + $0x2c] sm:$0xf]
      %v2606 = vld [vmem:[%s9 + $0x30] sm:$0xf]
      %v2607 = vld [vmem:[%s9 + $0x34] sm:$0xf]
      %v2608 = vld [vmem:[%s9 + $0x38] sm:$0xf]
      %v2609 = vld [vmem:[%s9 + $0x3c] sm:$0xf]
      %v2610 = vld [vmem:[%s10] sm:$0x1]
      %v2611 = vpack.c.bf16 %v2472, %v2471
      %v2613 = vlaneseq
      %v2614 = vshrl.u32 %v2613, 7
      %v2615 = vsub.s32 0, %v2614
      %v2616 = vrot.slane %v2610, %v2615
      %v2634 = vunpack.c.l.b16 %v2594
      %v2635 = vunpack.c.l.b16 %v2595
      %v2636 = vunpack.c.l.b16 %v2596
      %v2637 = vunpack.c.l.b16 %v2597
      %v2638 = vunpack.c.l.b16 %v2598
      %v2639 = vunpack.c.l.b16 %v2599
      %v2640 = vunpack.c.l.b16 %v2600
      %v2641 = vunpack.c.l.b16 %v2601
      %v2642 = vunpack.c.l.b16 %v2602
      %v2643 = vunpack.c.l.b16 %v2603
      %v2644 = vunpack.c.l.b16 %v2604
      %v2645 = vunpack.c.l.b16 %v2605
      %v2646 = vunpack.c.l.b16 %v2606
      %v2647 = vunpack.c.l.b16 %v2607
      %v2648 = vunpack.c.l.b16 %v2608
      %v2649 = vunpack.c.l.b16 %v2609
      %v2650 = vpack.c.b16 %v2635, %v2634
      %v2651 = vpack.c.b16 %v2637, %v2636
      %v2652 = vpack.c.b16 %v2639, %v2638
      %v2653 = vpack.c.b16 %v2641, %v2640
      %v2654 = vpack.c.b16 %v2643, %v2642
      %v2655 = vpack.c.b16 %v2645, %v2644
      %v2656 = vpack.c.b16 %v2647, %v2646
      %v2657 = vpack.c.b16 %v2649, %v2648
      %2666 = vmatprep.subr.bf16.mxu0 0
      %2667 = vmatpush1.bf16.msra.mxu0 %v2650
      %2668 = vmatprep.subr.bf16.mxu0 0
      %2669 = vmatpush1.bf16.msra.mxu0 %v2651
      %2670 = vmatprep.subr.bf16.mxu0 0
      %2671 = vmatpush1.bf16.msra.mxu0 %v2652
      %2672 = vmatprep.subr.bf16.mxu0 0
      %2673 = vmatpush1.bf16.msra.mxu0 %v2653
      %2674 = vmatprep.subr.bf16.mxu0 0
      %2675 = vmatpush1.bf16.msra.mxu0 %v2654
      %2676 = vmatprep.subr.bf16.mxu0 0
      %2677 = vmatpush1.bf16.msra.mxu0 %v2655
      %2678 = vmatprep.subr.bf16.mxu0 0
      %2679 = vmatpush1.bf16.msra.mxu0 %v2656
      %2680 = vmatprep.subr.bf16.mxu0 0
      %2681 = vmatpush1.bf16.msra.mxu0 %v2657
      %2682 = vmatprep.subr.bf16.mxu0 0
      %2683 = vmatpush1.bf16.msra.mxu0 0
      %2684 = vmatprep.subr.bf16.mxu0 0
      %2685 = vmatpush1.bf16.msra.mxu0 0
      %2686 = vmatprep.subr.bf16.mxu0 0
      %2687 = vmatpush1.bf16.msra.mxu0 0
      %2688 = vmatprep.subr.bf16.mxu0 0
      %2689 = vmatpush1.bf16.msra.mxu0 0
      %2690 = vmatprep.subr.bf16.mxu0 0
      %2691 = vmatpush1.bf16.msra.mxu0 0
      %2692 = vmatprep.subr.bf16.mxu0 0
      %2693 = vmatpush1.bf16.msra.mxu0 0
      %2694 = vmatprep.subr.bf16.mxu0 0
      %2695 = vmatpush1.bf16.msra.mxu0 0
      %2696 = vmatprep.subr.bf16.mxu0 0
      %2697 = vmatpush1.bf16.msra.mxu0 0
      %2698 = vmatprep.mubr.bf16.mxu0 0
      %2699 = vmatmul.mubr.bf16.gmra.mrb[0].mxu0 %v2611
      %v2700 = vpop.f32.mrb[0].mxu0
      %v2701 = vadd.f32 %v2616, %v2700
      %v2702 = vpop.f32.mrb[0].mxu0
      %v2703 = vpop.f32.mrb[0].mxu0
      %v2704 = vadd.f32 %v2616, %v2703
      %v2705 = vpop.f32.mrb[0].mxu0
      %2706 = vdwg.mxu0
      %v2709 = vunpack.c.l.s4 1966171168
      %v2710 = vunpack.c.0.s8 %v2709
      %v2711 = vlaneseq
      %v2712 = vshrl.u32 %v2711, 7
      %v2713 = vsub.s32 %v2710, %v2712
      %v2714 = vrot.slane %v2589, %v2713
      %v2715 = vcombine.high %v2714, %v2714
      %v2717 = vunpack.c.l.s4 1966171168
      %v2718 = vunpack.c.0.s8 %v2717
      %v2719 = vlaneseq
      %v2720 = vshrl.u32 %v2719, 7
      %v2721 = vsub.s32 %v2718, %v2720
      %v2722 = vrot.slane %v2714, %v2721
      %v2724 = vunpack.c.l.s4 1966171168
      %v2725 = vunpack.c.0.s8 %v2724
      %v2726 = vlaneseq
      %v2727 = vshrl.u32 %v2726, 7
      %v2728 = vsub.s32 %v2725, %v2727
      %v2729 = vrot.slane %v2715, %v2728
      %v2730 = vlaneseq
      %v2731 = vshrl.u32 %v2730, 7
      %v2732 = vsub.s32 0, %v2731
      %v2733 = vrot.slane %v2722, %v2732
      %v2734 = vlaneseq
      %v2735 = vshrl.u32 %v2734, 7
      %v2736 = vsub.s32 0, %v2735
      %v2737 = vrot.slane %v2729, %v2736
      %v2740 = vadd.f32 %v2701, %v2733
      %v2741 = vadd.f32 %v2704, %v2737
      %v2742 = vld [vmem:[%s13] sm:$0xf]
      %v2743 = vld [vmem:[%s13 + $0x4] sm:$0xf]
      %v2744 = vld [vmem:[%s13 + $0x8] sm:$0xf]
      %v2745 = vld [vmem:[%s13 + $0xc] sm:$0xf]
      %v2746 = vld [vmem:[%s13 + $0x10] sm:$0xf]
      %v2747 = vld [vmem:[%s13 + $0x14] sm:$0xf]
      %v2748 = vld [vmem:[%s13 + $0x18] sm:$0xf]
      %v2749 = vld [vmem:[%s13 + $0x1c] sm:$0xf]
      %v2750 = vld [vmem:[%s13 + $0x20] sm:$0xf]
      %v2751 = vld [vmem:[%s13 + $0x24] sm:$0xf]
      %v2752 = vld [vmem:[%s13 + $0x28] sm:$0xf]
      %v2753 = vld [vmem:[%s13 + $0x2c] sm:$0xf]
      %v2754 = vld [vmem:[%s13 + $0x30] sm:$0xf]
      %v2755 = vld [vmem:[%s13 + $0x34] sm:$0xf]
      %v2756 = vld [vmem:[%s13 + $0x38] sm:$0xf]
      %v2757 = vld [vmem:[%s13 + $0x3c] sm:$0xf]
      %v2758 = vld [vmem:[%s14] sm:$0x1]
      %v2760 = vlaneseq
      %v2761 = vshrl.u32 %v2760, 7
      %v2762 = vsub.s32 0, %v2761
      %v2763 = vrot.slane %v2758, %v2762
      %v2781 = vunpack.c.l.b16 %v2742
      %v2782 = vunpack.c.l.b16 %v2743
      %v2783 = vunpack.c.l.b16 %v2744
      %v2784 = vunpack.c.l.b16 %v2745
      %v2785 = vunpack.c.l.b16 %v2746
      %v2786 = vunpack.c.l.b16 %v2747
      %v2787 = vunpack.c.l.b16 %v2748
      %v2788 = vunpack.c.l.b16 %v2749
      %v2789 = vunpack.c.l.b16 %v2750
      %v2790 = vunpack.c.l.b16 %v2751
      %v2791 = vunpack.c.l.b16 %v2752
      %v2792 = vunpack.c.l.b16 %v2753
      %v2793 = vunpack.c.l.b16 %v2754
      %v2794 = vunpack.c.l.b16 %v2755
      %v2795 = vunpack.c.l.b16 %v2756
      %v2796 = vunpack.c.l.b16 %v2757
      %v2797 = vpack.c.b16 %v2782, %v2781
      %v2798 = vpack.c.b16 %v2784, %v2783
      %v2799 = vpack.c.b16 %v2786, %v2785
      %v2800 = vpack.c.b16 %v2788, %v2787
      %v2801 = vpack.c.b16 %v2790, %v2789
      %v2802 = vpack.c.b16 %v2792, %v2791
      %v2803 = vpack.c.b16 %v2794, %v2793
      %v2804 = vpack.c.b16 %v2796, %v2795
      %2813 = vmatprep.subr.bf16.mxu0 0
      %2814 = vmatpush1.bf16.msra.mxu0 %v2797
      %2815 = vmatprep.subr.bf16.mxu0 0
      %2816 = vmatpush1.bf16.msra.mxu0 %v2798
      %2817 = vmatprep.subr.bf16.mxu0 0
      %2818 = vmatpush1.bf16.msra.mxu0 %v2799
      %2819 = vmatprep.subr.bf16.mxu0 0
      %2820 = vmatpush1.bf16.msra.mxu0 %v2800
      %2821 = vmatprep.subr.bf16.mxu0 0
      %2822 = vmatpush1.bf16.msra.mxu0 %v2801
      %2823 = vmatprep.subr.bf16.mxu0 0
      %2824 = vmatpush1.bf16.msra.mxu0 %v2802
      %2825 = vmatprep.subr.bf16.mxu0 0
      %2826 = vmatpush1.bf16.msra.mxu0 %v2803
      %2827 = vmatprep.subr.bf16.mxu0 0
      %2828 = vmatpush1.bf16.msra.mxu0 %v2804
      %2829 = vmatprep.subr.bf16.mxu0 0
      %2830 = vmatpush1.bf16.msra.mxu0 0
      %2831 = vmatprep.subr.bf16.mxu0 0
      %2832 = vmatpush1.bf16.msra.mxu0 0
      %2833 = vmatprep.subr.bf16.mxu0 0
      %2834 = vmatpush1.bf16.msra.mxu0 0
      %2835 = vmatprep.subr.bf16.mxu0 0
      %2836 = vmatpush1.bf16.msra.mxu0 0
      %2837 = vmatprep.subr.bf16.mxu0 0
      %2838 = vmatpush1.bf16.msra.mxu0 0
      %2839 = vmatprep.subr.bf16.mxu0 0
      %2840 = vmatpush1.bf16.msra.mxu0 0
      %2841 = vmatprep.subr.bf16.mxu0 0
      %2842 = vmatpush1.bf16.msra.mxu0 0
      %2843 = vmatprep.subr.bf16.mxu0 0
      %2844 = vmatpush1.bf16.msra.mxu0 0
      %2845 = vmatprep.mubr.bf16.mxu0 0
      %2846 = vmatmul.mubr.bf16.gmra.mrb[0].mxu0 %v828
      %v2847 = vpop.f32.mrb[0].mxu0
      %v2848 = vadd.f32 %v2763, %v2847
      %v2849 = vpop.f32.mrb[0].mxu0
      %v2850 = vpop.f32.mrb[0].mxu0
      %v2851 = vadd.f32 %v2763, %v2850
      %v2852 = vpop.f32.mrb[0].mxu0
      %2853 = vmatprep.mubr.bf16.mxu0 0
      %2854 = vmatmul.mubr.bf16.gmra.mrb[0].mxu0 %v829
      %v2855 = vpop.f32.mrb[0].mxu0
      %v2856 = vadd.f32 %v2763, %v2855
      %v2857 = vpop.f32.mrb[0].mxu0
      %v2858 = vpop.f32.mrb[0].mxu0
      %v2859 = vadd.f32 %v2763, %v2858
      %v2860 = vpop.f32.mrb[0].mxu0
      %2861 = vdwg.mxu0
      %v2862 = vpack.c.bf16 %v2740, %v2740
      %v2863 = vpack.c.bf16 %v2741, %v2741
      %v2864 = vpack.c.bf16 %v2851, %v2848
      %v2865 = vpack.c.bf16 %v2859, %v2856
      %2866 = vmatprep.subr.bf16.mxu0 0
      %2867 = vmatpush1.bf16.xpose.msra.mxu0 %v2864
      %2868 = vmatprep.subr.bf16.mxu0 0
      %2869 = vmatpush1.bf16.xpose.msra.mxu0 0
      %2870 = vmatprep.subr.bf16.mxu0 0
      %2871 = vmatpush1.bf16.xpose.msra.mxu0 0
      %2872 = vmatprep.subr.bf16.mxu0 0
      %2873 = vmatpush1.bf16.xpose.msra.mxu0 0
      %2874 = vmatprep.subr.bf16.mxu0 0
      %2875 = vmatpush1.bf16.xpose.msra.mxu0 0
      %2876 = vmatprep.subr.bf16.mxu0 0
      %2877 = vmatpush1.bf16.xpose.msra.mxu0 0
      %2878 = vmatprep.subr.bf16.mxu0 0
      %2879 = vmatpush1.bf16.xpose.msra.mxu0 0
      %2880 = vmatprep.subr.bf16.mxu0 0
      %2881 = vmatpush1.bf16.xpose.msra.mxu0 0
      %2882 = vmatprep.subr.bf16.mxu0 0
      %2883 = vmatpush1.bf16.xpose.msra.mxu0 0
      %2884 = vmatprep.subr.bf16.mxu0 0
      %2885 = vmatpush1.bf16.xpose.msra.mxu0 0
      %2886 = vmatprep.subr.bf16.mxu0 0
      %2887 = vmatpush1.bf16.xpose.msra.mxu0 0
      %2888 = vmatprep.subr.bf16.mxu0 0
      %2889 = vmatpush1.bf16.xpose.msra.mxu0 0
      %2890 = vmatprep.subr.bf16.mxu0 0
      %2891 = vmatpush1.bf16.xpose.msra.mxu0 0
      %2892 = vmatprep.subr.bf16.mxu0 0
      %2893 = vmatpush1.bf16.xpose.msra.mxu0 0
      %2894 = vmatprep.subr.bf16.mxu0 0
      %2895 = vmatpush1.bf16.xpose.msra.mxu0 0
      %2896 = vmatprep.subr.bf16.mxu0 0
      %2897 = vmatpush1.bf16.xpose.msra.mxu0 0
      %2898 = vmatprep.mubr.bf16.mxu0 0
      %2899 = vmatmul.mubr.bf16.gmra.mrb[0].mxu0 %v2862
      %v2900 = vpop.f32.mrb[0].mxu0
      %v2901 = vadd.f32 0.0, %v2900
      %v2902 = vpop.f32.mrb[0].mxu0
      %v2903 = vpop.f32.mrb[0].mxu0
      %v2904 = vpop.f32.mrb[0].mxu0
      %2905 = vdwg.mxu0
      %2906 = vmatprep.subr.bf16.mxu0 0
      %2907 = vmatpush1.bf16.xpose.msra.mxu0 %v2865
      %2908 = vmatprep.subr.bf16.mxu0 0
      %2909 = vmatpush1.bf16.xpose.msra.mxu0 0
      %2910 = vmatprep.subr.bf16.mxu0 0
      %2911 = vmatpush1.bf16.xpose.msra.mxu0 0
      %2912 = vmatprep.subr.bf16.mxu0 0
      %2913 = vmatpush1.bf16.xpose.msra.mxu0 0
      %2914 = vmatprep.subr.bf16.mxu0 0
      %2915 = vmatpush1.bf16.xpose.msra.mxu0 0
      %2916 = vmatprep.subr.bf16.mxu0 0
      %2917 = vmatpush1.bf16.xpose.msra.mxu0 0
      %2918 = vmatprep.subr.bf16.mxu0 0
      %2919 = vmatpush1.bf16.xpose.msra.mxu0 0
      %2920 = vmatprep.subr.bf16.mxu0 0
      %2921 = vmatpush1.bf16.xpose.msra.mxu0 0
      %2922 = vmatprep.subr.bf16.mxu0 0
      %2923 = vmatpush1.bf16.xpose.msra.mxu0 0
      %2924 = vmatprep.subr.bf16.mxu0 0
      %2925 = vmatpush1.bf16.xpose.msra.mxu0 0
      %2926 = vmatprep.subr.bf16.mxu0 0
      %2927 = vmatpush1.bf16.xpose.msra.mxu0 0
      %2928 = vmatprep.subr.bf16.mxu0 0
      %2929 = vmatpush1.bf16.xpose.msra.mxu0 0
      %2930 = vmatprep.subr.bf16.mxu0 0
      %2931 = vmatpush1.bf16.xpose.msra.mxu0 0
      %2932 = vmatprep.subr.bf16.mxu0 0
      %2933 = vmatpush1.bf16.xpose.msra.mxu0 0
      %2934 = vmatprep.subr.bf16.mxu0 0
      %2935 = vmatpush1.bf16.xpose.msra.mxu0 0
      %2936 = vmatprep.subr.bf16.mxu0 0
      %2937 = vmatpush1.bf16.xpose.msra.mxu0 0
      %2938 = vmatprep.mubr.bf16.mxu0 0
      %2939 = vmatmul.mubr.bf16.gmra.mrb[0].mxu0 %v2863
      %v2940 = vpop.f32.mrb[0].mxu0
      %v2941 = vadd.f32 0.0, %v2940
      %v2942 = vpop.f32.mrb[0].mxu0
      %v2943 = vpop.f32.mrb[0].mxu0
      %v2944 = vpop.f32.mrb[0].mxu0
      %2945 = vdwg.mxu0
      %v2946 = vld [vmem:[%s781] sm:$0x1]
      %v2947 = vld [vmem:[%s781 + $0x1] sm:$0x1]
      %vm2948 = vcmp.gt.f32.partialorder %v2946, 0.0
      %vm2949 = vcmp.gt.f32.partialorder %v2947, 0.0
      %v2950 = vsel %vm2948, 1, 0
      %v2951 = vsel %vm2949, 1, 0
      %v2952 = vlaneseq
      %v2953 = vshrl.u32 %v2952, 7
      %v2954 = vsub.s32 0, %v2953
      %v2955 = vrot.slane %v2950, %v2954
      %v2956 = vlaneseq
      %v2957 = vshrl.u32 %v2956, 7
      %v2958 = vsub.s32 0, %v2957
      %v2959 = vrot.slane %v2951, %v2958
      %vm2960 = vcmp.eq.s32.totalorder %v2955, 1
      %vm2961 = vcmp.eq.s32.totalorder %v2959, 1
      %v2962 = vsel %vm2960, %v2901, -1e+09
      %v2963 = vsel %vm2961, %v2941, -1e+09
      %vm2964 = vcmask 130048
      %v2965 = vsel %vm2964, %v2962, -inf
      %2966 = vmax.xlane.f32.xlu0 %v2965
      %v2967 = vpop.xlane.xlu0 %2966
      %v2968 = vsel %vm2964, %v2963, -inf
      %2969 = vmax.xlane.f32.xlu0 %v2968
      %v2970 = vpop.xlane.xlu0 %2969
      %v2971 = vsub.f32 %v2962, %v2967
      %v2972 = vsub.f32 %v2963, %v2970
      %v2973 = vmul.f32 %v2971, 1.442695
      %v2974 = vpow.pop %v2973
      %v2975 = vmul.f32 %v2972, 1.442695
      %v2976 = vpow.pop %v2975
      %v2977 = vsel %vm2964, %v2974, 0.0
      %2978 = vadd.xlane.f32.xlu0 %v2977
      %v2979 = vpop.xlane.xlu0 %2978
      %v2980 = vsel %vm2964, %v2976, 0.0
      %2981 = vadd.xlane.f32.xlu0 %v2980
      %v2982 = vpop.xlane.xlu0 %2981
      %v2983 = vrcp.pop %v2979
      %v2984 = vrcp.pop %v2982
      %v2985 = vmul.f32 %v2974, %v2983
      %v2986 = vmul.f32 %v2976, %v2984
      %v2987 = vpack.c.bf16 %v2985, %v2985
      %v2988 = vpack.c.bf16 %v2986, %v2986
      %v2990 = vsel %vm2964, %v2987, 0
      %2992 = vmatprep.subr.bf16.mxu0 0
      %2993 = vmatpush1.bf16.msra.mxu0 %v828
      %2994 = vmatprep.subr.bf16.mxu0 0
      %2995 = vmatpush1.bf16.msra.mxu0 0
      %2996 = vmatprep.subr.bf16.mxu0 0
      %2997 = vmatpush1.bf16.msra.mxu0 0
      %2998 = vmatprep.subr.bf16.mxu0 0
      %2999 = vmatpush1.bf16.msra.mxu0 0
      %3000 = vmatprep.subr.bf16.mxu0 0
      %3001 = vmatpush1.bf16.msra.mxu0 0
      %3002 = vmatprep.subr.bf16.mxu0 0
      %3003 = vmatpush1.bf16.msra.mxu0 0
      %3004 = vmatprep.subr.bf16.mxu0 0
      %3005 = vmatpush1.bf16.msra.mxu0 0
      %3006 = vmatprep.subr.bf16.mxu0 0
      %3007 = vmatpush1.bf16.msra.mxu0 0
      %3008 = vmatprep.subr.bf16.mxu0 0
      %3009 = vmatpush1.bf16.msra.mxu0 0
      %3010 = vmatprep.subr.bf16.mxu0 0
      %3011 = vmatpush1.bf16.msra.mxu0 0
      %3012 = vmatprep.subr.bf16.mxu0 0
      %3013 = vmatpush1.bf16.msra.mxu0 0
      %3014 = vmatprep.subr.bf16.mxu0 0
      %3015 = vmatpush1.bf16.msra.mxu0 0
      %3016 = vmatprep.subr.bf16.mxu0 0
      %3017 = vmatpush1.bf16.msra.mxu0 0
      %3018 = vmatprep.subr.bf16.mxu0 0
      %3019 = vmatpush1.bf16.msra.mxu0 0
      %3020 = vmatprep.subr.bf16.mxu0 0
      %3021 = vmatpush1.bf16.msra.mxu0 0
      %3022 = vmatprep.subr.bf16.mxu0 0
      %3023 = vmatpush1.bf16.msra.mxu0 0
      %3024 = vmatprep.mubr.bf16.mxu0 0
      %3025 = vmatmul.mubr.bf16.gmra.mrb[0].mxu0 %v2990
      %v3026 = vpop.f32.mrb[0].mxu0
      %v3027 = vadd.f32 0.0, %v3026
      %v3028 = vpop.f32.mrb[0].mxu0
      %v3029 = vpop.f32.mrb[0].mxu0
      %v3030 = vpop.f32.mrb[0].mxu0
      %3031 = vdwg.mxu0
      %v3033 = vsel %vm2964, %v2988, 0
      %3035 = vmatprep.subr.bf16.mxu0 0
      %3036 = vmatpush1.bf16.msra.mxu0 %v829
      %3037 = vmatprep.subr.bf16.mxu0 0
      %3038 = vmatpush1.bf16.msra.mxu0 0
      %3039 = vmatprep.subr.bf16.mxu0 0
      %3040 = vmatpush1.bf16.msra.mxu0 0
      %3041 = vmatprep.subr.bf16.mxu0 0
      %3042 = vmatpush1.bf16.msra.mxu0 0
      %3043 = vmatprep.subr.bf16.mxu0 0
      %3044 = vmatpush1.bf16.msra.mxu0 0
      %3045 = vmatprep.subr.bf16.mxu0 0
      %3046 = vmatpush1.bf16.msra.mxu0 0
      %3047 = vmatprep.subr.bf16.mxu0 0
      %3048 = vmatpush1.bf16.msra.mxu0 0
      %3049 = vmatprep.subr.bf16.mxu0 0
      %3050 = vmatpush1.bf16.msra.mxu0 0
      %3051 = vmatprep.subr.bf16.mxu0 0
      %3052 = vmatpush1.bf16.msra.mxu0 0
      %3053 = vmatprep.subr.bf16.mxu0 0
      %3054 = vmatpush1.bf16.msra.mxu0 0
      %3055 = vmatprep.subr.bf16.mxu0 0
      %3056 = vmatpush1.bf16.msra.mxu0 0
      %3057 = vmatprep.subr.bf16.mxu0 0
      %3058 = vmatpush1.bf16.msra.mxu0 0
      %3059 = vmatprep.subr.bf16.mxu0 0
      %3060 = vmatpush1.bf16.msra.mxu0 0
      %3061 = vmatprep.subr.bf16.mxu0 0
      %3062 = vmatpush1.bf16.msra.mxu0 0
      %3063 = vmatprep.subr.bf16.mxu0 0
      %3064 = vmatpush1.bf16.msra.mxu0 0
      %3065 = vmatprep.subr.bf16.mxu0 0
      %3066 = vmatpush1.bf16.msra.mxu0 0
      %3067 = vmatprep.mubr.bf16.mxu0 0
      %3068 = vmatmul.mubr.bf16.gmra.mrb[0].mxu0 %v3033
      %v3069 = vpop.f32.mrb[0].mxu0
      %v3070 = vadd.f32 0.0, %v3069
      %v3071 = vpop.f32.mrb[0].mxu0
      %v3072 = vpop.f32.mrb[0].mxu0
      %v3073 = vpop.f32.mrb[0].mxu0
      %3074 = vdwg.mxu0
      %v3077 = vlaneseq
      %v3078 = vshrl.u32 %v3077, 7
      %v3079 = vsub.s32 0, %v3078
      %v3080 = vrot.slane %v830, %v3079
      %v3081 = vlaneseq
      %v3082 = vshrl.u32 %v3081, 7
      %v3083 = vsub.s32 0, %v3082
      %v3084 = vrot.slane %v831, %v3083
      %v3087 = vld [vmem:[%s15] sm:$0xff]
      %v3088 = vld [vmem:[%s15 + $0x8] sm:$0xff]
      %v3089 = vld [vmem:[%s15 + $0x10] sm:$0xff]
      %v3090 = vld [vmem:[%s15 + $0x18] sm:$0xff]
      %v3091 = vld [vmem:[%s15 + $0x20] sm:$0xff]
      %v3092 = vld [vmem:[%s15 + $0x28] sm:$0xff]
      %v3093 = vld [vmem:[%s15 + $0x30] sm:$0xff]
      %v3094 = vld [vmem:[%s15 + $0x38] sm:$0xff]
      %v3095 = vld [vmem:[%s15 + $0x40] sm:$0xff]
      %v3096 = vld [vmem:[%s15 + $0x48] sm:$0xff]
      %v3097 = vld [vmem:[%s15 + $0x50] sm:$0xff]
      %v3098 = vld [vmem:[%s15 + $0x58] sm:$0xff]
      %v3099 = vld [vmem:[%s15 + $0x60] sm:$0xff]
      %v3100 = vld [vmem:[%s15 + $0x68] sm:$0xff]
      %v3101 = vld [vmem:[%s15 + $0x70] sm:$0xff]
      %v3102 = vld [vmem:[%s15 + $0x78] sm:$0xff]
      %v3103 = vld [vmem:[%s15 + $0x80] sm:$0xff]
      %v3104 = vld [vmem:[%s15 + $0x88] sm:$0xff]
      %v3105 = vld [vmem:[%s15 + $0x90] sm:$0xff]
      %v3106 = vld [vmem:[%s15 + $0x98] sm:$0xff]
      %v3107 = vld [vmem:[%s15 + $0xa0] sm:$0xff]
      %v3108 = vld [vmem:[%s15 + $0xa8] sm:$0xff]
      %v3109 = vld [vmem:[%s15 + $0xb0] sm:$0xff]
      %v3110 = vld [vmem:[%s15 + $0xb8] sm:$0xff]
      %v3111 = vld [vmem:[%s15 + $0xc0] sm:$0xff]
      %v3112 = vld [vmem:[%s15 + $0xc8] sm:$0xff]
      %v3113 = vld [vmem:[%s15 + $0xd0] sm:$0xff]
      %v3114 = vld [vmem:[%s15 + $0xd8] sm:$0xff]
      %v3115 = vld [vmem:[%s15 + $0xe0] sm:$0xff]
      %v3116 = vld [vmem:[%s15 + $0xe8] sm:$0xff]
      %v3117 = vld [vmem:[%s15 + $0xf0] sm:$0xff]
      %v3118 = vld [vmem:[%s15 + $0xf8] sm:$0xff]
      %v3119 = vld [vmem:[%s15 + $0x100] sm:$0xff]
      %v3120 = vld [vmem:[%s15 + $0x108] sm:$0xff]
      %v3121 = vld [vmem:[%s15 + $0x110] sm:$0xff]
      %v3122 = vld [vmem:[%s15 + $0x118] sm:$0xff]
      %v3123 = vld [vmem:[%s15 + $0x120] sm:$0xff]
      %v3124 = vld [vmem:[%s15 + $0x128] sm:$0xff]
      %v3125 = vld [vmem:[%s15 + $0x130] sm:$0xff]
      %v3126 = vld [vmem:[%s15 + $0x138] sm:$0xff]
      %v3127 = vld [vmem:[%s15 + $0x140] sm:$0xff]
      %v3128 = vld [vmem:[%s15 + $0x148] sm:$0xff]
      %v3129 = vld [vmem:[%s15 + $0x150] sm:$0xff]
      %v3130 = vld [vmem:[%s15 + $0x158] sm:$0xff]
      %v3131 = vld [vmem:[%s15 + $0x160] sm:$0xff]
      %v3132 = vld [vmem:[%s15 + $0x168] sm:$0xff]
      %v3133 = vld [vmem:[%s15 + $0x170] sm:$0xff]
      %v3134 = vld [vmem:[%s15 + $0x178] sm:$0xff]
      %v3135 = vld [vmem:[%s16] sm:$0x3]
      %v3136 = vpack.c.bf16 %v3070, %v3027
      %v3137 = vpack.c.bf16 %v3084, %v3080
      %v3139 = vlaneseq
      %v3140 = vshrl.u32 %v3139, 7
      %v3141 = vsub.s32 0, %v3140
      %v3142 = vrot.slane %v3135, %v3141
      %v3143 = vlaneseq
      %v3144 = vshrl.u32 %v3143, 7
      %v3145 = vsub.s32 1, %v3144
      %v3146 = vrot.slane %v3135, %v3145
      %v3197 = vunpack.c.l.b16 %v3087
      %v3198 = vunpack.c.h.b16 %v3087
      %v3199 = vunpack.c.l.b16 %v3088
      %v3200 = vunpack.c.h.b16 %v3088
      %v3201 = vunpack.c.l.b16 %v3089
      %v3202 = vunpack.c.h.b16 %v3089
      %v3203 = vunpack.c.l.b16 %v3090
      %v3204 = vunpack.c.h.b16 %v3090
      %v3205 = vunpack.c.l.b16 %v3091
      %v3206 = vunpack.c.h.b16 %v3091
      %v3207 = vunpack.c.l.b16 %v3092
      %v3208 = vunpack.c.h.b16 %v3092
      %v3209 = vunpack.c.l.b16 %v3093
      %v3210 = vunpack.c.h.b16 %v3093
      %v3211 = vunpack.c.l.b16 %v3094
      %v3212 = vunpack.c.h.b16 %v3094
      %v3213 = vunpack.c.l.b16 %v3095
      %v3214 = vunpack.c.h.b16 %v3095
      %v3215 = vunpack.c.l.b16 %v3096
      %v3216 = vunpack.c.h.b16 %v3096
      %v3217 = vunpack.c.l.b16 %v3097
      %v3218 = vunpack.c.h.b16 %v3097
      %v3219 = vunpack.c.l.b16 %v3098
      %v3220 = vunpack.c.h.b16 %v3098
      %v3221 = vunpack.c.l.b16 %v3099
      %v3222 = vunpack.c.h.b16 %v3099
      %v3223 = vunpack.c.l.b16 %v3100
      %v3224 = vunpack.c.h.b16 %v3100
      %v3225 = vunpack.c.l.b16 %v3101
      %v3226 = vunpack.c.h.b16 %v3101
      %v3227 = vunpack.c.l.b16 %v3102
      %v3228 = vunpack.c.h.b16 %v3102
      %v3229 = vunpack.c.l.b16 %v3103
      %v3230 = vunpack.c.h.b16 %v3103
      %v3231 = vunpack.c.l.b16 %v3104
      %v3232 = vunpack.c.h.b16 %v3104
      %v3233 = vunpack.c.l.b16 %v3105
      %v3234 = vunpack.c.h.b16 %v3105
      %v3235 = vunpack.c.l.b16 %v3106
      %v3236 = vunpack.c.h.b16 %v3106
      %v3237 = vunpack.c.l.b16 %v3107
      %v3238 = vunpack.c.h.b16 %v3107
      %v3239 = vunpack.c.l.b16 %v3108
      %v3240 = vunpack.c.h.b16 %v3108
      %v3241 = vunpack.c.l.b16 %v3109
      %v3242 = vunpack.c.h.b16 %v3109
      %v3243 = vunpack.c.l.b16 %v3110
      %v3244 = vunpack.c.h.b16 %v3110
      %v3245 = vunpack.c.l.b16 %v3111
      %v3246 = vunpack.c.h.b16 %v3111
      %v3247 = vunpack.c.l.b16 %v3112
      %v3248 = vunpack.c.h.b16 %v3112
      %v3249 = vunpack.c.l.b16 %v3113
      %v3250 = vunpack.c.h.b16 %v3113
      %v3251 = vunpack.c.l.b16 %v3114
      %v3252 = vunpack.c.h.b16 %v3114
      %v3253 = vunpack.c.l.b16 %v3115
      %v3254 = vunpack.c.h.b16 %v3115
      %v3255 = vunpack.c.l.b16 %v3116
      %v3256 = vunpack.c.h.b16 %v3116
      %v3257 = vunpack.c.l.b16 %v3117
      %v3258 = vunpack.c.h.b16 %v3117
      %v3259 = vunpack.c.l.b16 %v3118
      %v3260 = vunpack.c.h.b16 %v3118
      %v3261 = vunpack.c.l.b16 %v3119
      %v3262 = vunpack.c.h.b16 %v3119
      %v3263 = vunpack.c.l.b16 %v3120
      %v3264 = vunpack.c.h.b16 %v3120
      %v3265 = vunpack.c.l.b16 %v3121
      %v3266 = vunpack.c.h.b16 %v3121
      %v3267 = vunpack.c.l.b16 %v3122
      %v3268 = vunpack.c.h.b16 %v3122
      %v3269 = vunpack.c.l.b16 %v3123
      %v3270 = vunpack.c.h.b16 %v3123
      %v3271 = vunpack.c.l.b16 %v3124
      %v3272 = vunpack.c.h.b16 %v3124
      %v3273 = vunpack.c.l.b16 %v3125
      %v3274 = vunpack.c.h.b16 %v3125
      %v3275 = vunpack.c.l.b16 %v3126
      %v3276 = vunpack.c.h.b16 %v3126
      %v3277 = vunpack.c.l.b16 %v3127
      %v3278 = vunpack.c.h.b16 %v3127
      %v3279 = vunpack.c.l.b16 %v3128
      %v3280 = vunpack.c.h.b16 %v3128
      %v3281 = vunpack.c.l.b16 %v3129
      %v3282 = vunpack.c.h.b16 %v3129
      %v3283 = vunpack.c.l.b16 %v3130
      %v3284 = vunpack.c.h.b16 %v3130
      %v3285 = vunpack.c.l.b16 %v3131
      %v3286 = vunpack.c.h.b16 %v3131
      %v3287 = vunpack.c.l.b16 %v3132
      %v3288 = vunpack.c.h.b16 %v3132
      %v3289 = vunpack.c.l.b16 %v3133
      %v3290 = vunpack.c.h.b16 %v3133
      %v3291 = vunpack.c.l.b16 %v3134
      %v3292 = vunpack.c.h.b16 %v3134
      %v3293 = vpack.c.b16 %v3199, %v3197
      %v3294 = vpack.c.b16 %v3200, %v3198
      %v3295 = vpack.c.b16 %v3203, %v3201
      %v3296 = vpack.c.b16 %v3204, %v3202
      %v3297 = vpack.c.b16 %v3207, %v3205
      %v3298 = vpack.c.b16 %v3208, %v3206
      %v3299 = vpack.c.b16 %v3211, %v3209
      %v3300 = vpack.c.b16 %v3212, %v3210
      %v3301 = vpack.c.b16 %v3215, %v3213
      %v3302 = vpack.c.b16 %v3216, %v3214
      %v3303 = vpack.c.b16 %v3219, %v3217
      %v3304 = vpack.c.b16 %v3220, %v3218
      %v3305 = vpack.c.b16 %v3223, %v3221
      %v3306 = vpack.c.b16 %v3224, %v3222
      %v3307 = vpack.c.b16 %v3227, %v3225
      %v3308 = vpack.c.b16 %v3228, %v3226
      %v3309 = vpack.c.b16 %v3231, %v3229
      %v3310 = vpack.c.b16 %v3232, %v3230
      %v3311 = vpack.c.b16 %v3235, %v3233
      %v3312 = vpack.c.b16 %v3236, %v3234
      %v3313 = vpack.c.b16 %v3239, %v3237
      %v3314 = vpack.c.b16 %v3240, %v3238
      %v3315 = vpack.c.b16 %v3243, %v3241
      %v3316 = vpack.c.b16 %v3244, %v3242
      %v3317 = vpack.c.b16 %v3247, %v3245
      %v3318 = vpack.c.b16 %v3248, %v3246
      %v3319 = vpack.c.b16 %v3251, %v3249
      %v3320 = vpack.c.b16 %v3252, %v3250
      %v3321 = vpack.c.b16 %v3255, %v3253
      %v3322 = vpack.c.b16 %v3256, %v3254
      %v3323 = vpack.c.b16 %v3259, %v3257
      %v3324 = vpack.c.b16 %v3260, %v3258
      %v3325 = vpack.c.b16 %v3263, %v3261
      %v3326 = vpack.c.b16 %v3264, %v3262
      %v3327 = vpack.c.b16 %v3267, %v3265
      %v3328 = vpack.c.b16 %v3268, %v3266
      %v3329 = vpack.c.b16 %v3271, %v3269
      %v3330 = vpack.c.b16 %v3272, %v3270
      %v3331 = vpack.c.b16 %v3275, %v3273
      %v3332 = vpack.c.b16 %v3276, %v3274
      %v3333 = vpack.c.b16 %v3279, %v3277
      %v3334 = vpack.c.b16 %v3280, %v3278
      %v3335 = vpack.c.b16 %v3283, %v3281
      %v3336 = vpack.c.b16 %v3284, %v3282
      %v3337 = vpack.c.b16 %v3287, %v3285
      %v3338 = vpack.c.b16 %v3288, %v3286
      %v3339 = vpack.c.b16 %v3291, %v3289
      %v3340 = vpack.c.b16 %v3292, %v3290
      %3389 = vmatprep.subr.bf16.mxu0 %v3294
      %3390 = vmatpush1.bf16.msra.mxu0 %v3293
      %3391 = vmatprep.subr.bf16.mxu0 %v3296
      %3392 = vmatpush1.bf16.msra.mxu0 %v3295
      %3393 = vmatprep.subr.bf16.mxu0 %v3298
      %3394 = vmatpush1.bf16.msra.mxu0 %v3297
      %3395 = vmatprep.subr.bf16.mxu0 %v3300
      %3396 = vmatpush1.bf16.msra.mxu0 %v3299
      %3397 = vmatprep.subr.bf16.mxu0 %v3302
      %3398 = vmatpush1.bf16.msra.mxu0 %v3301
      %3399 = vmatprep.subr.bf16.mxu0 %v3304
      %3400 = vmatpush1.bf16.msra.mxu0 %v3303
      %3401 = vmatprep.subr.bf16.mxu0 %v3306
      %3402 = vmatpush1.bf16.msra.mxu0 %v3305
      %3403 = vmatprep.subr.bf16.mxu0 %v3308
      %3404 = vmatpush1.bf16.msra.mxu0 %v3307
      %3405 = vmatprep.subr.bf16.mxu0 %v3310
      %3406 = vmatpush1.bf16.msra.mxu0 %v3309
      %3407 = vmatprep.subr.bf16.mxu0 %v3312
      %3408 = vmatpush1.bf16.msra.mxu0 %v3311
      %3409 = vmatprep.subr.bf16.mxu0 %v3314
      %3410 = vmatpush1.bf16.msra.mxu0 %v3313
      %3411 = vmatprep.subr.bf16.mxu0 %v3316
      %3412 = vmatpush1.bf16.msra.mxu0 %v3315
      %3413 = vmatprep.subr.bf16.mxu0 %v3318
      %3414 = vmatpush1.bf16.msra.mxu0 %v3317
      %3415 = vmatprep.subr.bf16.mxu0 %v3320
      %3416 = vmatpush1.bf16.msra.mxu0 %v3319
      %3417 = vmatprep.subr.bf16.mxu0 %v3322
      %3418 = vmatpush1.bf16.msra.mxu0 %v3321
      %3419 = vmatprep.subr.bf16.mxu0 %v3324
      %3420 = vmatpush1.bf16.msra.mxu0 %v3323
      %3421 = vmatprep.mubr.bf16.mxu0 %v3136
      %3422 = vmatmul.mubr.bf16.gmra.mrb[0].mxu0 %v2611
      %v3423 = vpop.f32.mrb[0].mxu0
      %v3424 = vadd.f32 %v3142, %v3423
      %v3425 = vpop.f32.mrb[0].mxu0
      %v3426 = vadd.f32 %v3146, %v3425
      %v3427 = vpop.f32.mrb[0].mxu0
      %v3428 = vadd.f32 %v3142, %v3427
      %v3429 = vpop.f32.mrb[0].mxu0
      %v3430 = vadd.f32 %v3146, %v3429
      %3431 = vdwg.mxu0
      %3432 = vmatprep.subr.bf16.mxu0 %v3326
      %3433 = vmatpush1.bf16.msra.mxu0 %v3325
      %3434 = vmatprep.subr.bf16.mxu0 %v3328
      %3435 = vmatpush1.bf16.msra.mxu0 %v3327
      %3436 = vmatprep.subr.bf16.mxu0 %v3330
      %3437 = vmatpush1.bf16.msra.mxu0 %v3329
      %3438 = vmatprep.subr.bf16.mxu0 %v3332
      %3439 = vmatpush1.bf16.msra.mxu0 %v3331
      %3440 = vmatprep.subr.bf16.mxu0 %v3334
      %3441 = vmatpush1.bf16.msra.mxu0 %v3333
      %3442 = vmatprep.subr.bf16.mxu0 %v3336
      %3443 = vmatpush1.bf16.msra.mxu0 %v3335
      %3444 = vmatprep.subr.bf16.mxu0 %v3338
      %3445 = vmatpush1.bf16.msra.mxu0 %v3337
      %3446 = vmatprep.subr.bf16.mxu0 %v3340
      %3447 = vmatpush1.bf16.msra.mxu0 %v3339
      %3448 = vmatprep.subr.bf16.mxu0 0
      %3449 = vmatpush1.bf16.msra.mxu0 0
      %3450 = vmatprep.subr.bf16.mxu0 0
      %3451 = vmatpush1.bf16.msra.mxu0 0
      %3452 = vmatprep.subr.bf16.mxu0 0
      %3453 = vmatpush1.bf16.msra.mxu0 0
      %3454 = vmatprep.subr.bf16.mxu0 0
      %3455 = vmatpush1.bf16.msra.mxu0 0
      %3456 = vmatprep.subr.bf16.mxu0 0
      %3457 = vmatpush1.bf16.msra.mxu0 0
      %3458 = vmatprep.subr.bf16.mxu0 0
      %3459 = vmatpush1.bf16.msra.mxu0 0
      %3460 = vmatprep.subr.bf16.mxu0 0
      %3461 = vmatpush1.bf16.msra.mxu0 0
      %3462 = vmatprep.subr.bf16.mxu0 0
      %3463 = vmatpush1.bf16.msra.mxu0 0
      %3464 = vmatprep.mubr.bf16.mxu0 0
      %3465 = vmatmul.mubr.bf16.gmra.mrb[0].mxu0 %v3137
      %v3466 = vpop.f32.mrb[0].mxu0
      %v3467 = vadd.f32 %v3424, %v3466
      %v3468 = vpop.f32.mrb[0].mxu0
      %v3469 = vadd.f32 %v3426, %v3468
      %v3470 = vpop.f32.mrb[0].mxu0
      %v3471 = vadd.f32 %v3428, %v3470
      %v3472 = vpop.f32.mrb[0].mxu0
      %v3473 = vadd.f32 %v3430, %v3472
      %3474 = vdwg.mxu0
      %v3475 = vld [vmem:[%s17] sm:$0xf]
      %v3476 = vld [vmem:[%s17 + $0x4] sm:$0xf]
      %v3477 = vld [vmem:[%s17 + $0x8] sm:$0xf]
      %v3478 = vld [vmem:[%s17 + $0xc] sm:$0xf]
      %v3479 = vld [vmem:[%s17 + $0x10] sm:$0xf]
      %v3480 = vld [vmem:[%s17 + $0x14] sm:$0xf]
      %v3481 = vld [vmem:[%s17 + $0x18] sm:$0xf]
      %v3482 = vld [vmem:[%s17 + $0x1c] sm:$0xf]
      %v3483 = vld [vmem:[%s17 + $0x20] sm:$0xf]
      %v3484 = vld [vmem:[%s17 + $0x24] sm:$0xf]
      %v3485 = vld [vmem:[%s17 + $0x28] sm:$0xf]
      %v3486 = vld [vmem:[%s17 + $0x2c] sm:$0xf]
      %v3487 = vld [vmem:[%s17 + $0x30] sm:$0xf]
      %v3488 = vld [vmem:[%s17 + $0x34] sm:$0xf]
      %v3489 = vld [vmem:[%s17 + $0x38] sm:$0xf]
      %v3490 = vld [vmem:[%s17 + $0x3c] sm:$0xf]
      %v3491 = vld [vmem:[%s17 + $0x40] sm:$0xf]
      %v3492 = vld [vmem:[%s17 + $0x44] sm:$0xf]
      %v3493 = vld [vmem:[%s17 + $0x48] sm:$0xf]
      %v3494 = vld [vmem:[%s17 + $0x4c] sm:$0xf]
      %v3495 = vld [vmem:[%s17 + $0x50] sm:$0xf]
      %v3496 = vld [vmem:[%s17 + $0x54] sm:$0xf]
      %v3497 = vld [vmem:[%s17 + $0x58] sm:$0xf]
      %v3498 = vld [vmem:[%s17 + $0x5c] sm:$0xf]
      %v3499 = vld [vmem:[%s17 + $0x60] sm:$0xf]
      %v3500 = vld [vmem:[%s17 + $0x64] sm:$0xf]
      %v3501 = vld [vmem:[%s17 + $0x68] sm:$0xf]
      %v3502 = vld [vmem:[%s17 + $0x6c] sm:$0xf]
      %v3503 = vld [vmem:[%s17 + $0x70] sm:$0xf]
      %v3504 = vld [vmem:[%s17 + $0x74] sm:$0xf]
      %v3505 = vld [vmem:[%s17 + $0x78] sm:$0xf]
      %v3506 = vld [vmem:[%s17 + $0x7c] sm:$0xf]
      %v3507 = vld [vmem:[%s17 + $0x80] sm:$0xf]
      %v3508 = vld [vmem:[%s17 + $0x84] sm:$0xf]
      %v3509 = vld [vmem:[%s17 + $0x88] sm:$0xf]
      %v3510 = vld [vmem:[%s17 + $0x8c] sm:$0xf]
      %v3511 = vld [vmem:[%s17 + $0x90] sm:$0xf]
      %v3512 = vld [vmem:[%s17 + $0x94] sm:$0xf]
      %v3513 = vld [vmem:[%s17 + $0x98] sm:$0xf]
      %v3514 = vld [vmem:[%s17 + $0x9c] sm:$0xf]
      %v3515 = vld [vmem:[%s17 + $0xa0] sm:$0xf]
      %v3516 = vld [vmem:[%s17 + $0xa4] sm:$0xf]
      %v3517 = vld [vmem:[%s17 + $0xa8] sm:$0xf]
      %v3518 = vld [vmem:[%s17 + $0xac] sm:$0xf]
      %v3519 = vld [vmem:[%s17 + $0xb0] sm:$0xf]
      %v3520 = vld [vmem:[%s17 + $0xb4] sm:$0xf]
      %v3521 = vld [vmem:[%s17 + $0xb8] sm:$0xf]
      %v3522 = vld [vmem:[%s17 + $0xbc] sm:$0xf]
      %v3523 = vld [vmem:[#allocation3] sm:$0x1]
      %v3525 = vlaneseq
      %v3526 = vshrl.u32 %v3525, 7
      %v3527 = vsub.s32 0, %v3526
      %v3528 = vrot.slane %v3523, %v3527
      %v3578 = vunpack.c.l.b16 %v3475
      %v3579 = vunpack.c.l.b16 %v3476
      %v3580 = vunpack.c.l.b16 %v3477
      %v3581 = vunpack.c.l.b16 %v3478
      %v3582 = vunpack.c.l.b16 %v3479
      %v3583 = vunpack.c.l.b16 %v3480
      %v3584 = vunpack.c.l.b16 %v3481
      %v3585 = vunpack.c.l.b16 %v3482
      %v3586 = vunpack.c.l.b16 %v3483
      %v3587 = vunpack.c.l.b16 %v3484
      %v3588 = vunpack.c.l.b16 %v3485
      %v3589 = vunpack.c.l.b16 %v3486
      %v3590 = vunpack.c.l.b16 %v3487
      %v3591 = vunpack.c.l.b16 %v3488
      %v3592 = vunpack.c.l.b16 %v3489
      %v3593 = vunpack.c.l.b16 %v3490
      %v3594 = vunpack.c.l.b16 %v3491
      %v3595 = vunpack.c.l.b16 %v3492
      %v3596 = vunpack.c.l.b16 %v3493
      %v3597 = vunpack.c.l.b16 %v3494
      %v3598 = vunpack.c.l.b16 %v3495
      %v3599 = vunpack.c.l.b16 %v3496
      %v3600 = vunpack.c.l.b16 %v3497
      %v3601 = vunpack.c.l.b16 %v3498
      %v3602 = vunpack.c.l.b16 %v3499
      %v3603 = vunpack.c.l.b16 %v3500
      %v3604 = vunpack.c.l.b16 %v3501
      %v3605 = vunpack.c.l.b16 %v3502
      %v3606 = vunpack.c.l.b16 %v3503
      %v3607 = vunpack.c.l.b16 %v3504
      %v3608 = vunpack.c.l.b16 %v3505
      %v3609 = vunpack.c.l.b16 %v3506
      %v3610 = vunpack.c.l.b16 %v3507
      %v3611 = vunpack.c.l.b16 %v3508
      %v3612 = vunpack.c.l.b16 %v3509
      %v3613 = vunpack.c.l.b16 %v3510
      %v3614 = vunpack.c.l.b16 %v3511
      %v3615 = vunpack.c.l.b16 %v3512
      %v3616 = vunpack.c.l.b16 %v3513
      %v3617 = vunpack.c.l.b16 %v3514
      %v3618 = vunpack.c.l.b16 %v3515
      %v3619 = vunpack.c.l.b16 %v3516
      %v3620 = vunpack.c.l.b16 %v3517
      %v3621 = vunpack.c.l.b16 %v3518
      %v3622 = vunpack.c.l.b16 %v3519
      %v3623 = vunpack.c.l.b16 %v3520
      %v3624 = vunpack.c.l.b16 %v3521
      %v3625 = vunpack.c.l.b16 %v3522
      %v3626 = vpack.c.b16 %v3579, %v3578
      %v3627 = vpack.c.b16 %v3581, %v3580
      %v3628 = vpack.c.b16 %v3583, %v3582
      %v3629 = vpack.c.b16 %v3585, %v3584
      %v3630 = vpack.c.b16 %v3587, %v3586
      %v3631 = vpack.c.b16 %v3589, %v3588
      %v3632 = vpack.c.b16 %v3591, %v3590
      %v3633 = vpack.c.b16 %v3593, %v3592
      %v3634 = vpack.c.b16 %v3595, %v3594
      %v3635 = vpack.c.b16 %v3597, %v3596
      %v3636 = vpack.c.b16 %v3599, %v3598
      %v3637 = vpack.c.b16 %v3601, %v3600
      %v3638 = vpack.c.b16 %v3603, %v3602
      %v3639 = vpack.c.b16 %v3605, %v3604
      %v3640 = vpack.c.b16 %v3607, %v3606
      %v3641 = vpack.c.b16 %v3609, %v3608
      %v3642 = vpack.c.b16 %v3611, %v3610
      %v3643 = vpack.c.b16 %v3613, %v3612
      %v3644 = vpack.c.b16 %v3615, %v3614
      %v3645 = vpack.c.b16 %v3617, %v3616
      %v3646 = vpack.c.b16 %v3619, %v3618
      %v3647 = vpack.c.b16 %v3621, %v3620
      %v3648 = vpack.c.b16 %v3623, %v3622
      %v3649 = vpack.c.b16 %v3625, %v3624
      %3674 = vmatprep.subr.bf16.mxu0 0
      %3675 = vmatpush1.bf16.msra.mxu0 %v3626
      %3676 = vmatprep.subr.bf16.mxu0 0
      %3677 = vmatpush1.bf16.msra.mxu0 %v3627
      %3678 = vmatprep.subr.bf16.mxu0 0
      %3679 = vmatpush1.bf16.msra.mxu0 %v3628
      %3680 = vmatprep.subr.bf16.mxu0 0
      %3681 = vmatpush1.bf16.msra.mxu0 %v3629
      %3682 = vmatprep.subr.bf16.mxu0 0
      %3683 = vmatpush1.bf16.msra.mxu0 %v3630
      %3684 = vmatprep.subr.bf16.mxu0 0
      %3685 = vmatpush1.bf16.msra.mxu0 %v3631
      %3686 = vmatprep.subr.bf16.mxu0 0
      %3687 = vmatpush1.bf16.msra.mxu0 %v3632
      %3688 = vmatprep.subr.bf16.mxu0 0
      %3689 = vmatpush1.bf16.msra.mxu0 %v3633
      %3690 = vmatprep.subr.bf16.mxu0 0
      %3691 = vmatpush1.bf16.msra.mxu0 %v3634
      %3692 = vmatprep.subr.bf16.mxu0 0
      %3693 = vmatpush1.bf16.msra.mxu0 %v3635
      %3694 = vmatprep.subr.bf16.mxu0 0
      %3695 = vmatpush1.bf16.msra.mxu0 %v3636
      %3696 = vmatprep.subr.bf16.mxu0 0
      %3697 = vmatpush1.bf16.msra.mxu0 %v3637
      %3698 = vmatprep.subr.bf16.mxu0 0
      %3699 = vmatpush1.bf16.msra.mxu0 %v3638
      %3700 = vmatprep.subr.bf16.mxu0 0
      %3701 = vmatpush1.bf16.msra.mxu0 %v3639
      %3702 = vmatprep.subr.bf16.mxu0 0
      %3703 = vmatpush1.bf16.msra.mxu0 %v3640
      %3704 = vmatprep.subr.bf16.mxu0 0
      %3705 = vmatpush1.bf16.msra.mxu0 %v3641
      %3706 = vmatprep.mubr.bf16.mxu0 %v3136
      %3707 = vmatmul.mubr.bf16.gmra.mrb[0].mxu0 %v2611
      %v3708 = vpop.f32.mrb[0].mxu0
      %v3709 = vadd.f32 %v3528, %v3708
      %v3710 = vpop.f32.mrb[0].mxu0
      %v3711 = vpop.f32.mrb[0].mxu0
      %v3712 = vadd.f32 %v3528, %v3711
      %v3713 = vpop.f32.mrb[0].mxu0
      %3714 = vdwg.mxu0
      %3715 = vmatprep.subr.bf16.mxu0 0
      %3716 = vmatpush1.bf16.msra.mxu0 %v3642
      %3717 = vmatprep.subr.bf16.mxu0 0
      %3718 = vmatpush1.bf16.msra.mxu0 %v3643
      %3719 = vmatprep.subr.bf16.mxu0 0
      %3720 = vmatpush1.bf16.msra.mxu0 %v3644
      %3721 = vmatprep.subr.bf16.mxu0 0
      %3722 = vmatpush1.bf16.msra.mxu0 %v3645
      %3723 = vmatprep.subr.bf16.mxu0 0
      %3724 = vmatpush1.bf16.msra.mxu0 %v3646
      %3725 = vmatprep.subr.bf16.mxu0 0
      %3726 = vmatpush1.bf16.msra.mxu0 %v3647
      %3727 = vmatprep.subr.bf16.mxu0 0
      %3728 = vmatpush1.bf16.msra.mxu0 %v3648
      %3729 = vmatprep.subr.bf16.mxu0 0
      %3730 = vmatpush1.bf16.msra.mxu0 %v3649
      %3731 = vmatprep.subr.bf16.mxu0 0
      %3732 = vmatpush1.bf16.msra.mxu0 0
      %3733 = vmatprep.subr.bf16.mxu0 0
      %3734 = vmatpush1.bf16.msra.mxu0 0
      %3735 = vmatprep.subr.bf16.mxu0 0
      %3736 = vmatpush1.bf16.msra.mxu0 0
      %3737 = vmatprep.subr.bf16.mxu0 0
      %3738 = vmatpush1.bf16.msra.mxu0 0
      %3739 = vmatprep.subr.bf16.mxu0 0
      %3740 = vmatpush1.bf16.msra.mxu0 0
      %3741 = vmatprep.subr.bf16.mxu0 0
      %3742 = vmatpush1.bf16.msra.mxu0 0
      %3743 = vmatprep.subr.bf16.mxu0 0
      %3744 = vmatpush1.bf16.msra.mxu0 0
      %3745 = vmatprep.subr.bf16.mxu0 0
      %3746 = vmatpush1.bf16.msra.mxu0 0
      %3747 = vmatprep.mubr.bf16.mxu0 0
      %3748 = vmatmul.mubr.bf16.gmra.mrb[0].mxu0 %v865
      %v3749 = vpop.f32.mrb[0].mxu0
      %v3750 = vadd.f32 %v3709, %v3749
      %v3751 = vpop.f32.mrb[0].mxu0
      %v3752 = vpop.f32.mrb[0].mxu0
      %v3753 = vadd.f32 %v3712, %v3752
      %v3754 = vpop.f32.mrb[0].mxu0
      %3755 = vdwg.mxu0
      %v3756 = vsub.f32 0.0, %v3750
      %v3757 = vsub.f32 0.0, %v3753
      %v3758 = vmul.f32 %v3756, 1.442695
      %v3759 = vpow.pop %v3758
      %v3760 = vmul.f32 %v3757, 1.442695
      %v3761 = vpow.pop %v3760
      %v3762 = vadd.f32 %v3759, 1.0
      %v3763 = vadd.f32 %v3761, 1.0
      %v3764 = vrcp.pop %v3762
      %v3765 = vrcp.pop %v3763
      %v3766 = vmax.f32 %v3467, %v3469
      %3767 = vmax.xlane.f32.xlu0 %v3766
      %v3768 = vpop.xlane.xlu0 %3767
      %v3769 = vmax.f32 %v3471, %v3473
      %3770 = vmax.xlane.f32.xlu0 %v3769
      %v3771 = vpop.xlane.xlu0 %3770
      %v3772 = vsub.f32 %v3467, %v3768
      %v3773 = vsub.f32 %v3469, %v3768
      %v3774 = vsub.f32 %v3471, %v3771
      %v3775 = vsub.f32 %v3473, %v3771
      %v3776 = vmul.f32 %v3772, 1.442695
      %v3777 = vpow.pop %v3776
      %v3778 = vmul.f32 %v3773, 1.442695
      %v3779 = vpow.pop %v3778
      %v3780 = vmul.f32 %v3774, 1.442695
      %v3781 = vpow.pop %v3780
      %v3782 = vmul.f32 %v3775, 1.442695
      %v3783 = vpow.pop %v3782
      %v3784 = vadd.f32 %v3777, %v3779
      %3785 = vadd.xlane.f32.xlu0 %v3784
      %v3786 = vpop.xlane.xlu0 %3785
      %v3787 = vadd.f32 %v3781, %v3783
      %3788 = vadd.xlane.f32.xlu0 %v3787
      %v3789 = vpop.xlane.xlu0 %3788
      %v3790 = vrcp.pop %v3786
      %v3791 = vrcp.pop %v3789
      %v3792 = vmul.f32 %v3777, %v3790
      %v3793 = vmul.f32 %v3779, %v3790
      %v3794 = vmul.f32 %v3781, %v3791
      %v3795 = vmul.f32 %v3783, %v3791
      %v3796 = vld [vmem:[%s788] sm:$0xff]
      %v3797 = vld [vmem:[%s788 + $0x8] sm:$0xff]
      %v3798 = vld [vmem:[%s788 + $0x10] sm:$0xff]
      %v3799 = vld [vmem:[%s788 + $0x18] sm:$0xff]
      %v3800 = vlaneseq
      %v3801 = vand.u32 %v3800, 127
      %v3802 = vadd.s32 %v3801, 128
      %3803 = vset.pattern.permute.xlu0 0
      %3804 = vperm.xlu0 %3803, %v3796
      %v3805 = vpop.permute.xlu0 %3804
      %3806 = vset.pattern.permute.xlu0 0
      %3807 = vperm.xlu0 %3806, %v3797
      %v3808 = vpop.permute.xlu0 %3807
      %3809 = vset.pattern.permute.xlu0 0
      %3810 = vperm.xlu0 %3809, %v3798
      %v3811 = vpop.permute.xlu0 %3810
      %3812 = vset.pattern.permute.xlu0 0
      %3813 = vperm.xlu0 %3812, %v3799
      %v3814 = vpop.permute.xlu0 %3813
      %vm3815 = vcmp.eq.s32.totalorder %v3805, %v3801
      %vm3816 = vcmp.eq.s32.totalorder %v3805, %v3802
      %vm3817 = vcmp.eq.s32.totalorder %v3808, %v3801
      %vm3818 = vcmp.eq.s32.totalorder %v3808, %v3802
      %vm3819 = vcmp.eq.s32.totalorder %v3811, %v3801
      %vm3820 = vcmp.eq.s32.totalorder %v3811, %v3802
      %vm3821 = vcmp.eq.s32.totalorder %v3814, %v3801
      %vm3822 = vcmp.eq.s32.totalorder %v3814, %v3802
      %v3823 = vsel %vm3815, 1, 0
      %v3824 = vsel %vm3816, 1, 0
      %v3825 = vsel %vm3817, 1, 0
      %v3826 = vsel %vm3818, 1, 0
      %v3827 = vsel %vm3819, 1, 0
      %v3828 = vsel %vm3820, 1, 0
      %v3829 = vsel %vm3821, 1, 0
      %v3830 = vsel %vm3822, 1, 0
      %v3831 = vcvt.s32.f32 %v3823
      %v3832 = vcvt.s32.f32 %v3824
      %v3833 = vcvt.s32.f32 %v3825
      %v3834 = vcvt.s32.f32 %v3826
      %v3835 = vcvt.s32.f32 %v3827
      %v3836 = vcvt.s32.f32 %v3828
      %v3837 = vcvt.s32.f32 %v3829
      %v3838 = vcvt.s32.f32 %v3830
      %v3839 = vpack.c.bf16 %v3833, %v3831
      %v3840 = vpack.c.bf16 %v3834, %v3832
      %v3841 = vpack.c.bf16 %v3837, %v3835
      %v3842 = vpack.c.bf16 %v3838, %v3836
      %3843 = vmatprep.subr.bf16.mxu0 %v3840
      %3844 = vmatpush1.bf16.msra.mxu0 %v3839
      %3845 = vmatprep.subr.bf16.mxu0 0
      %3846 = vmatpush1.bf16.msra.mxu0 0
      %3847 = vmatprep.subr.bf16.mxu0 0
      %3848 = vmatpush1.bf16.msra.mxu0 0
      %3849 = vmatprep.subr.bf16.mxu0 0
      %3850 = vmatpush1.bf16.msra.mxu0 0
      %3851 = vmatprep.subr.bf16.mxu0 0
      %3852 = vmatpush1.bf16.msra.mxu0 0
      %3853 = vmatprep.subr.bf16.mxu0 0
      %3854 = vmatpush1.bf16.msra.mxu0 0
      %3855 = vmatprep.subr.bf16.mxu0 0
      %3856 = vmatpush1.bf16.msra.mxu0 0
      %3857 = vmatprep.subr.bf16.mxu0 0
      %3858 = vmatpush1.bf16.msra.mxu0 0
      %3859 = vmatprep.subr.bf16.mxu0 0
      %3860 = vmatpush1.bf16.msra.mxu0 0
      %3861 = vmatprep.subr.bf16.mxu0 0
      %3862 = vmatpush1.bf16.msra.mxu0 0
      %3863 = vmatprep.subr.bf16.mxu0 0
      %3864 = vmatpush1.bf16.msra.mxu0 0
      %3865 = vmatprep.subr.bf16.mxu0 0
      %3866 = vmatpush1.bf16.msra.mxu0 0
      %3867 = vmatprep.subr.bf16.mxu0 0
      %3868 = vmatpush1.bf16.msra.mxu0 0
      %3869 = vmatprep.subr.bf16.mxu0 0
      %3870 = vmatpush1.bf16.msra.mxu0 0
      %3871 = vmatprep.subr.bf16.mxu0 0
      %3872 = vmatpush1.bf16.msra.mxu0 0
      %3873 = vmatprep.subr.bf16.mxu0 0
      %3874 = vmatpush1.bf16.msra.mxu0 0
      %3875 = vmatprep.mubr.bf16.mxu0 0
      %3876 = vmatmul.mubr.bf16.gmra.mrb[0].mxu0 %v2990
      %v3877 = vpop.f32.mrb[0].mxu0
      %v3878 = vadd.f32 0.0, %v3877
      %v3879 = vpop.f32.mrb[0].mxu0
      %v3880 = vadd.f32 0.0, %v3879
      %v3881 = vpop.f32.mrb[0].mxu0
      %v3882 = vpop.f32.mrb[0].mxu0
      %3883 = vdwg.mxu0
      %3884 = vmatprep.subr.bf16.mxu0 %v3842
      %3885 = vmatpush1.bf16.msra.mxu0 %v3841
      %3886 = vmatprep.subr.bf16.mxu0 0
      %3887 = vmatpush1.bf16.msra.mxu0 0
      %3888 = vmatprep.subr.bf16.mxu0 0
      %3889 = vmatpush1.bf16.msra.mxu0 0
      %3890 = vmatprep.subr.bf16.mxu0 0
      %3891 = vmatpush1.bf16.msra.mxu0 0
      %3892 = vmatprep.subr.bf16.mxu0 0
      %3893 = vmatpush1.bf16.msra.mxu0 0
      %3894 = vmatprep.subr.bf16.mxu0 0
      %3895 = vmatpush1.bf16.msra.mxu0 0
      %3896 = vmatprep.subr.bf16.mxu0 0
      %3897 = vmatpush1.bf16.msra.mxu0 0
      %3898 = vmatprep.subr.bf16.mxu0 0
      %3899 = vmatpush1.bf16.msra.mxu0 0
      %3900 = vmatprep.subr.bf16.mxu0 0
      %3901 = vmatpush1.bf16.msra.mxu0 0
      %3902 = vmatprep.subr.bf16.mxu0 0
      %3903 = vmatpush1.bf16.msra.mxu0 0
      %3904 = vmatprep.subr.bf16.mxu0 0
      %3905 = vmatpush1.bf16.msra.mxu0 0
      %3906 = vmatprep.subr.bf16.mxu0 0
      %3907 = vmatpush1.bf16.msra.mxu0 0
      %3908 = vmatprep.subr.bf16.mxu0 0
      %3909 = vmatpush1.bf16.msra.mxu0 0
      %3910 = vmatprep.subr.bf16.mxu0 0
      %3911 = vmatpush1.bf16.msra.mxu0 0
      %3912 = vmatprep.subr.bf16.mxu0 0
      %3913 = vmatpush1.bf16.msra.mxu0 0
      %3914 = vmatprep.subr.bf16.mxu0 0
      %3915 = vmatpush1.bf16.msra.mxu0 0
      %3916 = vmatprep.mubr.bf16.mxu0 0
      %3917 = vmatmul.mubr.bf16.gmra.mrb[0].mxu0 %v3033
      %v3918 = vpop.f32.mrb[0].mxu0
      %v3919 = vadd.f32 0.0, %v3918
      %v3920 = vpop.f32.mrb[0].mxu0
      %v3921 = vadd.f32 0.0, %v3920
      %v3922 = vpop.f32.mrb[0].mxu0
      %v3923 = vpop.f32.mrb[0].mxu0
      %3924 = vdwg.mxu0
      %3925 = vst [vmem:[%s800] sm:$0xff] %v3467
      %3926 = vst [vmem:[%s800 + $0x8] sm:$0xff] %v3469
      %3927 = vst [vmem:[%s800 + $0x10] sm:$0xff] %v3471
      %3928 = vst [vmem:[%s800 + $0x18] sm:$0xff] %v3473
      %3930 = vset.pattern.permute.xlu0 0
      %3931 = vperm.xlu0 %3930, %v3764
      %v3932 = vpop.permute.xlu0 %3931
      %3935 = vset.pattern.permute.xlu0 0
      %3936 = vperm.xlu0 %3935, %v3765
      %v3937 = vpop.permute.xlu0 %3936
      %v3939 = vmul.f32 %v3932, %v3792
      %v3940 = vmul.f32 %v3932, %v3793
      %v3941 = vmul.f32 %v3937, %v3794
      %v3942 = vmul.f32 %v3937, %v3795
      %v3943 = vsub.f32 1.0, %v3764
      %v3944 = vsub.f32 1.0, %v3765
      %3946 = vset.pattern.permute.xlu0 0
      %3947 = vperm.xlu0 %3946, %v3943
      %v3948 = vpop.permute.xlu0 %3947
      %3951 = vset.pattern.permute.xlu0 0
      %3952 = vperm.xlu0 %3951, %v3944
      %v3953 = vpop.permute.xlu0 %3952
      %v3955 = vmul.f32 %v3948, %v3878
      %v3956 = vmul.f32 %v3948, %v3880
      %v3957 = vmul.f32 %v3953, %v3919
      %v3958 = vmul.f32 %v3953, %v3921
      %v3959 = vadd.f32 %v3939, %v3955
      %v3960 = vadd.f32 %v3940, %v3956
      %v3961 = vadd.f32 %v3941, %v3957
      %v3962 = vadd.f32 %v3942, %v3958
      %3963 = vst [vmem:[%s807] sm:$0xff] %v3959
      %3964 = vst [vmem:[%s807 + $0x8] sm:$0xff] %v3960
      %3965 = vst [vmem:[%s807 + $0x10] sm:$0xff] %v3961
      %3966 = vst [vmem:[%s807 + $0x18] sm:$0xff] %v3962
      %3967 = vst.msk [vmem:[%s813] sm:$0xff] %vm2964, %v2985
      %3968 = vst.msk [vmem:[%s813 + $0x8] sm:$0xff] %vm2964, %v2986
      %vm3969 = vcmask 7168
      %3970 = vst.msk [vmem:[%s819] sm:$0xff] %vm3969, %v3764
      %3971 = vst.msk [vmem:[%s819 + $0x8] sm:$0xff] %vm3969, %v3765
      %s3972 = smul.u32 2, %s36
      %p3973 = scmp.lt.s32.totalorder %s3972, 3
      %s3974 = scalar_select %p3973, %s3972, 3
      %s3975 = smul.addr %s3974, 2
      %s3976 = smul.addr %s3975, 8
      %s3977 = scalar_lea.vmem %s19, %s3976
      %s3978 = smul.u32 2, %s36
      %p3979 = scmp.lt.s32.totalorder %s3978, 3
      %s3980 = scalar_select %p3979, %s3978, 3
      %s3981 = smul.addr %s3980, 2
      %s3982 = smul.addr %s3981, 8
      %s3983 = scalar_lea.vmem %s20, %s3982
      %s3984 = smul.u32 2, %s36
      %p3985 = scmp.lt.s32.totalorder %s3984, 3
      %s3986 = scalar_select %p3985, %s3984, 3
      %s3987 = smul.addr %s3986, 8
      %s3988 = scalar_lea.vmem %s21, %s3987
      %s3989 = smul.u32 2, %s36
      %p3990 = scmp.lt.s32.totalorder %s3989, 3
      %s3991 = scalar_select %p3990, %s3989, 3
      %s3992 = smul.addr %s3991, 8
      %s3993 = scalar_lea.vmem %s22, %s3992
      // Predicated region
      $region97: #{personalized_headline_forward.5} parent=95 // pred_check
        %p3994 = pneg %p478
      $region98: #{personalized_headline_forward.5} parent=95 // pred_check_branch
        %3996 = sbr.rel (%p3994) target = $region100
      $region99: #{personalized_headline_forward.5} parent=95 // pred_region
        %s3997 = smul.u32 2, %s36
      $region100: #{personalized_headline_forward.5} parent=95 // pred_fallthru
        _
      // Predicated region
      $region101: #{personalized_headline_forward.5} parent=95 // pred_check
        %p3998 = pneg %p504
      $region102: #{personalized_headline_forward.5} parent=95 // pred_check_branch
        %4000 = sbr.rel (%p3998) target = $region104
      $region103: #{personalized_headline_forward.5} parent=95 // pred_region
        %s4001 = smul.u32 2, %s36
      $region104: #{personalized_headline_forward.5} parent=95 // pred_fallthru
        _
      // Predicated region
      $region105: #{personalized_headline_forward.5} parent=95 // pred_check
        %p4002 = pneg %p530
      $region106: #{personalized_headline_forward.5} parent=95 // pred_check_branch
        %4004 = sbr.rel (%p4002) target = $region108
      $region107: #{personalized_headline_forward.5} parent=95 // pred_region
        %s4005 = smul.u32 2, %s36
      $region108: #{personalized_headline_forward.5} parent=95 // pred_fallthru
        _
      // Predicated region
      $region109: #{personalized_headline_forward.5} parent=95 // pred_check
        %p4006 = pneg %p556
      $region110: #{personalized_headline_forward.5} parent=95 // pred_check_branch
        %4008 = sbr.rel (%p4006) target = $region112
      $region111: #{personalized_headline_forward.5} parent=95 // pred_region
        %s4009 = smul.u32 2, %s36
      $region112: #{personalized_headline_forward.5} parent=95 // pred_fallthru
        _
    $region96: #{personalized_headline_forward.5} parent=5 // pred_fallthru
      _
    %p4010 = scmp.le.s32.totalorder 2, %s31
    // Predicated region
    $region113: #{personalized_headline_forward.5} parent=5 // pred_check
      %p4011 = pneg %p4010
    $region114: #{personalized_headline_forward.5} parent=5 // pred_check_branch
      %4013 = sbr.rel (%p4011) target = $region116
    $region115: #{personalized_headline_forward.5} parent=5 // pred_region
      %s4014 = ssub.s32 %s31, 2
      // Predicated region
      $region117: #{personalized_headline_forward.5} parent=115 // pred_check
        %p4015 = pneg %p484
      $region118: #{personalized_headline_forward.5} parent=115 // pred_check_branch
        %4017 = sbr.rel (%p4015) target = $region120
      $region119: #{personalized_headline_forward.5} parent=115 // pred_region
        %s4018 = smul.u32 2, %s37
        %p4019 = scmp.lt.s32.totalorder %s4018, 3
        %s4020 = scalar_select %p4019, %s4018, 3
        %s4021 = smul.addr %s4020, 2
        %s4022 = smul.addr %s4021, 8
        %s4023 = scalar_lea.vmem %s19, %s4022
      $region120: #{personalized_headline_forward.5} parent=115 // pred_fallthru
        _
      // Predicated region
      $region121: #{personalized_headline_forward.5} parent=115 // pred_check
        %p4024 = pneg %p510
      $region122: #{personalized_headline_forward.5} parent=115 // pred_check_branch
        %4026 = sbr.rel (%p4024) target = $region124
      $region123: #{personalized_headline_forward.5} parent=115 // pred_region
        %s4027 = smul.u32 2, %s37
        %p4028 = scmp.lt.s32.totalorder %s4027, 3
        %s4029 = scalar_select %p4028, %s4027, 3
        %s4030 = smul.addr %s4029, 2
        %s4031 = smul.addr %s4030, 8
        %s4032 = scalar_lea.vmem %s20, %s4031
      $region124: #{personalized_headline_forward.5} parent=115 // pred_fallthru
        _
      // Predicated region
      $region125: #{personalized_headline_forward.5} parent=115 // pred_check
        %p4033 = pneg %p536
      $region126: #{personalized_headline_forward.5} parent=115 // pred_check_branch
        %4035 = sbr.rel (%p4033) target = $region128
      $region127: #{personalized_headline_forward.5} parent=115 // pred_region
        %s4036 = smul.u32 2, %s37
        %p4037 = scmp.lt.s32.totalorder %s4036, 3
        %s4038 = scalar_select %p4037, %s4036, 3
        %s4039 = smul.addr %s4038, 8
        %s4040 = scalar_lea.vmem %s21, %s4039
      $region128: #{personalized_headline_forward.5} parent=115 // pred_fallthru
        _
      // Predicated region
      $region129: #{personalized_headline_forward.5} parent=115 // pred_check
        %p4041 = pneg %p562
      $region130: #{personalized_headline_forward.5} parent=115 // pred_check_branch
        %4043 = sbr.rel (%p4041) target = $region132
      $region131: #{personalized_headline_forward.5} parent=115 // pred_region
        %s4044 = smul.u32 2, %s37
        %p4045 = scmp.lt.s32.totalorder %s4044, 3
        %s4046 = scalar_select %p4045, %s4044, 3
        %s4047 = smul.addr %s4046, 8
        %s4048 = scalar_lea.vmem %s22, %s4047
      $region132: #{personalized_headline_forward.5} parent=115 // pred_fallthru
        _
    $region116: #{personalized_headline_forward.5} parent=5 // pred_fallthru
      _
  $region6: #{personalized_headline_forward.5} parent=0 // loop_footer
    %s35 = sadd.s32 1, %s31
  $region7: #{personalized_headline_forward.5} parent=0 // loop_footer_branch
    %30 = sbr.rel target = $region3
  $region8: #{personalized_headline_forward.5} parent=0 // loop_exit
    _

</llo_original>
